<compile_context>
chip_gen: v6e
topology: v6e:2x2x1
jax: 0.10.0
libtpu: 0.0.40
codegen_flags: <defaults>
</compile_context>

<pallas_src>
import functools

import jax
import jax.numpy as jnp
from jax.experimental import pallas as pl
from jax.experimental.pallas import tpu as pltpu

# ----------------------------- small synthetic config -------------------------
PATCH = 14           # DINOv2 patch size (EDGE_DIVISIBLE_BY = 14)
EMBED = 64           # shrunk embed dim (real ViT-L/14 uses 1024)
HEADS = 4
HEAD_DIM = EMBED // HEADS
MLP_DIM = 4 * EMBED
DEPTH = 2
DEC_C = 32           # decoder output channels
LN_EPS = 1e-5        # matches torch.nn.LayerNorm default

ROW_TILE = 1024      # row tile for the patch-embed linear


def _cparams(n_parallel=1):
    # Explicit scoped-VMEM limit (safe on v5e/v6e/v7x); all grid axes are parallel.
    return pltpu.CompilerParams(
        dimension_semantics=("parallel",) * n_parallel,
        vmem_limit_bytes=32 * 1024 * 1024)


def _round_up(x, m):
    return ((x + m - 1) // m) * m


def _ln(x, g, b):
    mu = jnp.mean(x, axis=-1, keepdims=True)
    xc = x - mu
    var = jnp.mean(xc * xc, axis=-1, keepdims=True)
    return xc * jax.lax.rsqrt(var + LN_EPS) * g + b


# ----------------------------- Pallas kernels --------------------------------
def _linear_kernel(x_ref, w_ref, b_ref, o_ref):
    """Row-tiled linear; weights already bf16, f32 accumulation."""
    o_ref[...] = (jnp.dot(x_ref[...].astype(jnp.bfloat16), w_ref[...],
                          preferred_element_type=jnp.float32) + b_ref[...])


def _block_body(x, ln1_g, ln1_b, wq_ref, bq_ref, wk_ref, bk_ref, wv_ref, bv_ref,
                wo_ref, bo, ln2_g, ln2_b, w1, b1, w2, b2):
    """One ViT block on a (T, EMBED) f32 token matrix. Weights are resident bf16.
    q weights/bias are pre-scaled by 1/sqrt(HEAD_DIM) in the wrapper."""
    h1 = _ln(x, ln1_g, ln1_b).astype(jnp.bfloat16)
    acc = None
    for h in range(HEADS):                                  # static unroll, HEADS=4
        q = jnp.dot(h1, wq_ref[h], preferred_element_type=jnp.float32) + bq_ref[h]
        k = jnp.dot(h1, wk_ref[h], preferred_element_type=jnp.float32) + bk_ref[h]
        v = jnp.dot(h1, wv_ref[h], preferred_element_type=jnp.float32) + bv_ref[h]
        s = jax.lax.dot_general(q.astype(jnp.bfloat16), k.astype(jnp.bfloat16),
                                (((1,), (1,)), ((), ())),
                                preferred_element_type=jnp.float32)     # (T, T)
        s = s - jnp.max(s, axis=-1, keepdims=True)
        p = jnp.exp(s)
        p = p * pl.reciprocal(jnp.sum(p, axis=-1, keepdims=True), approx=True)
        av = jnp.dot(p.astype(jnp.bfloat16), v.astype(jnp.bfloat16),
                     preferred_element_type=jnp.float32)                # (T, HD)
        c = jnp.dot(av.astype(jnp.bfloat16), wo_ref[h],
                    preferred_element_type=jnp.float32)                 # (T, E)
        acc = c if acc is None else acc + c                 # per-head proj accumulate
    x = x + acc + bo                                        # residual + proj bias
    h2 = _ln(x, ln2_g, ln2_b).astype(jnp.bfloat16)
    hid = jax.nn.gelu(jnp.dot(h2, w1, preferred_element_type=jnp.float32) + b1)
    y = jnp.dot(hid.astype(jnp.bfloat16), w2, preferred_element_type=jnp.float32) + b2
    return x + y                                            # fused residual add


def _block_kernel(*refs, first):
    """Whole transformer block per image.  The first block also folds in the
    cls-token concat and the positional-embedding add."""
    if first:
        ptok_ref, cls_ref, pos_ref = refs[:3]
        wrefs, o_ref = refs[3:-1], refs[-1]
        x = jnp.concatenate([cls_ref[...], ptok_ref[0]], axis=0) + pos_ref[0]
    else:
        x_ref = refs[0]
        wrefs, o_ref = refs[1:-1], refs[-1]
        x = x_ref[0]
    (ln1_g, ln1_b, wq, bq, wk, bk, wv, bv, wo, bo,
     ln2_g, ln2_b, w1, b1, w2, b2) = wrefs
    o_ref[0] = _block_body(x, ln1_g[...], ln1_b[...], wq, bq, wk, bk, wv, bv,
                           wo, bo[...], ln2_g[...], ln2_b[...],
                           w1[...], b1[...], w2[...], b2[...])
    # TODO(synk): at real scale (T~1370, EMBED=1024) tile the queries as a second
    # grid axis to bound the (T,T) score tile under v7x's 64 MiB VMEM.


def _dec_head_calib_kernel(f_ref, w1_ref, b1_ref, w2_ref, b2_ref, hw_ref, hb_ref,
                           pk_ref, st_ref, *, gh, gw):
    """Decoder 1x1 convs + head + exp-map + pinhole normal equations, per image,
    at patch resolution (pointwise ops commute with nearest-neighbour upsample).
    Matmuls in bf16; exp-map and calib sums in f32."""
    f = f_ref[0].astype(jnp.bfloat16)                                   # (NP, EMBED)
    f = jax.nn.gelu(jnp.dot(f, w1_ref[...], preferred_element_type=jnp.float32)
                    + b1_ref[...])
    f = jax.nn.gelu(jnp.dot(f.astype(jnp.bfloat16), w2_ref[...],
                            preferred_element_type=jnp.float32) + b2_ref[...])
    t = jnp.dot(f.astype(jnp.bfloat16), hw_ref[...],
                preferred_element_type=jnp.float32) + hb_ref[...]       # (NP, 2)

    # exp map at the z-axis: (NP, 2) tangent coords -> (NP, 3) unit rays
    theta2 = jnp.sum(t * t, axis=-1, keepdims=True)
    theta = jnp.sqrt(theta2)
    sinc = jnp.where(theta < 1e-6, 1.0 - theta2 / 6.0,
                     jnp.sin(theta) / jnp.maximum(theta, 1e-12))
    st = sinc * t                                                       # (NP, 2)
    cz = jnp.cos(theta)                                                 # (NP, 1)

    n_p = t.shape[0]
    # lane-packed dense output: [tangent(2), ray(3), pad(3)] -> split in wrapper
    pk_ref[0] = jnp.concatenate([t, st, cz, jnp.zeros((n_p, 3), jnp.float32)],
                                axis=-1)

    # patch-center pixel coordinates built in-kernel (gh, gw are static)
    idx = jax.lax.broadcasted_iota(jnp.int32, (n_p, 1), 0).astype(jnp.float32)
    row = jnp.floor((idx + 0.5) / float(gw))
    col = idx - row * float(gw)
    u = (col + 0.5) * float(PATCH)
    v = (row + 0.5) * float(PATCH)

    # TODO(synk): no clamp on 1/cz; the reference's RANSAC/refinement that would
    # reject near-degenerate rays is not translated.
    inv_z = 1.0 / cz
    xb = st[:, 0:1] * inv_z
    yb = st[:, 1:2] * inv_z

    def _s(a):                                                          # (1, 1)
        return jnp.sum(a, axis=0, keepdims=True)

    n = jnp.full((1, 1), float(n_p), jnp.float32)
    # per-patch sums == per-pixel sums / PATCH^2 (rays constant within a patch,
    # u/v are the exact per-patch means of the pixel coordinates)
    moments = jnp.concatenate(
        [_s(xb * xb), _s(xb), _s(yb * yb), _s(yb), n,
         _s(xb * u), _s(u), _s(yb * v), _s(v),
         jnp.zeros((1, 7), jnp.float32)], axis=-1)                      # (1, 16)
    st_ref[0] = float(PATCH * PATCH) * moments


# ----------------------------- Pallas wrappers --------------------------------
def linear_rows(x, w_bf16, b_row):
    """Row-tiled linear: x:(M,K) f32, w:(K,N) bf16 resident, b:(1,N) f32."""
    M, K = x.shape
    N = w_bf16.shape[1]
    if M <= 8:
        tm = M                                   # block == full rows (no 8-multiple needed)
    else:
        # cap at ~M/2 (rounded to sublane multiple) so v7x's 2 TCs both get work,
        # but never exceed ROW_TILE; Pallas masks the partial last block.
        tm = min(ROW_TILE, _round_up(pl.cdiv(M, 2), 8))
    grid = (pl.cdiv(M, tm),)
    return pl.pallas_call(
        _linear_kernel,
        out_shape=jax.ShapeDtypeStruct((M, N), jnp.float32),
        grid=grid,
        in_specs=[pl.BlockSpec((tm, K), lambda i: (i, 0)),
                  pl.BlockSpec((K, N), lambda i: (0, 0)),
                  pl.BlockSpec((1, N), lambda i: (0, 0))],
        out_specs=pl.BlockSpec((tm, N), lambda i: (i, 0)),
        compiler_params=_cparams(1),
    )(x, w_bf16, b_row)


def fused_block(bp, x, B, T, cls=None, pos=None):
    """One fused transformer block, gridded over images (>=2 parallel steps when B>=2)."""
    first = cls is not None
    weights = (bp["ln1_g"], bp["ln1_b"], bp["wq"], bp["bq"], bp["wk"], bp["bk"],
               bp["wv"], bp["bv"], bp["wo"], bp["bo"], bp["ln2_g"], bp["ln2_b"],
               bp["w1"], bp["b1"], bp["w2"], bp["b2"])
    w_specs = [pl.BlockSpec(w.shape, lambda b, nd=w.ndim: (0,) * nd) for w in weights]
    if first:
        n_patch = x.shape[1]
        in_specs = [pl.BlockSpec((1, n_patch, EMBED), lambda b: (b, 0, 0)),
                    pl.BlockSpec((1, EMBED), lambda b: (0, 0)),
                    pl.BlockSpec((1, T, EMBED), lambda b: (0, 0, 0))] + w_specs
        args = (x, cls, pos) + weights
    else:
        in_specs = [pl.BlockSpec((1, T, EMBED), lambda b: (b, 0, 0))] + w_specs
        args = (x,) + weights
    return pl.pallas_call(
        functools.partial(_block_kernel, first=first),
        out_shape=jax.ShapeDtypeStruct((B, T, EMBED), jnp.float32),
        grid=(B,),
        in_specs=in_specs,
        out_specs=pl.BlockSpec((1, T, EMBED), lambda b: (b, 0, 0)),
        compiler_params=_cparams(1),
    )(*args)


def decoder_head_calib(feats, prep, gh, gw):
    B, NP, _ = feats.shape
    weights = (prep["dec_w1"], prep["dec_b1"], prep["dec_w2"], prep["dec_b2"],
               prep["head_w"], prep["head_b"])
    w_specs = [pl.BlockSpec(w.shape, lambda b, nd=w.ndim: (0,) * nd) for w in weights]
    return pl.pallas_call(
        functools.partial(_dec_head_calib_kernel, gh=gh, gw=gw),
        out_shape=(jax.ShapeDtypeStruct((B, NP, 8), jnp.float32),
                   jax.ShapeDtypeStruct((B, 1, 16), jnp.float32)),
        grid=(B,),
        in_specs=[pl.BlockSpec((1, NP, EMBED), lambda b: (b, 0, 0))] + w_specs,
        out_specs=(pl.BlockSpec((1, NP, 8), lambda b: (b, 0, 0)),
                   pl.BlockSpec((1, 1, 16), lambda b: (b, 0, 0))),
        compiler_params=_cparams(1),
    )(feats, *weights)


# ----------------------------- model glue (plain JAX) ------------------------
def anycalib_forward(prep, image):
    """image: (B, 3, H, W) float32 in [0, 1] (NCHW, as in the PyTorch module)."""
    B, C, H, W = image.shape
    gh, gw = H // PATCH, W // PATCH
    n_patch = gh * gw
    T = n_patch + 1

    # --- backbone (DINOv2-style ViT): patch embed + (cls + pos folded in block 0) ---
    x = image.transpose(0, 2, 3, 1)                                  # NCHW -> NHWC
    x = x.reshape(B, gh, PATCH, gw, PATCH, C)
    x = x.transpose(0, 1, 3, 2, 4, 5).reshape(B * n_patch, PATCH * PATCH * C)
    ptok = linear_rows(x, prep["patch_w"], prep["patch_b"]).reshape(B, n_patch, EMBED)

    tok = None
    for i, blk in enumerate(prep["blocks"]):
        if i == 0:
            tok = fused_block(blk, ptok, B, T, cls=prep["cls"], pos=prep["pos"])
        else:
            tok = fused_block(blk, tok, B, T)
    feats = tok[:, 1:, :]                                            # drop cls token

    # --- decoder + head + calib reduction, fused at patch resolution ---
    packed, stats = decoder_head_calib(feats, prep, gh, gw)
    tangent_p = packed[..., 0:2]                                     # (B, NP, 2)
    rays_p = packed[..., 2:5]                                        # (B, NP, 3)
    # TODO(synk): real LightDPTDecoder does multi-scale reassembly + bilinear fusion;
    # here the nearest-neighbour upsample commutes with the pointwise decoder/head,
    # so the dense stage is computed at patch resolution and replicated below.

    def upsample(x_p, c):                                            # nearest NN replicate
        x_p = x_p.reshape(B, gh, 1, gw, 1, c)
        return jnp.broadcast_to(x_p, (B, gh, PATCH, gw, PATCH, c)).reshape(B, H * W, c)

    rays = upsample(rays_p, 3)                                       # (B, H*W, 3)
    tangent = upsample(tangent_p, 2)                                 # (B, H*W, 2)

    # --- calibrator: pinhole linear fit (normal equations already reduced) ---
    S = stats[:, 0, :]
    Sxx, Sx, Syy, Sy, Np, Sxu, Su, Syv, Sv = (S[:, i] for i in range(9))
    fx = (Np * Sxu - Sx * Su) / (Np * Sxx - Sx * Sx)
    fy = (Np * Syv - Sy * Sv) / (Np * Syy - Sy * Sy)
    cx = (Su - fx * Sx) / Np
    cy = (Sv - fy * Sy) / Np
    intrinsics = jnp.stack([fx, fy, cx, cy], axis=-1)                # (B, 4) [fx, fy, cx, cy]
    success = jnp.all(jnp.isfinite(intrinsics), axis=-1)

    icov = jnp.zeros((B, 4, 4), jnp.float32)
    icov = icov.at[:, 0, 0].set(Sxx).at[:, 0, 2].set(Sx).at[:, 2, 0].set(Sx).at[:, 2, 2].set(Np)
    icov = icov.at[:, 1, 1].set(Syy).at[:, 1, 3].set(Sy).at[:, 3, 1].set(Sy).at[:, 3, 3].set(Np)
    # TODO(synk): Gauss-Newton / LevMar refinement and RANSAC fallback of the reference
    # involve data-dependent per-camera control flow and are not translated.

    return {
        "rays": rays,
        "tangent_coords": tangent,
        "fov_field": tangent,
        "intrinsics": intrinsics,
        "success": success,
        "intrinsics_icovs": icov,
    }


# ----------------------------- deterministic params --------------------------
def init_params(key, h, w):
    """PyTorch-style (f32, fused-qkv) parameterization with synthetic weights."""
    n_tok = (h // PATCH) * (w // PATCH) + 1
    ks = iter(jax.random.split(key, 64))

    def w_(shape, fan_in, scale=1.0):
        return (scale * jax.random.normal(next(ks), shape) /
                (float(fan_in) ** 0.5)).astype(jnp.float32)

    params = {
        "patch_w": w_((PATCH * PATCH * 3, EMBED), PATCH * PATCH * 3),
        "patch_b": jnp.zeros((EMBED,), jnp.float32),
        "cls": w_((1, 1, EMBED), EMBED),
        "pos": (0.02 * jax.random.normal(next(ks), (1, n_tok, EMBED))).astype(jnp.float32),
        "dec_w1": w_((EMBED, DEC_C), EMBED),
        "dec_b1": jnp.zeros((DEC_C,), jnp.float32),
        "dec_w2": w_((DEC_C, DEC_C), DEC_C),
        "dec_b2": jnp.zeros((DEC_C,), jnp.float32),
        "head_w": (0.05 * jax.random.normal(next(ks), (DEC_C, 2))).astype(jnp.float32),
        "head_b": jnp.zeros((2,), jnp.float32),
        "blocks": [],
    }
    for _ in range(DEPTH):
        params["blocks"].append({
            "ln1_g": jnp.ones((EMBED,), jnp.float32),
            "ln1_b": jnp.zeros((EMBED,), jnp.float32),
            "qkv_w": w_((EMBED, 3 * EMBED), EMBED),
            "qkv_b": jnp.zeros((3 * EMBED,), jnp.float32),
            "proj_w": w_((EMBED, EMBED), EMBED),
            "proj_b": jnp.zeros((EMBED,), jnp.float32),
            "ln2_g": jnp.ones((EMBED,), jnp.float32),
            "ln2_b": jnp.zeros((EMBED,), jnp.float32),
            "fc1_w": w_((EMBED, MLP_DIM), EMBED),
            "fc1_b": jnp.zeros((MLP_DIM,), jnp.float32),
            "fc2_w": w_((MLP_DIM, EMBED), MLP_DIM),
            "fc2_b": jnp.zeros((EMBED,), jnp.float32),
        })
    return params


def prepare_params(p):
    """One-time kernel-ready weight prep: bf16 matmul weights, per-head q/k/v/proj
    slabs with the attention scale folded into q, 2-D biases / LN params."""
    scale = 1.0 / float(HEAD_DIM) ** 0.5

    def bf(w):
        return w.astype(jnp.bfloat16)

    prep = {
        "patch_w": bf(p["patch_w"]),
        "patch_b": p["patch_b"].reshape(1, -1),
        "cls": p["cls"].reshape(1, EMBED),
        "pos": p["pos"],
        "dec_w1": bf(p["dec_w1"]), "dec_b1": p["dec_b1"].reshape(1, -1),
        "dec_w2": bf(p["dec_w2"]), "dec_b2": p["dec_b2"].reshape(1, -1),
        "head_w": bf(p["head_w"]), "head_b": p["head_b"].reshape(1, -1),
        "blocks": [],
    }
    for b in p["blocks"]:
        qw = b["qkv_w"][:, 0 * EMBED:1 * EMBED].reshape(EMBED, HEADS, HEAD_DIM).transpose(1, 0, 2)
        kw = b["qkv_w"][:, 1 * EMBED:2 * EMBED].reshape(EMBED, HEADS, HEAD_DIM).transpose(1, 0, 2)
        vw = b["qkv_w"][:, 2 * EMBED:3 * EMBED].reshape(EMBED, HEADS, HEAD_DIM).transpose(1, 0, 2)
        qb = b["qkv_b"][0 * EMBED:1 * EMBED].reshape(HEADS, 1, HEAD_DIM)
        kb = b["qkv_b"][1 * EMBED:2 * EMBED].reshape(HEADS, 1, HEAD_DIM)
        vb = b["qkv_b"][2 * EMBED:3 * EMBED].reshape(HEADS, 1, HEAD_DIM)
        wo = b["proj_w"].reshape(HEADS, HEAD_DIM, EMBED)
        prep["blocks"].append({
            "ln1_g": b["ln1_g"].reshape(1, -1), "ln1_b": b["ln1_b"].reshape(1, -1),
            "wq": bf(qw * scale), "bq": qb * scale,
            "wk": bf(kw), "bk": kb,
            "wv": bf(vw), "bv": vb,
            "wo": bf(wo), "bo": b["proj_b"].reshape(1, -1),
            "ln2_g": b["ln2_g"].reshape(1, -1), "ln2_b": b["ln2_b"].reshape(1, -1),
            "w1": bf(b["fc1_w"]), "b1": b["fc1_b"].reshape(1, -1),
            "w2": bf(b["fc2_w"]), "b2": b["fc2_b"].reshape(1, -1),
        })
    return prep


if __name__ == "__main__":
    key = jax.random.PRNGKey(0)
    k_im, k_par = jax.random.split(key)
    B, H, W = 2, 2 * PATCH, 2 * PATCH                      # (2, 3, 28, 28)
    image = jax.random.uniform(k_im, (B, 3, H, W), dtype=jnp.float32)
    params = init_params(k_par, H, W)
    prep = prepare_params(params)                          # one-time bf16 / per-head prep

    out = jax.jit(anycalib_forward)(prep, image)
    out = jax.block_until_ready(out)

    assert out["rays"].shape == (B, H * W, 3)
    assert out["tangent_coords"].shape == (B, H * W, 2)
    assert out["fov_field"].shape == (B, H * W, 2)
    assert out["intrinsics"].shape == (B, 4)
    assert out["success"].shape == (B,)
    assert out["intrinsics_icovs"].shape == (B, 4, 4)
    print("KERNEL_OK")
</pallas_src>

<mosaic_0001>
module attributes {stable_mosaic.version = 11 : i64} {
  func.func @_linear_kernel(%arg0: i32, %arg1: memref<8x588xf32, #tpu.memory_space<vmem>>, %arg2: memref<588x64xbf16, #tpu.memory_space<vmem>>, %arg3: memref<1x64xf32, #tpu.memory_space<vmem>>, %arg4: memref<8x64xf32, #tpu.memory_space<vmem>>) attributes {dimension_semantics = [#tpu.dimension_semantics<parallel>], iteration_bounds = array<i64: 1>, scalar_prefetch = 0 : i64, scratch_operands = 0 : i64, tpu.core_type = #tpu.core_type<tc>, window_params = [{transform_indices = @transform_0, window_bounds = array<i64: 8, 588>}, {pipeline_mode = #tpu.pipeline_mode<synchronous>, transform_indices = @transform_1, window_bounds = array<i64: 588, 64>}, {pipeline_mode = #tpu.pipeline_mode<synchronous>, transform_indices = @transform_2, window_bounds = array<i64: 1, 64>}, {transform_indices = @transform_3, window_bounds = array<i64: 8, 64>}]} {
    %c0 = arith.constant 0 : index
    %c0_0 = arith.constant 0 : index
    %0 = vector.load %arg1[%c0, %c0_0] : memref<8x588xf32, #tpu.memory_space<vmem>>, vector<8x588xf32>
    %1 = arith.truncf %0 : vector<8x588xf32> to vector<8x588xbf16>
    %c0_1 = arith.constant 0 : index
    %c0_2 = arith.constant 0 : index
    %2 = vector.load %arg2[%c0_1, %c0_2] : memref<588x64xbf16, #tpu.memory_space<vmem>>, vector<588x64xbf16>
    %cst = arith.constant dense<0.000000e+00> : vector<8x64xf32>
    %3 = tpu.matmul %1, %2, %cst {dimension_numbers = #tpu.dot_dimension_numbers<[1], [0], [0], [1], [0, 0, 1, 1], [], []>} : vector<8x588xbf16>, vector<588x64xbf16>, vector<8x64xf32> -> vector<8x64xf32>
    %c0_3 = arith.constant 0 : index
    %c0_4 = arith.constant 0 : index
    %4 = vector.load %arg3[%c0_3, %c0_4] : memref<1x64xf32, #tpu.memory_space<vmem>>, vector<1x64xf32>
    %5 = vector.broadcast %4 : vector<1x64xf32> to vector<8x64xf32>
    %6 = arith.addf %3, %5 : vector<8x64xf32>
    %c0_5 = arith.constant 0 : index
    %c0_6 = arith.constant 0 : index
    %7 = vector.load %arg4[%c0_5, %c0_6] : memref<8x64xf32, #tpu.memory_space<vmem>>, vector<8x64xf32>
    tpu.vector_store %arg4[%c0_5, %c0_6], %6 {strides = array<i32>} : memref<8x64xf32, #tpu.memory_space<vmem>>, vector<8x64xf32>,
    return
  }
  func.func @transform_0(%arg0: i32) -> (i32, i32) {
    %c0_i32 = arith.constant 0 : i32
    %c0_i32_0 = arith.constant 0 : i32
    return %arg0, %c0_i32 : i32, i32
  }
  func.func @transform_1(%arg0: i32) -> (i32, i32) {
    %c0_i32 = arith.constant 0 : i32
    %c0_i32_0 = arith.constant 0 : i32
    %c0_i32_1 = arith.constant 0 : i32
    return %c0_i32, %c0_i32_0 : i32, i32
  }
  func.func @transform_2(%arg0: i32) -> (i32, i32) {
    %c0_i32 = arith.constant 0 : i32
    %c0_i32_0 = arith.constant 0 : i32
    %c0_i32_1 = arith.constant 0 : i32
    return %c0_i32, %c0_i32_0 : i32, i32
  }
  func.func @transform_3(%arg0: i32) -> (i32, i32) {
    %c0_i32 = arith.constant 0 : i32
    %c0_i32_0 = arith.constant 0 : i32
    return %arg0, %c0_i32 : i32, i32
  }
}

module attributes {stable_mosaic.version = 11 : i64} {
  func.func @_block_kernel(%arg0: i32, %arg1: memref<1x4x64xf32, #tpu.memory_space<vmem>>, %arg2: memref<1x64xf32, #tpu.memory_space<vmem>>, %arg3: memref<1x5x64xf32, #tpu.memory_space<vmem>>, %arg4: memref<1x64xf32, #tpu.memory_space<vmem>>, %arg5: memref<1x64xf32, #tpu.memory_space<vmem>>, %arg6: memref<4x64x16xbf16, #tpu.memory_space<vmem>>, %arg7: memref<4x1x16xf32, #tpu.memory_space<vmem>>, %arg8: memref<4x64x16xbf16, #tpu.memory_space<vmem>>, %arg9: memref<4x1x16xf32, #tpu.memory_space<vmem>>, %arg10: memref<4x64x16xbf16, #tpu.memory_space<vmem>>, %arg11: memref<4x1x16xf32, #tpu.memory_space<vmem>>, %arg12: memref<4x16x64xbf16, #tpu.memory_space<vmem>>, %arg13: memref<1x64xf32, #tpu.memory_space<vmem>>, %arg14: memref<1x64xf32, #tpu.memory_space<vmem>>, %arg15: memref<1x64xf32, #tpu.memory_space<vmem>>, %arg16: memref<64x256xbf16, #tpu.memory_space<vmem>>, %arg17: memref<1x256xf32, #tpu.memory_space<vmem>>, %arg18: memref<256x64xbf16, #tpu.memory_space<vmem>>, %arg19: memref<1x64xf32, #tpu.memory_space<vmem>>, %arg20: memref<1x5x64xf32, #tpu.memory_space<vmem>>) attributes {dimension_semantics = [#tpu.dimension_semantics<parallel>], iteration_bounds = array<i64: 2>, scalar_prefetch = 0 : i64, scratch_operands = 0 : i64, tpu.core_type = #tpu.core_type<tc>, window_params = [{transform_indices = @transform_0, window_bounds = array<i64: 1, 4, 64>}, {pipeline_mode = #tpu.pipeline_mode<synchronous>, transform_indices = @transform_1, window_bounds = array<i64: 1, 64>}, {pipeline_mode = #tpu.pipeline_mode<synchronous>, transform_indices = @transform_2, window_bounds = array<i64: 1, 5, 64>}, {pipeline_mode = #tpu.pipeline_mode<synchronous>, transform_indices = @transform_3, window_bounds = array<i64: 1, 64>}, {pipeline_mode = #tpu.pipeline_mode<synchronous>, transform_indices = @transform_4, window_bounds = array<i64: 1, 64>}, {pipeline_mode = #tpu.pipeline_mode<synchronous>, transform_indices = @transform_5, window_bounds = array<i64: 4, 64, 16>}, {pipeline_mode = #tpu.pipeline_mode<synchronous>, transform_indices = @transform_6, window_bounds = array<i64: 4, 1, 16>}, {pipeline_mode = #tpu.pipeline_mode<synchronous>, transform_indices = @transform_7, window_bounds = array<i64: 4, 64, 16>}, {pipeline_mode = #tpu.pipeline_mode<synchronous>, transform_indices = @transform_8, window_bounds = array<i64: 4, 1, 16>}, {pipeline_mode = #tpu.pipeline_mode<synchronous>, transform_indices = @transform_9, window_bounds = array<i64: 4, 64, 16>}, {pipeline_mode = #tpu.pipeline_mode<synchronous>, transform_indices = @transform_10, window_bounds = array<i64: 4, 1, 16>}, {pipeline_mode = #tpu.pipeline_mode<synchronous>, transform_indices = @transform_11, window_bounds = array<i64: 4, 16, 64>}, {pipeline_mode = #tpu.pipeline_mode<synchronous>, transform_indices = @transform_12, window_bounds = array<i64: 1, 64>}, {pipeline_mode = #tpu.pipeline_mode<synchronous>, transform_indices = @transform_13, window_bounds = array<i64: 1, 64>}, {pipeline_mode = #tpu.pipeline_mode<synchronous>, transform_indices = @transform_14, window_bounds = array<i64: 1, 64>}, {pipeline_mode = #tpu.pipeline_mode<synchronous>, transform_indices = @transform_15, window_bounds = array<i64: 64, 256>}, {pipeline_mode = #tpu.pipeline_mode<synchronous>, transform_indices = @transform_16, window_bounds = array<i64: 1, 256>}, {pipeline_mode = #tpu.pipeline_mode<synchronous>, transform_indices = @transform_17, window_bounds = array<i64: 256, 64>}, {pipeline_mode = #tpu.pipeline_mode<synchronous>, transform_indices = @transform_18, window_bounds = array<i64: 1, 64>}, {transform_indices = @transform_19, window_bounds = array<i64: 1, 5, 64>}]} {
    %c0 = arith.constant 0 : index
    %c0_0 = arith.constant 0 : index
    %0 = vector.load %arg2[%c0, %c0_0] : memref<1x64xf32, #tpu.memory_space<vmem>>, vector<1x64xf32>
    %c0_1 = arith.constant 0 : index
    %c0_2 = arith.constant 0 : index
    %c0_3 = arith.constant 0 : index
    %1 = vector.load %arg1[%c0_1, %c0_2, %c0_3] : memref<1x4x64xf32, #tpu.memory_space<vmem>>, vector<1x4x64xf32>
    %2 = vector.shape_cast %1 : vector<1x4x64xf32> to vector<4x64xf32>
    %3 = tpu.concatenate %0, %2 in 0 : vector<1x64xf32>, vector<4x64xf32> -> vector<5x64xf32>
    %c0_4 = arith.constant 0 : index
    %c0_5 = arith.constant 0 : index
    %c0_6 = arith.constant 0 : index
    %4 = vector.load %arg3[%c0_4, %c0_5, %c0_6] : memref<1x5x64xf32, #tpu.memory_space<vmem>>, vector<1x5x64xf32>
    %5 = vector.shape_cast %4 : vector<1x5x64xf32> to vector<5x64xf32>
    %6 = arith.addf %3, %5 : vector<5x64xf32>
    %c0_7 = arith.constant 0 : index
    %c0_8 = arith.constant 0 : index
    %7 = vector.load %arg4[%c0_7, %c0_8] : memref<1x64xf32, #tpu.memory_space<vmem>>, vector<1x64xf32>
    %c0_9 = arith.constant 0 : index
    %c0_10 = arith.constant 0 : index
    %8 = vector.load %arg5[%c0_9, %c0_10] : memref<1x64xf32, #tpu.memory_space<vmem>>, vector<1x64xf32>
    %c0_11 = arith.constant 0 : index
    %c0_12 = arith.constant 0 : index
    %9 = vector.load %arg13[%c0_11, %c0_12] : memref<1x64xf32, #tpu.memory_space<vmem>>, vector<1x64xf32>
    %c0_13 = arith.constant 0 : index
    %c0_14 = arith.constant 0 : index
    %10 = vector.load %arg14[%c0_13, %c0_14] : memref<1x64xf32, #tpu.memory_space<vmem>>, vector<1x64xf32>
    %c0_15 = arith.constant 0 : index
    %c0_16 = arith.constant 0 : index
    %11 = vector.load %arg15[%c0_15, %c0_16] : memref<1x64xf32, #tpu.memory_space<vmem>>, vector<1x64xf32>
    %c0_17 = arith.constant 0 : index
    %c0_18 = arith.constant 0 : index
    %12 = vector.load %arg16[%c0_17, %c0_18] : memref<64x256xbf16, #tpu.memory_space<vmem>>, vector<64x256xbf16>
    %c0_19 = arith.constant 0 : index
    %c0_20 = arith.constant 0 : index
    %13 = vector.load %arg17[%c0_19, %c0_20] : memref<1x256xf32, #tpu.memory_space<vmem>>, vector<1x256xf32>
    %c0_21 = arith.constant 0 : index
    %c0_22 = arith.constant 0 : index
    %14 = vector.load %arg18[%c0_21, %c0_22] : memref<256x64xbf16, #tpu.memory_space<vmem>>, vector<256x64xbf16>
    %c0_23 = arith.constant 0 : index
    %c0_24 = arith.constant 0 : index
    %15 = vector.load %arg19[%c0_23, %c0_24] : memref<1x64xf32, #tpu.memory_space<vmem>>, vector<1x64xf32>
    %cst = arith.constant dense<0.000000e+00> : vector<5xf32>
    %16 = vector.multi_reduction <add>, %6, %cst [1] : vector<5x64xf32> to vector<5xf32>
    %17 = vector.shape_cast %16 : vector<5xf32> to vector<5x1xf32>
    %cst_25 = arith.constant 6.400000e+01 : f32
    %18 = vector.broadcast %cst_25 : f32 to vector<5x1xf32>
    %19 = arith.divf %17, %18 : vector<5x1xf32>
    %20 = vector.broadcast %19 : vector<5x1xf32> to vector<5x64xf32>
    %21 = arith.subf %6, %20 : vector<5x64xf32>
    %22 = arith.mulf %21, %21 : vector<5x64xf32>
    %cst_26 = arith.constant dense<0.000000e+00> : vector<5xf32>
    %23 = vector.multi_reduction <add>, %22, %cst_26 [1] : vector<5x64xf32> to vector<5xf32>
    %24 = vector.shape_cast %23 : vector<5xf32> to vector<5x1xf32>
    %cst_27 = arith.constant 6.400000e+01 : f32
    %25 = vector.broadcast %cst_27 : f32 to vector<5x1xf32>
    %26 = arith.divf %24, %25 : vector<5x1xf32>
    %cst_28 = arith.constant 9.99999974E-6 : f32
    %27 = vector.broadcast %cst_28 : f32 to vector<5x1xf32>
    %28 = arith.addf %26, %27 : vector<5x1xf32>
    %29 = math.rsqrt %28 : vector<5x1xf32>
    %30 = vector.broadcast %29 : vector<5x1xf32> to vector<5x64xf32>
    %31 = arith.mulf %21, %30 : vector<5x64xf32>
    %32 = vector.broadcast %7 : vector<1x64xf32> to vector<5x64xf32>
    %33 = arith.mulf %31, %32 : vector<5x64xf32>
    %34 = vector.broadcast %8 : vector<1x64xf32> to vector<5x64xf32>
    %35 = arith.addf %33, %34 : vector<5x64xf32>
    %36 = arith.truncf %35 : vector<5x64xf32> to vector<5x64xbf16>
    %c0_29 = arith.constant 0 : index
    %c0_30 = arith.constant 0 : index
    %c0_31 = arith.constant 0 : index
    %37 = vector.load %arg6[%c0_29, %c0_30, %c0_31] : memref<4x64x16xbf16, #tpu.memory_space<vmem>>, vector<1x64x16xbf16>
    %38 = vector.shape_cast %37 : vector<1x64x16xbf16> to vector<64x16xbf16>
    %cst_32 = arith.constant dense<0.000000e+00> : vector<5x16xf32>
    %39 = tpu.matmul %36, %38, %cst_32 {dimension_numbers = #tpu.dot_dimension_numbers<[1], [0], [0], [1], [0, 0, 1, 1], [], []>} : vector<5x64xbf16>, vector<64x16xbf16>, vector<5x16xf32> -> vector<5x16xf32>
    %c0_33 = arith.constant 0 : index
    %c0_34 = arith.constant 0 : index
    %c0_35 = arith.constant 0 : index
    %40 = vector.load %arg7[%c0_33, %c0_34, %c0_35] : memref<4x1x16xf32, #tpu.memory_space<vmem>>, vector<1x1x16xf32>
    %41 = vector.shape_cast %40 : vector<1x1x16xf32> to vector<1x16xf32>
    %42 = vector.broadcast %41 : vector<1x16xf32> to vector<5x16xf32>
    %43 = arith.addf %39, %42 : vector<5x16xf32>
    %c0_36 = arith.constant 0 : index
    %c0_37 = arith.constant 0 : index
    %c0_38 = arith.constant 0 : index
    %44 = vector.load %arg8[%c0_36, %c0_37, %c0_38] : memref<4x64x16xbf16, #tpu.memory_space<vmem>>, vector<1x64x16xbf16>
    %45 = vector.shape_cast %44 : vector<1x64x16xbf16> to vector<64x16xbf16>
    %cst_39 = arith.constant dense<0.000000e+00> : vector<5x16xf32>
    %46 = tpu.matmul %36, %45, %cst_39 {dimension_numbers = #tpu.dot_dimension_numbers<[1], [0], [0], [1], [0, 0, 1, 1], [], []>} : vector<5x64xbf16>, vector<64x16xbf16>, vector<5x16xf32> -> vector<5x16xf32>
    %c0_40 = arith.constant 0 : index
    %c0_41 = arith.constant 0 : index
    %c0_42 = arith.constant 0 : index
    %47 = vector.load %arg9[%c0_40, %c0_41, %c0_42] : memref<4x1x16xf32, #tpu.memory_space<vmem>>, vector<1x1x16xf32>
    %48 = vector.shape_cast %47 : vector<1x1x16xf32> to vector<1x16xf32>
    %49 = vector.broadcast %48 : vector<1x16xf32> to vector<5x16xf32>
    %50 = arith.addf %46, %49 : vector<5x16xf32>
    %c0_43 = arith.constant 0 : index
    %c0_44 = arith.constant 0 : index
    %c0_45 = arith.constant 0 : index
    %51 = vector.load %arg10[%c0_43, %c0_44, %c0_45] : memref<4x64x16xbf16, #tpu.memory_space<vmem>>, vector<1x64x16xbf16>
    %52 = vector.shape_cast %51 : vector<1x64x16xbf16> to vector<64x16xbf16>
    %cst_46 = arith.constant dense<0.000000e+00> : vector<5x16xf32>
    %53 = tpu.matmul %36, %52, %cst_46 {dimension_numbers = #tpu.dot_dimension_numbers<[1], [0], [0], [1], [0, 0, 1, 1], [], []>} : vector<5x64xbf16>, vector<64x16xbf16>, vector<5x16xf32> -> vector<5x16xf32>
    %c0_47 = arith.constant 0 : index
    %c0_48 = arith.constant 0 : index
    %c0_49 = arith.constant 0 : index
    %54 = vector.load %arg11[%c0_47, %c0_48, %c0_49] : memref<4x1x16xf32, #tpu.memory_space<vmem>>, vector<1x1x16xf32>
    %55 = vector.shape_cast %54 : vector<1x1x16xf32> to vector<1x16xf32>
    %56 = vector.broadcast %55 : vector<1x16xf32> to vector<5x16xf32>
    %57 = arith.addf %53, %56 : vector<5x16xf32>
    %58 = arith.truncf %43 : vector<5x16xf32> to vector<5x16xbf16>
    %59 = arith.truncf %50 : vector<5x16xf32> to vector<5x16xbf16>
    %cst_50 = arith.constant dense<0.000000e+00> : vector<5x5xf32>
    %60 = tpu.matmul %58, %59, %cst_50 {dimension_numbers = #tpu.dot_dimension_numbers<[1], [1], [0], [0], [0, 0, 1, 0], [], []>} : vector<5x16xbf16>, vector<5x16xbf16>, vector<5x5xf32> -> vector<5x5xf32>
    %cst_51 = arith.constant dense<0xFF800000> : vector<5xf32>
    %61 = vector.multi_reduction <maximumf>, %60, %cst_51 [1] : vector<5x5xf32> to vector<5xf32>
    %62 = vector.shape_cast %61 : vector<5xf32> to vector<5x1xf32>
    %63 = vector.broadcast %62 : vector<5x1xf32> to vector<5x5xf32>
    %64 = arith.subf %60, %63 : vector<5x5xf32>
    %65 = math.exp %64 : vector<5x5xf32>
    %cst_52 = arith.constant dense<0.000000e+00> : vector<5xf32>
    %66 = vector.multi_reduction <add>, %65, %cst_52 [1] : vector<5x5xf32> to vector<5xf32>
    %67 = vector.shape_cast %66 : vector<5xf32> to vector<5x1xf32>
    %68 = tpu.reciprocal %67 {approx = true} : vector<5x1xf32> -> vector<5x1xf32>
    %69 = vector.broadcast %68 : vector<5x1xf32> to vector<5x5xf32>
    %70 = arith.mulf %65, %69 : vector<5x5xf32>
    %71 = arith.truncf %70 : vector<5x5xf32> to vector<5x5xbf16>
    %72 = arith.truncf %57 : vector<5x16xf32> to vector<5x16xbf16>
    %cst_53 = arith.constant dense<0.000000e+00> : vector<5x16xf32>
    %73 = tpu.matmul %71, %72, %cst_53 {dimension_numbers = #tpu.dot_dimension_numbers<[1], [0], [0], [1], [0, 0, 1, 1], [], []>} : vector<5x5xbf16>, vector<5x16xbf16>, vector<5x16xf32> -> vector<5x16xf32>
    %74 = arith.truncf %73 : vector<5x16xf32> to vector<5x16xbf16>
    %c0_54 = arith.constant 0 : index
    %c0_55 = arith.constant 0 : index
    %c0_56 = arith.constant 0 : index
    %75 = vector.load %arg12[%c0_54, %c0_55, %c0_56] : memref<4x16x64xbf16, #tpu.memory_space<vmem>>, vector<1x16x64xbf16>
    %76 = vector.shape_cast %75 : vector<1x16x64xbf16> to vector<16x64xbf16>
    %cst_57 = arith.constant dense<0.000000e+00> : vector<5x64xf32>
    %77 = tpu.matmul %74, %76, %cst_57 {dimension_numbers = #tpu.dot_dimension_numbers<[1], [0], [0], [1], [0, 0, 1, 1], [], []>} : vector<5x16xbf16>, vector<16x64xbf16>, vector<5x64xf32> -> vector<5x64xf32>
    %c1 = arith.constant 1 : index
    %c0_58 = arith.constant 0 : index
    %c0_59 = arith.constant 0 : index
    %78 = vector.load %arg6[%c1, %c0_58, %c0_59] : memref<4x64x16xbf16, #tpu.memory_space<vmem>>, vector<1x64x16xbf16>
    %79 = vector.shape_cast %78 : vector<1x64x16xbf16> to vector<64x16xbf16>
    %cst_60 = arith.constant dense<0.000000e+00> : vector<5x16xf32>
    %80 = tpu.matmul %36, %79, %cst_60 {dimension_numbers = #tpu.dot_dimension_numbers<[1], [0], [0], [1], [0, 0, 1, 1], [], []>} : vector<5x64xbf16>, vector<64x16xbf16>, vector<5x16xf32> -> vector<5x16xf32>
    %c1_61 = arith.constant 1 : index
    %c0_62 = arith.constant 0 : index
    %c0_63 = arith.constant 0 : index
    %81 = vector.load %arg7[%c1_61, %c0_62, %c0_63] : memref<4x1x16xf32, #tpu.memory_space<vmem>>, vector<1x1x16xf32>
    %82 = vector.shape_cast %81 : vector<1x1x16xf32> to vector<1x16xf32>
    %83 = vector.broadcast %82 : vector<1x16xf32> to vector<5x16xf32>
    %84 = arith.addf %80, %83 : vector<5x16xf32>
    %c1_64 = arith.constant 1 : index
    %c0_65 = arith.constant 0 : index
    %c0_66 = arith.constant 0 : index
    %85 = vector.load %arg8[%c1_64, %c0_65, %c0_66] : memref<4x64x16xbf16, #tpu.memory_space<vmem>>, vector<1x64x16xbf16>
    %86 = vector.shape_cast %85 : vector<1x64x16xbf16> to vector<64x16xbf16>
    %cst_67 = arith.constant dense<0.000000e+00> : vector<5x16xf32>
    %87 = tpu.matmul %36, %86, %cst_67 {dimension_numbers = #tpu.dot_dimension_numbers<[1], [0], [0], [1], [0, 0, 1, 1], [], []>} : vector<5x64xbf16>, vector<64x16xbf16>, vector<5x16xf32> -> vector<5x16xf32>
    %c1_68 = arith.constant 1 : index
    %c0_69 = arith.constant 0 : index
    %c0_70 = arith.constant 0 : index
    %88 = vector.load %arg9[%c1_68, %c0_69, %c0_70] : memref<4x1x16xf32, #tpu.memory_space<vmem>>, vector<1x1x16xf32>
    %89 = vector.shape_cast %88 : vector<1x1x16xf32> to vector<1x16xf32>
    %90 = vector.broadcast %89 : vector<1x16xf32> to vector<5x16xf32>
    %91 = arith.addf %87, %90 : vector<5x16xf32>
    %c1_71 = arith.constant 1 : index
    %c0_72 = arith.constant 0 : index
    %c0_73 = arith.constant 0 : index
    %92 = vector.load %arg10[%c1_71, %c0_72, %c0_73] : memref<4x64x16xbf16, #tpu.memory_space<vmem>>, vector<1x64x16xbf16>
    %93 = vector.shape_cast %92 : vector<1x64x16xbf16> to vector<64x16xbf16>
    %cst_74 = arith.constant dense<0.000000e+00> : vector<5x16xf32>
    %94 = tpu.matmul %36, %93, %cst_74 {dimension_numbers = #tpu.dot_dimension_numbers<[1], [0], [0], [1], [0, 0, 1, 1], [], []>} : vector<5x64xbf16>, vector<64x16xbf16>, vector<5x16xf32> -> vector<5x16xf32>
    %c1_75 = arith.constant 1 : index
    %c0_76 = arith.constant 0 : index
    %c0_77 = arith.constant 0 : index
    %95 = vector.load %arg11[%c1_75, %c0_76, %c0_77] : memref<4x1x16xf32, #tpu.memory_space<vmem>>, vector<1x1x16xf32>
    %96 = vector.shape_cast %95 : vector<1x1x16xf32> to vector<1x16xf32>
    %97 = vector.broadcast %96 : vector<1x16xf32> to vector<5x16xf32>
    %98 = arith.addf %94, %97 : vector<5x16xf32>
    %99 = arith.truncf %84 : vector<5x16xf32> to vector<5x16xbf16>
    %100 = arith.truncf %91 : vector<5x16xf32> to vector<5x16xbf16>
    %cst_78 = arith.constant dense<0.000000e+00> : vector<5x5xf32>
    %101 = tpu.matmul %99, %100, %cst_78 {dimension_numbers = #tpu.dot_dimension_numbers<[1], [1], [0], [0], [0, 0, 1, 0], [], []>} : vector<5x16xbf16>, vector<5x16xbf16>, vector<5x5xf32> -> vector<5x5xf32>
    %cst_79 = arith.constant dense<0xFF800000> : vector<5xf32>
    %102 = vector.multi_reduction <maximumf>, %101, %cst_79 [1] : vector<5x5xf32> to vector<5xf32>
    %103 = vector.shape_cast %102 : vector<5xf32> to vector<5x1xf32>
    %104 = vector.broadcast %103 : vector<5x1xf32> to vector<5x5xf32>
    %105 = arith.subf %101, %104 : vector<5x5xf32>
    %106 = math.exp %105 : vector<5x5xf32>
    %cst_80 = arith.constant dense<0.000000e+00> : vector<5xf32>
    %107 = vector.multi_reduction <add>, %106, %cst_80 [1] : vector<5x5xf32> to vector<5xf32>
    %108 = vector.shape_cast %107 : vector<5xf32> to vector<5x1xf32>
    %109 = tpu.reciprocal %108 {approx = true} : vector<5x1xf32> -> vector<5x1xf32>
    %110 = vector.broadcast %109 : vector<5x1xf32> to vector<5x5xf32>
    %111 = arith.mulf %106, %110 : vector<5x5xf32>
    %112 = arith.truncf %111 : vector<5x5xf32> to vector<5x5xbf16>
    %113 = arith.truncf %98 : vector<5x16xf32> to vector<5x16xbf16>
    %cst_81 = arith.constant dense<0.000000e+00> : vector<5x16xf32>
    %114 = tpu.matmul %112, %113, %cst_81 {dimension_numbers = #tpu.dot_dimension_numbers<[1], [0], [0], [1], [0, 0, 1, 1], [], []>} : vector<5x5xbf16>, vector<5x16xbf16>, vector<5x16xf32> -> vector<5x16xf32>
    %115 = arith.truncf %114 : vector<5x16xf32> to vector<5x16xbf16>
    %c1_82 = arith.constant 1 : index
    %c0_83 = arith.constant 0 : index
    %c0_84 = arith.constant 0 : index
    %116 = vector.load %arg12[%c1_82, %c0_83, %c0_84] : memref<4x16x64xbf16, #tpu.memory_space<vmem>>, vector<1x16x64xbf16>
    %117 = vector.shape_cast %116 : vector<1x16x64xbf16> to vector<16x64xbf16>
    %cst_85 = arith.constant dense<0.000000e+00> : vector<5x64xf32>
    %118 = tpu.matmul %115, %117, %cst_85 {dimension_numbers = #tpu.dot_dimension_numbers<[1], [0], [0], [1], [0, 0, 1, 1], [], []>} : vector<5x16xbf16>, vector<16x64xbf16>, vector<5x64xf32> -> vector<5x64xf32>
    %119 = arith.addf %77, %118 : vector<5x64xf32>
    %c2 = arith.constant 2 : index
    %c0_86 = arith.constant 0 : index
    %c0_87 = arith.constant 0 : index
    %120 = vector.load %arg6[%c2, %c0_86, %c0_87] : memref<4x64x16xbf16, #tpu.memory_space<vmem>>, vector<1x64x16xbf16>
    %121 = vector.shape_cast %120 : vector<1x64x16xbf16> to vector<64x16xbf16>
    %cst_88 = arith.constant dense<0.000000e+00> : vector<5x16xf32>
    %122 = tpu.matmul %36, %121, %cst_88 {dimension_numbers = #tpu.dot_dimension_numbers<[1], [0], [0], [1], [0, 0, 1, 1], [], []>} : vector<5x64xbf16>, vector<64x16xbf16>, vector<5x16xf32> -> vector<5x16xf32>
    %c2_89 = arith.constant 2 : index
    %c0_90 = arith.constant 0 : index
    %c0_91 = arith.constant 0 : index
    %123 = vector.load %arg7[%c2_89, %c0_90, %c0_91] : memref<4x1x16xf32, #tpu.memory_space<vmem>>, vector<1x1x16xf32>
    %124 = vector.shape_cast %123 : vector<1x1x16xf32> to vector<1x16xf32>
    %125 = vector.broadcast %124 : vector<1x16xf32> to vector<5x16xf32>
    %126 = arith.addf %122, %125 : vector<5x16xf32>
    %c2_92 = arith.constant 2 : index
    %c0_93 = arith.constant 0 : index
    %c0_94 = arith.constant 0 : index
    %127 = vector.load %arg8[%c2_92, %c0_93, %c0_94] : memref<4x64x16xbf16, #tpu.memory_space<vmem>>, vector<1x64x16xbf16>
    %128 = vector.shape_cast %127 : vector<1x64x16xbf16> to vector<64x16xbf16>
    %cst_95 = arith.constant dense<0.000000e+00> : vector<5x16xf32>
    %129 = tpu.matmul %36, %128, %cst_95 {dimension_numbers = #tpu.dot_dimension_numbers<[1], [0], [0], [1], [0, 0, 1, 1], [], []>} : vector<5x64xbf16>, vector<64x16xbf16>, vector<5x16xf32> -> vector<5x16xf32>
    %c2_96 = arith.constant 2 : index
    %c0_97 = arith.constant 0 : index
    %c0_98 = arith.constant 0 : index
    %130 = vector.load %arg9[%c2_96, %c0_97, %c0_98] : memref<4x1x16xf32, #tpu.memory_space<vmem>>, vector<1x1x16xf32>
    %131 = vector.shape_cast %130 : vector<1x1x16xf32> to vector<1x16xf32>
    %132 = vector.broadcast %131 : vector<1x16xf32> to vector<5x16xf32>
    %133 = arith.addf %129, %132 : vector<5x16xf32>
    %c2_99 = arith.constant 2 : index
    %c0_100 = arith.constant 0 : index
    %c0_101 = arith.constant 0 : index
    %134 = vector.load %arg10[%c2_99, %c0_100, %c0_101] : memref<4x64x16xbf16, #tpu.memory_space<vmem>>, vector<1x64x16xbf16>
    %135 = vector.shape_cast %134 : vector<1x64x16xbf16> to vector<64x16xbf16>
    %cst_102 = arith.constant dense<0.000000e+00> : vector<5x16xf32>
    %136 = tpu.matmul %36, %135, %cst_102 {dimension_numbers = #tpu.dot_dimension_numbers<[1], [0], [0], [1], [0, 0, 1, 1], [], []>} : vector<5x64xbf16>, vector<64x16xbf16>, vector<5x16xf32> -> vector<5x16xf32>
    %c2_103 = arith.constant 2 : index
    %c0_104 = arith.constant 0 : index
    %c0_105 = arith.constant 0 : index
    %137 = vector.load %arg11[%c2_103, %c0_104, %c0_105] : memref<4x1x16xf32, #tpu.memory_space<vmem>>, vector<1x1x16xf32>
    %138 = vector.shape_cast %137 : vector<1x1x16xf32> to vector<1x16xf32>
    %139 = vector.broadcast %138 : vector<1x16xf32> to vector<5x16xf32>
    %140 = arith.addf %136, %139 : vector<5x16xf32>
    %141 = arith.truncf %126 : vector<5x16xf32> to vector<5x16xbf16>
    %142 = arith.truncf %133 : vector<5x16xf32> to vector<5x16xbf16>
    %cst_106 = arith.constant dense<0.000000e+00> : vector<5x5xf32>
    %143 = tpu.matmul %141, %142, %cst_106 {dimension_numbers = #tpu.dot_dimension_numbers<[1], [1], [0], [0], [0, 0, 1, 0], [], []>} : vector<5x16xbf16>, vector<5x16xbf16>, vector<5x5xf32> -> vector<5x5xf32>
    %cst_107 = arith.constant dense<0xFF800000> : vector<5xf32>
    %144 = vector.multi_reduction <maximumf>, %143, %cst_107 [1] : vector<5x5xf32> to vector<5xf32>
    %145 = vector.shape_cast %144 : vector<5xf32> to vector<5x1xf32>
    %146 = vector.broadcast %145 : vector<5x1xf32> to vector<5x5xf32>
    %147 = arith.subf %143, %146 : vector<5x5xf32>
    %148 = math.exp %147 : vector<5x5xf32>
    %cst_108 = arith.constant dense<0.000000e+00> : vector<5xf32>
    %149 = vector.multi_reduction <add>, %148, %cst_108 [1] : vector<5x5xf32> to vector<5xf32>
    %150 = vector.shape_cast %149 : vector<5xf32> to vector<5x1xf32>
    %151 = tpu.reciprocal %150 {approx = true} : vector<5x1xf32> -> vector<5x1xf32>
    %152 = vector.broadcast %151 : vector<5x1xf32> to vector<5x5xf32>
    %153 = arith.mulf %148, %152 : vector<5x5xf32>
    %154 = arith.truncf %153 : vector<5x5xf32> to vector<5x5xbf16>
    %155 = arith.truncf %140 : vector<5x16xf32> to vector<5x16xbf16>
    %cst_109 = arith.constant dense<0.000000e+00> : vector<5x16xf32>
    %156 = tpu.matmul %154, %155, %cst_109 {dimension_numbers = #tpu.dot_dimension_numbers<[1], [0], [0], [1], [0, 0, 1, 1], [], []>} : vector<5x5xbf16>, vector<5x16xbf16>, vector<5x16xf32> -> vector<5x16xf32>
    %157 = arith.truncf %156 : vector<5x16xf32> to vector<5x16xbf16>
    %c2_110 = arith.constant 2 : index
    %c0_111 = arith.constant 0 : index
    %c0_112 = arith.constant 0 : index
    %158 = vector.load %arg12[%c2_110, %c0_111, %c0_112] : memref<4x16x64xbf16, #tpu.memory_space<vmem>>, vector<1x16x64xbf16>
    %159 = vector.shape_cast %158 : vector<1x16x64xbf16> to vector<16x64xbf16>
    %cst_113 = arith.constant dense<0.000000e+00> : vector<5x64xf32>
    %160 = tpu.matmul %157, %159, %cst_113 {dimension_numbers = #tpu.dot_dimension_numbers<[1], [0], [0], [1], [0, 0, 1, 1], [], []>} : vector<5x16xbf16>, vector<16x64xbf16>, vector<5x64xf32> -> vector<5x64xf32>
    %161 = arith.addf %119, %160 : vector<5x64xf32>
    %c3 = arith.constant 3 : index
    %c0_114 = arith.constant 0 : index
    %c0_115 = arith.constant 0 : index
    %162 = vector.load %arg6[%c3, %c0_114, %c0_115] : memref<4x64x16xbf16, #tpu.memory_space<vmem>>, vector<1x64x16xbf16>
    %163 = vector.shape_cast %162 : vector<1x64x16xbf16> to vector<64x16xbf16>
    %cst_116 = arith.constant dense<0.000000e+00> : vector<5x16xf32>
    %164 = tpu.matmul %36, %163, %cst_116 {dimension_numbers = #tpu.dot_dimension_numbers<[1], [0], [0], [1], [0, 0, 1, 1], [], []>} : vector<5x64xbf16>, vector<64x16xbf16>, vector<5x16xf32> -> vector<5x16xf32>
    %c3_117 = arith.constant 3 : index
    %c0_118 = arith.constant 0 : index
    %c0_119 = arith.constant 0 : index
    %165 = vector.load %arg7[%c3_117, %c0_118, %c0_119] : memref<4x1x16xf32, #tpu.memory_space<vmem>>, vector<1x1x16xf32>
    %166 = vector.shape_cast %165 : vector<1x1x16xf32> to vector<1x16xf32>
    %167 = vector.broadcast %166 : vector<1x16xf32> to vector<5x16xf32>
    %168 = arith.addf %164, %167 : vector<5x16xf32>
    %c3_120 = arith.constant 3 : index
    %c0_121 = arith.constant 0 : index
    %c0_122 = arith.constant 0 : index
    %169 = vector.load %arg8[%c3_120, %c0_121, %c0_122] : memref<4x64x16xbf16, #tpu.memory_space<vmem>>, vector<1x64x16xbf16>
    %170 = vector.shape_cast %169 : vector<1x64x16xbf16> to vector<64x16xbf16>
    %cst_123 = arith.constant dense<0.000000e+00> : vector<5x16xf32>
    %171 = tpu.matmul %36, %170, %cst_123 {dimension_numbers = #tpu.dot_dimension_numbers<[1], [0], [0], [1], [0, 0, 1, 1], [], []>} : vector<5x64xbf16>, vector<64x16xbf16>, vector<5x16xf32> -> vector<5x16xf32>
    %c3_124 = arith.constant 3 : index
    %c0_125 = arith.constant 0 : index
    %c0_126 = arith.constant 0 : index
    %172 = vector.load %arg9[%c3_124, %c0_125, %c0_126] : memref<4x1x16xf32, #tpu.memory_space<vmem>>, vector<1x1x16xf32>
    %173 = vector.shape_cast %172 : vector<1x1x16xf32> to vector<1x16xf32>
    %174 = vector.broadcast %173 : vector<1x16xf32> to vector<5x16xf32>
    %175 = arith.addf %171, %174 : vector<5x16xf32>
    %c3_127 = arith.constant 3 : index
    %c0_128 = arith.constant 0 : index
    %c0_129 = arith.constant 0 : index
    %176 = vector.load %arg10[%c3_127, %c0_128, %c0_129] : memref<4x64x16xbf16, #tpu.memory_space<vmem>>, vector<1x64x16xbf16>
    %177 = vector.shape_cast %176 : vector<1x64x16xbf16> to vector<64x16xbf16>
    %cst_130 = arith.constant dense<0.000000e+00> : vector<5x16xf32>
    %178 = tpu.matmul %36, %177, %cst_130 {dimension_numbers = #tpu.dot_dimension_numbers<[1], [0], [0], [1], [0, 0, 1, 1], [], []>} : vector<5x64xbf16>, vector<64x16xbf16>, vector<5x16xf32> -> vector<5x16xf32>
    %c3_131 = arith.constant 3 : index
    %c0_132 = arith.constant 0 : index
    %c0_133 = arith.constant 0 : index
    %179 = vector.load %arg11[%c3_131, %c0_132, %c0_133] : memref<4x1x16xf32, #tpu.memory_space<vmem>>, vector<1x1x16xf32>
    %180 = vector.shape_cast %179 : vector<1x1x16xf32> to vector<1x16xf32>
    %181 = vector.broadcast %180 : vector<1x16xf32> to vector<5x16xf32>
    %182 = arith.addf %178, %181 : vector<5x16xf32>
    %183 = arith.truncf %168 : vector<5x16xf32> to vector<5x16xbf16>
    %184 = arith.truncf %175 : vector<5x16xf32> to vector<5x16xbf16>
    %cst_134 = arith.constant dense<0.000000e+00> : vector<5x5xf32>
    %185 = tpu.matmul %183, %184, %cst_134 {dimension_numbers = #tpu.dot_dimension_numbers<[1], [1], [0], [0], [0, 0, 1, 0], [], []>} : vector<5x16xbf16>, vector<5x16xbf16>, vector<5x5xf32> -> vector<5x5xf32>
    %cst_135 = arith.constant dense<0xFF800000> : vector<5xf32>
    %186 = vector.multi_reduction <maximumf>, %185, %cst_135 [1] : vector<5x5xf32> to vector<5xf32>
    %187 = vector.shape_cast %186 : vector<5xf32> to vector<5x1xf32>
    %188 = vector.broadcast %187 : vector<5x1xf32> to vector<5x5xf32>
    %189 = arith.subf %185, %188 : vector<5x5xf32>
    %190 = math.exp %189 : vector<5x5xf32>
    %cst_136 = arith.constant dense<0.000000e+00> : vector<5xf32>
    %191 = vector.multi_reduction <add>, %190, %cst_136 [1] : vector<5x5xf32> to vector<5xf32>
    %192 = vector.shape_cast %191 : vector<5xf32> to vector<5x1xf32>
    %193 = tpu.reciprocal %192 {approx = true} : vector<5x1xf32> -> vector<5x1xf32>
    %194 = vector.broadcast %193 : vector<5x1xf32> to vector<5x5xf32>
    %195 = arith.mulf %190, %194 : vector<5x5xf32>
    %196 = arith.truncf %195 : vector<5x5xf32> to vector<5x5xbf16>
    %197 = arith.truncf %182 : vector<5x16xf32> to vector<5x16xbf16>
    %cst_137 = arith.constant dense<0.000000e+00> : vector<5x16xf32>
    %198 = tpu.matmul %196, %197, %cst_137 {dimension_numbers = #tpu.dot_dimension_numbers<[1], [0], [0], [1], [0, 0, 1, 1], [], []>} : vector<5x5xbf16>, vector<5x16xbf16>, vector<5x16xf32> -> vector<5x16xf32>
    %199 = arith.truncf %198 : vector<5x16xf32> to vector<5x16xbf16>
    %c3_138 = arith.constant 3 : index
    %c0_139 = arith.constant 0 : index
    %c0_140 = arith.constant 0 : index
    %200 = vector.load %arg12[%c3_138, %c0_139, %c0_140] : memref<4x16x64xbf16, #tpu.memory_space<vmem>>, vector<1x16x64xbf16>
    %201 = vector.shape_cast %200 : vector<1x16x64xbf16> to vector<16x64xbf16>
    %cst_141 = arith.constant dense<0.000000e+00> : vector<5x64xf32>
    %202 = tpu.matmul %199, %201, %cst_141 {dimension_numbers = #tpu.dot_dimension_numbers<[1], [0], [0], [1], [0, 0, 1, 1], [], []>} : vector<5x16xbf16>, vector<16x64xbf16>, vector<5x64xf32> -> vector<5x64xf32>
    %203 = arith.addf %161, %202 : vector<5x64xf32>
    %204 = arith.addf %6, %203 : vector<5x64xf32>
    %205 = vector.broadcast %9 : vector<1x64xf32> to vector<5x64xf32>
    %206 = arith.addf %204, %205 : vector<5x64xf32>
    %cst_142 = arith.constant dense<0.000000e+00> : vector<5xf32>
    %207 = vector.multi_reduction <add>, %206, %cst_142 [1] : vector<5x64xf32> to vector<5xf32>
    %208 = vector.shape_cast %207 : vector<5xf32> to vector<5x1xf32>
    %cst_143 = arith.constant 6.400000e+01 : f32
    %209 = vector.broadcast %cst_143 : f32 to vector<5x1xf32>
    %210 = arith.divf %208, %209 : vector<5x1xf32>
    %211 = vector.broadcast %210 : vector<5x1xf32> to vector<5x64xf32>
    %212 = arith.subf %206, %211 : vector<5x64xf32>
    %213 = arith.mulf %212, %212 : vector<5x64xf32>
    %cst_144 = arith.constant dense<0.000000e+00> : vector<5xf32>
    %214 = vector.multi_reduction <add>, %213, %cst_144 [1] : vector<5x64xf32> to vector<5xf32>
    %215 = vector.shape_cast %214 : vector<5xf32> to vector<5x1xf32>
    %cst_145 = arith.constant 6.400000e+01 : f32
    %216 = vector.broadcast %cst_145 : f32 to vector<5x1xf32>
    %217 = arith.divf %215, %216 : vector<5x1xf32>
    %cst_146 = arith.constant 9.99999974E-6 : f32
    %218 = vector.broadcast %cst_146 : f32 to vector<5x1xf32>
    %219 = arith.addf %217, %218 : vector<5x1xf32>
    %220 = math.rsqrt %219 : vector<5x1xf32>
    %221 = vector.broadcast %220 : vector<5x1xf32> to vector<5x64xf32>
    %222 = arith.mulf %212, %221 : vector<5x64xf32>
    %223 = vector.broadcast %10 : vector<1x64xf32> to vector<5x64xf32>
    %224 = arith.mulf %222, %223 : vector<5x64xf32>
    %225 = vector.broadcast %11 : vector<1x64xf32> to vector<5x64xf32>
    %226 = arith.addf %224, %225 : vector<5x64xf32>
    %227 = arith.truncf %226 : vector<5x64xf32> to vector<5x64xbf16>
    %cst_147 = arith.constant dense<0.000000e+00> : vector<5x256xf32>
    %228 = tpu.matmul %227, %12, %cst_147 {dimension_numbers = #tpu.dot_dimension_numbers<[1], [0], [0], [1], [0, 0, 1, 1], [], []>} : vector<5x64xbf16>, vector<64x256xbf16>, vector<5x256xf32> -> vector<5x256xf32>
    %229 = vector.broadcast %13 : vector<1x256xf32> to vector<5x256xf32>
    %230 = arith.addf %228, %229 : vector<5x256xf32>
    %231 = arith.mulf %230, %230 : vector<5x256xf32>
    %232 = arith.mulf %230, %231 : vector<5x256xf32>
    %cst_148 = arith.constant 4.471500e-02 : f32
    %233 = vector.broadcast %cst_148 : f32 to vector<5x256xf32>
    %234 = arith.mulf %233, %232 : vector<5x256xf32>
    %235 = arith.addf %230, %234 : vector<5x256xf32>
    %cst_149 = arith.constant 0.797884583 : f32
    %236 = vector.broadcast %cst_149 : f32 to vector<5x256xf32>
    %237 = arith.mulf %236, %235 : vector<5x256xf32>
    %238 = math.tanh %237 : vector<5x256xf32>
    %cst_150 = arith.constant 1.000000e+00 : f32
    %239 = vector.broadcast %cst_150 : f32 to vector<5x256xf32>
    %240 = arith.addf %239, %238 : vector<5x256xf32>
    %cst_151 = arith.constant 5.000000e-01 : f32
    %241 = vector.broadcast %cst_151 : f32 to vector<5x256xf32>
    %242 = arith.mulf %241, %240 : vector<5x256xf32>
    %243 = arith.mulf %230, %242 : vector<5x256xf32>
    %244 = arith.truncf %243 : vector<5x256xf32> to vector<5x256xbf16>
    %cst_152 = arith.constant dense<0.000000e+00> : vector<5x64xf32>
    %245 = tpu.matmul %244, %14, %cst_152 {dimension_numbers = #tpu.dot_dimension_numbers<[1], [0], [0], [1], [0, 0, 1, 1], [], []>} : vector<5x256xbf16>, vector<256x64xbf16>, vector<5x64xf32> -> vector<5x64xf32>
    %246 = vector.broadcast %15 : vector<1x64xf32> to vector<5x64xf32>
    %247 = arith.addf %245, %246 : vector<5x64xf32>
    %248 = arith.addf %206, %247 : vector<5x64xf32>
    %c0_153 = arith.constant 0 : index
    %c0_154 = arith.constant 0 : index
    %c0_155 = arith.constant 0 : index
    %249 = vector.load %arg20[%c0_153, %c0_154, %c0_155] : memref<1x5x64xf32, #tpu.memory_space<vmem>>, vector<1x5x64xf32>
    %250 = vector.shape_cast %249 : vector<1x5x64xf32> to vector<5x64xf32>
    %251 = vector.shape_cast %248 : vector<5x64xf32> to vector<1x5x64xf32>
    tpu.vector_store %arg20[%c0_153, %c0_154, %c0_155], %251 {strides = array<i32>} : memref<1x5x64xf32, #tpu.memory_space<vmem>>, vector<1x5x64xf32>,
    return
  }
  func.func @transform_0(%arg0: i32) -> (i32, i32, i32) {
    %c0_i32 = arith.constant 0 : i32
    %c0_i32_0 = arith.constant 0 : i32
    %c0_i32_1 = arith.constant 0 : i32
    return %arg0, %c0_i32, %c0_i32_0 : i32, i32, i32
  }
  func.func @transform_1(%arg0: i32) -> (i32, i32) {
    %c0_i32 = arith.constant 0 : i32
    %c0_i32_0 = arith.constant 0 : i32
    %c0_i32_1 = arith.constant 0 : i32
    return %c0_i32, %c0_i32_0 : i32, i32
  }
  func.func @transform_2(%arg0: i32) -> (i32, i32, i32) {
    %c0_i32 = arith.constant 0 : i32
    %c0_i32_0 = arith.constant 0 : i32
    %c0_i32_1 = arith.constant 0 : i32
    %c0_i32_2 = arith.constant 0 : i32
    return %c0_i32, %c0_i32_0, %c0_i32_1 : i32, i32, i32
  }
  func.func @transform_3(%arg0: i32) -> (i32, i32) {
    %c0_i32 = arith.constant 0 : i32
    %c0_i32_0 = arith.constant 0 : i32
    %c0_i32_1 = arith.constant 0 : i32
    return %c0_i32, %c0_i32_0 : i32, i32
  }
  func.func @transform_4(%arg0: i32) -> (i32, i32) {
    %c0_i32 = arith.constant 0 : i32
    %c0_i32_0 = arith.constant 0 : i32
    %c0_i32_1 = arith.constant 0 : i32
    return %c0_i32, %c0_i32_0 : i32, i32
  }
  func.func @transform_5(%arg0: i32) -> (i32, i32, i32) {
    %c0_i32 = arith.constant 0 : i32
    %c0_i32_0 = arith.constant 0 : i32
    %c0_i32_1 = arith.constant 0 : i32
    %c0_i32_2 = arith.constant 0 : i32
    return %c0_i32, %c0_i32_0, %c0_i32_1 : i32, i32, i32
  }
  func.func @transform_6(%arg0: i32) -> (i32, i32, i32) {
    %c0_i32 = arith.constant 0 : i32
    %c0_i32_0 = arith.constant 0 : i32
    %c0_i32_1 = arith.constant 0 : i32
    %c0_i32_2 = arith.constant 0 : i32
    return %c0_i32, %c0_i32_0, %c0_i32_1 : i32, i32, i32
  }
  func.func @transform_7(%arg0: i32) -> (i32, i32, i32) {
    %c0_i32 = arith.constant 0 : i32
    %c0_i32_0 = arith.constant 0 : i32
    %c0_i32_1 = arith.constant 0 : i32
    %c0_i32_2 = arith.constant 0 : i32
    return %c0_i32, %c0_i32_0, %c0_i32_1 : i32, i32, i32
  }
  func.func @transform_8(%arg0: i32) -> (i32, i32, i32) {
    %c0_i32 = arith.constant 0 : i32
    %c0_i32_0 = arith.constant 0 : i32
    %c0_i32_1 = arith.constant 0 : i32
    %c0_i32_2 = arith.constant 0 : i32
    return %c0_i32, %c0_i32_0, %c0_i32_1 : i32, i32, i32
  }
  func.func @transform_9(%arg0: i32) -> (i32, i32, i32) {
    %c0_i32 = arith.constant 0 : i32
    %c0_i32_0 = arith.constant 0 : i32
    %c0_i32_1 = arith.constant 0 : i32
    %c0_i32_2 = arith.constant 0 : i32
    return %c0_i32, %c0_i32_0, %c0_i32_1 : i32, i32, i32
  }
  func.func @transform_10(%arg0: i32) -> (i32, i32, i32) {
    %c0_i32 = arith.constant 0 : i32
    %c0_i32_0 = arith.constant 0 : i32
    %c0_i32_1 = arith.constant 0 : i32
    %c0_i32_2 = arith.constant 0 : i32
    return %c0_i32, %c0_i32_0, %c0_i32_1 : i32, i32, i32
  }
  func.func @transform_11(%arg0: i32) -> (i32, i32, i32) {
    %c0_i32 = arith.constant 0 : i32
    %c0_i32_0 = arith.constant 0 : i32
    %c0_i32_1 = arith.constant 0 : i32
    %c0_i32_2 = arith.constant 0 : i32
    return %c0_i32, %c0_i32_0, %c0_i32_1 : i32, i32, i32
  }
  func.func @transform_12(%arg0: i32) -> (i32, i32) {
    %c0_i32 = arith.constant 0 : i32
    %c0_i32_0 = arith.constant 0 : i32
    %c0_i32_1 = arith.constant 0 : i32
    return %c0_i32, %c0_i32_0 : i32, i32
  }
  func.func @transform_13(%arg0: i32) -> (i32, i32) {
    %c0_i32 = arith.constant 0 : i32
    %c0_i32_0 = arith.constant 0 : i32
    %c0_i32_1 = arith.constant 0 : i32
    return %c0_i32, %c0_i32_0 : i32, i32
  }
  func.func @transform_14(%arg0: i32) -> (i32, i32) {
    %c0_i32 = arith.constant 0 : i32
    %c0_i32_0 = arith.constant 0 : i32
    %c0_i32_1 = arith.constant 0 : i32
    return %c0_i32, %c0_i32_0 : i32, i32
  }
  func.func @transform_15(%arg0: i32) -> (i32, i32) {
    %c0_i32 = arith.constant 0 : i32
    %c0_i32_0 = arith.constant 0 : i32
    %c0_i32_1 = arith.constant 0 : i32
    return %c0_i32, %c0_i32_0 : i32, i32
  }
  func.func @transform_16(%arg0: i32) -> (i32, i32) {
    %c0_i32 = arith.constant 0 : i32
    %c0_i32_0 = arith.constant 0 : i32
    %c0_i32_1 = arith.constant 0 : i32
    return %c0_i32, %c0_i32_0 : i32, i32
  }
  func.func @transform_17(%arg0: i32) -> (i32, i32) {
    %c0_i32 = arith.constant 0 : i32
    %c0_i32_0 = arith.constant 0 : i32
    %c0_i32_1 = arith.constant 0 : i32
    return %c0_i32, %c0_i32_0 : i32, i32
  }
  func.func @transform_18(%arg0: i32) -> (i32, i32) {
    %c0_i32 = arith.constant 0 : i32
    %c0_i32_0 = arith.constant 0 : i32
    %c0_i32_1 = arith.constant 0 : i32
    return %c0_i32, %c0_i32_0 : i32, i32
  }
  func.func @transform_19(%arg0: i32) -> (i32, i32, i32) {
    %c0_i32 = arith.constant 0 : i32
    %c0_i32_0 = arith.constant 0 : i32
    %c0_i32_1 = arith.constant 0 : i32
    return %arg0, %c0_i32, %c0_i32_0 : i32, i32, i32
  }
}

module attributes {stable_mosaic.version = 11 : i64} {
  func.func @_block_kernel(%arg0: i32, %arg1: memref<1x5x64xf32, #tpu.memory_space<vmem>>, %arg2: memref<1x64xf32, #tpu.memory_space<vmem>>, %arg3: memref<1x64xf32, #tpu.memory_space<vmem>>, %arg4: memref<4x64x16xbf16, #tpu.memory_space<vmem>>, %arg5: memref<4x1x16xf32, #tpu.memory_space<vmem>>, %arg6: memref<4x64x16xbf16, #tpu.memory_space<vmem>>, %arg7: memref<4x1x16xf32, #tpu.memory_space<vmem>>, %arg8: memref<4x64x16xbf16, #tpu.memory_space<vmem>>, %arg9: memref<4x1x16xf32, #tpu.memory_space<vmem>>, %arg10: memref<4x16x64xbf16, #tpu.memory_space<vmem>>, %arg11: memref<1x64xf32, #tpu.memory_space<vmem>>, %arg12: memref<1x64xf32, #tpu.memory_space<vmem>>, %arg13: memref<1x64xf32, #tpu.memory_space<vmem>>, %arg14: memref<64x256xbf16, #tpu.memory_space<vmem>>, %arg15: memref<1x256xf32, #tpu.memory_space<vmem>>, %arg16: memref<256x64xbf16, #tpu.memory_space<vmem>>, %arg17: memref<1x64xf32, #tpu.memory_space<vmem>>, %arg18: memref<1x5x64xf32, #tpu.memory_space<vmem>>) attributes {dimension_semantics = [#tpu.dimension_semantics<parallel>], iteration_bounds = array<i64: 2>, scalar_prefetch = 0 : i64, scratch_operands = 0 : i64, tpu.core_type = #tpu.core_type<tc>, window_params = [{transform_indices = @transform_0, window_bounds = array<i64: 1, 5, 64>}, {pipeline_mode = #tpu.pipeline_mode<synchronous>, transform_indices = @transform_1, window_bounds = array<i64: 1, 64>}, {pipeline_mode = #tpu.pipeline_mode<synchronous>, transform_indices = @transform_2, window_bounds = array<i64: 1, 64>}, {pipeline_mode = #tpu.pipeline_mode<synchronous>, transform_indices = @transform_3, window_bounds = array<i64: 4, 64, 16>}, {pipeline_mode = #tpu.pipeline_mode<synchronous>, transform_indices = @transform_4, window_bounds = array<i64: 4, 1, 16>}, {pipeline_mode = #tpu.pipeline_mode<synchronous>, transform_indices = @transform_5, window_bounds = array<i64: 4, 64, 16>}, {pipeline_mode = #tpu.pipeline_mode<synchronous>, transform_indices = @transform_6, window_bounds = array<i64: 4, 1, 16>}, {pipeline_mode = #tpu.pipeline_mode<synchronous>, transform_indices = @transform_7, window_bounds = array<i64: 4, 64, 16>}, {pipeline_mode = #tpu.pipeline_mode<synchronous>, transform_indices = @transform_8, window_bounds = array<i64: 4, 1, 16>}, {pipeline_mode = #tpu.pipeline_mode<synchronous>, transform_indices = @transform_9, window_bounds = array<i64: 4, 16, 64>}, {pipeline_mode = #tpu.pipeline_mode<synchronous>, transform_indices = @transform_10, window_bounds = array<i64: 1, 64>}, {pipeline_mode = #tpu.pipeline_mode<synchronous>, transform_indices = @transform_11, window_bounds = array<i64: 1, 64>}, {pipeline_mode = #tpu.pipeline_mode<synchronous>, transform_indices = @transform_12, window_bounds = array<i64: 1, 64>}, {pipeline_mode = #tpu.pipeline_mode<synchronous>, transform_indices = @transform_13, window_bounds = array<i64: 64, 256>}, {pipeline_mode = #tpu.pipeline_mode<synchronous>, transform_indices = @transform_14, window_bounds = array<i64: 1, 256>}, {pipeline_mode = #tpu.pipeline_mode<synchronous>, transform_indices = @transform_15, window_bounds = array<i64: 256, 64>}, {pipeline_mode = #tpu.pipeline_mode<synchronous>, transform_indices = @transform_16, window_bounds = array<i64: 1, 64>}, {transform_indices = @transform_17, window_bounds = array<i64: 1, 5, 64>}]} {
    %c0 = arith.constant 0 : index
    %c0_0 = arith.constant 0 : index
    %c0_1 = arith.constant 0 : index
    %0 = vector.load %arg1[%c0, %c0_0, %c0_1] : memref<1x5x64xf32, #tpu.memory_space<vmem>>, vector<1x5x64xf32>
    %1 = vector.shape_cast %0 : vector<1x5x64xf32> to vector<5x64xf32>
    %c0_2 = arith.constant 0 : index
    %c0_3 = arith.constant 0 : index
    %2 = vector.load %arg2[%c0_2, %c0_3] : memref<1x64xf32, #tpu.memory_space<vmem>>, vector<1x64xf32>
    %c0_4 = arith.constant 0 : index
    %c0_5 = arith.constant 0 : index
    %3 = vector.load %arg3[%c0_4, %c0_5] : memref<1x64xf32, #tpu.memory_space<vmem>>, vector<1x64xf32>
    %c0_6 = arith.constant 0 : index
    %c0_7 = arith.constant 0 : index
    %4 = vector.load %arg11[%c0_6, %c0_7] : memref<1x64xf32, #tpu.memory_space<vmem>>, vector<1x64xf32>
    %c0_8 = arith.constant 0 : index
    %c0_9 = arith.constant 0 : index
    %5 = vector.load %arg12[%c0_8, %c0_9] : memref<1x64xf32, #tpu.memory_space<vmem>>, vector<1x64xf32>
    %c0_10 = arith.constant 0 : index
    %c0_11 = arith.constant 0 : index
    %6 = vector.load %arg13[%c0_10, %c0_11] : memref<1x64xf32, #tpu.memory_space<vmem>>, vector<1x64xf32>
    %c0_12 = arith.constant 0 : index
    %c0_13 = arith.constant 0 : index
    %7 = vector.load %arg14[%c0_12, %c0_13] : memref<64x256xbf16, #tpu.memory_space<vmem>>, vector<64x256xbf16>
    %c0_14 = arith.constant 0 : index
    %c0_15 = arith.constant 0 : index
    %8 = vector.load %arg15[%c0_14, %c0_15] : memref<1x256xf32, #tpu.memory_space<vmem>>, vector<1x256xf32>
    %c0_16 = arith.constant 0 : index
    %c0_17 = arith.constant 0 : index
    %9 = vector.load %arg16[%c0_16, %c0_17] : memref<256x64xbf16, #tpu.memory_space<vmem>>, vector<256x64xbf16>
    %c0_18 = arith.constant 0 : index
    %c0_19 = arith.constant 0 : index
    %10 = vector.load %arg17[%c0_18, %c0_19] : memref<1x64xf32, #tpu.memory_space<vmem>>, vector<1x64xf32>
    %cst = arith.constant dense<0.000000e+00> : vector<5xf32>
    %11 = vector.multi_reduction <add>, %1, %cst [1] : vector<5x64xf32> to vector<5xf32>
    %12 = vector.shape_cast %11 : vector<5xf32> to vector<5x1xf32>
    %cst_20 = arith.constant 6.400000e+01 : f32
    %13 = vector.broadcast %cst_20 : f32 to vector<5x1xf32>
    %14 = arith.divf %12, %13 : vector<5x1xf32>
    %15 = vector.broadcast %14 : vector<5x1xf32> to vector<5x64xf32>
    %16 = arith.subf %1, %15 : vector<5x64xf32>
    %17 = arith.mulf %16, %16 : vector<5x64xf32>
    %cst_21 = arith.constant dense<0.000000e+00> : vector<5xf32>
    %18 = vector.multi_reduction <add>, %17, %cst_21 [1] : vector<5x64xf32> to vector<5xf32>
    %19 = vector.shape_cast %18 : vector<5xf32> to vector<5x1xf32>
    %cst_22 = arith.constant 6.400000e+01 : f32
    %20 = vector.broadcast %cst_22 : f32 to vector<5x1xf32>
    %21 = arith.divf %19, %20 : vector<5x1xf32>
    %cst_23 = arith.constant 9.99999974E-6 : f32
    %22 = vector.broadcast %cst_23 : f32 to vector<5x1xf32>
    %23 = arith.addf %21, %22 : vector<5x1xf32>
    %24 = math.rsqrt %23 : vector<5x1xf32>
    %25 = vector.broadcast %24 : vector<5x1xf32> to vector<5x64xf32>
    %26 = arith.mulf %16, %25 : vector<5x64xf32>
    %27 = vector.broadcast %2 : vector<1x64xf32> to vector<5x64xf32>
    %28 = arith.mulf %26, %27 : vector<5x64xf32>
    %29 = vector.broadcast %3 : vector<1x64xf32> to vector<5x64xf32>
    %30 = arith.addf %28, %29 : vector<5x64xf32>
    %31 = arith.truncf %30 : vector<5x64xf32> to vector<5x64xbf16>
    %c0_24 = arith.constant 0 : index
    %c0_25 = arith.constant 0 : index
    %c0_26 = arith.constant 0 : index
    %32 = vector.load %arg4[%c0_24, %c0_25, %c0_26] : memref<4x64x16xbf16, #tpu.memory_space<vmem>>, vector<1x64x16xbf16>
    %33 = vector.shape_cast %32 : vector<1x64x16xbf16> to vector<64x16xbf16>
    %cst_27 = arith.constant dense<0.000000e+00> : vector<5x16xf32>
    %34 = tpu.matmul %31, %33, %cst_27 {dimension_numbers = #tpu.dot_dimension_numbers<[1], [0], [0], [1], [0, 0, 1, 1], [], []>} : vector<5x64xbf16>, vector<64x16xbf16>, vector<5x16xf32> -> vector<5x16xf32>
    %c0_28 = arith.constant 0 : index
    %c0_29 = arith.constant 0 : index
    %c0_30 = arith.constant 0 : index
    %35 = vector.load %arg5[%c0_28, %c0_29, %c0_30] : memref<4x1x16xf32, #tpu.memory_space<vmem>>, vector<1x1x16xf32>
    %36 = vector.shape_cast %35 : vector<1x1x16xf32> to vector<1x16xf32>
    %37 = vector.broadcast %36 : vector<1x16xf32> to vector<5x16xf32>
    %38 = arith.addf %34, %37 : vector<5x16xf32>
    %c0_31 = arith.constant 0 : index
    %c0_32 = arith.constant 0 : index
    %c0_33 = arith.constant 0 : index
    %39 = vector.load %arg6[%c0_31, %c0_32, %c0_33] : memref<4x64x16xbf16, #tpu.memory_space<vmem>>, vector<1x64x16xbf16>
    %40 = vector.shape_cast %39 : vector<1x64x16xbf16> to vector<64x16xbf16>
    %cst_34 = arith.constant dense<0.000000e+00> : vector<5x16xf32>
    %41 = tpu.matmul %31, %40, %cst_34 {dimension_numbers = #tpu.dot_dimension_numbers<[1], [0], [0], [1], [0, 0, 1, 1], [], []>} : vector<5x64xbf16>, vector<64x16xbf16>, vector<5x16xf32> -> vector<5x16xf32>
    %c0_35 = arith.constant 0 : index
    %c0_36 = arith.constant 0 : index
    %c0_37 = arith.constant 0 : index
    %42 = vector.load %arg7[%c0_35, %c0_36, %c0_37] : memref<4x1x16xf32, #tpu.memory_space<vmem>>, vector<1x1x16xf32>
    %43 = vector.shape_cast %42 : vector<1x1x16xf32> to vector<1x16xf32>
    %44 = vector.broadcast %43 : vector<1x16xf32> to vector<5x16xf32>
    %45 = arith.addf %41, %44 : vector<5x16xf32>
    %c0_38 = arith.constant 0 : index
    %c0_39 = arith.constant 0 : index
    %c0_40 = arith.constant 0 : index
    %46 = vector.load %arg8[%c0_38, %c0_39, %c0_40] : memref<4x64x16xbf16, #tpu.memory_space<vmem>>, vector<1x64x16xbf16>
    %47 = vector.shape_cast %46 : vector<1x64x16xbf16> to vector<64x16xbf16>
    %cst_41 = arith.constant dense<0.000000e+00> : vector<5x16xf32>
    %48 = tpu.matmul %31, %47, %cst_41 {dimension_numbers = #tpu.dot_dimension_numbers<[1], [0], [0], [1], [0, 0, 1, 1], [], []>} : vector<5x64xbf16>, vector<64x16xbf16>, vector<5x16xf32> -> vector<5x16xf32>
    %c0_42 = arith.constant 0 : index
    %c0_43 = arith.constant 0 : index
    %c0_44 = arith.constant 0 : index
    %49 = vector.load %arg9[%c0_42, %c0_43, %c0_44] : memref<4x1x16xf32, #tpu.memory_space<vmem>>, vector<1x1x16xf32>
    %50 = vector.shape_cast %49 : vector<1x1x16xf32> to vector<1x16xf32>
    %51 = vector.broadcast %50 : vector<1x16xf32> to vector<5x16xf32>
    %52 = arith.addf %48, %51 : vector<5x16xf32>
    %53 = arith.truncf %38 : vector<5x16xf32> to vector<5x16xbf16>
    %54 = arith.truncf %45 : vector<5x16xf32> to vector<5x16xbf16>
    %cst_45 = arith.constant dense<0.000000e+00> : vector<5x5xf32>
    %55 = tpu.matmul %53, %54, %cst_45 {dimension_numbers = #tpu.dot_dimension_numbers<[1], [1], [0], [0], [0, 0, 1, 0], [], []>} : vector<5x16xbf16>, vector<5x16xbf16>, vector<5x5xf32> -> vector<5x5xf32>
    %cst_46 = arith.constant dense<0xFF800000> : vector<5xf32>
    %56 = vector.multi_reduction <maximumf>, %55, %cst_46 [1] : vector<5x5xf32> to vector<5xf32>
    %57 = vector.shape_cast %56 : vector<5xf32> to vector<5x1xf32>
    %58 = vector.broadcast %57 : vector<5x1xf32> to vector<5x5xf32>
    %59 = arith.subf %55, %58 : vector<5x5xf32>
    %60 = math.exp %59 : vector<5x5xf32>
    %cst_47 = arith.constant dense<0.000000e+00> : vector<5xf32>
    %61 = vector.multi_reduction <add>, %60, %cst_47 [1] : vector<5x5xf32> to vector<5xf32>
    %62 = vector.shape_cast %61 : vector<5xf32> to vector<5x1xf32>
    %63 = tpu.reciprocal %62 {approx = true} : vector<5x1xf32> -> vector<5x1xf32>
    %64 = vector.broadcast %63 : vector<5x1xf32> to vector<5x5xf32>
    %65 = arith.mulf %60, %64 : vector<5x5xf32>
    %66 = arith.truncf %65 : vector<5x5xf32> to vector<5x5xbf16>
    %67 = arith.truncf %52 : vector<5x16xf32> to vector<5x16xbf16>
    %cst_48 = arith.constant dense<0.000000e+00> : vector<5x16xf32>
    %68 = tpu.matmul %66, %67, %cst_48 {dimension_numbers = #tpu.dot_dimension_numbers<[1], [0], [0], [1], [0, 0, 1, 1], [], []>} : vector<5x5xbf16>, vector<5x16xbf16>, vector<5x16xf32> -> vector<5x16xf32>
    %69 = arith.truncf %68 : vector<5x16xf32> to vector<5x16xbf16>
    %c0_49 = arith.constant 0 : index
    %c0_50 = arith.constant 0 : index
    %c0_51 = arith.constant 0 : index
    %70 = vector.load %arg10[%c0_49, %c0_50, %c0_51] : memref<4x16x64xbf16, #tpu.memory_space<vmem>>, vector<1x16x64xbf16>
    %71 = vector.shape_cast %70 : vector<1x16x64xbf16> to vector<16x64xbf16>
    %cst_52 = arith.constant dense<0.000000e+00> : vector<5x64xf32>
    %72 = tpu.matmul %69, %71, %cst_52 {dimension_numbers = #tpu.dot_dimension_numbers<[1], [0], [0], [1], [0, 0, 1, 1], [], []>} : vector<5x16xbf16>, vector<16x64xbf16>, vector<5x64xf32> -> vector<5x64xf32>
    %c1 = arith.constant 1 : index
    %c0_53 = arith.constant 0 : index
    %c0_54 = arith.constant 0 : index
    %73 = vector.load %arg4[%c1, %c0_53, %c0_54] : memref<4x64x16xbf16, #tpu.memory_space<vmem>>, vector<1x64x16xbf16>
    %74 = vector.shape_cast %73 : vector<1x64x16xbf16> to vector<64x16xbf16>
    %cst_55 = arith.constant dense<0.000000e+00> : vector<5x16xf32>
    %75 = tpu.matmul %31, %74, %cst_55 {dimension_numbers = #tpu.dot_dimension_numbers<[1], [0], [0], [1], [0, 0, 1, 1], [], []>} : vector<5x64xbf16>, vector<64x16xbf16>, vector<5x16xf32> -> vector<5x16xf32>
    %c1_56 = arith.constant 1 : index
    %c0_57 = arith.constant 0 : index
    %c0_58 = arith.constant 0 : index
    %76 = vector.load %arg5[%c1_56, %c0_57, %c0_58] : memref<4x1x16xf32, #tpu.memory_space<vmem>>, vector<1x1x16xf32>
    %77 = vector.shape_cast %76 : vector<1x1x16xf32> to vector<1x16xf32>
    %78 = vector.broadcast %77 : vector<1x16xf32> to vector<5x16xf32>
    %79 = arith.addf %75, %78 : vector<5x16xf32>
    %c1_59 = arith.constant 1 : index
    %c0_60 = arith.constant 0 : index
    %c0_61 = arith.constant 0 : index
    %80 = vector.load %arg6[%c1_59, %c0_60, %c0_61] : memref<4x64x16xbf16, #tpu.memory_space<vmem>>, vector<1x64x16xbf16>
    %81 = vector.shape_cast %80 : vector<1x64x16xbf16> to vector<64x16xbf16>
    %cst_62 = arith.constant dense<0.000000e+00> : vector<5x16xf32>
    %82 = tpu.matmul %31, %81, %cst_62 {dimension_numbers = #tpu.dot_dimension_numbers<[1], [0], [0], [1], [0, 0, 1, 1], [], []>} : vector<5x64xbf16>, vector<64x16xbf16>, vector<5x16xf32> -> vector<5x16xf32>
    %c1_63 = arith.constant 1 : index
    %c0_64 = arith.constant 0 : index
    %c0_65 = arith.constant 0 : index
    %83 = vector.load %arg7[%c1_63, %c0_64, %c0_65] : memref<4x1x16xf32, #tpu.memory_space<vmem>>, vector<1x1x16xf32>
    %84 = vector.shape_cast %83 : vector<1x1x16xf32> to vector<1x16xf32>
    %85 = vector.broadcast %84 : vector<1x16xf32> to vector<5x16xf32>
    %86 = arith.addf %82, %85 : vector<5x16xf32>
    %c1_66 = arith.constant 1 : index
    %c0_67 = arith.constant 0 : index
    %c0_68 = arith.constant 0 : index
    %87 = vector.load %arg8[%c1_66, %c0_67, %c0_68] : memref<4x64x16xbf16, #tpu.memory_space<vmem>>, vector<1x64x16xbf16>
    %88 = vector.shape_cast %87 : vector<1x64x16xbf16> to vector<64x16xbf16>
    %cst_69 = arith.constant dense<0.000000e+00> : vector<5x16xf32>
    %89 = tpu.matmul %31, %88, %cst_69 {dimension_numbers = #tpu.dot_dimension_numbers<[1], [0], [0], [1], [0, 0, 1, 1], [], []>} : vector<5x64xbf16>, vector<64x16xbf16>, vector<5x16xf32> -> vector<5x16xf32>
    %c1_70 = arith.constant 1 : index
    %c0_71 = arith.constant 0 : index
    %c0_72 = arith.constant 0 : index
    %90 = vector.load %arg9[%c1_70, %c0_71, %c0_72] : memref<4x1x16xf32, #tpu.memory_space<vmem>>, vector<1x1x16xf32>
    %91 = vector.shape_cast %90 : vector<1x1x16xf32> to vector<1x16xf32>
    %92 = vector.broadcast %91 : vector<1x16xf32> to vector<5x16xf32>
    %93 = arith.addf %89, %92 : vector<5x16xf32>
    %94 = arith.truncf %79 : vector<5x16xf32> to vector<5x16xbf16>
    %95 = arith.truncf %86 : vector<5x16xf32> to vector<5x16xbf16>
    %cst_73 = arith.constant dense<0.000000e+00> : vector<5x5xf32>
    %96 = tpu.matmul %94, %95, %cst_73 {dimension_numbers = #tpu.dot_dimension_numbers<[1], [1], [0], [0], [0, 0, 1, 0], [], []>} : vector<5x16xbf16>, vector<5x16xbf16>, vector<5x5xf32> -> vector<5x5xf32>
    %cst_74 = arith.constant dense<0xFF800000> : vector<5xf32>
    %97 = vector.multi_reduction <maximumf>, %96, %cst_74 [1] : vector<5x5xf32> to vector<5xf32>
    %98 = vector.shape_cast %97 : vector<5xf32> to vector<5x1xf32>
    %99 = vector.broadcast %98 : vector<5x1xf32> to vector<5x5xf32>
    %100 = arith.subf %96, %99 : vector<5x5xf32>
    %101 = math.exp %100 : vector<5x5xf32>
    %cst_75 = arith.constant dense<0.000000e+00> : vector<5xf32>
    %102 = vector.multi_reduction <add>, %101, %cst_75 [1] : vector<5x5xf32> to vector<5xf32>
    %103 = vector.shape_cast %102 : vector<5xf32> to vector<5x1xf32>
    %104 = tpu.reciprocal %103 {approx = true} : vector<5x1xf32> -> vector<5x1xf32>
    %105 = vector.broadcast %104 : vector<5x1xf32> to vector<5x5xf32>
    %106 = arith.mulf %101, %105 : vector<5x5xf32>
    %107 = arith.truncf %106 : vector<5x5xf32> to vector<5x5xbf16>
    %108 = arith.truncf %93 : vector<5x16xf32> to vector<5x16xbf16>
    %cst_76 = arith.constant dense<0.000000e+00> : vector<5x16xf32>
    %109 = tpu.matmul %107, %108, %cst_76 {dimension_numbers = #tpu.dot_dimension_numbers<[1], [0], [0], [1], [0, 0, 1, 1], [], []>} : vector<5x5xbf16>, vector<5x16xbf16>, vector<5x16xf32> -> vector<5x16xf32>
    %110 = arith.truncf %109 : vector<5x16xf32> to vector<5x16xbf16>
    %c1_77 = arith.constant 1 : index
    %c0_78 = arith.constant 0 : index
    %c0_79 = arith.constant 0 : index
    %111 = vector.load %arg10[%c1_77, %c0_78, %c0_79] : memref<4x16x64xbf16, #tpu.memory_space<vmem>>, vector<1x16x64xbf16>
    %112 = vector.shape_cast %111 : vector<1x16x64xbf16> to vector<16x64xbf16>
    %cst_80 = arith.constant dense<0.000000e+00> : vector<5x64xf32>
    %113 = tpu.matmul %110, %112, %cst_80 {dimension_numbers = #tpu.dot_dimension_numbers<[1], [0], [0], [1], [0, 0, 1, 1], [], []>} : vector<5x16xbf16>, vector<16x64xbf16>, vector<5x64xf32> -> vector<5x64xf32>
    %114 = arith.addf %72, %113 : vector<5x64xf32>
    %c2 = arith.constant 2 : index
    %c0_81 = arith.constant 0 : index
    %c0_82 = arith.constant 0 : index
    %115 = vector.load %arg4[%c2, %c0_81, %c0_82] : memref<4x64x16xbf16, #tpu.memory_space<vmem>>, vector<1x64x16xbf16>
    %116 = vector.shape_cast %115 : vector<1x64x16xbf16> to vector<64x16xbf16>
    %cst_83 = arith.constant dense<0.000000e+00> : vector<5x16xf32>
    %117 = tpu.matmul %31, %116, %cst_83 {dimension_numbers = #tpu.dot_dimension_numbers<[1], [0], [0], [1], [0, 0, 1, 1], [], []>} : vector<5x64xbf16>, vector<64x16xbf16>, vector<5x16xf32> -> vector<5x16xf32>
    %c2_84 = arith.constant 2 : index
    %c0_85 = arith.constant 0 : index
    %c0_86 = arith.constant 0 : index
    %118 = vector.load %arg5[%c2_84, %c0_85, %c0_86] : memref<4x1x16xf32, #tpu.memory_space<vmem>>, vector<1x1x16xf32>
    %119 = vector.shape_cast %118 : vector<1x1x16xf32> to vector<1x16xf32>
    %120 = vector.broadcast %119 : vector<1x16xf32> to vector<5x16xf32>
    %121 = arith.addf %117, %120 : vector<5x16xf32>
    %c2_87 = arith.constant 2 : index
    %c0_88 = arith.constant 0 : index
    %c0_89 = arith.constant 0 : index
    %122 = vector.load %arg6[%c2_87, %c0_88, %c0_89] : memref<4x64x16xbf16, #tpu.memory_space<vmem>>, vector<1x64x16xbf16>
    %123 = vector.shape_cast %122 : vector<1x64x16xbf16> to vector<64x16xbf16>
    %cst_90 = arith.constant dense<0.000000e+00> : vector<5x16xf32>
    %124 = tpu.matmul %31, %123, %cst_90 {dimension_numbers = #tpu.dot_dimension_numbers<[1], [0], [0], [1], [0, 0, 1, 1], [], []>} : vector<5x64xbf16>, vector<64x16xbf16>, vector<5x16xf32> -> vector<5x16xf32>
    %c2_91 = arith.constant 2 : index
    %c0_92 = arith.constant 0 : index
    %c0_93 = arith.constant 0 : index
    %125 = vector.load %arg7[%c2_91, %c0_92, %c0_93] : memref<4x1x16xf32, #tpu.memory_space<vmem>>, vector<1x1x16xf32>
    %126 = vector.shape_cast %125 : vector<1x1x16xf32> to vector<1x16xf32>
    %127 = vector.broadcast %126 : vector<1x16xf32> to vector<5x16xf32>
    %128 = arith.addf %124, %127 : vector<5x16xf32>
    %c2_94 = arith.constant 2 : index
    %c0_95 = arith.constant 0 : index
    %c0_96 = arith.constant 0 : index
    %129 = vector.load %arg8[%c2_94, %c0_95, %c0_96] : memref<4x64x16xbf16, #tpu.memory_space<vmem>>, vector<1x64x16xbf16>
    %130 = vector.shape_cast %129 : vector<1x64x16xbf16> to vector<64x16xbf16>
    %cst_97 = arith.constant dense<0.000000e+00> : vector<5x16xf32>
    %131 = tpu.matmul %31, %130, %cst_97 {dimension_numbers = #tpu.dot_dimension_numbers<[1], [0], [0], [1], [0, 0, 1, 1], [], []>} : vector<5x64xbf16>, vector<64x16xbf16>, vector<5x16xf32> -> vector<5x16xf32>
    %c2_98 = arith.constant 2 : index
    %c0_99 = arith.constant 0 : index
    %c0_100 = arith.constant 0 : index
    %132 = vector.load %arg9[%c2_98, %c0_99, %c0_100] : memref<4x1x16xf32, #tpu.memory_space<vmem>>, vector<1x1x16xf32>
    %133 = vector.shape_cast %132 : vector<1x1x16xf32> to vector<1x16xf32>
    %134 = vector.broadcast %133 : vector<1x16xf32> to vector<5x16xf32>
    %135 = arith.addf %131, %134 : vector<5x16xf32>
    %136 = arith.truncf %121 : vector<5x16xf32> to vector<5x16xbf16>
    %137 = arith.truncf %128 : vector<5x16xf32> to vector<5x16xbf16>
    %cst_101 = arith.constant dense<0.000000e+00> : vector<5x5xf32>
    %138 = tpu.matmul %136, %137, %cst_101 {dimension_numbers = #tpu.dot_dimension_numbers<[1], [1], [0], [0], [0, 0, 1, 0], [], []>} : vector<5x16xbf16>, vector<5x16xbf16>, vector<5x5xf32> -> vector<5x5xf32>
    %cst_102 = arith.constant dense<0xFF800000> : vector<5xf32>
    %139 = vector.multi_reduction <maximumf>, %138, %cst_102 [1] : vector<5x5xf32> to vector<5xf32>
    %140 = vector.shape_cast %139 : vector<5xf32> to vector<5x1xf32>
    %141 = vector.broadcast %140 : vector<5x1xf32> to vector<5x5xf32>
    %142 = arith.subf %138, %141 : vector<5x5xf32>
    %143 = math.exp %142 : vector<5x5xf32>
    %cst_103 = arith.constant dense<0.000000e+00> : vector<5xf32>
    %144 = vector.multi_reduction <add>, %143, %cst_103 [1] : vector<5x5xf32> to vector<5xf32>
    %145 = vector.shape_cast %144 : vector<5xf32> to vector<5x1xf32>
    %146 = tpu.reciprocal %145 {approx = true} : vector<5x1xf32> -> vector<5x1xf32>
    %147 = vector.broadcast %146 : vector<5x1xf32> to vector<5x5xf32>
    %148 = arith.mulf %143, %147 : vector<5x5xf32>
    %149 = arith.truncf %148 : vector<5x5xf32> to vector<5x5xbf16>
    %150 = arith.truncf %135 : vector<5x16xf32> to vector<5x16xbf16>
    %cst_104 = arith.constant dense<0.000000e+00> : vector<5x16xf32>
    %151 = tpu.matmul %149, %150, %cst_104 {dimension_numbers = #tpu.dot_dimension_numbers<[1], [0], [0], [1], [0, 0, 1, 1], [], []>} : vector<5x5xbf16>, vector<5x16xbf16>, vector<5x16xf32> -> vector<5x16xf32>
    %152 = arith.truncf %151 : vector<5x16xf32> to vector<5x16xbf16>
    %c2_105 = arith.constant 2 : index
    %c0_106 = arith.constant 0 : index
    %c0_107 = arith.constant 0 : index
    %153 = vector.load %arg10[%c2_105, %c0_106, %c0_107] : memref<4x16x64xbf16, #tpu.memory_space<vmem>>, vector<1x16x64xbf16>
    %154 = vector.shape_cast %153 : vector<1x16x64xbf16> to vector<16x64xbf16>
    %cst_108 = arith.constant dense<0.000000e+00> : vector<5x64xf32>
    %155 = tpu.matmul %152, %154, %cst_108 {dimension_numbers = #tpu.dot_dimension_numbers<[1], [0], [0], [1], [0, 0, 1, 1], [], []>} : vector<5x16xbf16>, vector<16x64xbf16>, vector<5x64xf32> -> vector<5x64xf32>
    %156 = arith.addf %114, %155 : vector<5x64xf32>
    %c3 = arith.constant 3 : index
    %c0_109 = arith.constant 0 : index
    %c0_110 = arith.constant 0 : index
    %157 = vector.load %arg4[%c3, %c0_109, %c0_110] : memref<4x64x16xbf16, #tpu.memory_space<vmem>>, vector<1x64x16xbf16>
    %158 = vector.shape_cast %157 : vector<1x64x16xbf16> to vector<64x16xbf16>
    %cst_111 = arith.constant dense<0.000000e+00> : vector<5x16xf32>
    %159 = tpu.matmul %31, %158, %cst_111 {dimension_numbers = #tpu.dot_dimension_numbers<[1], [0], [0], [1], [0, 0, 1, 1], [], []>} : vector<5x64xbf16>, vector<64x16xbf16>, vector<5x16xf32> -> vector<5x16xf32>
    %c3_112 = arith.constant 3 : index
    %c0_113 = arith.constant 0 : index
    %c0_114 = arith.constant 0 : index
    %160 = vector.load %arg5[%c3_112, %c0_113, %c0_114] : memref<4x1x16xf32, #tpu.memory_space<vmem>>, vector<1x1x16xf32>
    %161 = vector.shape_cast %160 : vector<1x1x16xf32> to vector<1x16xf32>
    %162 = vector.broadcast %161 : vector<1x16xf32> to vector<5x16xf32>
    %163 = arith.addf %159, %162 : vector<5x16xf32>
    %c3_115 = arith.constant 3 : index
    %c0_116 = arith.constant 0 : index
    %c0_117 = arith.constant 0 : index
    %164 = vector.load %arg6[%c3_115, %c0_116, %c0_117] : memref<4x64x16xbf16, #tpu.memory_space<vmem>>, vector<1x64x16xbf16>
    %165 = vector.shape_cast %164 : vector<1x64x16xbf16> to vector<64x16xbf16>
    %cst_118 = arith.constant dense<0.000000e+00> : vector<5x16xf32>
    %166 = tpu.matmul %31, %165, %cst_118 {dimension_numbers = #tpu.dot_dimension_numbers<[1], [0], [0], [1], [0, 0, 1, 1], [], []>} : vector<5x64xbf16>, vector<64x16xbf16>, vector<5x16xf32> -> vector<5x16xf32>
    %c3_119 = arith.constant 3 : index
    %c0_120 = arith.constant 0 : index
    %c0_121 = arith.constant 0 : index
    %167 = vector.load %arg7[%c3_119, %c0_120, %c0_121] : memref<4x1x16xf32, #tpu.memory_space<vmem>>, vector<1x1x16xf32>
    %168 = vector.shape_cast %167 : vector<1x1x16xf32> to vector<1x16xf32>
    %169 = vector.broadcast %168 : vector<1x16xf32> to vector<5x16xf32>
    %170 = arith.addf %166, %169 : vector<5x16xf32>
    %c3_122 = arith.constant 3 : index
    %c0_123 = arith.constant 0 : index
    %c0_124 = arith.constant 0 : index
    %171 = vector.load %arg8[%c3_122, %c0_123, %c0_124] : memref<4x64x16xbf16, #tpu.memory_space<vmem>>, vector<1x64x16xbf16>
    %172 = vector.shape_cast %171 : vector<1x64x16xbf16> to vector<64x16xbf16>
    %cst_125 = arith.constant dense<0.000000e+00> : vector<5x16xf32>
    %173 = tpu.matmul %31, %172, %cst_125 {dimension_numbers = #tpu.dot_dimension_numbers<[1], [0], [0], [1], [0, 0, 1, 1], [], []>} : vector<5x64xbf16>, vector<64x16xbf16>, vector<5x16xf32> -> vector<5x16xf32>
    %c3_126 = arith.constant 3 : index
    %c0_127 = arith.constant 0 : index
    %c0_128 = arith.constant 0 : index
    %174 = vector.load %arg9[%c3_126, %c0_127, %c0_128] : memref<4x1x16xf32, #tpu.memory_space<vmem>>, vector<1x1x16xf32>
    %175 = vector.shape_cast %174 : vector<1x1x16xf32> to vector<1x16xf32>
    %176 = vector.broadcast %175 : vector<1x16xf32> to vector<5x16xf32>
    %177 = arith.addf %173, %176 : vector<5x16xf32>
    %178 = arith.truncf %163 : vector<5x16xf32> to vector<5x16xbf16>
    %179 = arith.truncf %170 : vector<5x16xf32> to vector<5x16xbf16>
    %cst_129 = arith.constant dense<0.000000e+00> : vector<5x5xf32>
    %180 = tpu.matmul %178, %179, %cst_129 {dimension_numbers = #tpu.dot_dimension_numbers<[1], [1], [0], [0], [0, 0, 1, 0], [], []>} : vector<5x16xbf16>, vector<5x16xbf16>, vector<5x5xf32> -> vector<5x5xf32>
    %cst_130 = arith.constant dense<0xFF800000> : vector<5xf32>
    %181 = vector.multi_reduction <maximumf>, %180, %cst_130 [1] : vector<5x5xf32> to vector<5xf32>
    %182 = vector.shape_cast %181 : vector<5xf32> to vector<5x1xf32>
    %183 = vector.broadcast %182 : vector<5x1xf32> to vector<5x5xf32>
    %184 = arith.subf %180, %183 : vector<5x5xf32>
    %185 = math.exp %184 : vector<5x5xf32>
    %cst_131 = arith.constant dense<0.000000e+00> : vector<5xf32>
    %186 = vector.multi_reduction <add>, %185, %cst_131 [1] : vector<5x5xf32> to vector<5xf32>
    %187 = vector.shape_cast %186 : vector<5xf32> to vector<5x1xf32>
    %188 = tpu.reciprocal %187 {approx = true} : vector<5x1xf32> -> vector<5x1xf32>
    %189 = vector.broadcast %188 : vector<5x1xf32> to vector<5x5xf32>
    %190 = arith.mulf %185, %189 : vector<5x5xf32>
    %191 = arith.truncf %190 : vector<5x5xf32> to vector<5x5xbf16>
    %192 = arith.truncf %177 : vector<5x16xf32> to vector<5x16xbf16>
    %cst_132 = arith.constant dense<0.000000e+00> : vector<5x16xf32>
    %193 = tpu.matmul %191, %192, %cst_132 {dimension_numbers = #tpu.dot_dimension_numbers<[1], [0], [0], [1], [0, 0, 1, 1], [], []>} : vector<5x5xbf16>, vector<5x16xbf16>, vector<5x16xf32> -> vector<5x16xf32>
    %194 = arith.truncf %193 : vector<5x16xf32> to vector<5x16xbf16>
    %c3_133 = arith.constant 3 : index
    %c0_134 = arith.constant 0 : index
    %c0_135 = arith.constant 0 : index
    %195 = vector.load %arg10[%c3_133, %c0_134, %c0_135] : memref<4x16x64xbf16, #tpu.memory_space<vmem>>, vector<1x16x64xbf16>
    %196 = vector.shape_cast %195 : vector<1x16x64xbf16> to vector<16x64xbf16>
    %cst_136 = arith.constant dense<0.000000e+00> : vector<5x64xf32>
    %197 = tpu.matmul %194, %196, %cst_136 {dimension_numbers = #tpu.dot_dimension_numbers<[1], [0], [0], [1], [0, 0, 1, 1], [], []>} : vector<5x16xbf16>, vector<16x64xbf16>, vector<5x64xf32> -> vector<5x64xf32>
    %198 = arith.addf %156, %197 : vector<5x64xf32>
    %199 = arith.addf %1, %198 : vector<5x64xf32>
    %200 = vector.broadcast %4 : vector<1x64xf32> to vector<5x64xf32>
    %201 = arith.addf %199, %200 : vector<5x64xf32>
    %cst_137 = arith.constant dense<0.000000e+00> : vector<5xf32>
    %202 = vector.multi_reduction <add>, %201, %cst_137 [1] : vector<5x64xf32> to vector<5xf32>
    %203 = vector.shape_cast %202 : vector<5xf32> to vector<5x1xf32>
    %cst_138 = arith.constant 6.400000e+01 : f32
    %204 = vector.broadcast %cst_138 : f32 to vector<5x1xf32>
    %205 = arith.divf %203, %204 : vector<5x1xf32>
    %206 = vector.broadcast %205 : vector<5x1xf32> to vector<5x64xf32>
    %207 = arith.subf %201, %206 : vector<5x64xf32>
    %208 = arith.mulf %207, %207 : vector<5x64xf32>
    %cst_139 = arith.constant dense<0.000000e+00> : vector<5xf32>
    %209 = vector.multi_reduction <add>, %208, %cst_139 [1] : vector<5x64xf32> to vector<5xf32>
    %210 = vector.shape_cast %209 : vector<5xf32> to vector<5x1xf32>
    %cst_140 = arith.constant 6.400000e+01 : f32
    %211 = vector.broadcast %cst_140 : f32 to vector<5x1xf32>
    %212 = arith.divf %210, %211 : vector<5x1xf32>
    %cst_141 = arith.constant 9.99999974E-6 : f32
    %213 = vector.broadcast %cst_141 : f32 to vector<5x1xf32>
    %214 = arith.addf %212, %213 : vector<5x1xf32>
    %215 = math.rsqrt %214 : vector<5x1xf32>
    %216 = vector.broadcast %215 : vector<5x1xf32> to vector<5x64xf32>
    %217 = arith.mulf %207, %216 : vector<5x64xf32>
    %218 = vector.broadcast %5 : vector<1x64xf32> to vector<5x64xf32>
    %219 = arith.mulf %217, %218 : vector<5x64xf32>
    %220 = vector.broadcast %6 : vector<1x64xf32> to vector<5x64xf32>
    %221 = arith.addf %219, %220 : vector<5x64xf32>
    %222 = arith.truncf %221 : vector<5x64xf32> to vector<5x64xbf16>
    %cst_142 = arith.constant dense<0.000000e+00> : vector<5x256xf32>
    %223 = tpu.matmul %222, %7, %cst_142 {dimension_numbers = #tpu.dot_dimension_numbers<[1], [0], [0], [1], [0, 0, 1, 1], [], []>} : vector<5x64xbf16>, vector<64x256xbf16>, vector<5x256xf32> -> vector<5x256xf32>
    %224 = vector.broadcast %8 : vector<1x256xf32> to vector<5x256xf32>
    %225 = arith.addf %223, %224 : vector<5x256xf32>
    %226 = arith.mulf %225, %225 : vector<5x256xf32>
    %227 = arith.mulf %225, %226 : vector<5x256xf32>
    %cst_143 = arith.constant 4.471500e-02 : f32
    %228 = vector.broadcast %cst_143 : f32 to vector<5x256xf32>
    %229 = arith.mulf %228, %227 : vector<5x256xf32>
    %230 = arith.addf %225, %229 : vector<5x256xf32>
    %cst_144 = arith.constant 0.797884583 : f32
    %231 = vector.broadcast %cst_144 : f32 to vector<5x256xf32>
    %232 = arith.mulf %231, %230 : vector<5x256xf32>
    %233 = math.tanh %232 : vector<5x256xf32>
    %cst_145 = arith.constant 1.000000e+00 : f32
    %234 = vector.broadcast %cst_145 : f32 to vector<5x256xf32>
    %235 = arith.addf %234, %233 : vector<5x256xf32>
    %cst_146 = arith.constant 5.000000e-01 : f32
    %236 = vector.broadcast %cst_146 : f32 to vector<5x256xf32>
    %237 = arith.mulf %236, %235 : vector<5x256xf32>
    %238 = arith.mulf %225, %237 : vector<5x256xf32>
    %239 = arith.truncf %238 : vector<5x256xf32> to vector<5x256xbf16>
    %cst_147 = arith.constant dense<0.000000e+00> : vector<5x64xf32>
    %240 = tpu.matmul %239, %9, %cst_147 {dimension_numbers = #tpu.dot_dimension_numbers<[1], [0], [0], [1], [0, 0, 1, 1], [], []>} : vector<5x256xbf16>, vector<256x64xbf16>, vector<5x64xf32> -> vector<5x64xf32>
    %241 = vector.broadcast %10 : vector<1x64xf32> to vector<5x64xf32>
    %242 = arith.addf %240, %241 : vector<5x64xf32>
    %243 = arith.addf %201, %242 : vector<5x64xf32>
    %c0_148 = arith.constant 0 : index
    %c0_149 = arith.constant 0 : index
    %c0_150 = arith.constant 0 : index
    %244 = vector.load %arg18[%c0_148, %c0_149, %c0_150] : memref<1x5x64xf32, #tpu.memory_space<vmem>>, vector<1x5x64xf32>
    %245 = vector.shape_cast %244 : vector<1x5x64xf32> to vector<5x64xf32>
    %246 = vector.shape_cast %243 : vector<5x64xf32> to vector<1x5x64xf32>
    tpu.vector_store %arg18[%c0_148, %c0_149, %c0_150], %246 {strides = array<i32>} : memref<1x5x64xf32, #tpu.memory_space<vmem>>, vector<1x5x64xf32>,
    return
  }
  func.func @transform_0(%arg0: i32) -> (i32, i32, i32) {
    %c0_i32 = arith.constant 0 : i32
    %c0_i32_0 = arith.constant 0 : i32
    %c0_i32_1 = arith.constant 0 : i32
    return %arg0, %c0_i32, %c0_i32_0 : i32, i32, i32
  }
  func.func @transform_1(%arg0: i32) -> (i32, i32) {
    %c0_i32 = arith.constant 0 : i32
    %c0_i32_0 = arith.constant 0 : i32
    %c0_i32_1 = arith.constant 0 : i32
    return %c0_i32, %c0_i32_0 : i32, i32
  }
  func.func @transform_2(%arg0: i32) -> (i32, i32) {
    %c0_i32 = arith.constant 0 : i32
    %c0_i32_0 = arith.constant 0 : i32
    %c0_i32_1 = arith.constant 0 : i32
    return %c0_i32, %c0_i32_0 : i32, i32
  }
  func.func @transform_3(%arg0: i32) -> (i32, i32, i32) {
    %c0_i32 = arith.constant 0 : i32
    %c0_i32_0 = arith.constant 0 : i32
    %c0_i32_1 = arith.constant 0 : i32
    %c0_i32_2 = arith.constant 0 : i32
    return %c0_i32, %c0_i32_0, %c0_i32_1 : i32, i32, i32
  }
  func.func @transform_4(%arg0: i32) -> (i32, i32, i32) {
    %c0_i32 = arith.constant 0 : i32
    %c0_i32_0 = arith.constant 0 : i32
    %c0_i32_1 = arith.constant 0 : i32
    %c0_i32_2 = arith.constant 0 : i32
    return %c0_i32, %c0_i32_0, %c0_i32_1 : i32, i32, i32
  }
  func.func @transform_5(%arg0: i32) -> (i32, i32, i32) {
    %c0_i32 = arith.constant 0 : i32
    %c0_i32_0 = arith.constant 0 : i32
    %c0_i32_1 = arith.constant 0 : i32
    %c0_i32_2 = arith.constant 0 : i32
    return %c0_i32, %c0_i32_0, %c0_i32_1 : i32, i32, i32
  }
  func.func @transform_6(%arg0: i32) -> (i32, i32, i32) {
    %c0_i32 = arith.constant 0 : i32
    %c0_i32_0 = arith.constant 0 : i32
    %c0_i32_1 = arith.constant 0 : i32
    %c0_i32_2 = arith.constant 0 : i32
    return %c0_i32, %c0_i32_0, %c0_i32_1 : i32, i32, i32
  }
  func.func @transform_7(%arg0: i32) -> (i32, i32, i32) {
    %c0_i32 = arith.constant 0 : i32
    %c0_i32_0 = arith.constant 0 : i32
    %c0_i32_1 = arith.constant 0 : i32
    %c0_i32_2 = arith.constant 0 : i32
    return %c0_i32, %c0_i32_0, %c0_i32_1 : i32, i32, i32
  }
  func.func @transform_8(%arg0: i32) -> (i32, i32, i32) {
    %c0_i32 = arith.constant 0 : i32
    %c0_i32_0 = arith.constant 0 : i32
    %c0_i32_1 = arith.constant 0 : i32
    %c0_i32_2 = arith.constant 0 : i32
    return %c0_i32, %c0_i32_0, %c0_i32_1 : i32, i32, i32
  }
  func.func @transform_9(%arg0: i32) -> (i32, i32, i32) {
    %c0_i32 = arith.constant 0 : i32
    %c0_i32_0 = arith.constant 0 : i32
    %c0_i32_1 = arith.constant 0 : i32
    %c0_i32_2 = arith.constant 0 : i32
    return %c0_i32, %c0_i32_0, %c0_i32_1 : i32, i32, i32
  }
  func.func @transform_10(%arg0: i32) -> (i32, i32) {
    %c0_i32 = arith.constant 0 : i32
    %c0_i32_0 = arith.constant 0 : i32
    %c0_i32_1 = arith.constant 0 : i32
    return %c0_i32, %c0_i32_0 : i32, i32
  }
  func.func @transform_11(%arg0: i32) -> (i32, i32) {
    %c0_i32 = arith.constant 0 : i32
    %c0_i32_0 = arith.constant 0 : i32
    %c0_i32_1 = arith.constant 0 : i32
    return %c0_i32, %c0_i32_0 : i32, i32
  }
  func.func @transform_12(%arg0: i32) -> (i32, i32) {
    %c0_i32 = arith.constant 0 : i32
    %c0_i32_0 = arith.constant 0 : i32
    %c0_i32_1 = arith.constant 0 : i32
    return %c0_i32, %c0_i32_0 : i32, i32
  }
  func.func @transform_13(%arg0: i32) -> (i32, i32) {
    %c0_i32 = arith.constant 0 : i32
    %c0_i32_0 = arith.constant 0 : i32
    %c0_i32_1 = arith.constant 0 : i32
    return %c0_i32, %c0_i32_0 : i32, i32
  }
  func.func @transform_14(%arg0: i32) -> (i32, i32) {
    %c0_i32 = arith.constant 0 : i32
    %c0_i32_0 = arith.constant 0 : i32
    %c0_i32_1 = arith.constant 0 : i32
    return %c0_i32, %c0_i32_0 : i32, i32
  }
  func.func @transform_15(%arg0: i32) -> (i32, i32) {
    %c0_i32 = arith.constant 0 : i32
    %c0_i32_0 = arith.constant 0 : i32
    %c0_i32_1 = arith.constant 0 : i32
    return %c0_i32, %c0_i32_0 : i32, i32
  }
  func.func @transform_16(%arg0: i32) -> (i32, i32) {
    %c0_i32 = arith.constant 0 : i32
    %c0_i32_0 = arith.constant 0 : i32
    %c0_i32_1 = arith.constant 0 : i32
    return %c0_i32, %c0_i32_0 : i32, i32
  }
  func.func @transform_17(%arg0: i32) -> (i32, i32, i32) {
    %c0_i32 = arith.constant 0 : i32
    %c0_i32_0 = arith.constant 0 : i32
    %c0_i32_1 = arith.constant 0 : i32
    return %arg0, %c0_i32, %c0_i32_0 : i32, i32, i32
  }
}

module attributes {stable_mosaic.version = 11 : i64} {
  func.func @_dec_head_calib_kernel(%arg0: i32, %arg1: memref<1x4x64xf32, #tpu.memory_space<vmem>>, %arg2: memref<64x32xbf16, #tpu.memory_space<vmem>>, %arg3: memref<1x32xf32, #tpu.memory_space<vmem>>, %arg4: memref<32x32xbf16, #tpu.memory_space<vmem>>, %arg5: memref<1x32xf32, #tpu.memory_space<vmem>>, %arg6: memref<32x2xbf16, #tpu.memory_space<vmem>>, %arg7: memref<1x2xf32, #tpu.memory_space<vmem>>, %arg8: memref<1x4x8xf32, #tpu.memory_space<vmem>>, %arg9: memref<1x1x16xf32, #tpu.memory_space<vmem>>) attributes {dimension_semantics = [#tpu.dimension_semantics<parallel>], iteration_bounds = array<i64: 2>, scalar_prefetch = 0 : i64, scratch_operands = 0 : i64, tpu.core_type = #tpu.core_type<tc>, window_params = [{transform_indices = @transform_0, window_bounds = array<i64: 1, 4, 64>}, {pipeline_mode = #tpu.pipeline_mode<synchronous>, transform_indices = @transform_1, window_bounds = array<i64: 64, 32>}, {pipeline_mode = #tpu.pipeline_mode<synchronous>, transform_indices = @transform_2, window_bounds = array<i64: 1, 32>}, {pipeline_mode = #tpu.pipeline_mode<synchronous>, transform_indices = @transform_3, window_bounds = array<i64: 32, 32>}, {pipeline_mode = #tpu.pipeline_mode<synchronous>, transform_indices = @transform_4, window_bounds = array<i64: 1, 32>}, {pipeline_mode = #tpu.pipeline_mode<synchronous>, transform_indices = @transform_5, window_bounds = array<i64: 32, 2>}, {pipeline_mode = #tpu.pipeline_mode<synchronous>, transform_indices = @transform_6, window_bounds = array<i64: 1, 2>}, {transform_indices = @transform_7, window_bounds = array<i64: 1, 4, 8>}, {transform_indices = @transform_8, window_bounds = array<i64: 1, 1, 16>}]} {
    %c0 = arith.constant 0 : index
    %c0_0 = arith.constant 0 : index
    %c0_1 = arith.constant 0 : index
    %0 = vector.load %arg1[%c0, %c0_0, %c0_1] : memref<1x4x64xf32, #tpu.memory_space<vmem>>, vector<1x4x64xf32>
    %1 = vector.shape_cast %0 : vector<1x4x64xf32> to vector<4x64xf32>
    %2 = arith.truncf %1 : vector<4x64xf32> to vector<4x64xbf16>
    %c0_2 = arith.constant 0 : index
    %c0_3 = arith.constant 0 : index
    %3 = vector.load %arg2[%c0_2, %c0_3] : memref<64x32xbf16, #tpu.memory_space<vmem>>, vector<64x32xbf16>
    %cst = arith.constant dense<0.000000e+00> : vector<4x32xf32>
    %4 = tpu.matmul %2, %3, %cst {dimension_numbers = #tpu.dot_dimension_numbers<[1], [0], [0], [1], [0, 0, 1, 1], [], []>} : vector<4x64xbf16>, vector<64x32xbf16>, vector<4x32xf32> -> vector<4x32xf32>
    %c0_4 = arith.constant 0 : index
    %c0_5 = arith.constant 0 : index
    %5 = vector.load %arg3[%c0_4, %c0_5] : memref<1x32xf32, #tpu.memory_space<vmem>>, vector<1x32xf32>
    %6 = vector.broadcast %5 : vector<1x32xf32> to vector<4x32xf32>
    %7 = arith.addf %4, %6 : vector<4x32xf32>
    %8 = arith.mulf %7, %7 : vector<4x32xf32>
    %9 = arith.mulf %7, %8 : vector<4x32xf32>
    %cst_6 = arith.constant 4.471500e-02 : f32
    %10 = vector.broadcast %cst_6 : f32 to vector<4x32xf32>
    %11 = arith.mulf %10, %9 : vector<4x32xf32>
    %12 = arith.addf %7, %11 : vector<4x32xf32>
    %cst_7 = arith.constant 0.797884583 : f32
    %13 = vector.broadcast %cst_7 : f32 to vector<4x32xf32>
    %14 = arith.mulf %13, %12 : vector<4x32xf32>
    %15 = math.tanh %14 : vector<4x32xf32>
    %cst_8 = arith.constant 1.000000e+00 : f32
    %16 = vector.broadcast %cst_8 : f32 to vector<4x32xf32>
    %17 = arith.addf %16, %15 : vector<4x32xf32>
    %cst_9 = arith.constant 5.000000e-01 : f32
    %18 = vector.broadcast %cst_9 : f32 to vector<4x32xf32>
    %19 = arith.mulf %18, %17 : vector<4x32xf32>
    %20 = arith.mulf %7, %19 : vector<4x32xf32>
    %21 = arith.truncf %20 : vector<4x32xf32> to vector<4x32xbf16>
    %c0_10 = arith.constant 0 : index
    %c0_11 = arith.constant 0 : index
    %22 = vector.load %arg4[%c0_10, %c0_11] : memref<32x32xbf16, #tpu.memory_space<vmem>>, vector<32x32xbf16>
    %cst_12 = arith.constant dense<0.000000e+00> : vector<4x32xf32>
    %23 = tpu.matmul %21, %22, %cst_12 {dimension_numbers = #tpu.dot_dimension_numbers<[1], [0], [0], [1], [0, 0, 1, 1], [], []>} : vector<4x32xbf16>, vector<32x32xbf16>, vector<4x32xf32> -> vector<4x32xf32>
    %c0_13 = arith.constant 0 : index
    %c0_14 = arith.constant 0 : index
    %24 = vector.load %arg5[%c0_13, %c0_14] : memref<1x32xf32, #tpu.memory_space<vmem>>, vector<1x32xf32>
    %25 = vector.broadcast %24 : vector<1x32xf32> to vector<4x32xf32>
    %26 = arith.addf %23, %25 : vector<4x32xf32>
    %27 = arith.mulf %26, %26 : vector<4x32xf32>
    %28 = arith.mulf %26, %27 : vector<4x32xf32>
    %cst_15 = arith.constant 4.471500e-02 : f32
    %29 = vector.broadcast %cst_15 : f32 to vector<4x32xf32>
    %30 = arith.mulf %29, %28 : vector<4x32xf32>
    %31 = arith.addf %26, %30 : vector<4x32xf32>
    %cst_16 = arith.constant 0.797884583 : f32
    %32 = vector.broadcast %cst_16 : f32 to vector<4x32xf32>
    %33 = arith.mulf %32, %31 : vector<4x32xf32>
    %34 = math.tanh %33 : vector<4x32xf32>
    %cst_17 = arith.constant 1.000000e+00 : f32
    %35 = vector.broadcast %cst_17 : f32 to vector<4x32xf32>
    %36 = arith.addf %35, %34 : vector<4x32xf32>
    %cst_18 = arith.constant 5.000000e-01 : f32
    %37 = vector.broadcast %cst_18 : f32 to vector<4x32xf32>
    %38 = arith.mulf %37, %36 : vector<4x32xf32>
    %39 = arith.mulf %26, %38 : vector<4x32xf32>
    %40 = arith.truncf %39 : vector<4x32xf32> to vector<4x32xbf16>
    %c0_19 = arith.constant 0 : index
    %c0_20 = arith.constant 0 : index
    %41 = vector.load %arg6[%c0_19, %c0_20] : memref<32x2xbf16, #tpu.memory_space<vmem>>, vector<32x2xbf16>
    %cst_21 = arith.constant dense<0.000000e+00> : vector<4x2xf32>
    %42 = tpu.matmul %40, %41, %cst_21 {dimension_numbers = #tpu.dot_dimension_numbers<[1], [0], [0], [1], [0, 0, 1, 1], [], []>} : vector<4x32xbf16>, vector<32x2xbf16>, vector<4x2xf32> -> vector<4x2xf32>
    %c0_22 = arith.constant 0 : index
    %c0_23 = arith.constant 0 : index
    %43 = vector.load %arg7[%c0_22, %c0_23] : memref<1x2xf32, #tpu.memory_space<vmem>>, vector<1x2xf32>
    %44 = vector.broadcast %43 : vector<1x2xf32> to vector<4x2xf32>
    %45 = arith.addf %42, %44 : vector<4x2xf32>
    %46 = arith.mulf %45, %45 : vector<4x2xf32>
    %cst_24 = arith.constant dense<0.000000e+00> : vector<4xf32>
    %47 = vector.multi_reduction <add>, %46, %cst_24 [1] : vector<4x2xf32> to vector<4xf32>
    %48 = vector.shape_cast %47 : vector<4xf32> to vector<4x1xf32>
    %49 = math.sqrt %48 : vector<4x1xf32>
    %cst_25 = arith.constant 9.99999997E-7 : f32
    %50 = vector.broadcast %cst_25 : f32 to vector<4x1xf32>
    %51 = arith.cmpf olt, %49, %50 : vector<4x1xf32>
    %cst_26 = arith.constant 6.000000e+00 : f32
    %52 = vector.broadcast %cst_26 : f32 to vector<4x1xf32>
    %53 = arith.divf %48, %52 : vector<4x1xf32>
    %cst_27 = arith.constant 1.000000e+00 : f32
    %54 = vector.broadcast %cst_27 : f32 to vector<4x1xf32>
    %55 = arith.subf %54, %53 : vector<4x1xf32>
    %56 = math.sin %49 : vector<4x1xf32>
    %cst_28 = arith.constant 9.99999996E-13 : f32
    %57 = vector.broadcast %cst_28 : f32 to vector<4x1xf32>
    %58 = arith.maximumf %49, %57 : vector<4x1xf32>
    %59 = arith.divf %56, %58 : vector<4x1xf32>
    %60 = arith.select %51, %55, %59 : vector<4x1xi1>, vector<4x1xf32>
    %61 = vector.broadcast %60 : vector<4x1xf32> to vector<4x2xf32>
    %62 = arith.mulf %61, %45 : vector<4x2xf32>
    %63 = math.cos %49 : vector<4x1xf32>
    %cst_29 = arith.constant 0.000000e+00 : f32
    %64 = vector.broadcast %cst_29 : f32 to vector<4x3xf32>
    %65 = tpu.concatenate %45, %62, %63, %64 in 1 : vector<4x2xf32>, vector<4x2xf32>, vector<4x1xf32>, vector<4x3xf32> -> vector<4x8xf32>
    %c0_30 = arith.constant 0 : index
    %c0_31 = arith.constant 0 : index
    %c0_32 = arith.constant 0 : index
    %66 = vector.load %arg8[%c0_30, %c0_31, %c0_32] : memref<1x4x8xf32, #tpu.memory_space<vmem>>, vector<1x4x8xf32>
    %67 = vector.shape_cast %66 : vector<1x4x8xf32> to vector<4x8xf32>
    %68 = vector.shape_cast %65 : vector<4x8xf32> to vector<1x4x8xf32>
    tpu.vector_store %arg8[%c0_30, %c0_31, %c0_32], %68 {strides = array<i32>} : memref<1x4x8xf32, #tpu.memory_space<vmem>>, vector<1x4x8xf32>,
    %69 = tpu.iota {dimensions = array<i32: 0>} : vector<4x1xi32>
    %70 = arith.sitofp %69 : vector<4x1xi32> to vector<4x1xf32>
    %cst_33 = arith.constant 5.000000e-01 : f32
    %71 = vector.broadcast %cst_33 : f32 to vector<4x1xf32>
    %72 = arith.addf %70, %71 : vector<4x1xf32>
    %cst_34 = arith.constant 2.000000e+00 : f32
    %73 = vector.broadcast %cst_34 : f32 to vector<4x1xf32>
    %74 = arith.divf %72, %73 : vector<4x1xf32>
    %75 = math.floor %74 : vector<4x1xf32>
    %cst_35 = arith.constant 2.000000e+00 : f32
    %76 = vector.broadcast %cst_35 : f32 to vector<4x1xf32>
    %77 = arith.mulf %75, %76 : vector<4x1xf32>
    %78 = arith.subf %70, %77 : vector<4x1xf32>
    %cst_36 = arith.constant 5.000000e-01 : f32
    %79 = vector.broadcast %cst_36 : f32 to vector<4x1xf32>
    %80 = arith.addf %78, %79 : vector<4x1xf32>
    %cst_37 = arith.constant 1.400000e+01 : f32
    %81 = vector.broadcast %cst_37 : f32 to vector<4x1xf32>
    %82 = arith.mulf %80, %81 : vector<4x1xf32>
    %cst_38 = arith.constant 5.000000e-01 : f32
    %83 = vector.broadcast %cst_38 : f32 to vector<4x1xf32>
    %84 = arith.addf %75, %83 : vector<4x1xf32>
    %cst_39 = arith.constant 1.400000e+01 : f32
    %85 = vector.broadcast %cst_39 : f32 to vector<4x1xf32>
    %86 = arith.mulf %84, %85 : vector<4x1xf32>
    %cst_40 = arith.constant 1.000000e+00 : f32
    %87 = vector.broadcast %cst_40 : f32 to vector<4x1xf32>
    %88 = arith.divf %87, %63 : vector<4x1xf32>
    %89 = vector.extract_strided_slice %62 {offsets = [0, 0], sizes = [4, 1], strides = [1, 1]} : vector<4x2xf32> to vector<4x1xf32>
    %90 = arith.mulf %89, %88 : vector<4x1xf32>
    %91 = vector.extract_strided_slice %62 {offsets = [0, 1], sizes = [4, 1], strides = [1, 1]} : vector<4x2xf32> to vector<4x1xf32>
    %92 = arith.mulf %91, %88 : vector<4x1xf32>
    %cst_41 = arith.constant 4.000000e+00 : f32
    %93 = vector.broadcast %cst_41 : f32 to vector<1x1xf32>
    %94 = arith.mulf %90, %90 : vector<4x1xf32>
    %cst_42 = arith.constant dense<0.000000e+00> : vector<1xf32>
    %95 = vector.multi_reduction <add>, %94, %cst_42 [0] : vector<4x1xf32> to vector<1xf32>
    %96 = vector.shape_cast %95 : vector<1xf32> to vector<1x1xf32>
    %cst_43 = arith.constant dense<0.000000e+00> : vector<1xf32>
    %97 = vector.multi_reduction <add>, %90, %cst_43 [0] : vector<4x1xf32> to vector<1xf32>
    %98 = vector.shape_cast %97 : vector<1xf32> to vector<1x1xf32>
    %99 = arith.mulf %92, %92 : vector<4x1xf32>
    %cst_44 = arith.constant dense<0.000000e+00> : vector<1xf32>
    %100 = vector.multi_reduction <add>, %99, %cst_44 [0] : vector<4x1xf32> to vector<1xf32>
    %101 = vector.shape_cast %100 : vector<1xf32> to vector<1x1xf32>
    %cst_45 = arith.constant dense<0.000000e+00> : vector<1xf32>
    %102 = vector.multi_reduction <add>, %92, %cst_45 [0] : vector<4x1xf32> to vector<1xf32>
    %103 = vector.shape_cast %102 : vector<1xf32> to vector<1x1xf32>
    %104 = arith.mulf %90, %82 : vector<4x1xf32>
    %cst_46 = arith.constant dense<0.000000e+00> : vector<1xf32>
    %105 = vector.multi_reduction <add>, %104, %cst_46 [0] : vector<4x1xf32> to vector<1xf32>
    %106 = vector.shape_cast %105 : vector<1xf32> to vector<1x1xf32>
    %cst_47 = arith.constant dense<0.000000e+00> : vector<1xf32>
    %107 = vector.multi_reduction <add>, %82, %cst_47 [0] : vector<4x1xf32> to vector<1xf32>
    %108 = vector.shape_cast %107 : vector<1xf32> to vector<1x1xf32>
    %109 = arith.mulf %92, %86 : vector<4x1xf32>
    %cst_48 = arith.constant dense<0.000000e+00> : vector<1xf32>
    %110 = vector.multi_reduction <add>, %109, %cst_48 [0] : vector<4x1xf32> to vector<1xf32>
    %111 = vector.shape_cast %110 : vector<1xf32> to vector<1x1xf32>
    %cst_49 = arith.constant dense<0.000000e+00> : vector<1xf32>
    %112 = vector.multi_reduction <add>, %86, %cst_49 [0] : vector<4x1xf32> to vector<1xf32>
    %113 = vector.shape_cast %112 : vector<1xf32> to vector<1x1xf32>
    %cst_50 = arith.constant 0.000000e+00 : f32
    %114 = vector.broadcast %cst_50 : f32 to vector<1x7xf32>
    %115 = tpu.concatenate %96, %98, %101, %103, %93, %106, %108, %111, %113, %114 in 1 : vector<1x1xf32>, vector<1x1xf32>, vector<1x1xf32>, vector<1x1xf32>, vector<1x1xf32>, vector<1x1xf32>, vector<1x1xf32>, vector<1x1xf32>, vector<1x1xf32>, vector<1x7xf32> -> vector<1x16xf32>
    %cst_51 = arith.constant 1.960000e+02 : f32
    %116 = vector.broadcast %cst_51 : f32 to vector<1x16xf32>
    %117 = arith.mulf %116, %115 : vector<1x16xf32>
    %c0_52 = arith.constant 0 : index
    %c0_53 = arith.constant 0 : index
    %c0_54 = arith.constant 0 : index
    %118 = vector.load %arg9[%c0_52, %c0_53, %c0_54] : memref<1x1x16xf32, #tpu.memory_space<vmem>>, vector<1x1x16xf32>
    %119 = vector.shape_cast %118 : vector<1x1x16xf32> to vector<1x16xf32>
    %120 = vector.shape_cast %117 : vector<1x16xf32> to vector<1x1x16xf32>
    tpu.vector_store %arg9[%c0_52, %c0_53, %c0_54], %120 {strides = array<i32>} : memref<1x1x16xf32, #tpu.memory_space<vmem>>, vector<1x1x16xf32>,
    return
  }
  func.func @transform_0(%arg0: i32) -> (i32, i32, i32) {
    %c0_i32 = arith.constant 0 : i32
    %c0_i32_0 = arith.constant 0 : i32
    %c0_i32_1 = arith.constant 0 : i32
    return %arg0, %c0_i32, %c0_i32_0 : i32, i32, i32
  }
  func.func @transform_1(%arg0: i32) -> (i32, i32) {
    %c0_i32 = arith.constant 0 : i32
    %c0_i32_0 = arith.constant 0 : i32
    %c0_i32_1 = arith.constant 0 : i32
    return %c0_i32, %c0_i32_0 : i32, i32
  }
  func.func @transform_2(%arg0: i32) -> (i32, i32) {
    %c0_i32 = arith.constant 0 : i32
    %c0_i32_0 = arith.constant 0 : i32
    %c0_i32_1 = arith.constant 0 : i32
    return %c0_i32, %c0_i32_0 : i32, i32
  }
  func.func @transform_3(%arg0: i32) -> (i32, i32) {
    %c0_i32 = arith.constant 0 : i32
    %c0_i32_0 = arith.constant 0 : i32
    %c0_i32_1 = arith.constant 0 : i32
    return %c0_i32, %c0_i32_0 : i32, i32
  }
  func.func @transform_4(%arg0: i32) -> (i32, i32) {
    %c0_i32 = arith.constant 0 : i32
    %c0_i32_0 = arith.constant 0 : i32
    %c0_i32_1 = arith.constant 0 : i32
    return %c0_i32, %c0_i32_0 : i32, i32
  }
  func.func @transform_5(%arg0: i32) -> (i32, i32) {
    %c0_i32 = arith.constant 0 : i32
    %c0_i32_0 = arith.constant 0 : i32
    %c0_i32_1 = arith.constant 0 : i32
    return %c0_i32, %c0_i32_0 : i32, i32
  }
  func.func @transform_6(%arg0: i32) -> (i32, i32) {
    %c0_i32 = arith.constant 0 : i32
    %c0_i32_0 = arith.constant 0 : i32
    %c0_i32_1 = arith.constant 0 : i32
    return %c0_i32, %c0_i32_0 : i32, i32
  }
  func.func @transform_7(%arg0: i32) -> (i32, i32, i32) {
    %c0_i32 = arith.constant 0 : i32
    %c0_i32_0 = arith.constant 0 : i32
    %c0_i32_1 = arith.constant 0 : i32
    return %arg0, %c0_i32, %c0_i32_0 : i32, i32, i32
  }
  func.func @transform_8(%arg0: i32) -> (i32, i32, i32) {
    %c0_i32 = arith.constant 0 : i32
    %c0_i32_0 = arith.constant 0 : i32
    %c0_i32_1 = arith.constant 0 : i32
    return %arg0, %c0_i32, %c0_i32_0 : i32, i32, i32
  }
}

</mosaic_0001>

<llo_original>
// kernel: anycalib_forward.4
$region0: #{anycalib_forward.4}
  #allocation0 [shape = 'u32[]', space=smem, size = 0x4, offset = 0x4, fixed_abs, tag = 'smem constant byte address 0x4 - core index']
  #allocation1 [shape = 'u32[144,128]{1,0:T(1,128)}', space=vmem, size = 0x12000, scoped, tag = 'internal scratch']
  %s0 = inlined_call_operand.vmem [shape: f32[8,588], index: 0, kind: input, shape index: {}]
  %s1 = inlined_call_operand.vmem [shape: bf16[588,64], index: 1, kind: input, shape index: {}]
  %s2 = inlined_call_operand.vmem [shape: f32[1,64], index: 2, kind: input, shape index: {}]
  %s3 = inlined_call_operand.vmem [shape: f32[8,64], index: 3, kind: output, shape index: {}]
  %s4 = sld [smem:[#allocation0]]
  $region22: #{anycalib_forward.4} parent=0
    _
  %s6 = ssub.s32 1, %s4
  %s7 = scalar_select 0, %s6, %s4
  // Predicated region
  $region2: #{anycalib_forward.4} parent=0 // pred_check
    _
  $region3: #{anycalib_forward.4} parent=0 // pred_check_branch
    %9 = sbr.rel (0) target = $region5
  $region4: #{anycalib_forward.4} parent=0 // pred_region
    _
  $region5: #{anycalib_forward.4} parent=0 // pred_fallthru
    _
  // Predicated region
  $region6: #{anycalib_forward.4} parent=0 // pred_check
    _
  $region7: #{anycalib_forward.4} parent=0 // pred_check_branch
    %11 = sbr.rel (0) target = $region9
  $region8: #{anycalib_forward.4} parent=0 // pred_region
    _
  $region9: #{anycalib_forward.4} parent=0 // pred_fallthru
    _
  // Predicated region
  $region10: #{anycalib_forward.4} parent=0 // pred_check
    _
  $region11: #{anycalib_forward.4} parent=0 // pred_check_branch
    %13 = sbr.rel (0) target = $region13
  $region12: #{anycalib_forward.4} parent=0 // pred_region
    _
  $region13: #{anycalib_forward.4} parent=0 // pred_fallthru
    _
  %v15 = vld [vmem:[%s0] sm:$0xff]
  %v16 = vld [vmem:[%s0 + $0x8] sm:$0xff]
  %v17 = vld [vmem:[%s0 + $0x10] sm:$0xff]
  %v18 = vld [vmem:[%s0 + $0x18] sm:$0xff]
  %v19 = vld [vmem:[%s0 + $0x20] sm:$0xff]
  %v20 = vpack.c.bf16 %v15, %v15
  %v21 = vpack.c.bf16 %v16, %v16
  %v22 = vpack.c.bf16 %v17, %v17
  %v23 = vpack.c.bf16 %v18, %v18
  %v24 = vpack.c.bf16 %v19, %v19
  %v25 = vld [vmem:[%s1] sm:$0xf]
  %v26 = vld [vmem:[%s1 + $0x4] sm:$0xf]
  %v27 = vld [vmem:[%s1 + $0x8] sm:$0xf]
  %v28 = vld [vmem:[%s1 + $0xc] sm:$0xf]
  %v29 = vld [vmem:[%s1 + $0x10] sm:$0xf]
  %v30 = vld [vmem:[%s1 + $0x14] sm:$0xf]
  %v31 = vld [vmem:[%s1 + $0x18] sm:$0xf]
  %v32 = vld [vmem:[%s1 + $0x1c] sm:$0xf]
  %v33 = vld [vmem:[%s1 + $0x20] sm:$0xf]
  %v34 = vld [vmem:[%s1 + $0x24] sm:$0xf]
  %v35 = vld [vmem:[%s1 + $0x28] sm:$0xf]
  %v36 = vld [vmem:[%s1 + $0x2c] sm:$0xf]
  %v37 = vld [vmem:[%s1 + $0x30] sm:$0xf]
  %v38 = vld [vmem:[%s1 + $0x34] sm:$0xf]
  %v39 = vld [vmem:[%s1 + $0x38] sm:$0xf]
  %v40 = vld [vmem:[%s1 + $0x3c] sm:$0xf]
  %v41 = vld [vmem:[%s1 + $0x40] sm:$0xf]
  %v42 = vld [vmem:[%s1 + $0x44] sm:$0xf]
  %v43 = vld [vmem:[%s1 + $0x48] sm:$0xf]
  %v44 = vld [vmem:[%s1 + $0x4c] sm:$0xf]
  %v45 = vld [vmem:[%s1 + $0x50] sm:$0xf]
  %v46 = vld [vmem:[%s1 + $0x54] sm:$0xf]
  %v47 = vld [vmem:[%s1 + $0x58] sm:$0xf]
  %v48 = vld [vmem:[%s1 + $0x5c] sm:$0xf]
  %v49 = vld [vmem:[%s1 + $0x60] sm:$0xf]
  %v50 = vld [vmem:[%s1 + $0x64] sm:$0xf]
  %v51 = vld [vmem:[%s1 + $0x68] sm:$0xf]
  %v52 = vld [vmem:[%s1 + $0x6c] sm:$0xf]
  %v53 = vld [vmem:[%s1 + $0x70] sm:$0xf]
  %v54 = vld [vmem:[%s1 + $0x74] sm:$0xf]
  %v55 = vld [vmem:[%s1 + $0x78] sm:$0xf]
  %v56 = vld [vmem:[%s1 + $0x7c] sm:$0xf]
  %v57 = vld [vmem:[%s1 + $0x80] sm:$0xf]
  %v58 = vld [vmem:[%s1 + $0x84] sm:$0xf]
  %v59 = vld [vmem:[%s1 + $0x88] sm:$0xf]
  %v60 = vld [vmem:[%s1 + $0x8c] sm:$0xf]
  %v61 = vld [vmem:[%s1 + $0x90] sm:$0xf]
  %v62 = vld [vmem:[%s1 + $0x94] sm:$0xf]
  %v63 = vld [vmem:[%s1 + $0x98] sm:$0xf]
  %v64 = vld [vmem:[%s1 + $0x9c] sm:$0xf]
  %v65 = vld [vmem:[%s1 + $0xa0] sm:$0xf]
  %v66 = vld [vmem:[%s1 + $0xa4] sm:$0xf]
  %v67 = vld [vmem:[%s1 + $0xa8] sm:$0xf]
  %v68 = vld [vmem:[%s1 + $0xac] sm:$0xf]
  %v69 = vld [vmem:[%s1 + $0xb0] sm:$0xf]
  %v70 = vld [vmem:[%s1 + $0xb4] sm:$0xf]
  %v71 = vld [vmem:[%s1 + $0xb8] sm:$0xf]
  %v72 = vld [vmem:[%s1 + $0xbc] sm:$0xf]
  %v73 = vld [vmem:[%s1 + $0xc0] sm:$0xf]
  %v74 = vld [vmem:[%s1 + $0xc4] sm:$0xf]
  %v75 = vld [vmem:[%s1 + $0xc8] sm:$0xf]
  %v76 = vld [vmem:[%s1 + $0xcc] sm:$0xf]
  %v77 = vld [vmem:[%s1 + $0xd0] sm:$0xf]
  %v78 = vld [vmem:[%s1 + $0xd4] sm:$0xf]
  %v79 = vld [vmem:[%s1 + $0xd8] sm:$0xf]
  %v80 = vld [vmem:[%s1 + $0xdc] sm:$0xf]
  %v81 = vld [vmem:[%s1 + $0xe0] sm:$0xf]
  %v82 = vld [vmem:[%s1 + $0xe4] sm:$0xf]
  %v83 = vld [vmem:[%s1 + $0xe8] sm:$0xf]
  %v84 = vld [vmem:[%s1 + $0xec] sm:$0xf]
  %v85 = vld [vmem:[%s1 + $0xf0] sm:$0xf]
  %v86 = vld [vmem:[%s1 + $0xf4] sm:$0xf]
  %v87 = vld [vmem:[%s1 + $0xf8] sm:$0xf]
  %v88 = vld [vmem:[%s1 + $0xfc] sm:$0xf]
  %v89 = vld [vmem:[%s1 + $0x100] sm:$0xf]
  %v90 = vld [vmem:[%s1 + $0x104] sm:$0xf]
  %v91 = vld [vmem:[%s1 + $0x108] sm:$0xf]
  %v92 = vld [vmem:[%s1 + $0x10c] sm:$0xf]
  %v93 = vld [vmem:[%s1 + $0x110] sm:$0xf]
  %v94 = vld [vmem:[%s1 + $0x114] sm:$0xf]
  %v95 = vld [vmem:[%s1 + $0x118] sm:$0xf]
  %v96 = vld [vmem:[%s1 + $0x11c] sm:$0xf]
  %v97 = vld [vmem:[%s1 + $0x120] sm:$0xf]
  %v98 = vld [vmem:[%s1 + $0x124] sm:$0x3]
  %v99 = vld [vmem:[%s2] sm:$0x1]
  %v101 = vlaneseq
  %v102 = vshrl.u32 %v101, 7
  %v103 = vsub.s32 0, %v102
  %v104 = vrot.slane %v99, %v103
  %v180 = vunpack.c.l.b16 %v25
  %v181 = vunpack.c.l.b16 %v26
  %v182 = vunpack.c.l.b16 %v27
  %v183 = vunpack.c.l.b16 %v28
  %v184 = vunpack.c.l.b16 %v29
  %v185 = vunpack.c.l.b16 %v30
  %v186 = vunpack.c.l.b16 %v31
  %v187 = vunpack.c.l.b16 %v32
  %v188 = vunpack.c.l.b16 %v33
  %v189 = vunpack.c.l.b16 %v34
  %v190 = vunpack.c.l.b16 %v35
  %v191 = vunpack.c.l.b16 %v36
  %v192 = vunpack.c.l.b16 %v37
  %v193 = vunpack.c.l.b16 %v38
  %v194 = vunpack.c.l.b16 %v39
  %v195 = vunpack.c.l.b16 %v40
  %v196 = vunpack.c.l.b16 %v41
  %v197 = vunpack.c.l.b16 %v42
  %v198 = vunpack.c.l.b16 %v43
  %v199 = vunpack.c.l.b16 %v44
  %v200 = vunpack.c.l.b16 %v45
  %v201 = vunpack.c.l.b16 %v46
  %v202 = vunpack.c.l.b16 %v47
  %v203 = vunpack.c.l.b16 %v48
  %v204 = vunpack.c.l.b16 %v49
  %v205 = vunpack.c.l.b16 %v50
  %v206 = vunpack.c.l.b16 %v51
  %v207 = vunpack.c.l.b16 %v52
  %v208 = vunpack.c.l.b16 %v53
  %v209 = vunpack.c.l.b16 %v54
  %v210 = vunpack.c.l.b16 %v55
  %v211 = vunpack.c.l.b16 %v56
  %v212 = vunpack.c.l.b16 %v57
  %v213 = vunpack.c.l.b16 %v58
  %v214 = vunpack.c.l.b16 %v59
  %v215 = vunpack.c.l.b16 %v60
  %v216 = vunpack.c.l.b16 %v61
  %v217 = vunpack.c.l.b16 %v62
  %v218 = vunpack.c.l.b16 %v63
  %v219 = vunpack.c.l.b16 %v64
  %v220 = vunpack.c.l.b16 %v65
  %v221 = vunpack.c.l.b16 %v66
  %v222 = vunpack.c.l.b16 %v67
  %v223 = vunpack.c.l.b16 %v68
  %v224 = vunpack.c.l.b16 %v69
  %v225 = vunpack.c.l.b16 %v70
  %v226 = vunpack.c.l.b16 %v71
  %v227 = vunpack.c.l.b16 %v72
  %v228 = vunpack.c.l.b16 %v73
  %v229 = vunpack.c.l.b16 %v74
  %v230 = vunpack.c.l.b16 %v75
  %v231 = vunpack.c.l.b16 %v76
  %v232 = vunpack.c.l.b16 %v77
  %v233 = vunpack.c.l.b16 %v78
  %v234 = vunpack.c.l.b16 %v79
  %v235 = vunpack.c.l.b16 %v80
  %v236 = vunpack.c.l.b16 %v81
  %v237 = vunpack.c.l.b16 %v82
  %v238 = vunpack.c.l.b16 %v83
  %v239 = vunpack.c.l.b16 %v84
  %v240 = vunpack.c.l.b16 %v85
  %v241 = vunpack.c.l.b16 %v86
  %v242 = vunpack.c.l.b16 %v87
  %v243 = vunpack.c.l.b16 %v88
  %v244 = vunpack.c.l.b16 %v89
  %v245 = vunpack.c.l.b16 %v90
  %v246 = vunpack.c.l.b16 %v91
  %v247 = vunpack.c.l.b16 %v92
  %v248 = vunpack.c.l.b16 %v93
  %v249 = vunpack.c.l.b16 %v94
  %v250 = vunpack.c.l.b16 %v95
  %v251 = vunpack.c.l.b16 %v96
  %v252 = vunpack.c.l.b16 %v97
  %v253 = vunpack.c.l.b16 %v98
  %v254 = vpack.c.b16 %v181, %v180
  %v255 = vpack.c.b16 %v183, %v182
  %v256 = vpack.c.b16 %v185, %v184
  %v257 = vpack.c.b16 %v187, %v186
  %v258 = vpack.c.b16 %v189, %v188
  %v259 = vpack.c.b16 %v191, %v190
  %v260 = vpack.c.b16 %v193, %v192
  %v261 = vpack.c.b16 %v195, %v194
  %v262 = vpack.c.b16 %v197, %v196
  %v263 = vpack.c.b16 %v199, %v198
  %v264 = vpack.c.b16 %v201, %v200
  %v265 = vpack.c.b16 %v203, %v202
  %v266 = vpack.c.b16 %v205, %v204
  %v267 = vpack.c.b16 %v207, %v206
  %v268 = vpack.c.b16 %v209, %v208
  %v269 = vpack.c.b16 %v211, %v210
  %v270 = vpack.c.b16 %v213, %v212
  %v271 = vpack.c.b16 %v215, %v214
  %v272 = vpack.c.b16 %v217, %v216
  %v273 = vpack.c.b16 %v219, %v218
  %v274 = vpack.c.b16 %v221, %v220
  %v275 = vpack.c.b16 %v223, %v222
  %v276 = vpack.c.b16 %v225, %v224
  %v277 = vpack.c.b16 %v227, %v226
  %v278 = vpack.c.b16 %v229, %v228
  %v279 = vpack.c.b16 %v231, %v230
  %v280 = vpack.c.b16 %v233, %v232
  %v281 = vpack.c.b16 %v235, %v234
  %v282 = vpack.c.b16 %v237, %v236
  %v283 = vpack.c.b16 %v239, %v238
  %v284 = vpack.c.b16 %v241, %v240
  %v285 = vpack.c.b16 %v243, %v242
  %v286 = vpack.c.b16 %v245, %v244
  %v287 = vpack.c.b16 %v247, %v246
  %v288 = vpack.c.b16 %v249, %v248
  %v289 = vpack.c.b16 %v251, %v250
  %v290 = vpack.c.b16 %v253, %v252
  %vm327 = vcmask 621568
  %v329 = vsel %vm327, %v24, 0
  %vm331 = vcmask 1045504
  %v333 = vsel %vm331, %v290, 0
  %335 = vmatprep.subr.bf16.mxu0 0
  %336 = vmatpush1.bf16.msra.mxu0 %v261
  %337 = vmatprep.subr.bf16.mxu0 0
  %338 = vmatpush1.bf16.msra.mxu0 %v260
  %339 = vmatprep.subr.bf16.mxu0 0
  %340 = vmatpush1.bf16.msra.mxu0 %v259
  %341 = vmatprep.subr.bf16.mxu0 0
  %342 = vmatpush1.bf16.msra.mxu0 %v258
  %343 = vmatprep.subr.bf16.mxu0 0
  %344 = vmatpush1.bf16.msra.mxu0 %v257
  %345 = vmatprep.subr.bf16.mxu0 0
  %346 = vmatpush1.bf16.msra.mxu0 %v256
  %347 = vmatprep.subr.bf16.mxu0 0
  %348 = vmatpush1.bf16.msra.mxu0 %v255
  %349 = vmatprep.subr.bf16.mxu0 0
  %350 = vmatpush1.bf16.msra.mxu0 %v254
  %351 = vmatprep.subr.bf16.mxu0 0
  %352 = vmatpush2.bf16.msra.mxu0 %v269
  %353 = vmatprep.subr.bf16.mxu0 0
  %354 = vmatpush2.bf16.msra.mxu0 %v268
  %355 = vmatprep.subr.bf16.mxu0 0
  %356 = vmatpush2.bf16.msra.mxu0 %v267
  %357 = vmatprep.subr.bf16.mxu0 0
  %358 = vmatpush2.bf16.msra.mxu0 %v266
  %359 = vmatprep.subr.bf16.mxu0 0
  %360 = vmatpush2.bf16.msra.mxu0 %v265
  %361 = vmatprep.subr.bf16.mxu0 0
  %362 = vmatpush2.bf16.msra.mxu0 %v264
  %363 = vmatprep.subr.bf16.mxu0 0
  %364 = vmatpush2.bf16.msra.mxu0 %v263
  %365 = vmatprep.subr.bf16.mxu0 0
  %366 = vmatpush2.bf16.msra.mxu0 %v262
  %367 = vmatprep.mubr.bf16.mxu0 %v21
  %368 = vmatmul.mubr.bf16.gmra.mxu0 %v20
  %v369 = vpop.f32.mrf.mxu0
  %v370 = vadd.f32 %v104, %v369
  %v371 = vpop.f32.mrf.mxu0
  %v372 = vpop.f32.mrf.mxu0
  %v373 = vpop.f32.mrf.mxu0
  %374 = vdwg.mxu0
  %375 = vmatprep.subr.bf16.mxu0 0
  %376 = vmatpush1.bf16.msra.mxu0 %v277
  %377 = vmatprep.subr.bf16.mxu0 0
  %378 = vmatpush1.bf16.msra.mxu0 %v276
  %379 = vmatprep.subr.bf16.mxu0 0
  %380 = vmatpush1.bf16.msra.mxu0 %v275
  %381 = vmatprep.subr.bf16.mxu0 0
  %382 = vmatpush1.bf16.msra.mxu0 %v274
  %383 = vmatprep.subr.bf16.mxu0 0
  %384 = vmatpush1.bf16.msra.mxu0 %v273
  %385 = vmatprep.subr.bf16.mxu0 0
  %386 = vmatpush1.bf16.msra.mxu0 %v272
  %387 = vmatprep.subr.bf16.mxu0 0
  %388 = vmatpush1.bf16.msra.mxu0 %v271
  %389 = vmatprep.subr.bf16.mxu0 0
  %390 = vmatpush1.bf16.msra.mxu0 %v270
  %391 = vmatprep.subr.bf16.mxu0 0
  %392 = vmatpush2.bf16.msra.mxu0 %v285
  %393 = vmatprep.subr.bf16.mxu0 0
  %394 = vmatpush2.bf16.msra.mxu0 %v284
  %395 = vmatprep.subr.bf16.mxu0 0
  %396 = vmatpush2.bf16.msra.mxu0 %v283
  %397 = vmatprep.subr.bf16.mxu0 0
  %398 = vmatpush2.bf16.msra.mxu0 %v282
  %399 = vmatprep.subr.bf16.mxu0 0
  %400 = vmatpush2.bf16.msra.mxu0 %v281
  %401 = vmatprep.subr.bf16.mxu0 0
  %402 = vmatpush2.bf16.msra.mxu0 %v280
  %403 = vmatprep.subr.bf16.mxu0 0
  %404 = vmatpush2.bf16.msra.mxu0 %v279
  %405 = vmatprep.subr.bf16.mxu0 0
  %406 = vmatpush2.bf16.msra.mxu0 %v278
  %407 = vmatprep.mubr.bf16.mxu0 %v23
  %408 = vmatmul.mubr.bf16.gmra.mxu0 %v22
  %v409 = vpop.f32.mrf.mxu0
  %v410 = vadd.f32 %v370, %v409
  %v411 = vpop.f32.mrf.mxu0
  %v412 = vpop.f32.mrf.mxu0
  %v413 = vpop.f32.mrf.mxu0
  %414 = vdwg.mxu0
  %415 = vmatprep.subr.bf16.mxu0 0
  %416 = vmatpush1.bf16.msra.mxu0 0
  %417 = vmatprep.subr.bf16.mxu0 0
  %418 = vmatpush1.bf16.msra.mxu0 0
  %419 = vmatprep.subr.bf16.mxu0 0
  %420 = vmatpush1.bf16.msra.mxu0 0
  %421 = vmatprep.subr.bf16.mxu0 0
  %422 = vmatpush1.bf16.msra.mxu0 %v333
  %423 = vmatprep.subr.bf16.mxu0 0
  %424 = vmatpush1.bf16.msra.mxu0 %v289
  %425 = vmatprep.subr.bf16.mxu0 0
  %426 = vmatpush1.bf16.msra.mxu0 %v288
  %427 = vmatprep.subr.bf16.mxu0 0
  %428 = vmatpush1.bf16.msra.mxu0 %v287
  %429 = vmatprep.subr.bf16.mxu0 0
  %430 = vmatpush1.bf16.msra.mxu0 %v286
  %431 = vmatprep.subr.bf16.mxu0 0
  %432 = vmatpush2.bf16.msra.mxu0 0
  %433 = vmatprep.subr.bf16.mxu0 0
  %434 = vmatpush2.bf16.msra.mxu0 0
  %435 = vmatprep.subr.bf16.mxu0 0
  %436 = vmatpush2.bf16.msra.mxu0 0
  %437 = vmatprep.subr.bf16.mxu0 0
  %438 = vmatpush2.bf16.msra.mxu0 0
  %439 = vmatprep.subr.bf16.mxu0 0
  %440 = vmatpush2.bf16.msra.mxu0 0
  %441 = vmatprep.subr.bf16.mxu0 0
  %442 = vmatpush2.bf16.msra.mxu0 0
  %443 = vmatprep.subr.bf16.mxu0 0
  %444 = vmatpush2.bf16.msra.mxu0 0
  %445 = vmatprep.subr.bf16.mxu0 0
  %446 = vmatpush2.bf16.msra.mxu0 0
  %447 = vmatprep.mubr.bf16.mxu0 0
  %448 = vmatmul.mubr.bf16.gmra.mxu0 %v329
  %v449 = vpop.f32.mrf.mxu0
  %v450 = vadd.f32 %v410, %v449
  %v451 = vpop.f32.mrf.mxu0
  %v452 = vpop.f32.mrf.mxu0
  %v453 = vpop.f32.mrf.mxu0
  %454 = vdwg.mxu0
  %vm455 = vcmask 523264
  %456 = vst.msk [vmem:[%s3] sm:$0xff] %vm455, %v450
  // Predicated region
  $region14: #{anycalib_forward.4} parent=0 // pred_check
    _
  $region15: #{anycalib_forward.4} parent=0 // pred_check_branch
    %458 = sbr.rel (0) target = $region17
  $region16: #{anycalib_forward.4} parent=0 // pred_region
    _
  $region17: #{anycalib_forward.4} parent=0 // pred_fallthru
    _
  // Predicated region
  $region18: #{anycalib_forward.4} parent=0 // pred_check
    _
  $region19: #{anycalib_forward.4} parent=0 // pred_check_branch
    %460 = sbr.rel (0) target = $region21
  $region20: #{anycalib_forward.4} parent=0 // pred_region
    _
  $region21: #{anycalib_forward.4} parent=0 // pred_fallthru
    _

// kernel: anycalib_forward.5
$region0: #{anycalib_forward.5}
  #allocation0 [shape = 'u32[]', space=smem, size = 0x4, offset = 0x4, fixed_abs, tag = 'smem constant byte address 0x4 - core index']
  #allocation1 [shape = 'u32[144,128]{1,0:T(1,128)}', space=vmem, size = 0x12000, scoped, tag = 'internal scratch']
  %s0 = inlined_call_operand.vmem [shape: f32[2,4,64], index: 0, kind: input, shape index: {}]
  %s1 = inlined_call_operand.vmem [shape: f32[1,64], index: 1, kind: input, shape index: {}]
  %s2 = inlined_call_operand.vmem [shape: f32[1,5,64], index: 2, kind: input, shape index: {}]
  %s3 = inlined_call_operand.vmem [shape: f32[1,64], index: 3, kind: input, shape index: {}]
  %s4 = inlined_call_operand.vmem [shape: f32[1,64], index: 4, kind: input, shape index: {}]
  %s5 = inlined_call_operand.vmem [shape: bf16[4,64,16], index: 5, kind: input, shape index: {}]
  %s6 = inlined_call_operand.vmem [shape: f32[4,1,16], index: 6, kind: input, shape index: {}]
  %s7 = inlined_call_operand.vmem [shape: bf16[4,64,16], index: 7, kind: input, shape index: {}]
  %s8 = inlined_call_operand.vmem [shape: f32[4,1,16], index: 8, kind: input, shape index: {}]
  %s9 = inlined_call_operand.vmem [shape: bf16[4,64,16], index: 9, kind: input, shape index: {}]
  %s10 = inlined_call_operand.vmem [shape: f32[4,1,16], index: 10, kind: input, shape index: {}]
  %s11 = inlined_call_operand.vmem [shape: bf16[4,16,64], index: 11, kind: input, shape index: {}]
  %s12 = inlined_call_operand.vmem [shape: f32[1,64], index: 12, kind: input, shape index: {}]
  %s13 = inlined_call_operand.vmem [shape: f32[1,64], index: 13, kind: input, shape index: {}]
  %s14 = inlined_call_operand.vmem [shape: f32[1,64], index: 14, kind: input, shape index: {}]
  %s15 = inlined_call_operand.vmem [shape: bf16[64,256], index: 15, kind: input, shape index: {}]
  %s16 = inlined_call_operand.vmem [shape: f32[1,256], index: 16, kind: input, shape index: {}]
  %s17 = inlined_call_operand.vmem [shape: bf16[256,64], index: 17, kind: input, shape index: {}]
  %s18 = inlined_call_operand.vmem [shape: f32[1,64], index: 18, kind: input, shape index: {}]
  %s19 = inlined_call_operand.vmem [shape: f32[2,5,64], index: 19, kind: output, shape index: {}]
  %s20 = sld [smem:[#allocation0]]
  $region109: #{anycalib_forward.5} parent=0
    _
  %s22 = ssub.s32 1, %s20
  %s23 = scalar_select 0, %s22, %s20
  loop: start=0, step=1, limit=4
  $region2: #{anycalib_forward.5} parent=0 // loop_pre_header
    _
  $region3: #{anycalib_forward.5} parent=0 // loop_header
    %s25 = sphi 0, %s29
    %p26 = scmp.ge.s32.totalorder %s25, 4
    %s35 = sphi 0, %s37
    %s38 = sphi 0, %s35
    %s39 = sphi 0, %s38
    %s55 = sphi 0, %s39
    %s59 = sphi 0, %s59
    %s61 = sphi 0, %s59
    %s62 = sphi 0, %s61
    %s76 = sphi 0, %s62
    %s80 = sphi 0, %s80
    %s82 = sphi 0, %s80
    %s83 = sphi 0, %s82
    %s97 = sphi 0, %s83
    %s101 = sphi 0, %s101
    %s103 = sphi 0, %s101
    %s104 = sphi 0, %s103
    %s118 = sphi 0, %s104
    %s122 = sphi 0, %s122
    %s124 = sphi 0, %s122
    %s125 = sphi 0, %s124
    %s139 = sphi 0, %s125
    %s143 = sphi 0, %s143
    %s145 = sphi 0, %s143
    %s146 = sphi 0, %s145
    %s160 = sphi 0, %s146
    %s164 = sphi 0, %s164
    %s166 = sphi 0, %s164
    %s167 = sphi 0, %s166
    %s181 = sphi 0, %s167
    %s185 = sphi 0, %s185
    %s187 = sphi 0, %s185
    %s188 = sphi 0, %s187
    %s202 = sphi 0, %s188
    %s206 = sphi 0, %s206
    %s208 = sphi 0, %s206
    %s209 = sphi 0, %s208
    %s223 = sphi 0, %s209
    %s227 = sphi 0, %s227
    %s229 = sphi 0, %s227
    %s230 = sphi 0, %s229
    %s244 = sphi 0, %s230
    %s248 = sphi 0, %s248
    %s250 = sphi 0, %s248
    %s251 = sphi 0, %s250
    %s265 = sphi 0, %s251
    %s269 = sphi 0, %s269
    %s271 = sphi 0, %s269
    %s272 = sphi 0, %s271
    %s286 = sphi 0, %s272
    %s290 = sphi 0, %s290
    %s292 = sphi 0, %s290
    %s293 = sphi 0, %s292
    %s307 = sphi 0, %s293
    %s311 = sphi 0, %s311
    %s313 = sphi 0, %s311
    %s314 = sphi 0, %s313
    %s328 = sphi 0, %s314
    %s332 = sphi 0, %s332
    %s334 = sphi 0, %s332
    %s335 = sphi 0, %s334
    %s349 = sphi 0, %s335
    %s353 = sphi 0, %s353
    %s355 = sphi 0, %s353
    %s356 = sphi 0, %s355
    %s370 = sphi 0, %s356
    %s374 = sphi 0, %s374
    %s376 = sphi 0, %s374
    %s377 = sphi 0, %s376
    %s391 = sphi 0, %s377
    %s395 = sphi 0, %s395
    %s397 = sphi 0, %s395
    %s398 = sphi 0, %s397
    %s412 = sphi 0, %s398
    %s416 = sphi 0, %s416
    %s418 = sphi 0, %s416
    %s419 = sphi 0, %s418
    %s433 = sphi 0, %s419
    %s439 = sphi 0, %s441
    %s442 = sphi 0, %s439
    %s443 = sphi 0, %s442
    %s459 = sphi 0, %s443
  $region4: #{anycalib_forward.5} parent=0 // loop_header_branch
    %28 = sbr.rel (%p26) target = $region8
  $region5: #{anycalib_forward.5} parent=0 // loop_body
    %s30 = ssub.s32 %s25, 1
    %s31 = ssub.s32 %s25, 2
    %s32 = sadd.s32 %s25, 1
    %s33 = ssub.s32 %s25, %s32
    %p34 = scmp.eq.s32.totalorder %s33, 0
    %s36 = sadd.s32 %s35, 1
    %s37 = scalar_select %p34, %s35, %s36
    %p40 = pneg %p34
    %p41 = scmp.eq.s32.totalorder %s25, 1
    %p42 = por %p40, %p41
    %p43 = scmp.ne.s32.totalorder %s35, %s38
    %p44 = scmp.eq.s32.totalorder %s25, 0
    %p45 = por %p43, %p44
    %p46 = scmp.ne.s32.totalorder %s35, %s38
    %p47 = scmp.eq.s32.totalorder %s30, 1
    %p48 = por %p46, %p47
    %p49 = scmp.ne.s32.totalorder %s38, %s39
    %p50 = scmp.eq.s32.totalorder %s30, 0
    %p51 = por %p49, %p50
    %p52 = scmp.ne.s32.totalorder %s38, %s39
    %p53 = scmp.eq.s32.totalorder %s31, 1
    %p54 = por %p52, %p53
    %p56 = scmp.ne.s32.totalorder %s39, %s55
    %p57 = scmp.eq.s32.totalorder %s31, 0
    %p58 = por %p56, %p57
    %s60 = sadd.s32 %s59, 1
    %p63 = scmp.eq.s32.totalorder %s25, 1
    %p64 = scmp.ne.s32.totalorder %s59, %s61
    %p65 = scmp.eq.s32.totalorder %s25, 0
    %p66 = por %p64, %p65
    %p67 = scmp.ne.s32.totalorder %s59, %s61
    %p68 = scmp.eq.s32.totalorder %s30, 1
    %p69 = por %p67, %p68
    %p70 = scmp.ne.s32.totalorder %s61, %s62
    %p71 = scmp.eq.s32.totalorder %s30, 0
    %p72 = por %p70, %p71
    %p73 = scmp.ne.s32.totalorder %s61, %s62
    %p74 = scmp.eq.s32.totalorder %s31, 1
    %p75 = por %p73, %p74
    %p77 = scmp.ne.s32.totalorder %s62, %s76
    %p78 = scmp.eq.s32.totalorder %s31, 0
    %p79 = por %p77, %p78
    %s81 = sadd.s32 %s80, 1
    %p84 = scmp.eq.s32.totalorder %s25, 1
    %p85 = scmp.ne.s32.totalorder %s80, %s82
    %p86 = scmp.eq.s32.totalorder %s25, 0
    %p87 = por %p85, %p86
    %p88 = scmp.ne.s32.totalorder %s80, %s82
    %p89 = scmp.eq.s32.totalorder %s30, 1
    %p90 = por %p88, %p89
    %p91 = scmp.ne.s32.totalorder %s82, %s83
    %p92 = scmp.eq.s32.totalorder %s30, 0
    %p93 = por %p91, %p92
    %p94 = scmp.ne.s32.totalorder %s82, %s83
    %p95 = scmp.eq.s32.totalorder %s31, 1
    %p96 = por %p94, %p95
    %p98 = scmp.ne.s32.totalorder %s83, %s97
    %p99 = scmp.eq.s32.totalorder %s31, 0
    %p100 = por %p98, %p99
    %s102 = sadd.s32 %s101, 1
    %p105 = scmp.eq.s32.totalorder %s25, 1
    %p106 = scmp.ne.s32.totalorder %s101, %s103
    %p107 = scmp.eq.s32.totalorder %s25, 0
    %p108 = por %p106, %p107
    %p109 = scmp.ne.s32.totalorder %s101, %s103
    %p110 = scmp.eq.s32.totalorder %s30, 1
    %p111 = por %p109, %p110
    %p112 = scmp.ne.s32.totalorder %s103, %s104
    %p113 = scmp.eq.s32.totalorder %s30, 0
    %p114 = por %p112, %p113
    %p115 = scmp.ne.s32.totalorder %s103, %s104
    %p116 = scmp.eq.s32.totalorder %s31, 1
    %p117 = por %p115, %p116
    %p119 = scmp.ne.s32.totalorder %s104, %s118
    %p120 = scmp.eq.s32.totalorder %s31, 0
    %p121 = por %p119, %p120
    %s123 = sadd.s32 %s122, 1
    %p126 = scmp.eq.s32.totalorder %s25, 1
    %p127 = scmp.ne.s32.totalorder %s122, %s124
    %p128 = scmp.eq.s32.totalorder %s25, 0
    %p129 = por %p127, %p128
    %p130 = scmp.ne.s32.totalorder %s122, %s124
    %p131 = scmp.eq.s32.totalorder %s30, 1
    %p132 = por %p130, %p131
    %p133 = scmp.ne.s32.totalorder %s124, %s125
    %p134 = scmp.eq.s32.totalorder %s30, 0
    %p135 = por %p133, %p134
    %p136 = scmp.ne.s32.totalorder %s124, %s125
    %p137 = scmp.eq.s32.totalorder %s31, 1
    %p138 = por %p136, %p137
    %p140 = scmp.ne.s32.totalorder %s125, %s139
    %p141 = scmp.eq.s32.totalorder %s31, 0
    %p142 = por %p140, %p141
    %s144 = sadd.s32 %s143, 1
    %p147 = scmp.eq.s32.totalorder %s25, 1
    %p148 = scmp.ne.s32.totalorder %s143, %s145
    %p149 = scmp.eq.s32.totalorder %s25, 0
    %p150 = por %p148, %p149
    %p151 = scmp.ne.s32.totalorder %s143, %s145
    %p152 = scmp.eq.s32.totalorder %s30, 1
    %p153 = por %p151, %p152
    %p154 = scmp.ne.s32.totalorder %s145, %s146
    %p155 = scmp.eq.s32.totalorder %s30, 0
    %p156 = por %p154, %p155
    %p157 = scmp.ne.s32.totalorder %s145, %s146
    %p158 = scmp.eq.s32.totalorder %s31, 1
    %p159 = por %p157, %p158
    %p161 = scmp.ne.s32.totalorder %s146, %s160
    %p162 = scmp.eq.s32.totalorder %s31, 0
    %p163 = por %p161, %p162
    %s165 = sadd.s32 %s164, 1
    %p168 = scmp.eq.s32.totalorder %s25, 1
    %p169 = scmp.ne.s32.totalorder %s164, %s166
    %p170 = scmp.eq.s32.totalorder %s25, 0
    %p171 = por %p169, %p170
    %p172 = scmp.ne.s32.totalorder %s164, %s166
    %p173 = scmp.eq.s32.totalorder %s30, 1
    %p174 = por %p172, %p173
    %p175 = scmp.ne.s32.totalorder %s166, %s167
    %p176 = scmp.eq.s32.totalorder %s30, 0
    %p177 = por %p175, %p176
    %p178 = scmp.ne.s32.totalorder %s166, %s167
    %p179 = scmp.eq.s32.totalorder %s31, 1
    %p180 = por %p178, %p179
    %p182 = scmp.ne.s32.totalorder %s167, %s181
    %p183 = scmp.eq.s32.totalorder %s31, 0
    %p184 = por %p182, %p183
    %s186 = sadd.s32 %s185, 1
    %p189 = scmp.eq.s32.totalorder %s25, 1
    %p190 = scmp.ne.s32.totalorder %s185, %s187
    %p191 = scmp.eq.s32.totalorder %s25, 0
    %p192 = por %p190, %p191
    %p193 = scmp.ne.s32.totalorder %s185, %s187
    %p194 = scmp.eq.s32.totalorder %s30, 1
    %p195 = por %p193, %p194
    %p196 = scmp.ne.s32.totalorder %s187, %s188
    %p197 = scmp.eq.s32.totalorder %s30, 0
    %p198 = por %p196, %p197
    %p199 = scmp.ne.s32.totalorder %s187, %s188
    %p200 = scmp.eq.s32.totalorder %s31, 1
    %p201 = por %p199, %p200
    %p203 = scmp.ne.s32.totalorder %s188, %s202
    %p204 = scmp.eq.s32.totalorder %s31, 0
    %p205 = por %p203, %p204
    %s207 = sadd.s32 %s206, 1
    %p210 = scmp.eq.s32.totalorder %s25, 1
    %p211 = scmp.ne.s32.totalorder %s206, %s208
    %p212 = scmp.eq.s32.totalorder %s25, 0
    %p213 = por %p211, %p212
    %p214 = scmp.ne.s32.totalorder %s206, %s208
    %p215 = scmp.eq.s32.totalorder %s30, 1
    %p216 = por %p214, %p215
    %p217 = scmp.ne.s32.totalorder %s208, %s209
    %p218 = scmp.eq.s32.totalorder %s30, 0
    %p219 = por %p217, %p218
    %p220 = scmp.ne.s32.totalorder %s208, %s209
    %p221 = scmp.eq.s32.totalorder %s31, 1
    %p222 = por %p220, %p221
    %p224 = scmp.ne.s32.totalorder %s209, %s223
    %p225 = scmp.eq.s32.totalorder %s31, 0
    %p226 = por %p224, %p225
    %s228 = sadd.s32 %s227, 1
    %p231 = scmp.eq.s32.totalorder %s25, 1
    %p232 = scmp.ne.s32.totalorder %s227, %s229
    %p233 = scmp.eq.s32.totalorder %s25, 0
    %p234 = por %p232, %p233
    %p235 = scmp.ne.s32.totalorder %s227, %s229
    %p236 = scmp.eq.s32.totalorder %s30, 1
    %p237 = por %p235, %p236
    %p238 = scmp.ne.s32.totalorder %s229, %s230
    %p239 = scmp.eq.s32.totalorder %s30, 0
    %p240 = por %p238, %p239
    %p241 = scmp.ne.s32.totalorder %s229, %s230
    %p242 = scmp.eq.s32.totalorder %s31, 1
    %p243 = por %p241, %p242
    %p245 = scmp.ne.s32.totalorder %s230, %s244
    %p246 = scmp.eq.s32.totalorder %s31, 0
    %p247 = por %p245, %p246
    %s249 = sadd.s32 %s248, 1
    %p252 = scmp.eq.s32.totalorder %s25, 1
    %p253 = scmp.ne.s32.totalorder %s248, %s250
    %p254 = scmp.eq.s32.totalorder %s25, 0
    %p255 = por %p253, %p254
    %p256 = scmp.ne.s32.totalorder %s248, %s250
    %p257 = scmp.eq.s32.totalorder %s30, 1
    %p258 = por %p256, %p257
    %p259 = scmp.ne.s32.totalorder %s250, %s251
    %p260 = scmp.eq.s32.totalorder %s30, 0
    %p261 = por %p259, %p260
    %p262 = scmp.ne.s32.totalorder %s250, %s251
    %p263 = scmp.eq.s32.totalorder %s31, 1
    %p264 = por %p262, %p263
    %p266 = scmp.ne.s32.totalorder %s251, %s265
    %p267 = scmp.eq.s32.totalorder %s31, 0
    %p268 = por %p266, %p267
    %s270 = sadd.s32 %s269, 1
    %p273 = scmp.eq.s32.totalorder %s25, 1
    %p274 = scmp.ne.s32.totalorder %s269, %s271
    %p275 = scmp.eq.s32.totalorder %s25, 0
    %p276 = por %p274, %p275
    %p277 = scmp.ne.s32.totalorder %s269, %s271
    %p278 = scmp.eq.s32.totalorder %s30, 1
    %p279 = por %p277, %p278
    %p280 = scmp.ne.s32.totalorder %s271, %s272
    %p281 = scmp.eq.s32.totalorder %s30, 0
    %p282 = por %p280, %p281
    %p283 = scmp.ne.s32.totalorder %s271, %s272
    %p284 = scmp.eq.s32.totalorder %s31, 1
    %p285 = por %p283, %p284
    %p287 = scmp.ne.s32.totalorder %s272, %s286
    %p288 = scmp.eq.s32.totalorder %s31, 0
    %p289 = por %p287, %p288
    %s291 = sadd.s32 %s290, 1
    %p294 = scmp.eq.s32.totalorder %s25, 1
    %p295 = scmp.ne.s32.totalorder %s290, %s292
    %p296 = scmp.eq.s32.totalorder %s25, 0
    %p297 = por %p295, %p296
    %p298 = scmp.ne.s32.totalorder %s290, %s292
    %p299 = scmp.eq.s32.totalorder %s30, 1
    %p300 = por %p298, %p299
    %p301 = scmp.ne.s32.totalorder %s292, %s293
    %p302 = scmp.eq.s32.totalorder %s30, 0
    %p303 = por %p301, %p302
    %p304 = scmp.ne.s32.totalorder %s292, %s293
    %p305 = scmp.eq.s32.totalorder %s31, 1
    %p306 = por %p304, %p305
    %p308 = scmp.ne.s32.totalorder %s293, %s307
    %p309 = scmp.eq.s32.totalorder %s31, 0
    %p310 = por %p308, %p309
    %s312 = sadd.s32 %s311, 1
    %p315 = scmp.eq.s32.totalorder %s25, 1
    %p316 = scmp.ne.s32.totalorder %s311, %s313
    %p317 = scmp.eq.s32.totalorder %s25, 0
    %p318 = por %p316, %p317
    %p319 = scmp.ne.s32.totalorder %s311, %s313
    %p320 = scmp.eq.s32.totalorder %s30, 1
    %p321 = por %p319, %p320
    %p322 = scmp.ne.s32.totalorder %s313, %s314
    %p323 = scmp.eq.s32.totalorder %s30, 0
    %p324 = por %p322, %p323
    %p325 = scmp.ne.s32.totalorder %s313, %s314
    %p326 = scmp.eq.s32.totalorder %s31, 1
    %p327 = por %p325, %p326
    %p329 = scmp.ne.s32.totalorder %s314, %s328
    %p330 = scmp.eq.s32.totalorder %s31, 0
    %p331 = por %p329, %p330
    %s333 = sadd.s32 %s332, 1
    %p336 = scmp.eq.s32.totalorder %s25, 1
    %p337 = scmp.ne.s32.totalorder %s332, %s334
    %p338 = scmp.eq.s32.totalorder %s25, 0
    %p339 = por %p337, %p338
    %p340 = scmp.ne.s32.totalorder %s332, %s334
    %p341 = scmp.eq.s32.totalorder %s30, 1
    %p342 = por %p340, %p341
    %p343 = scmp.ne.s32.totalorder %s334, %s335
    %p344 = scmp.eq.s32.totalorder %s30, 0
    %p345 = por %p343, %p344
    %p346 = scmp.ne.s32.totalorder %s334, %s335
    %p347 = scmp.eq.s32.totalorder %s31, 1
    %p348 = por %p346, %p347
    %p350 = scmp.ne.s32.totalorder %s335, %s349
    %p351 = scmp.eq.s32.totalorder %s31, 0
    %p352 = por %p350, %p351
    %s354 = sadd.s32 %s353, 1
    %p357 = scmp.eq.s32.totalorder %s25, 1
    %p358 = scmp.ne.s32.totalorder %s353, %s355
    %p359 = scmp.eq.s32.totalorder %s25, 0
    %p360 = por %p358, %p359
    %p361 = scmp.ne.s32.totalorder %s353, %s355
    %p362 = scmp.eq.s32.totalorder %s30, 1
    %p363 = por %p361, %p362
    %p364 = scmp.ne.s32.totalorder %s355, %s356
    %p365 = scmp.eq.s32.totalorder %s30, 0
    %p366 = por %p364, %p365
    %p367 = scmp.ne.s32.totalorder %s355, %s356
    %p368 = scmp.eq.s32.totalorder %s31, 1
    %p369 = por %p367, %p368
    %p371 = scmp.ne.s32.totalorder %s356, %s370
    %p372 = scmp.eq.s32.totalorder %s31, 0
    %p373 = por %p371, %p372
    %s375 = sadd.s32 %s374, 1
    %p378 = scmp.eq.s32.totalorder %s25, 1
    %p379 = scmp.ne.s32.totalorder %s374, %s376
    %p380 = scmp.eq.s32.totalorder %s25, 0
    %p381 = por %p379, %p380
    %p382 = scmp.ne.s32.totalorder %s374, %s376
    %p383 = scmp.eq.s32.totalorder %s30, 1
    %p384 = por %p382, %p383
    %p385 = scmp.ne.s32.totalorder %s376, %s377
    %p386 = scmp.eq.s32.totalorder %s30, 0
    %p387 = por %p385, %p386
    %p388 = scmp.ne.s32.totalorder %s376, %s377
    %p389 = scmp.eq.s32.totalorder %s31, 1
    %p390 = por %p388, %p389
    %p392 = scmp.ne.s32.totalorder %s377, %s391
    %p393 = scmp.eq.s32.totalorder %s31, 0
    %p394 = por %p392, %p393
    %s396 = sadd.s32 %s395, 1
    %p399 = scmp.eq.s32.totalorder %s25, 1
    %p400 = scmp.ne.s32.totalorder %s395, %s397
    %p401 = scmp.eq.s32.totalorder %s25, 0
    %p402 = por %p400, %p401
    %p403 = scmp.ne.s32.totalorder %s395, %s397
    %p404 = scmp.eq.s32.totalorder %s30, 1
    %p405 = por %p403, %p404
    %p406 = scmp.ne.s32.totalorder %s397, %s398
    %p407 = scmp.eq.s32.totalorder %s30, 0
    %p408 = por %p406, %p407
    %p409 = scmp.ne.s32.totalorder %s397, %s398
    %p410 = scmp.eq.s32.totalorder %s31, 1
    %p411 = por %p409, %p410
    %p413 = scmp.ne.s32.totalorder %s398, %s412
    %p414 = scmp.eq.s32.totalorder %s31, 0
    %p415 = por %p413, %p414
    %s417 = sadd.s32 %s416, 1
    %p420 = scmp.eq.s32.totalorder %s25, 1
    %p421 = scmp.ne.s32.totalorder %s416, %s418
    %p422 = scmp.eq.s32.totalorder %s25, 0
    %p423 = por %p421, %p422
    %p424 = scmp.ne.s32.totalorder %s416, %s418
    %p425 = scmp.eq.s32.totalorder %s30, 1
    %p426 = por %p424, %p425
    %p427 = scmp.ne.s32.totalorder %s418, %s419
    %p428 = scmp.eq.s32.totalorder %s30, 0
    %p429 = por %p427, %p428
    %p430 = scmp.ne.s32.totalorder %s418, %s419
    %p431 = scmp.eq.s32.totalorder %s31, 1
    %p432 = por %p430, %p431
    %p434 = scmp.ne.s32.totalorder %s419, %s433
    %p435 = scmp.eq.s32.totalorder %s31, 0
    %p436 = por %p434, %p435
    %s437 = ssub.s32 %s25, %s32
    %p438 = scmp.eq.s32.totalorder %s437, 0
    %s440 = sadd.s32 %s439, 1
    %s441 = scalar_select %p438, %s439, %s440
    %p444 = pneg %p438
    %p445 = scmp.eq.s32.totalorder %s25, 1
    %p446 = por %p444, %p445
    %p447 = scmp.ne.s32.totalorder %s439, %s442
    %p448 = scmp.eq.s32.totalorder %s25, 0
    %p449 = por %p447, %p448
    %p450 = scmp.ne.s32.totalorder %s439, %s442
    %p451 = scmp.eq.s32.totalorder %s30, 1
    %p452 = por %p450, %p451
    %p453 = scmp.ne.s32.totalorder %s442, %s443
    %p454 = scmp.eq.s32.totalorder %s30, 0
    %p455 = por %p453, %p454
    %p456 = scmp.ne.s32.totalorder %s442, %s443
    %p457 = scmp.eq.s32.totalorder %s31, 1
    %p458 = por %p456, %p457
    %p460 = scmp.ne.s32.totalorder %s443, %s459
    %p461 = scmp.eq.s32.totalorder %s31, 0
    %p462 = por %p460, %p461
    %p463 = scmp.le.s32.totalorder 1, %s25
    %p464 = scmp.lt.s32.totalorder %s25, 3
    %p465 = pnand %p463, %p464
    %p466 = pneg %p465
    // Predicated region
    $region9: #{anycalib_forward.5} parent=5 // pred_check
      _
    $region10: #{anycalib_forward.5} parent=5 // pred_check_branch
      %468 = sbr.rel (%p465) target = $region12
    $region11: #{anycalib_forward.5} parent=5 // pred_region
      %s469 = ssub.s32 %s25, 1
      // Predicated region
      $region13: #{anycalib_forward.5} parent=11 // pred_check
        %p470 = pneg %p72
      $region14: #{anycalib_forward.5} parent=11 // pred_check_branch
        %472 = sbr.rel (%p470) target = $region16
      $region15: #{anycalib_forward.5} parent=11 // pred_region
        _
      $region16: #{anycalib_forward.5} parent=11 // pred_fallthru
        _
      // Predicated region
      $region17: #{anycalib_forward.5} parent=11 // pred_check
        %p473 = pneg %p93
      $region18: #{anycalib_forward.5} parent=11 // pred_check_branch
        %475 = sbr.rel (%p473) target = $region20
      $region19: #{anycalib_forward.5} parent=11 // pred_region
        _
      $region20: #{anycalib_forward.5} parent=11 // pred_fallthru
        _
      // Predicated region
      $region21: #{anycalib_forward.5} parent=11 // pred_check
        %p476 = pneg %p114
      $region22: #{anycalib_forward.5} parent=11 // pred_check_branch
        %478 = sbr.rel (%p476) target = $region24
      $region23: #{anycalib_forward.5} parent=11 // pred_region
        _
      $region24: #{anycalib_forward.5} parent=11 // pred_fallthru
        _
      // Predicated region
      $region25: #{anycalib_forward.5} parent=11 // pred_check
        %p479 = pneg %p135
      $region26: #{anycalib_forward.5} parent=11 // pred_check_branch
        %481 = sbr.rel (%p479) target = $region28
      $region27: #{anycalib_forward.5} parent=11 // pred_region
        _
      $region28: #{anycalib_forward.5} parent=11 // pred_fallthru
        _
      // Predicated region
      $region29: #{anycalib_forward.5} parent=11 // pred_check
        %p482 = pneg %p156
      $region30: #{anycalib_forward.5} parent=11 // pred_check_branch
        %484 = sbr.rel (%p482) target = $region32
      $region31: #{anycalib_forward.5} parent=11 // pred_region
        _
      $region32: #{anycalib_forward.5} parent=11 // pred_fallthru
        _
      // Predicated region
      $region33: #{anycalib_forward.5} parent=11 // pred_check
        %p485 = pneg %p177
      $region34: #{anycalib_forward.5} parent=11 // pred_check_branch
        %487 = sbr.rel (%p485) target = $region36
      $region35: #{anycalib_forward.5} parent=11 // pred_region
        _
      $region36: #{anycalib_forward.5} parent=11 // pred_fallthru
        _
      // Predicated region
      $region37: #{anycalib_forward.5} parent=11 // pred_check
        %p488 = pneg %p198
      $region38: #{anycalib_forward.5} parent=11 // pred_check_branch
        %490 = sbr.rel (%p488) target = $region40
      $region39: #{anycalib_forward.5} parent=11 // pred_region
        _
      $region40: #{anycalib_forward.5} parent=11 // pred_fallthru
        _
      // Predicated region
      $region41: #{anycalib_forward.5} parent=11 // pred_check
        %p491 = pneg %p219
      $region42: #{anycalib_forward.5} parent=11 // pred_check_branch
        %493 = sbr.rel (%p491) target = $region44
      $region43: #{anycalib_forward.5} parent=11 // pred_region
        _
      $region44: #{anycalib_forward.5} parent=11 // pred_fallthru
        _
      // Predicated region
      $region45: #{anycalib_forward.5} parent=11 // pred_check
        %p494 = pneg %p240
      $region46: #{anycalib_forward.5} parent=11 // pred_check_branch
        %496 = sbr.rel (%p494) target = $region48
      $region47: #{anycalib_forward.5} parent=11 // pred_region
        _
      $region48: #{anycalib_forward.5} parent=11 // pred_fallthru
        _
      // Predicated region
      $region49: #{anycalib_forward.5} parent=11 // pred_check
        %p497 = pneg %p261
      $region50: #{anycalib_forward.5} parent=11 // pred_check_branch
        %499 = sbr.rel (%p497) target = $region52
      $region51: #{anycalib_forward.5} parent=11 // pred_region
        _
      $region52: #{anycalib_forward.5} parent=11 // pred_fallthru
        _
      // Predicated region
      $region53: #{anycalib_forward.5} parent=11 // pred_check
        %p500 = pneg %p282
      $region54: #{anycalib_forward.5} parent=11 // pred_check_branch
        %502 = sbr.rel (%p500) target = $region56
      $region55: #{anycalib_forward.5} parent=11 // pred_region
        _
      $region56: #{anycalib_forward.5} parent=11 // pred_fallthru
        _
      // Predicated region
      $region57: #{anycalib_forward.5} parent=11 // pred_check
        %p503 = pneg %p303
      $region58: #{anycalib_forward.5} parent=11 // pred_check_branch
        %505 = sbr.rel (%p503) target = $region60
      $region59: #{anycalib_forward.5} parent=11 // pred_region
        _
      $region60: #{anycalib_forward.5} parent=11 // pred_fallthru
        _
      // Predicated region
      $region61: #{anycalib_forward.5} parent=11 // pred_check
        %p506 = pneg %p324
      $region62: #{anycalib_forward.5} parent=11 // pred_check_branch
        %508 = sbr.rel (%p506) target = $region64
      $region63: #{anycalib_forward.5} parent=11 // pred_region
        _
      $region64: #{anycalib_forward.5} parent=11 // pred_fallthru
        _
      // Predicated region
      $region65: #{anycalib_forward.5} parent=11 // pred_check
        %p509 = pneg %p345
      $region66: #{anycalib_forward.5} parent=11 // pred_check_branch
        %511 = sbr.rel (%p509) target = $region68
      $region67: #{anycalib_forward.5} parent=11 // pred_region
        _
      $region68: #{anycalib_forward.5} parent=11 // pred_fallthru
        _
      // Predicated region
      $region69: #{anycalib_forward.5} parent=11 // pred_check
        %p512 = pneg %p366
      $region70: #{anycalib_forward.5} parent=11 // pred_check_branch
        %514 = sbr.rel (%p512) target = $region72
      $region71: #{anycalib_forward.5} parent=11 // pred_region
        _
      $region72: #{anycalib_forward.5} parent=11 // pred_fallthru
        _
      // Predicated region
      $region73: #{anycalib_forward.5} parent=11 // pred_check
        %p515 = pneg %p387
      $region74: #{anycalib_forward.5} parent=11 // pred_check_branch
        %517 = sbr.rel (%p515) target = $region76
      $region75: #{anycalib_forward.5} parent=11 // pred_region
        _
      $region76: #{anycalib_forward.5} parent=11 // pred_fallthru
        _
      // Predicated region
      $region77: #{anycalib_forward.5} parent=11 // pred_check
        %p518 = pneg %p408
      $region78: #{anycalib_forward.5} parent=11 // pred_check_branch
        %520 = sbr.rel (%p518) target = $region80
      $region79: #{anycalib_forward.5} parent=11 // pred_region
        _
      $region80: #{anycalib_forward.5} parent=11 // pred_fallthru
        _
      // Predicated region
      $region81: #{anycalib_forward.5} parent=11 // pred_check
        %p521 = pneg %p429
      $region82: #{anycalib_forward.5} parent=11 // pred_check_branch
        %523 = sbr.rel (%p521) target = $region84
      $region83: #{anycalib_forward.5} parent=11 // pred_region
        _
      $region84: #{anycalib_forward.5} parent=11 // pred_fallthru
        _
    $region12: #{anycalib_forward.5} parent=5 // pred_fallthru
      _
    %p524 = scmp.lt.s32.totalorder %s25, 2
    // Predicated region
    $region85: #{anycalib_forward.5} parent=5 // pred_check
      %p525 = pneg %p524
    $region86: #{anycalib_forward.5} parent=5 // pred_check_branch
      %527 = sbr.rel (%p525) target = $region88
    $region87: #{anycalib_forward.5} parent=5 // pred_region
      // Predicated region
      $region89: #{anycalib_forward.5} parent=87 // pred_check
        %p528 = pneg %p45
      $region90: #{anycalib_forward.5} parent=87 // pred_check_branch
        %530 = sbr.rel (%p528) target = $region92
      $region91: #{anycalib_forward.5} parent=87 // pred_region
        %p531 = scmp.lt.s32.totalorder %s25, 1
        %s532 = scalar_select %p531, %s25, 1
        %s533 = smul.addr %s532, 4
        %s534 = scalar_lea.vmem %s0, %s533
      $region92: #{anycalib_forward.5} parent=87 // pred_fallthru
        _
    $region88: #{anycalib_forward.5} parent=5 // pred_fallthru
      _
    %p535 = scmp.le.s32.totalorder 1, %s25
    %p536 = scmp.lt.s32.totalorder %s25, 3
    %p537 = pnand %p535, %p536
    %p538 = pneg %p537
    // Predicated region
    $region93: #{anycalib_forward.5} parent=5 // pred_check
      _
    $region94: #{anycalib_forward.5} parent=5 // pred_check_branch
      %540 = sbr.rel (%p537) target = $region96
    $region95: #{anycalib_forward.5} parent=5 // pred_region
      %s541 = ssub.s32 %s25, 1
      %p542 = scmp.lt.s32.totalorder %s30, 1
      %s543 = scalar_select %p542, %s30, 1
      %s544 = smul.addr %s543, 4
      %s545 = scalar_lea.vmem %s0, %s544
      %p546 = pneg %p51
      %p547 = pneg %p48
      %p548 = pneg %p72
      %p549 = pneg %p69
      %p550 = pneg %p93
      %p551 = pneg %p90
      %p552 = pneg %p114
      %p553 = pneg %p111
      %p554 = pneg %p135
      %p555 = pneg %p132
      %p556 = pneg %p156
      %p557 = pneg %p153
      %p558 = pneg %p177
      %p559 = pneg %p174
      %p560 = pneg %p198
      %p561 = pneg %p195
      %p562 = pneg %p219
      %p563 = pneg %p216
      %p564 = pneg %p240
      %p565 = pneg %p237
      %p566 = pneg %p261
      %p567 = pneg %p258
      %p568 = pneg %p282
      %p569 = pneg %p279
      %p570 = pneg %p303
      %p571 = pneg %p300
      %p572 = pneg %p324
      %p573 = pneg %p321
      %p574 = pneg %p345
      %p575 = pneg %p342
      %p576 = pneg %p366
      %p577 = pneg %p363
      %p578 = pneg %p387
      %p579 = pneg %p384
      %p580 = pneg %p408
      %p581 = pneg %p405
      %p582 = pneg %p429
      %p583 = pneg %p426
      %p584 = pneg %p455
      %p585 = pneg %p452
      %p586 = scmp.lt.s32.totalorder %s30, 1
      %s587 = scalar_select %p586, %s30, 1
      %s588 = smul.addr %s587, 8
      %s589 = scalar_lea.vmem %s19, %s588
      %p590 = scmp.lt.s32.totalorder %s30, 1
      %s591 = scalar_select %p590, %s30, 1
      %s592 = smul.addr %s591, 4
      %s593 = scalar_lea.vmem %s0, %s592
      %p594 = scmp.lt.s32.totalorder %s30, 1
      %s595 = scalar_select %p594, %s30, 1
      %s596 = smul.addr %s595, 8
      %s597 = scalar_lea.vmem %s19, %s596
      %v599 = vld [vmem:[%s1] sm:$0x1]
      %v600 = vld [vmem:[%s593] sm:$0xf]
      %v602 = vrot.slane %v600, 7
      %vm604 = vcmask 1040384
      %v605 = vsel %vm604, %v599, %v602
      %v606 = vld [vmem:[%s2] sm:$0x1f]
      %v607 = vadd.f32 %v605, %v606
      %v608 = vld [vmem:[%s3] sm:$0x1]
      %v609 = vld [vmem:[%s4] sm:$0x1]
      %v610 = vld [vmem:[%s12] sm:$0x1]
      %v611 = vld [vmem:[%s13] sm:$0x1]
      %v612 = vld [vmem:[%s14] sm:$0x1]
      %v613 = vld [vmem:[%s15] sm:$0xff]
      %v614 = vld [vmem:[%s15 + $0x8] sm:$0xff]
      %v615 = vld [vmem:[%s15 + $0x10] sm:$0xff]
      %v616 = vld [vmem:[%s15 + $0x18] sm:$0xff]
      %v617 = vld [vmem:[%s15 + $0x20] sm:$0xff]
      %v618 = vld [vmem:[%s15 + $0x28] sm:$0xff]
      %v619 = vld [vmem:[%s15 + $0x30] sm:$0xff]
      %v620 = vld [vmem:[%s15 + $0x38] sm:$0xff]
      %v621 = vld [vmem:[%s16] sm:$0x3]
      %v622 = vld [vmem:[%s17] sm:$0xf]
      %v623 = vld [vmem:[%s17 + $0x4] sm:$0xf]
      %v624 = vld [vmem:[%s17 + $0x8] sm:$0xf]
      %v625 = vld [vmem:[%s17 + $0xc] sm:$0xf]
      %v626 = vld [vmem:[%s17 + $0x10] sm:$0xf]
      %v627 = vld [vmem:[%s17 + $0x14] sm:$0xf]
      %v628 = vld [vmem:[%s17 + $0x18] sm:$0xf]
      %v629 = vld [vmem:[%s17 + $0x1c] sm:$0xf]
      %v630 = vld [vmem:[%s17 + $0x20] sm:$0xf]
      %v631 = vld [vmem:[%s17 + $0x24] sm:$0xf]
      %v632 = vld [vmem:[%s17 + $0x28] sm:$0xf]
      %v633 = vld [vmem:[%s17 + $0x2c] sm:$0xf]
      %v634 = vld [vmem:[%s17 + $0x30] sm:$0xf]
      %v635 = vld [vmem:[%s17 + $0x34] sm:$0xf]
      %v636 = vld [vmem:[%s17 + $0x38] sm:$0xf]
      %v637 = vld [vmem:[%s17 + $0x3c] sm:$0xf]
      %v638 = vld [vmem:[%s17 + $0x40] sm:$0xf]
      %v639 = vld [vmem:[%s17 + $0x44] sm:$0xf]
      %v640 = vld [vmem:[%s17 + $0x48] sm:$0xf]
      %v641 = vld [vmem:[%s17 + $0x4c] sm:$0xf]
      %v642 = vld [vmem:[%s17 + $0x50] sm:$0xf]
      %v643 = vld [vmem:[%s17 + $0x54] sm:$0xf]
      %v644 = vld [vmem:[%s17 + $0x58] sm:$0xf]
      %v645 = vld [vmem:[%s17 + $0x5c] sm:$0xf]
      %v646 = vld [vmem:[%s17 + $0x60] sm:$0xf]
      %v647 = vld [vmem:[%s17 + $0x64] sm:$0xf]
      %v648 = vld [vmem:[%s17 + $0x68] sm:$0xf]
      %v649 = vld [vmem:[%s17 + $0x6c] sm:$0xf]
      %v650 = vld [vmem:[%s17 + $0x70] sm:$0xf]
      %v651 = vld [vmem:[%s17 + $0x74] sm:$0xf]
      %v652 = vld [vmem:[%s17 + $0x78] sm:$0xf]
      %v653 = vld [vmem:[%s17 + $0x7c] sm:$0xf]
      %v654 = vld [vmem:[%s18] sm:$0x1]
      %vm655 = vcmask 520192
      %v656 = vsel %vm655, %v607, 0.0
      %657 = vadd.xlane.f32.xlu0 %v656
      %v658 = vpop.xlane.xlu0 %657
      %v659 = vrcp.pop 64.0
      %v660 = vmul.f32 %v658, %v659
      %v661 = vsub.f32 %v607, %v660
      %v662 = vmul.f32 %v661, %v661
      %v663 = vsel %vm655, %v662, 0.0
      %664 = vadd.xlane.f32.xlu0 %v663
      %v665 = vpop.xlane.xlu0 %664
      %v666 = vmul.f32 %v665, %v659
      %v667 = vadd.f32 %v666, 1e-05
      %v668 = vrsqrt.pop %v667
      %v669 = vmul.f32 %v661, %v668
      %v671 = vlaneseq
      %v672 = vshrl.u32 %v671, 7
      %v673 = vsub.s32 0, %v672
      %v674 = vrot.slane %v608, %v673
      %v676 = vmul.f32 %v669, %v674
      %v678 = vlaneseq
      %v679 = vshrl.u32 %v678, 7
      %v680 = vsub.s32 0, %v679
      %v681 = vrot.slane %v609, %v680
      %v683 = vadd.f32 %v676, %v681
      %v684 = vpack.c.bf16 %v683, %v683
      %v685 = vld [vmem:[%s5] sm:$0xf]
      %v686 = vld [vmem:[%s5 + $0x4] sm:$0xf]
      %v687 = vld [vmem:[%s5 + $0x8] sm:$0xf]
      %v688 = vld [vmem:[%s5 + $0xc] sm:$0xf]
      %v689 = vld [vmem:[%s5 + $0x10] sm:$0xf]
      %v690 = vld [vmem:[%s5 + $0x14] sm:$0xf]
      %v691 = vld [vmem:[%s5 + $0x18] sm:$0xf]
      %v692 = vld [vmem:[%s5 + $0x1c] sm:$0xf]
      %v693 = vld [vmem:[%s6] sm:$0x1]
      %v695 = vlaneseq
      %v696 = vshrl.u32 %v695, 7
      %v697 = vsub.s32 0, %v696
      %v698 = vrot.slane %v693, %v697
      %v708 = vunpack.c.l.b16 %v685
      %v709 = vunpack.c.l.b16 %v686
      %v710 = vunpack.c.l.b16 %v687
      %v711 = vunpack.c.l.b16 %v688
      %v712 = vunpack.c.l.b16 %v689
      %v713 = vunpack.c.l.b16 %v690
      %v714 = vunpack.c.l.b16 %v691
      %v715 = vunpack.c.l.b16 %v692
      %v716 = vpack.c.b16 %v709, %v708
      %v717 = vpack.c.b16 %v711, %v710
      %v718 = vpack.c.b16 %v713, %v712
      %v719 = vpack.c.b16 %v715, %v714
      %vm724 = vcmask 523264
      %v726 = vsel %vm724, %v684, 0
      %728 = vmatprep.subr.bf16.mxu0 0
      %729 = vmatpush1.bf16.msra.mxu0 0
      %730 = vmatprep.subr.bf16.mxu0 0
      %731 = vmatpush1.bf16.msra.mxu0 0
      %732 = vmatprep.subr.bf16.mxu0 0
      %733 = vmatpush1.bf16.msra.mxu0 0
      %734 = vmatprep.subr.bf16.mxu0 0
      %735 = vmatpush1.bf16.msra.mxu0 0
      %736 = vmatprep.subr.bf16.mxu0 0
      %737 = vmatpush1.bf16.msra.mxu0 %v719
      %738 = vmatprep.subr.bf16.mxu0 0
      %739 = vmatpush1.bf16.msra.mxu0 %v718
      %740 = vmatprep.subr.bf16.mxu0 0
      %741 = vmatpush1.bf16.msra.mxu0 %v717
      %742 = vmatprep.subr.bf16.mxu0 0
      %743 = vmatpush1.bf16.msra.mxu0 %v716
      %744 = vmatprep.subr.bf16.mxu0 0
      %745 = vmatpush2.bf16.msra.mxu0 0
      %746 = vmatprep.subr.bf16.mxu0 0
      %747 = vmatpush2.bf16.msra.mxu0 0
      %748 = vmatprep.subr.bf16.mxu0 0
      %749 = vmatpush2.bf16.msra.mxu0 0
      %750 = vmatprep.subr.bf16.mxu0 0
      %751 = vmatpush2.bf16.msra.mxu0 0
      %752 = vmatprep.subr.bf16.mxu0 0
      %753 = vmatpush2.bf16.msra.mxu0 0
      %754 = vmatprep.subr.bf16.mxu0 0
      %755 = vmatpush2.bf16.msra.mxu0 0
      %756 = vmatprep.subr.bf16.mxu0 0
      %757 = vmatpush2.bf16.msra.mxu0 0
      %758 = vmatprep.subr.bf16.mxu0 0
      %759 = vmatpush2.bf16.msra.mxu0 0
      %760 = vmatprep.mubr.bf16.mxu0 0
      %761 = vmatmul.mubr.bf16.gmra.mxu0 %v726
      %v762 = vpop.f32.mrf.mxu0
      %v763 = vadd.f32 %v698, %v762
      %v764 = vpop.f32.mrf.mxu0
      %v765 = vpop.f32.mrf.mxu0
      %v766 = vpop.f32.mrf.mxu0
      %767 = vdwg.mxu0
      %v768 = vld [vmem:[%s7] sm:$0xf]
      %v769 = vld [vmem:[%s7 + $0x4] sm:$0xf]
      %v770 = vld [vmem:[%s7 + $0x8] sm:$0xf]
      %v771 = vld [vmem:[%s7 + $0xc] sm:$0xf]
      %v772 = vld [vmem:[%s7 + $0x10] sm:$0xf]
      %v773 = vld [vmem:[%s7 + $0x14] sm:$0xf]
      %v774 = vld [vmem:[%s7 + $0x18] sm:$0xf]
      %v775 = vld [vmem:[%s7 + $0x1c] sm:$0xf]
      %v776 = vld [vmem:[%s8] sm:$0x1]
      %v778 = vlaneseq
      %v779 = vshrl.u32 %v778, 7
      %v780 = vsub.s32 0, %v779
      %v781 = vrot.slane %v776, %v780
      %v791 = vunpack.c.l.b16 %v768
      %v792 = vunpack.c.l.b16 %v769
      %v793 = vunpack.c.l.b16 %v770
      %v794 = vunpack.c.l.b16 %v771
      %v795 = vunpack.c.l.b16 %v772
      %v796 = vunpack.c.l.b16 %v773
      %v797 = vunpack.c.l.b16 %v774
      %v798 = vunpack.c.l.b16 %v775
      %v799 = vpack.c.b16 %v792, %v791
      %v800 = vpack.c.b16 %v794, %v793
      %v801 = vpack.c.b16 %v796, %v795
      %v802 = vpack.c.b16 %v798, %v797
      %807 = vmatprep.subr.bf16.mxu0 0
      %808 = vmatpush1.bf16.msra.mxu0 0
      %809 = vmatprep.subr.bf16.mxu0 0
      %810 = vmatpush1.bf16.msra.mxu0 0
      %811 = vmatprep.subr.bf16.mxu0 0
      %812 = vmatpush1.bf16.msra.mxu0 0
      %813 = vmatprep.subr.bf16.mxu0 0
      %814 = vmatpush1.bf16.msra.mxu0 0
      %815 = vmatprep.subr.bf16.mxu0 0
      %816 = vmatpush1.bf16.msra.mxu0 %v802
      %817 = vmatprep.subr.bf16.mxu0 0
      %818 = vmatpush1.bf16.msra.mxu0 %v801
      %819 = vmatprep.subr.bf16.mxu0 0
      %820 = vmatpush1.bf16.msra.mxu0 %v800
      %821 = vmatprep.subr.bf16.mxu0 0
      %822 = vmatpush1.bf16.msra.mxu0 %v799
      %823 = vmatprep.subr.bf16.mxu0 0
      %824 = vmatpush2.bf16.msra.mxu0 0
      %825 = vmatprep.subr.bf16.mxu0 0
      %826 = vmatpush2.bf16.msra.mxu0 0
      %827 = vmatprep.subr.bf16.mxu0 0
      %828 = vmatpush2.bf16.msra.mxu0 0
      %829 = vmatprep.subr.bf16.mxu0 0
      %830 = vmatpush2.bf16.msra.mxu0 0
      %831 = vmatprep.subr.bf16.mxu0 0
      %832 = vmatpush2.bf16.msra.mxu0 0
      %833 = vmatprep.subr.bf16.mxu0 0
      %834 = vmatpush2.bf16.msra.mxu0 0
      %835 = vmatprep.subr.bf16.mxu0 0
      %836 = vmatpush2.bf16.msra.mxu0 0
      %837 = vmatprep.subr.bf16.mxu0 0
      %838 = vmatpush2.bf16.msra.mxu0 0
      %839 = vmatprep.mubr.bf16.mxu0 0
      %840 = vmatmul.mubr.bf16.gmra.mxu0 %v726
      %v841 = vpop.f32.mrf.mxu0
      %v842 = vadd.f32 %v781, %v841
      %v843 = vpop.f32.mrf.mxu0
      %v844 = vpop.f32.mrf.mxu0
      %v845 = vpop.f32.mrf.mxu0
      %846 = vdwg.mxu0
      %v847 = vld [vmem:[%s9] sm:$0xf]
      %v848 = vld [vmem:[%s9 + $0x4] sm:$0xf]
      %v849 = vld [vmem:[%s9 + $0x8] sm:$0xf]
      %v850 = vld [vmem:[%s9 + $0xc] sm:$0xf]
      %v851 = vld [vmem:[%s9 + $0x10] sm:$0xf]
      %v852 = vld [vmem:[%s9 + $0x14] sm:$0xf]
      %v853 = vld [vmem:[%s9 + $0x18] sm:$0xf]
      %v854 = vld [vmem:[%s9 + $0x1c] sm:$0xf]
      %v855 = vld [vmem:[%s10] sm:$0x1]
      %v857 = vlaneseq
      %v858 = vshrl.u32 %v857, 7
      %v859 = vsub.s32 0, %v858
      %v860 = vrot.slane %v855, %v859
      %v870 = vunpack.c.l.b16 %v847
      %v871 = vunpack.c.l.b16 %v848
      %v872 = vunpack.c.l.b16 %v849
      %v873 = vunpack.c.l.b16 %v850
      %v874 = vunpack.c.l.b16 %v851
      %v875 = vunpack.c.l.b16 %v852
      %v876 = vunpack.c.l.b16 %v853
      %v877 = vunpack.c.l.b16 %v854
      %v878 = vpack.c.b16 %v871, %v870
      %v879 = vpack.c.b16 %v873, %v872
      %v880 = vpack.c.b16 %v875, %v874
      %v881 = vpack.c.b16 %v877, %v876
      %886 = vmatprep.subr.bf16.mxu0 0
      %887 = vmatpush1.bf16.msra.mxu0 0
      %888 = vmatprep.subr.bf16.mxu0 0
      %889 = vmatpush1.bf16.msra.mxu0 0
      %890 = vmatprep.subr.bf16.mxu0 0
      %891 = vmatpush1.bf16.msra.mxu0 0
      %892 = vmatprep.subr.bf16.mxu0 0
      %893 = vmatpush1.bf16.msra.mxu0 0
      %894 = vmatprep.subr.bf16.mxu0 0
      %895 = vmatpush1.bf16.msra.mxu0 %v881
      %896 = vmatprep.subr.bf16.mxu0 0
      %897 = vmatpush1.bf16.msra.mxu0 %v880
      %898 = vmatprep.subr.bf16.mxu0 0
      %899 = vmatpush1.bf16.msra.mxu0 %v879
      %900 = vmatprep.subr.bf16.mxu0 0
      %901 = vmatpush1.bf16.msra.mxu0 %v878
      %902 = vmatprep.subr.bf16.mxu0 0
      %903 = vmatpush2.bf16.msra.mxu0 0
      %904 = vmatprep.subr.bf16.mxu0 0
      %905 = vmatpush2.bf16.msra.mxu0 0
      %906 = vmatprep.subr.bf16.mxu0 0
      %907 = vmatpush2.bf16.msra.mxu0 0
      %908 = vmatprep.subr.bf16.mxu0 0
      %909 = vmatpush2.bf16.msra.mxu0 0
      %910 = vmatprep.subr.bf16.mxu0 0
      %911 = vmatpush2.bf16.msra.mxu0 0
      %912 = vmatprep.subr.bf16.mxu0 0
      %913 = vmatpush2.bf16.msra.mxu0 0
      %914 = vmatprep.subr.bf16.mxu0 0
      %915 = vmatpush2.bf16.msra.mxu0 0
      %916 = vmatprep.subr.bf16.mxu0 0
      %917 = vmatpush2.bf16.msra.mxu0 0
      %918 = vmatprep.mubr.bf16.mxu0 0
      %919 = vmatmul.mubr.bf16.gmra.mxu0 %v726
      %v920 = vpop.f32.mrf.mxu0
      %v921 = vadd.f32 %v860, %v920
      %v922 = vpop.f32.mrf.mxu0
      %v923 = vpop.f32.mrf.mxu0
      %v924 = vpop.f32.mrf.mxu0
      %925 = vdwg.mxu0
      %v926 = vpack.c.bf16 %v763, %v763
      %v927 = vpack.c.bf16 %v842, %v842
      %vm928 = vcmask 130048
      %v930 = vsel %vm928, %v926, 0
      %v933 = vsel %vm928, %v927, 0
      %935 = vmatprep.subr.bf16.mxu0 0
      %936 = vmatpush1.bf16.xpose.msra.mxu0 0
      %937 = vmatprep.subr.bf16.mxu0 0
      %938 = vmatpush1.bf16.xpose.msra.mxu0 0
      %939 = vmatprep.subr.bf16.mxu0 0
      %940 = vmatpush1.bf16.xpose.msra.mxu0 0
      %941 = vmatprep.subr.bf16.mxu0 0
      %942 = vmatpush1.bf16.xpose.msra.mxu0 0
      %943 = vmatprep.subr.bf16.mxu0 0
      %944 = vmatpush1.bf16.xpose.msra.mxu0 0
      %945 = vmatprep.subr.bf16.mxu0 0
      %946 = vmatpush1.bf16.xpose.msra.mxu0 0
      %947 = vmatprep.subr.bf16.mxu0 0
      %948 = vmatpush1.bf16.xpose.msra.mxu0 0
      %949 = vmatprep.subr.bf16.mxu0 0
      %950 = vmatpush1.bf16.xpose.msra.mxu0 %v933
      %951 = vmatprep.subr.bf16.mxu0 0
      %952 = vmatpush2.bf16.xpose.msra.mxu0 0
      %953 = vmatprep.subr.bf16.mxu0 0
      %954 = vmatpush2.bf16.xpose.msra.mxu0 0
      %955 = vmatprep.subr.bf16.mxu0 0
      %956 = vmatpush2.bf16.xpose.msra.mxu0 0
      %957 = vmatprep.subr.bf16.mxu0 0
      %958 = vmatpush2.bf16.xpose.msra.mxu0 0
      %959 = vmatprep.subr.bf16.mxu0 0
      %960 = vmatpush2.bf16.xpose.msra.mxu0 0
      %961 = vmatprep.subr.bf16.mxu0 0
      %962 = vmatpush2.bf16.xpose.msra.mxu0 0
      %963 = vmatprep.subr.bf16.mxu0 0
      %964 = vmatpush2.bf16.xpose.msra.mxu0 0
      %965 = vmatprep.subr.bf16.mxu0 0
      %966 = vmatpush2.bf16.xpose.msra.mxu0 0
      %967 = vmatprep.mubr.bf16.mxu0 0
      %968 = vmatmul.mubr.bf16.gmra.mxu0 %v930
      %v969 = vpop.f32.mrf.mxu0
      %v970 = vadd.f32 0.0, %v969
      %v971 = vpop.f32.mrf.mxu0
      %v972 = vpop.f32.mrf.mxu0
      %v973 = vpop.f32.mrf.mxu0
      %974 = vdwg.mxu0
      %vm975 = vcmask 36864
      %v976 = vsel %vm975, %v970, -inf
      %977 = vmax.xlane.f32.xlu0 %v976
      %v978 = vpop.xlane.xlu0 %977
      %v979 = vsub.f32 %v970, %v978
      %v980 = vmul.f32 %v979, 1.442695
      %v981 = vpow.pop %v980
      %v982 = vsel %vm975, %v981, 0.0
      %983 = vadd.xlane.f32.xlu0 %v982
      %v984 = vpop.xlane.xlu0 %983
      %v985 = vrcp.pop %v984
      %v986 = vmul.f32 %v981, %v985
      %v987 = vpack.c.bf16 %v986, %v986
      %v988 = vpack.c.bf16 %v921, %v921
      %vm989 = vcmask 39936
      %v991 = vsel %vm989, %v987, 0
      %vm993 = vcmask 1041408
      %vm994 = vcmask 1042432
      %v995 = vsel %vm993, 4294967295, 65535
      %v996 = vsel %vm994, %v995, 0
      %v998 = vand.u32 %v988, %v996
      %1000 = vmatprep.subr.bf16.mxu0 0
      %1001 = vmatpush1.bf16.msra.mxu0 0
      %1002 = vmatprep.subr.bf16.mxu0 0
      %1003 = vmatpush1.bf16.msra.mxu0 0
      %1004 = vmatprep.subr.bf16.mxu0 0
      %1005 = vmatpush1.bf16.msra.mxu0 0
      %1006 = vmatprep.subr.bf16.mxu0 0
      %1007 = vmatpush1.bf16.msra.mxu0 0
      %1008 = vmatprep.subr.bf16.mxu0 0
      %1009 = vmatpush1.bf16.msra.mxu0 0
      %1010 = vmatprep.subr.bf16.mxu0 0
      %1011 = vmatpush1.bf16.msra.mxu0 0
      %1012 = vmatprep.subr.bf16.mxu0 0
      %1013 = vmatpush1.bf16.msra.mxu0 0
      %1014 = vmatprep.subr.bf16.mxu0 0
      %1015 = vmatpush1.bf16.msra.mxu0 %v998
      %1016 = vmatprep.subr.bf16.mxu0 0
      %1017 = vmatpush2.bf16.msra.mxu0 0
      %1018 = vmatprep.subr.bf16.mxu0 0
      %1019 = vmatpush2.bf16.msra.mxu0 0
      %1020 = vmatprep.subr.bf16.mxu0 0
      %1021 = vmatpush2.bf16.msra.mxu0 0
      %1022 = vmatprep.subr.bf16.mxu0 0
      %1023 = vmatpush2.bf16.msra.mxu0 0
      %1024 = vmatprep.subr.bf16.mxu0 0
      %1025 = vmatpush2.bf16.msra.mxu0 0
      %1026 = vmatprep.subr.bf16.mxu0 0
      %1027 = vmatpush2.bf16.msra.mxu0 0
      %1028 = vmatprep.subr.bf16.mxu0 0
      %1029 = vmatpush2.bf16.msra.mxu0 0
      %1030 = vmatprep.subr.bf16.mxu0 0
      %1031 = vmatpush2.bf16.msra.mxu0 0
      %1032 = vmatprep.mubr.bf16.mxu0 0
      %1033 = vmatmul.mubr.bf16.gmra.mxu0 %v991
      %v1034 = vpop.f32.mrf.mxu0
      %v1035 = vadd.f32 0.0, %v1034
      %v1036 = vpop.f32.mrf.mxu0
      %v1037 = vpop.f32.mrf.mxu0
      %v1038 = vpop.f32.mrf.mxu0
      %1039 = vdwg.mxu0
      %v1040 = vpack.c.bf16 %v1035, %v1035
      %v1041 = vld [vmem:[%s11] sm:$0xf]
      %v1042 = vld [vmem:[%s11 + $0x4] sm:$0xf]
      %s1043 = scalar_lea.vmem %s5, 32
      %v1044 = vld [vmem:[%s1043] sm:$0xf]
      %v1045 = vld [vmem:[%s1043 + $0x4] sm:$0xf]
      %v1046 = vld [vmem:[%s1043 + $0x8] sm:$0xf]
      %v1047 = vld [vmem:[%s1043 + $0xc] sm:$0xf]
      %v1048 = vld [vmem:[%s1043 + $0x10] sm:$0xf]
      %v1049 = vld [vmem:[%s1043 + $0x14] sm:$0xf]
      %v1050 = vld [vmem:[%s1043 + $0x18] sm:$0xf]
      %v1051 = vld [vmem:[%s1043 + $0x1c] sm:$0xf]
      %s1052 = scalar_lea.vmem %s6, 1
      %v1053 = vld [vmem:[%s1052] sm:$0x1]
      %v1055 = vlaneseq
      %v1056 = vshrl.u32 %v1055, 7
      %v1057 = vsub.s32 0, %v1056
      %v1058 = vrot.slane %v1053, %v1057
      %v1068 = vunpack.c.l.b16 %v1044
      %v1069 = vunpack.c.l.b16 %v1045
      %v1070 = vunpack.c.l.b16 %v1046
      %v1071 = vunpack.c.l.b16 %v1047
      %v1072 = vunpack.c.l.b16 %v1048
      %v1073 = vunpack.c.l.b16 %v1049
      %v1074 = vunpack.c.l.b16 %v1050
      %v1075 = vunpack.c.l.b16 %v1051
      %v1076 = vpack.c.b16 %v1069, %v1068
      %v1077 = vpack.c.b16 %v1071, %v1070
      %v1078 = vpack.c.b16 %v1073, %v1072
      %v1079 = vpack.c.b16 %v1075, %v1074
      %1084 = vmatprep.subr.bf16.mxu0 0
      %1085 = vmatpush1.bf16.msra.mxu0 0
      %1086 = vmatprep.subr.bf16.mxu0 0
      %1087 = vmatpush1.bf16.msra.mxu0 0
      %1088 = vmatprep.subr.bf16.mxu0 0
      %1089 = vmatpush1.bf16.msra.mxu0 0
      %1090 = vmatprep.subr.bf16.mxu0 0
      %1091 = vmatpush1.bf16.msra.mxu0 0
      %1092 = vmatprep.subr.bf16.mxu0 0
      %1093 = vmatpush1.bf16.msra.mxu0 %v1079
      %1094 = vmatprep.subr.bf16.mxu0 0
      %1095 = vmatpush1.bf16.msra.mxu0 %v1078
      %1096 = vmatprep.subr.bf16.mxu0 0
      %1097 = vmatpush1.bf16.msra.mxu0 %v1077
      %1098 = vmatprep.subr.bf16.mxu0 0
      %1099 = vmatpush1.bf16.msra.mxu0 %v1076
      %1100 = vmatprep.subr.bf16.mxu0 0
      %1101 = vmatpush2.bf16.msra.mxu0 0
      %1102 = vmatprep.subr.bf16.mxu0 0
      %1103 = vmatpush2.bf16.msra.mxu0 0
      %1104 = vmatprep.subr.bf16.mxu0 0
      %1105 = vmatpush2.bf16.msra.mxu0 0
      %1106 = vmatprep.subr.bf16.mxu0 0
      %1107 = vmatpush2.bf16.msra.mxu0 0
      %1108 = vmatprep.subr.bf16.mxu0 0
      %1109 = vmatpush2.bf16.msra.mxu0 0
      %1110 = vmatprep.subr.bf16.mxu0 0
      %1111 = vmatpush2.bf16.msra.mxu0 0
      %1112 = vmatprep.subr.bf16.mxu0 0
      %1113 = vmatpush2.bf16.msra.mxu0 0
      %1114 = vmatprep.subr.bf16.mxu0 0
      %1115 = vmatpush2.bf16.msra.mxu0 0
      %1116 = vmatprep.mubr.bf16.mxu0 0
      %1117 = vmatmul.mubr.bf16.gmra.mxu0 %v726
      %v1118 = vpop.f32.mrf.mxu0
      %v1119 = vadd.f32 %v1058, %v1118
      %v1120 = vpop.f32.mrf.mxu0
      %v1121 = vpop.f32.mrf.mxu0
      %v1122 = vpop.f32.mrf.mxu0
      %1123 = vdwg.mxu0
      %s1124 = scalar_lea.vmem %s7, 32
      %v1125 = vld [vmem:[%s1124] sm:$0xf]
      %v1126 = vld [vmem:[%s1124 + $0x4] sm:$0xf]
      %v1127 = vld [vmem:[%s1124 + $0x8] sm:$0xf]
      %v1128 = vld [vmem:[%s1124 + $0xc] sm:$0xf]
      %v1129 = vld [vmem:[%s1124 + $0x10] sm:$0xf]
      %v1130 = vld [vmem:[%s1124 + $0x14] sm:$0xf]
      %v1131 = vld [vmem:[%s1124 + $0x18] sm:$0xf]
      %v1132 = vld [vmem:[%s1124 + $0x1c] sm:$0xf]
      %s1133 = scalar_lea.vmem %s8, 1
      %v1134 = vld [vmem:[%s1133] sm:$0x1]
      %v1136 = vlaneseq
      %v1137 = vshrl.u32 %v1136, 7
      %v1138 = vsub.s32 0, %v1137
      %v1139 = vrot.slane %v1134, %v1138
      %v1149 = vunpack.c.l.b16 %v1125
      %v1150 = vunpack.c.l.b16 %v1126
      %v1151 = vunpack.c.l.b16 %v1127
      %v1152 = vunpack.c.l.b16 %v1128
      %v1153 = vunpack.c.l.b16 %v1129
      %v1154 = vunpack.c.l.b16 %v1130
      %v1155 = vunpack.c.l.b16 %v1131
      %v1156 = vunpack.c.l.b16 %v1132
      %v1157 = vpack.c.b16 %v1150, %v1149
      %v1158 = vpack.c.b16 %v1152, %v1151
      %v1159 = vpack.c.b16 %v1154, %v1153
      %v1160 = vpack.c.b16 %v1156, %v1155
      %1165 = vmatprep.subr.bf16.mxu0 0
      %1166 = vmatpush1.bf16.msra.mxu0 0
      %1167 = vmatprep.subr.bf16.mxu0 0
      %1168 = vmatpush1.bf16.msra.mxu0 0
      %1169 = vmatprep.subr.bf16.mxu0 0
      %1170 = vmatpush1.bf16.msra.mxu0 0
      %1171 = vmatprep.subr.bf16.mxu0 0
      %1172 = vmatpush1.bf16.msra.mxu0 0
      %1173 = vmatprep.subr.bf16.mxu0 0
      %1174 = vmatpush1.bf16.msra.mxu0 %v1160
      %1175 = vmatprep.subr.bf16.mxu0 0
      %1176 = vmatpush1.bf16.msra.mxu0 %v1159
      %1177 = vmatprep.subr.bf16.mxu0 0
      %1178 = vmatpush1.bf16.msra.mxu0 %v1158
      %1179 = vmatprep.subr.bf16.mxu0 0
      %1180 = vmatpush1.bf16.msra.mxu0 %v1157
      %1181 = vmatprep.subr.bf16.mxu0 0
      %1182 = vmatpush2.bf16.msra.mxu0 0
      %1183 = vmatprep.subr.bf16.mxu0 0
      %1184 = vmatpush2.bf16.msra.mxu0 0
      %1185 = vmatprep.subr.bf16.mxu0 0
      %1186 = vmatpush2.bf16.msra.mxu0 0
      %1187 = vmatprep.subr.bf16.mxu0 0
      %1188 = vmatpush2.bf16.msra.mxu0 0
      %1189 = vmatprep.subr.bf16.mxu0 0
      %1190 = vmatpush2.bf16.msra.mxu0 0
      %1191 = vmatprep.subr.bf16.mxu0 0
      %1192 = vmatpush2.bf16.msra.mxu0 0
      %1193 = vmatprep.subr.bf16.mxu0 0
      %1194 = vmatpush2.bf16.msra.mxu0 0
      %1195 = vmatprep.subr.bf16.mxu0 0
      %1196 = vmatpush2.bf16.msra.mxu0 0
      %1197 = vmatprep.mubr.bf16.mxu0 0
      %1198 = vmatmul.mubr.bf16.gmra.mxu0 %v726
      %v1199 = vpop.f32.mrf.mxu0
      %v1200 = vadd.f32 %v1139, %v1199
      %v1201 = vpop.f32.mrf.mxu0
      %v1202 = vpop.f32.mrf.mxu0
      %v1203 = vpop.f32.mrf.mxu0
      %1204 = vdwg.mxu0
      %s1205 = scalar_lea.vmem %s9, 32
      %v1206 = vld [vmem:[%s1205] sm:$0xf]
      %v1207 = vld [vmem:[%s1205 + $0x4] sm:$0xf]
      %v1208 = vld [vmem:[%s1205 + $0x8] sm:$0xf]
      %v1209 = vld [vmem:[%s1205 + $0xc] sm:$0xf]
      %v1210 = vld [vmem:[%s1205 + $0x10] sm:$0xf]
      %v1211 = vld [vmem:[%s1205 + $0x14] sm:$0xf]
      %v1212 = vld [vmem:[%s1205 + $0x18] sm:$0xf]
      %v1213 = vld [vmem:[%s1205 + $0x1c] sm:$0xf]
      %s1214 = scalar_lea.vmem %s10, 1
      %v1215 = vld [vmem:[%s1214] sm:$0x1]
      %v1217 = vlaneseq
      %v1218 = vshrl.u32 %v1217, 7
      %v1219 = vsub.s32 0, %v1218
      %v1220 = vrot.slane %v1215, %v1219
      %v1230 = vunpack.c.l.b16 %v1206
      %v1231 = vunpack.c.l.b16 %v1207
      %v1232 = vunpack.c.l.b16 %v1208
      %v1233 = vunpack.c.l.b16 %v1209
      %v1234 = vunpack.c.l.b16 %v1210
      %v1235 = vunpack.c.l.b16 %v1211
      %v1236 = vunpack.c.l.b16 %v1212
      %v1237 = vunpack.c.l.b16 %v1213
      %v1238 = vpack.c.b16 %v1231, %v1230
      %v1239 = vpack.c.b16 %v1233, %v1232
      %v1240 = vpack.c.b16 %v1235, %v1234
      %v1241 = vpack.c.b16 %v1237, %v1236
      %1246 = vmatprep.subr.bf16.mxu0 0
      %1247 = vmatpush1.bf16.msra.mxu0 0
      %1248 = vmatprep.subr.bf16.mxu0 0
      %1249 = vmatpush1.bf16.msra.mxu0 0
      %1250 = vmatprep.subr.bf16.mxu0 0
      %1251 = vmatpush1.bf16.msra.mxu0 0
      %1252 = vmatprep.subr.bf16.mxu0 0
      %1253 = vmatpush1.bf16.msra.mxu0 0
      %1254 = vmatprep.subr.bf16.mxu0 0
      %1255 = vmatpush1.bf16.msra.mxu0 %v1241
      %1256 = vmatprep.subr.bf16.mxu0 0
      %1257 = vmatpush1.bf16.msra.mxu0 %v1240
      %1258 = vmatprep.subr.bf16.mxu0 0
      %1259 = vmatpush1.bf16.msra.mxu0 %v1239
      %1260 = vmatprep.subr.bf16.mxu0 0
      %1261 = vmatpush1.bf16.msra.mxu0 %v1238
      %1262 = vmatprep.subr.bf16.mxu0 0
      %1263 = vmatpush2.bf16.msra.mxu0 0
      %1264 = vmatprep.subr.bf16.mxu0 0
      %1265 = vmatpush2.bf16.msra.mxu0 0
      %1266 = vmatprep.subr.bf16.mxu0 0
      %1267 = vmatpush2.bf16.msra.mxu0 0
      %1268 = vmatprep.subr.bf16.mxu0 0
      %1269 = vmatpush2.bf16.msra.mxu0 0
      %1270 = vmatprep.subr.bf16.mxu0 0
      %1271 = vmatpush2.bf16.msra.mxu0 0
      %1272 = vmatprep.subr.bf16.mxu0 0
      %1273 = vmatpush2.bf16.msra.mxu0 0
      %1274 = vmatprep.subr.bf16.mxu0 0
      %1275 = vmatpush2.bf16.msra.mxu0 0
      %1276 = vmatprep.subr.bf16.mxu0 0
      %1277 = vmatpush2.bf16.msra.mxu0 0
      %1278 = vmatprep.mubr.bf16.mxu0 0
      %1279 = vmatmul.mubr.bf16.gmra.mxu0 %v726
      %v1280 = vpop.f32.mrf.mxu0
      %v1281 = vadd.f32 %v1220, %v1280
      %v1282 = vpop.f32.mrf.mxu0
      %v1283 = vpop.f32.mrf.mxu0
      %v1284 = vpop.f32.mrf.mxu0
      %1285 = vdwg.mxu0
      %v1286 = vpack.c.bf16 %v1119, %v1119
      %v1287 = vpack.c.bf16 %v1200, %v1200
      %v1289 = vsel %vm928, %v1286, 0
      %v1292 = vsel %vm928, %v1287, 0
      %1294 = vmatprep.subr.bf16.mxu0 0
      %1295 = vmatpush1.bf16.xpose.msra.mxu0 0
      %1296 = vmatprep.subr.bf16.mxu0 0
      %1297 = vmatpush1.bf16.xpose.msra.mxu0 0
      %1298 = vmatprep.subr.bf16.mxu0 0
      %1299 = vmatpush1.bf16.xpose.msra.mxu0 0
      %1300 = vmatprep.subr.bf16.mxu0 0
      %1301 = vmatpush1.bf16.xpose.msra.mxu0 0
      %1302 = vmatprep.subr.bf16.mxu0 0
      %1303 = vmatpush1.bf16.xpose.msra.mxu0 0
      %1304 = vmatprep.subr.bf16.mxu0 0
      %1305 = vmatpush1.bf16.xpose.msra.mxu0 0
      %1306 = vmatprep.subr.bf16.mxu0 0
      %1307 = vmatpush1.bf16.xpose.msra.mxu0 0
      %1308 = vmatprep.subr.bf16.mxu0 0
      %1309 = vmatpush1.bf16.xpose.msra.mxu0 %v1292
      %1310 = vmatprep.subr.bf16.mxu0 0
      %1311 = vmatpush2.bf16.xpose.msra.mxu0 0
      %1312 = vmatprep.subr.bf16.mxu0 0
      %1313 = vmatpush2.bf16.xpose.msra.mxu0 0
      %1314 = vmatprep.subr.bf16.mxu0 0
      %1315 = vmatpush2.bf16.xpose.msra.mxu0 0
      %1316 = vmatprep.subr.bf16.mxu0 0
      %1317 = vmatpush2.bf16.xpose.msra.mxu0 0
      %1318 = vmatprep.subr.bf16.mxu0 0
      %1319 = vmatpush2.bf16.xpose.msra.mxu0 0
      %1320 = vmatprep.subr.bf16.mxu0 0
      %1321 = vmatpush2.bf16.xpose.msra.mxu0 0
      %1322 = vmatprep.subr.bf16.mxu0 0
      %1323 = vmatpush2.bf16.xpose.msra.mxu0 0
      %1324 = vmatprep.subr.bf16.mxu0 0
      %1325 = vmatpush2.bf16.xpose.msra.mxu0 0
      %1326 = vmatprep.mubr.bf16.mxu0 0
      %1327 = vmatmul.mubr.bf16.gmra.mxu0 %v1289
      %v1328 = vpop.f32.mrf.mxu0
      %v1329 = vadd.f32 0.0, %v1328
      %v1330 = vpop.f32.mrf.mxu0
      %v1331 = vpop.f32.mrf.mxu0
      %v1332 = vpop.f32.mrf.mxu0
      %1333 = vdwg.mxu0
      %v1334 = vsel %vm975, %v1329, -inf
      %1335 = vmax.xlane.f32.xlu0 %v1334
      %v1336 = vpop.xlane.xlu0 %1335
      %v1337 = vsub.f32 %v1329, %v1336
      %v1338 = vmul.f32 %v1337, 1.442695
      %v1339 = vpow.pop %v1338
      %v1340 = vsel %vm975, %v1339, 0.0
      %1341 = vadd.xlane.f32.xlu0 %v1340
      %v1342 = vpop.xlane.xlu0 %1341
      %v1343 = vrcp.pop %v1342
      %v1344 = vmul.f32 %v1339, %v1343
      %v1345 = vpack.c.bf16 %v1344, %v1344
      %v1346 = vpack.c.bf16 %v1281, %v1281
      %v1348 = vsel %vm989, %v1345, 0
      %v1351 = vand.u32 %v1346, %v996
      %1353 = vmatprep.subr.bf16.mxu0 0
      %1354 = vmatpush1.bf16.msra.mxu0 0
      %1355 = vmatprep.subr.bf16.mxu0 0
      %1356 = vmatpush1.bf16.msra.mxu0 0
      %1357 = vmatprep.subr.bf16.mxu0 0
      %1358 = vmatpush1.bf16.msra.mxu0 0
      %1359 = vmatprep.subr.bf16.mxu0 0
      %1360 = vmatpush1.bf16.msra.mxu0 0
      %1361 = vmatprep.subr.bf16.mxu0 0
      %1362 = vmatpush1.bf16.msra.mxu0 0
      %1363 = vmatprep.subr.bf16.mxu0 0
      %1364 = vmatpush1.bf16.msra.mxu0 0
      %1365 = vmatprep.subr.bf16.mxu0 0
      %1366 = vmatpush1.bf16.msra.mxu0 0
      %1367 = vmatprep.subr.bf16.mxu0 0
      %1368 = vmatpush1.bf16.msra.mxu0 %v1351
      %1369 = vmatprep.subr.bf16.mxu0 0
      %1370 = vmatpush2.bf16.msra.mxu0 0
      %1371 = vmatprep.subr.bf16.mxu0 0
      %1372 = vmatpush2.bf16.msra.mxu0 0
      %1373 = vmatprep.subr.bf16.mxu0 0
      %1374 = vmatpush2.bf16.msra.mxu0 0
      %1375 = vmatprep.subr.bf16.mxu0 0
      %1376 = vmatpush2.bf16.msra.mxu0 0
      %1377 = vmatprep.subr.bf16.mxu0 0
      %1378 = vmatpush2.bf16.msra.mxu0 0
      %1379 = vmatprep.subr.bf16.mxu0 0
      %1380 = vmatpush2.bf16.msra.mxu0 0
      %1381 = vmatprep.subr.bf16.mxu0 0
      %1382 = vmatpush2.bf16.msra.mxu0 0
      %1383 = vmatprep.subr.bf16.mxu0 0
      %1384 = vmatpush2.bf16.msra.mxu0 0
      %1385 = vmatprep.mubr.bf16.mxu0 0
      %1386 = vmatmul.mubr.bf16.gmra.mxu0 %v1348
      %v1387 = vpop.f32.mrf.mxu0
      %v1388 = vadd.f32 0.0, %v1387
      %v1389 = vpop.f32.mrf.mxu0
      %v1390 = vpop.f32.mrf.mxu0
      %v1391 = vpop.f32.mrf.mxu0
      %1392 = vdwg.mxu0
      %v1393 = vpack.c.bf16 %v1388, %v1388
      %s1394 = scalar_lea.vmem %s11, 8
      %v1395 = vld [vmem:[%s1394] sm:$0xf]
      %v1396 = vld [vmem:[%s1394 + $0x4] sm:$0xf]
      %v1399 = vunpack.c.l.b16 %v1395
      %v1400 = vunpack.c.l.b16 %v1396
      %v1401 = vpack.c.b16 %v1400, %v1399
      %v1404 = vsel %vm928, %v1393, 0
      %1406 = vmatprep.subr.bf16.mxu0 0
      %1407 = vmatpush1.bf16.msra.mxu0 0
      %1408 = vmatprep.subr.bf16.mxu0 0
      %1409 = vmatpush1.bf16.msra.mxu0 0
      %1410 = vmatprep.subr.bf16.mxu0 0
      %1411 = vmatpush1.bf16.msra.mxu0 0
      %1412 = vmatprep.subr.bf16.mxu0 0
      %1413 = vmatpush1.bf16.msra.mxu0 0
      %1414 = vmatprep.subr.bf16.mxu0 0
      %1415 = vmatpush1.bf16.msra.mxu0 0
      %1416 = vmatprep.subr.bf16.mxu0 0
      %1417 = vmatpush1.bf16.msra.mxu0 0
      %1418 = vmatprep.subr.bf16.mxu0 0
      %1419 = vmatpush1.bf16.msra.mxu0 0
      %1420 = vmatprep.subr.bf16.mxu0 0
      %1421 = vmatpush1.bf16.msra.mxu0 %v1401
      %1422 = vmatprep.subr.bf16.mxu0 0
      %1423 = vmatpush2.bf16.msra.mxu0 0
      %1424 = vmatprep.subr.bf16.mxu0 0
      %1425 = vmatpush2.bf16.msra.mxu0 0
      %1426 = vmatprep.subr.bf16.mxu0 0
      %1427 = vmatpush2.bf16.msra.mxu0 0
      %1428 = vmatprep.subr.bf16.mxu0 0
      %1429 = vmatpush2.bf16.msra.mxu0 0
      %1430 = vmatprep.subr.bf16.mxu0 0
      %1431 = vmatpush2.bf16.msra.mxu0 0
      %1432 = vmatprep.subr.bf16.mxu0 0
      %1433 = vmatpush2.bf16.msra.mxu0 0
      %1434 = vmatprep.subr.bf16.mxu0 0
      %1435 = vmatpush2.bf16.msra.mxu0 0
      %1436 = vmatprep.subr.bf16.mxu0 0
      %1437 = vmatpush2.bf16.msra.mxu0 0
      %1438 = vmatprep.mubr.bf16.mxu0 0
      %1439 = vmatmul.mubr.bf16.gmra.mxu0 %v1404
      %v1440 = vpop.f32.mrf.mxu0
      %v1441 = vadd.f32 0.0, %v1440
      %v1442 = vpop.f32.mrf.mxu0
      %v1443 = vpop.f32.mrf.mxu0
      %v1444 = vpop.f32.mrf.mxu0
      %1445 = vdwg.mxu0
      %v1448 = vunpack.c.l.b16 %v1041
      %v1449 = vunpack.c.l.b16 %v1042
      %v1450 = vpack.c.b16 %v1449, %v1448
      %v1453 = vsel %vm928, %v1040, 0
      %1455 = vmatprep.subr.bf16.mxu0 0
      %1456 = vmatpush1.bf16.msra.mxu0 0
      %1457 = vmatprep.subr.bf16.mxu0 0
      %1458 = vmatpush1.bf16.msra.mxu0 0
      %1459 = vmatprep.subr.bf16.mxu0 0
      %1460 = vmatpush1.bf16.msra.mxu0 0
      %1461 = vmatprep.subr.bf16.mxu0 0
      %1462 = vmatpush1.bf16.msra.mxu0 0
      %1463 = vmatprep.subr.bf16.mxu0 0
      %1464 = vmatpush1.bf16.msra.mxu0 0
      %1465 = vmatprep.subr.bf16.mxu0 0
      %1466 = vmatpush1.bf16.msra.mxu0 0
      %1467 = vmatprep.subr.bf16.mxu0 0
      %1468 = vmatpush1.bf16.msra.mxu0 0
      %1469 = vmatprep.subr.bf16.mxu0 0
      %1470 = vmatpush1.bf16.msra.mxu0 %v1450
      %1471 = vmatprep.subr.bf16.mxu0 0
      %1472 = vmatpush2.bf16.msra.mxu0 0
      %1473 = vmatprep.subr.bf16.mxu0 0
      %1474 = vmatpush2.bf16.msra.mxu0 0
      %1475 = vmatprep.subr.bf16.mxu0 0
      %1476 = vmatpush2.bf16.msra.mxu0 0
      %1477 = vmatprep.subr.bf16.mxu0 0
      %1478 = vmatpush2.bf16.msra.mxu0 0
      %1479 = vmatprep.subr.bf16.mxu0 0
      %1480 = vmatpush2.bf16.msra.mxu0 0
      %1481 = vmatprep.subr.bf16.mxu0 0
      %1482 = vmatpush2.bf16.msra.mxu0 0
      %1483 = vmatprep.subr.bf16.mxu0 0
      %1484 = vmatpush2.bf16.msra.mxu0 0
      %1485 = vmatprep.subr.bf16.mxu0 0
      %1486 = vmatpush2.bf16.msra.mxu0 0
      %1487 = vmatprep.mubr.bf16.mxu0 0
      %1488 = vmatmul.mubr.bf16.gmra.mxu0 %v1453
      %v1489 = vpop.f32.mrf.mxu0
      %v1490 = vadd.f32 %v1441, %v1489
      %v1491 = vpop.f32.mrf.mxu0
      %v1492 = vpop.f32.mrf.mxu0
      %v1493 = vpop.f32.mrf.mxu0
      %1494 = vdwg.mxu0
      %s1495 = scalar_lea.vmem %s5, 64
      %v1496 = vld [vmem:[%s1495] sm:$0xf]
      %v1497 = vld [vmem:[%s1495 + $0x4] sm:$0xf]
      %v1498 = vld [vmem:[%s1495 + $0x8] sm:$0xf]
      %v1499 = vld [vmem:[%s1495 + $0xc] sm:$0xf]
      %v1500 = vld [vmem:[%s1495 + $0x10] sm:$0xf]
      %v1501 = vld [vmem:[%s1495 + $0x14] sm:$0xf]
      %v1502 = vld [vmem:[%s1495 + $0x18] sm:$0xf]
      %v1503 = vld [vmem:[%s1495 + $0x1c] sm:$0xf]
      %s1504 = scalar_lea.vmem %s6, 2
      %v1505 = vld [vmem:[%s1504] sm:$0x1]
      %v1507 = vlaneseq
      %v1508 = vshrl.u32 %v1507, 7
      %v1509 = vsub.s32 0, %v1508
      %v1510 = vrot.slane %v1505, %v1509
      %v1520 = vunpack.c.l.b16 %v1496
      %v1521 = vunpack.c.l.b16 %v1497
      %v1522 = vunpack.c.l.b16 %v1498
      %v1523 = vunpack.c.l.b16 %v1499
      %v1524 = vunpack.c.l.b16 %v1500
      %v1525 = vunpack.c.l.b16 %v1501
      %v1526 = vunpack.c.l.b16 %v1502
      %v1527 = vunpack.c.l.b16 %v1503
      %v1528 = vpack.c.b16 %v1521, %v1520
      %v1529 = vpack.c.b16 %v1523, %v1522
      %v1530 = vpack.c.b16 %v1525, %v1524
      %v1531 = vpack.c.b16 %v1527, %v1526
      %1536 = vmatprep.subr.bf16.mxu0 0
      %1537 = vmatpush1.bf16.msra.mxu0 0
      %1538 = vmatprep.subr.bf16.mxu0 0
      %1539 = vmatpush1.bf16.msra.mxu0 0
      %1540 = vmatprep.subr.bf16.mxu0 0
      %1541 = vmatpush1.bf16.msra.mxu0 0
      %1542 = vmatprep.subr.bf16.mxu0 0
      %1543 = vmatpush1.bf16.msra.mxu0 0
      %1544 = vmatprep.subr.bf16.mxu0 0
      %1545 = vmatpush1.bf16.msra.mxu0 %v1531
      %1546 = vmatprep.subr.bf16.mxu0 0
      %1547 = vmatpush1.bf16.msra.mxu0 %v1530
      %1548 = vmatprep.subr.bf16.mxu0 0
      %1549 = vmatpush1.bf16.msra.mxu0 %v1529
      %1550 = vmatprep.subr.bf16.mxu0 0
      %1551 = vmatpush1.bf16.msra.mxu0 %v1528
      %1552 = vmatprep.subr.bf16.mxu0 0
      %1553 = vmatpush2.bf16.msra.mxu0 0
      %1554 = vmatprep.subr.bf16.mxu0 0
      %1555 = vmatpush2.bf16.msra.mxu0 0
      %1556 = vmatprep.subr.bf16.mxu0 0
      %1557 = vmatpush2.bf16.msra.mxu0 0
      %1558 = vmatprep.subr.bf16.mxu0 0
      %1559 = vmatpush2.bf16.msra.mxu0 0
      %1560 = vmatprep.subr.bf16.mxu0 0
      %1561 = vmatpush2.bf16.msra.mxu0 0
      %1562 = vmatprep.subr.bf16.mxu0 0
      %1563 = vmatpush2.bf16.msra.mxu0 0
      %1564 = vmatprep.subr.bf16.mxu0 0
      %1565 = vmatpush2.bf16.msra.mxu0 0
      %1566 = vmatprep.subr.bf16.mxu0 0
      %1567 = vmatpush2.bf16.msra.mxu0 0
      %1568 = vmatprep.mubr.bf16.mxu0 0
      %1569 = vmatmul.mubr.bf16.gmra.mxu0 %v726
      %v1570 = vpop.f32.mrf.mxu0
      %v1571 = vadd.f32 %v1510, %v1570
      %v1572 = vpop.f32.mrf.mxu0
      %v1573 = vpop.f32.mrf.mxu0
      %v1574 = vpop.f32.mrf.mxu0
      %1575 = vdwg.mxu0
      %s1576 = scalar_lea.vmem %s7, 64
      %v1577 = vld [vmem:[%s1576] sm:$0xf]
      %v1578 = vld [vmem:[%s1576 + $0x4] sm:$0xf]
      %v1579 = vld [vmem:[%s1576 + $0x8] sm:$0xf]
      %v1580 = vld [vmem:[%s1576 + $0xc] sm:$0xf]
      %v1581 = vld [vmem:[%s1576 + $0x10] sm:$0xf]
      %v1582 = vld [vmem:[%s1576 + $0x14] sm:$0xf]
      %v1583 = vld [vmem:[%s1576 + $0x18] sm:$0xf]
      %v1584 = vld [vmem:[%s1576 + $0x1c] sm:$0xf]
      %s1585 = scalar_lea.vmem %s8, 2
      %v1586 = vld [vmem:[%s1585] sm:$0x1]
      %v1588 = vlaneseq
      %v1589 = vshrl.u32 %v1588, 7
      %v1590 = vsub.s32 0, %v1589
      %v1591 = vrot.slane %v1586, %v1590
      %v1601 = vunpack.c.l.b16 %v1577
      %v1602 = vunpack.c.l.b16 %v1578
      %v1603 = vunpack.c.l.b16 %v1579
      %v1604 = vunpack.c.l.b16 %v1580
      %v1605 = vunpack.c.l.b16 %v1581
      %v1606 = vunpack.c.l.b16 %v1582
      %v1607 = vunpack.c.l.b16 %v1583
      %v1608 = vunpack.c.l.b16 %v1584
      %v1609 = vpack.c.b16 %v1602, %v1601
      %v1610 = vpack.c.b16 %v1604, %v1603
      %v1611 = vpack.c.b16 %v1606, %v1605
      %v1612 = vpack.c.b16 %v1608, %v1607
      %1617 = vmatprep.subr.bf16.mxu0 0
      %1618 = vmatpush1.bf16.msra.mxu0 0
      %1619 = vmatprep.subr.bf16.mxu0 0
      %1620 = vmatpush1.bf16.msra.mxu0 0
      %1621 = vmatprep.subr.bf16.mxu0 0
      %1622 = vmatpush1.bf16.msra.mxu0 0
      %1623 = vmatprep.subr.bf16.mxu0 0
      %1624 = vmatpush1.bf16.msra.mxu0 0
      %1625 = vmatprep.subr.bf16.mxu0 0
      %1626 = vmatpush1.bf16.msra.mxu0 %v1612
      %1627 = vmatprep.subr.bf16.mxu0 0
      %1628 = vmatpush1.bf16.msra.mxu0 %v1611
      %1629 = vmatprep.subr.bf16.mxu0 0
      %1630 = vmatpush1.bf16.msra.mxu0 %v1610
      %1631 = vmatprep.subr.bf16.mxu0 0
      %1632 = vmatpush1.bf16.msra.mxu0 %v1609
      %1633 = vmatprep.subr.bf16.mxu0 0
      %1634 = vmatpush2.bf16.msra.mxu0 0
      %1635 = vmatprep.subr.bf16.mxu0 0
      %1636 = vmatpush2.bf16.msra.mxu0 0
      %1637 = vmatprep.subr.bf16.mxu0 0
      %1638 = vmatpush2.bf16.msra.mxu0 0
      %1639 = vmatprep.subr.bf16.mxu0 0
      %1640 = vmatpush2.bf16.msra.mxu0 0
      %1641 = vmatprep.subr.bf16.mxu0 0
      %1642 = vmatpush2.bf16.msra.mxu0 0
      %1643 = vmatprep.subr.bf16.mxu0 0
      %1644 = vmatpush2.bf16.msra.mxu0 0
      %1645 = vmatprep.subr.bf16.mxu0 0
      %1646 = vmatpush2.bf16.msra.mxu0 0
      %1647 = vmatprep.subr.bf16.mxu0 0
      %1648 = vmatpush2.bf16.msra.mxu0 0
      %1649 = vmatprep.mubr.bf16.mxu0 0
      %1650 = vmatmul.mubr.bf16.gmra.mxu0 %v726
      %v1651 = vpop.f32.mrf.mxu0
      %v1652 = vadd.f32 %v1591, %v1651
      %v1653 = vpop.f32.mrf.mxu0
      %v1654 = vpop.f32.mrf.mxu0
      %v1655 = vpop.f32.mrf.mxu0
      %1656 = vdwg.mxu0
      %s1657 = scalar_lea.vmem %s9, 64
      %v1658 = vld [vmem:[%s1657] sm:$0xf]
      %v1659 = vld [vmem:[%s1657 + $0x4] sm:$0xf]
      %v1660 = vld [vmem:[%s1657 + $0x8] sm:$0xf]
      %v1661 = vld [vmem:[%s1657 + $0xc] sm:$0xf]
      %v1662 = vld [vmem:[%s1657 + $0x10] sm:$0xf]
      %v1663 = vld [vmem:[%s1657 + $0x14] sm:$0xf]
      %v1664 = vld [vmem:[%s1657 + $0x18] sm:$0xf]
      %v1665 = vld [vmem:[%s1657 + $0x1c] sm:$0xf]
      %s1666 = scalar_lea.vmem %s10, 2
      %v1667 = vld [vmem:[%s1666] sm:$0x1]
      %v1669 = vlaneseq
      %v1670 = vshrl.u32 %v1669, 7
      %v1671 = vsub.s32 0, %v1670
      %v1672 = vrot.slane %v1667, %v1671
      %v1682 = vunpack.c.l.b16 %v1658
      %v1683 = vunpack.c.l.b16 %v1659
      %v1684 = vunpack.c.l.b16 %v1660
      %v1685 = vunpack.c.l.b16 %v1661
      %v1686 = vunpack.c.l.b16 %v1662
      %v1687 = vunpack.c.l.b16 %v1663
      %v1688 = vunpack.c.l.b16 %v1664
      %v1689 = vunpack.c.l.b16 %v1665
      %v1690 = vpack.c.b16 %v1683, %v1682
      %v1691 = vpack.c.b16 %v1685, %v1684
      %v1692 = vpack.c.b16 %v1687, %v1686
      %v1693 = vpack.c.b16 %v1689, %v1688
      %1698 = vmatprep.subr.bf16.mxu0 0
      %1699 = vmatpush1.bf16.msra.mxu0 0
      %1700 = vmatprep.subr.bf16.mxu0 0
      %1701 = vmatpush1.bf16.msra.mxu0 0
      %1702 = vmatprep.subr.bf16.mxu0 0
      %1703 = vmatpush1.bf16.msra.mxu0 0
      %1704 = vmatprep.subr.bf16.mxu0 0
      %1705 = vmatpush1.bf16.msra.mxu0 0
      %1706 = vmatprep.subr.bf16.mxu0 0
      %1707 = vmatpush1.bf16.msra.mxu0 %v1693
      %1708 = vmatprep.subr.bf16.mxu0 0
      %1709 = vmatpush1.bf16.msra.mxu0 %v1692
      %1710 = vmatprep.subr.bf16.mxu0 0
      %1711 = vmatpush1.bf16.msra.mxu0 %v1691
      %1712 = vmatprep.subr.bf16.mxu0 0
      %1713 = vmatpush1.bf16.msra.mxu0 %v1690
      %1714 = vmatprep.subr.bf16.mxu0 0
      %1715 = vmatpush2.bf16.msra.mxu0 0
      %1716 = vmatprep.subr.bf16.mxu0 0
      %1717 = vmatpush2.bf16.msra.mxu0 0
      %1718 = vmatprep.subr.bf16.mxu0 0
      %1719 = vmatpush2.bf16.msra.mxu0 0
      %1720 = vmatprep.subr.bf16.mxu0 0
      %1721 = vmatpush2.bf16.msra.mxu0 0
      %1722 = vmatprep.subr.bf16.mxu0 0
      %1723 = vmatpush2.bf16.msra.mxu0 0
      %1724 = vmatprep.subr.bf16.mxu0 0
      %1725 = vmatpush2.bf16.msra.mxu0 0
      %1726 = vmatprep.subr.bf16.mxu0 0
      %1727 = vmatpush2.bf16.msra.mxu0 0
      %1728 = vmatprep.subr.bf16.mxu0 0
      %1729 = vmatpush2.bf16.msra.mxu0 0
      %1730 = vmatprep.mubr.bf16.mxu0 0
      %1731 = vmatmul.mubr.bf16.gmra.mxu0 %v726
      %v1732 = vpop.f32.mrf.mxu0
      %v1733 = vadd.f32 %v1672, %v1732
      %v1734 = vpop.f32.mrf.mxu0
      %v1735 = vpop.f32.mrf.mxu0
      %v1736 = vpop.f32.mrf.mxu0
      %1737 = vdwg.mxu0
      %v1738 = vpack.c.bf16 %v1571, %v1571
      %v1739 = vpack.c.bf16 %v1652, %v1652
      %v1741 = vsel %vm928, %v1738, 0
      %v1744 = vsel %vm928, %v1739, 0
      %1746 = vmatprep.subr.bf16.mxu0 0
      %1747 = vmatpush1.bf16.xpose.msra.mxu0 0
      %1748 = vmatprep.subr.bf16.mxu0 0
      %1749 = vmatpush1.bf16.xpose.msra.mxu0 0
      %1750 = vmatprep.subr.bf16.mxu0 0
      %1751 = vmatpush1.bf16.xpose.msra.mxu0 0
      %1752 = vmatprep.subr.bf16.mxu0 0
      %1753 = vmatpush1.bf16.xpose.msra.mxu0 0
      %1754 = vmatprep.subr.bf16.mxu0 0
      %1755 = vmatpush1.bf16.xpose.msra.mxu0 0
      %1756 = vmatprep.subr.bf16.mxu0 0
      %1757 = vmatpush1.bf16.xpose.msra.mxu0 0
      %1758 = vmatprep.subr.bf16.mxu0 0
      %1759 = vmatpush1.bf16.xpose.msra.mxu0 0
      %1760 = vmatprep.subr.bf16.mxu0 0
      %1761 = vmatpush1.bf16.xpose.msra.mxu0 %v1744
      %1762 = vmatprep.subr.bf16.mxu0 0
      %1763 = vmatpush2.bf16.xpose.msra.mxu0 0
      %1764 = vmatprep.subr.bf16.mxu0 0
      %1765 = vmatpush2.bf16.xpose.msra.mxu0 0
      %1766 = vmatprep.subr.bf16.mxu0 0
      %1767 = vmatpush2.bf16.xpose.msra.mxu0 0
      %1768 = vmatprep.subr.bf16.mxu0 0
      %1769 = vmatpush2.bf16.xpose.msra.mxu0 0
      %1770 = vmatprep.subr.bf16.mxu0 0
      %1771 = vmatpush2.bf16.xpose.msra.mxu0 0
      %1772 = vmatprep.subr.bf16.mxu0 0
      %1773 = vmatpush2.bf16.xpose.msra.mxu0 0
      %1774 = vmatprep.subr.bf16.mxu0 0
      %1775 = vmatpush2.bf16.xpose.msra.mxu0 0
      %1776 = vmatprep.subr.bf16.mxu0 0
      %1777 = vmatpush2.bf16.xpose.msra.mxu0 0
      %1778 = vmatprep.mubr.bf16.mxu0 0
      %1779 = vmatmul.mubr.bf16.gmra.mxu0 %v1741
      %v1780 = vpop.f32.mrf.mxu0
      %v1781 = vadd.f32 0.0, %v1780
      %v1782 = vpop.f32.mrf.mxu0
      %v1783 = vpop.f32.mrf.mxu0
      %v1784 = vpop.f32.mrf.mxu0
      %1785 = vdwg.mxu0
      %v1786 = vsel %vm975, %v1781, -inf
      %1787 = vmax.xlane.f32.xlu0 %v1786
      %v1788 = vpop.xlane.xlu0 %1787
      %v1789 = vsub.f32 %v1781, %v1788
      %v1790 = vmul.f32 %v1789, 1.442695
      %v1791 = vpow.pop %v1790
      %v1792 = vsel %vm975, %v1791, 0.0
      %1793 = vadd.xlane.f32.xlu0 %v1792
      %v1794 = vpop.xlane.xlu0 %1793
      %v1795 = vrcp.pop %v1794
      %v1796 = vmul.f32 %v1791, %v1795
      %v1797 = vpack.c.bf16 %v1796, %v1796
      %v1798 = vpack.c.bf16 %v1733, %v1733
      %v1800 = vsel %vm989, %v1797, 0
      %v1803 = vand.u32 %v1798, %v996
      %1805 = vmatprep.subr.bf16.mxu0 0
      %1806 = vmatpush1.bf16.msra.mxu0 0
      %1807 = vmatprep.subr.bf16.mxu0 0
      %1808 = vmatpush1.bf16.msra.mxu0 0
      %1809 = vmatprep.subr.bf16.mxu0 0
      %1810 = vmatpush1.bf16.msra.mxu0 0
      %1811 = vmatprep.subr.bf16.mxu0 0
      %1812 = vmatpush1.bf16.msra.mxu0 0
      %1813 = vmatprep.subr.bf16.mxu0 0
      %1814 = vmatpush1.bf16.msra.mxu0 0
      %1815 = vmatprep.subr.bf16.mxu0 0
      %1816 = vmatpush1.bf16.msra.mxu0 0
      %1817 = vmatprep.subr.bf16.mxu0 0
      %1818 = vmatpush1.bf16.msra.mxu0 0
      %1819 = vmatprep.subr.bf16.mxu0 0
      %1820 = vmatpush1.bf16.msra.mxu0 %v1803
      %1821 = vmatprep.subr.bf16.mxu0 0
      %1822 = vmatpush2.bf16.msra.mxu0 0
      %1823 = vmatprep.subr.bf16.mxu0 0
      %1824 = vmatpush2.bf16.msra.mxu0 0
      %1825 = vmatprep.subr.bf16.mxu0 0
      %1826 = vmatpush2.bf16.msra.mxu0 0
      %1827 = vmatprep.subr.bf16.mxu0 0
      %1828 = vmatpush2.bf16.msra.mxu0 0
      %1829 = vmatprep.subr.bf16.mxu0 0
      %1830 = vmatpush2.bf16.msra.mxu0 0
      %1831 = vmatprep.subr.bf16.mxu0 0
      %1832 = vmatpush2.bf16.msra.mxu0 0
      %1833 = vmatprep.subr.bf16.mxu0 0
      %1834 = vmatpush2.bf16.msra.mxu0 0
      %1835 = vmatprep.subr.bf16.mxu0 0
      %1836 = vmatpush2.bf16.msra.mxu0 0
      %1837 = vmatprep.mubr.bf16.mxu0 0
      %1838 = vmatmul.mubr.bf16.gmra.mxu0 %v1800
      %v1839 = vpop.f32.mrf.mxu0
      %v1840 = vadd.f32 0.0, %v1839
      %v1841 = vpop.f32.mrf.mxu0
      %v1842 = vpop.f32.mrf.mxu0
      %v1843 = vpop.f32.mrf.mxu0
      %1844 = vdwg.mxu0
      %v1845 = vpack.c.bf16 %v1840, %v1840
      %s1846 = scalar_lea.vmem %s11, 16
      %v1847 = vld [vmem:[%s1846] sm:$0xf]
      %v1848 = vld [vmem:[%s1846 + $0x4] sm:$0xf]
      %v1851 = vunpack.c.l.b16 %v1847
      %v1852 = vunpack.c.l.b16 %v1848
      %v1853 = vpack.c.b16 %v1852, %v1851
      %v1856 = vsel %vm928, %v1845, 0
      %1858 = vmatprep.subr.bf16.mxu0 0
      %1859 = vmatpush1.bf16.msra.mxu0 0
      %1860 = vmatprep.subr.bf16.mxu0 0
      %1861 = vmatpush1.bf16.msra.mxu0 0
      %1862 = vmatprep.subr.bf16.mxu0 0
      %1863 = vmatpush1.bf16.msra.mxu0 0
      %1864 = vmatprep.subr.bf16.mxu0 0
      %1865 = vmatpush1.bf16.msra.mxu0 0
      %1866 = vmatprep.subr.bf16.mxu0 0
      %1867 = vmatpush1.bf16.msra.mxu0 0
      %1868 = vmatprep.subr.bf16.mxu0 0
      %1869 = vmatpush1.bf16.msra.mxu0 0
      %1870 = vmatprep.subr.bf16.mxu0 0
      %1871 = vmatpush1.bf16.msra.mxu0 0
      %1872 = vmatprep.subr.bf16.mxu0 0
      %1873 = vmatpush1.bf16.msra.mxu0 %v1853
      %1874 = vmatprep.subr.bf16.mxu0 0
      %1875 = vmatpush2.bf16.msra.mxu0 0
      %1876 = vmatprep.subr.bf16.mxu0 0
      %1877 = vmatpush2.bf16.msra.mxu0 0
      %1878 = vmatprep.subr.bf16.mxu0 0
      %1879 = vmatpush2.bf16.msra.mxu0 0
      %1880 = vmatprep.subr.bf16.mxu0 0
      %1881 = vmatpush2.bf16.msra.mxu0 0
      %1882 = vmatprep.subr.bf16.mxu0 0
      %1883 = vmatpush2.bf16.msra.mxu0 0
      %1884 = vmatprep.subr.bf16.mxu0 0
      %1885 = vmatpush2.bf16.msra.mxu0 0
      %1886 = vmatprep.subr.bf16.mxu0 0
      %1887 = vmatpush2.bf16.msra.mxu0 0
      %1888 = vmatprep.subr.bf16.mxu0 0
      %1889 = vmatpush2.bf16.msra.mxu0 0
      %1890 = vmatprep.mubr.bf16.mxu0 0
      %1891 = vmatmul.mubr.bf16.gmra.mxu0 %v1856
      %v1892 = vpop.f32.mrf.mxu0
      %v1893 = vadd.f32 0.0, %v1892
      %v1894 = vpop.f32.mrf.mxu0
      %v1895 = vpop.f32.mrf.mxu0
      %v1896 = vpop.f32.mrf.mxu0
      %1897 = vdwg.mxu0
      %v1898 = vadd.f32 %v1490, %v1893
      %s1899 = scalar_lea.vmem %s5, 96
      %v1900 = vld [vmem:[%s1899] sm:$0xf]
      %v1901 = vld [vmem:[%s1899 + $0x4] sm:$0xf]
      %v1902 = vld [vmem:[%s1899 + $0x8] sm:$0xf]
      %v1903 = vld [vmem:[%s1899 + $0xc] sm:$0xf]
      %v1904 = vld [vmem:[%s1899 + $0x10] sm:$0xf]
      %v1905 = vld [vmem:[%s1899 + $0x14] sm:$0xf]
      %v1906 = vld [vmem:[%s1899 + $0x18] sm:$0xf]
      %v1907 = vld [vmem:[%s1899 + $0x1c] sm:$0xf]
      %s1908 = scalar_lea.vmem %s6, 3
      %v1909 = vld [vmem:[%s1908] sm:$0x1]
      %v1911 = vlaneseq
      %v1912 = vshrl.u32 %v1911, 7
      %v1913 = vsub.s32 0, %v1912
      %v1914 = vrot.slane %v1909, %v1913
      %v1924 = vunpack.c.l.b16 %v1900
      %v1925 = vunpack.c.l.b16 %v1901
      %v1926 = vunpack.c.l.b16 %v1902
      %v1927 = vunpack.c.l.b16 %v1903
      %v1928 = vunpack.c.l.b16 %v1904
      %v1929 = vunpack.c.l.b16 %v1905
      %v1930 = vunpack.c.l.b16 %v1906
      %v1931 = vunpack.c.l.b16 %v1907
      %v1932 = vpack.c.b16 %v1925, %v1924
      %v1933 = vpack.c.b16 %v1927, %v1926
      %v1934 = vpack.c.b16 %v1929, %v1928
      %v1935 = vpack.c.b16 %v1931, %v1930
      %1940 = vmatprep.subr.bf16.mxu0 0
      %1941 = vmatpush1.bf16.msra.mxu0 0
      %1942 = vmatprep.subr.bf16.mxu0 0
      %1943 = vmatpush1.bf16.msra.mxu0 0
      %1944 = vmatprep.subr.bf16.mxu0 0
      %1945 = vmatpush1.bf16.msra.mxu0 0
      %1946 = vmatprep.subr.bf16.mxu0 0
      %1947 = vmatpush1.bf16.msra.mxu0 0
      %1948 = vmatprep.subr.bf16.mxu0 0
      %1949 = vmatpush1.bf16.msra.mxu0 %v1935
      %1950 = vmatprep.subr.bf16.mxu0 0
      %1951 = vmatpush1.bf16.msra.mxu0 %v1934
      %1952 = vmatprep.subr.bf16.mxu0 0
      %1953 = vmatpush1.bf16.msra.mxu0 %v1933
      %1954 = vmatprep.subr.bf16.mxu0 0
      %1955 = vmatpush1.bf16.msra.mxu0 %v1932
      %1956 = vmatprep.subr.bf16.mxu0 0
      %1957 = vmatpush2.bf16.msra.mxu0 0
      %1958 = vmatprep.subr.bf16.mxu0 0
      %1959 = vmatpush2.bf16.msra.mxu0 0
      %1960 = vmatprep.subr.bf16.mxu0 0
      %1961 = vmatpush2.bf16.msra.mxu0 0
      %1962 = vmatprep.subr.bf16.mxu0 0
      %1963 = vmatpush2.bf16.msra.mxu0 0
      %1964 = vmatprep.subr.bf16.mxu0 0
      %1965 = vmatpush2.bf16.msra.mxu0 0
      %1966 = vmatprep.subr.bf16.mxu0 0
      %1967 = vmatpush2.bf16.msra.mxu0 0
      %1968 = vmatprep.subr.bf16.mxu0 0
      %1969 = vmatpush2.bf16.msra.mxu0 0
      %1970 = vmatprep.subr.bf16.mxu0 0
      %1971 = vmatpush2.bf16.msra.mxu0 0
      %1972 = vmatprep.mubr.bf16.mxu0 0
      %1973 = vmatmul.mubr.bf16.gmra.mxu0 %v726
      %v1974 = vpop.f32.mrf.mxu0
      %v1975 = vadd.f32 %v1914, %v1974
      %v1976 = vpop.f32.mrf.mxu0
      %v1977 = vpop.f32.mrf.mxu0
      %v1978 = vpop.f32.mrf.mxu0
      %1979 = vdwg.mxu0
      %s1980 = scalar_lea.vmem %s7, 96
      %v1981 = vld [vmem:[%s1980] sm:$0xf]
      %v1982 = vld [vmem:[%s1980 + $0x4] sm:$0xf]
      %v1983 = vld [vmem:[%s1980 + $0x8] sm:$0xf]
      %v1984 = vld [vmem:[%s1980 + $0xc] sm:$0xf]
      %v1985 = vld [vmem:[%s1980 + $0x10] sm:$0xf]
      %v1986 = vld [vmem:[%s1980 + $0x14] sm:$0xf]
      %v1987 = vld [vmem:[%s1980 + $0x18] sm:$0xf]
      %v1988 = vld [vmem:[%s1980 + $0x1c] sm:$0xf]
      %s1989 = scalar_lea.vmem %s8, 3
      %v1990 = vld [vmem:[%s1989] sm:$0x1]
      %v1992 = vlaneseq
      %v1993 = vshrl.u32 %v1992, 7
      %v1994 = vsub.s32 0, %v1993
      %v1995 = vrot.slane %v1990, %v1994
      %v2005 = vunpack.c.l.b16 %v1981
      %v2006 = vunpack.c.l.b16 %v1982
      %v2007 = vunpack.c.l.b16 %v1983
      %v2008 = vunpack.c.l.b16 %v1984
      %v2009 = vunpack.c.l.b16 %v1985
      %v2010 = vunpack.c.l.b16 %v1986
      %v2011 = vunpack.c.l.b16 %v1987
      %v2012 = vunpack.c.l.b16 %v1988
      %v2013 = vpack.c.b16 %v2006, %v2005
      %v2014 = vpack.c.b16 %v2008, %v2007
      %v2015 = vpack.c.b16 %v2010, %v2009
      %v2016 = vpack.c.b16 %v2012, %v2011
      %2021 = vmatprep.subr.bf16.mxu0 0
      %2022 = vmatpush1.bf16.msra.mxu0 0
      %2023 = vmatprep.subr.bf16.mxu0 0
      %2024 = vmatpush1.bf16.msra.mxu0 0
      %2025 = vmatprep.subr.bf16.mxu0 0
      %2026 = vmatpush1.bf16.msra.mxu0 0
      %2027 = vmatprep.subr.bf16.mxu0 0
      %2028 = vmatpush1.bf16.msra.mxu0 0
      %2029 = vmatprep.subr.bf16.mxu0 0
      %2030 = vmatpush1.bf16.msra.mxu0 %v2016
      %2031 = vmatprep.subr.bf16.mxu0 0
      %2032 = vmatpush1.bf16.msra.mxu0 %v2015
      %2033 = vmatprep.subr.bf16.mxu0 0
      %2034 = vmatpush1.bf16.msra.mxu0 %v2014
      %2035 = vmatprep.subr.bf16.mxu0 0
      %2036 = vmatpush1.bf16.msra.mxu0 %v2013
      %2037 = vmatprep.subr.bf16.mxu0 0
      %2038 = vmatpush2.bf16.msra.mxu0 0
      %2039 = vmatprep.subr.bf16.mxu0 0
      %2040 = vmatpush2.bf16.msra.mxu0 0
      %2041 = vmatprep.subr.bf16.mxu0 0
      %2042 = vmatpush2.bf16.msra.mxu0 0
      %2043 = vmatprep.subr.bf16.mxu0 0
      %2044 = vmatpush2.bf16.msra.mxu0 0
      %2045 = vmatprep.subr.bf16.mxu0 0
      %2046 = vmatpush2.bf16.msra.mxu0 0
      %2047 = vmatprep.subr.bf16.mxu0 0
      %2048 = vmatpush2.bf16.msra.mxu0 0
      %2049 = vmatprep.subr.bf16.mxu0 0
      %2050 = vmatpush2.bf16.msra.mxu0 0
      %2051 = vmatprep.subr.bf16.mxu0 0
      %2052 = vmatpush2.bf16.msra.mxu0 0
      %2053 = vmatprep.mubr.bf16.mxu0 0
      %2054 = vmatmul.mubr.bf16.gmra.mxu0 %v726
      %v2055 = vpop.f32.mrf.mxu0
      %v2056 = vadd.f32 %v1995, %v2055
      %v2057 = vpop.f32.mrf.mxu0
      %v2058 = vpop.f32.mrf.mxu0
      %v2059 = vpop.f32.mrf.mxu0
      %2060 = vdwg.mxu0
      %s2061 = scalar_lea.vmem %s9, 96
      %v2062 = vld [vmem:[%s2061] sm:$0xf]
      %v2063 = vld [vmem:[%s2061 + $0x4] sm:$0xf]
      %v2064 = vld [vmem:[%s2061 + $0x8] sm:$0xf]
      %v2065 = vld [vmem:[%s2061 + $0xc] sm:$0xf]
      %v2066 = vld [vmem:[%s2061 + $0x10] sm:$0xf]
      %v2067 = vld [vmem:[%s2061 + $0x14] sm:$0xf]
      %v2068 = vld [vmem:[%s2061 + $0x18] sm:$0xf]
      %v2069 = vld [vmem:[%s2061 + $0x1c] sm:$0xf]
      %s2070 = scalar_lea.vmem %s10, 3
      %v2071 = vld [vmem:[%s2070] sm:$0x1]
      %v2073 = vlaneseq
      %v2074 = vshrl.u32 %v2073, 7
      %v2075 = vsub.s32 0, %v2074
      %v2076 = vrot.slane %v2071, %v2075
      %v2086 = vunpack.c.l.b16 %v2062
      %v2087 = vunpack.c.l.b16 %v2063
      %v2088 = vunpack.c.l.b16 %v2064
      %v2089 = vunpack.c.l.b16 %v2065
      %v2090 = vunpack.c.l.b16 %v2066
      %v2091 = vunpack.c.l.b16 %v2067
      %v2092 = vunpack.c.l.b16 %v2068
      %v2093 = vunpack.c.l.b16 %v2069
      %v2094 = vpack.c.b16 %v2087, %v2086
      %v2095 = vpack.c.b16 %v2089, %v2088
      %v2096 = vpack.c.b16 %v2091, %v2090
      %v2097 = vpack.c.b16 %v2093, %v2092
      %2102 = vmatprep.subr.bf16.mxu0 0
      %2103 = vmatpush1.bf16.msra.mxu0 0
      %2104 = vmatprep.subr.bf16.mxu0 0
      %2105 = vmatpush1.bf16.msra.mxu0 0
      %2106 = vmatprep.subr.bf16.mxu0 0
      %2107 = vmatpush1.bf16.msra.mxu0 0
      %2108 = vmatprep.subr.bf16.mxu0 0
      %2109 = vmatpush1.bf16.msra.mxu0 0
      %2110 = vmatprep.subr.bf16.mxu0 0
      %2111 = vmatpush1.bf16.msra.mxu0 %v2097
      %2112 = vmatprep.subr.bf16.mxu0 0
      %2113 = vmatpush1.bf16.msra.mxu0 %v2096
      %2114 = vmatprep.subr.bf16.mxu0 0
      %2115 = vmatpush1.bf16.msra.mxu0 %v2095
      %2116 = vmatprep.subr.bf16.mxu0 0
      %2117 = vmatpush1.bf16.msra.mxu0 %v2094
      %2118 = vmatprep.subr.bf16.mxu0 0
      %2119 = vmatpush2.bf16.msra.mxu0 0
      %2120 = vmatprep.subr.bf16.mxu0 0
      %2121 = vmatpush2.bf16.msra.mxu0 0
      %2122 = vmatprep.subr.bf16.mxu0 0
      %2123 = vmatpush2.bf16.msra.mxu0 0
      %2124 = vmatprep.subr.bf16.mxu0 0
      %2125 = vmatpush2.bf16.msra.mxu0 0
      %2126 = vmatprep.subr.bf16.mxu0 0
      %2127 = vmatpush2.bf16.msra.mxu0 0
      %2128 = vmatprep.subr.bf16.mxu0 0
      %2129 = vmatpush2.bf16.msra.mxu0 0
      %2130 = vmatprep.subr.bf16.mxu0 0
      %2131 = vmatpush2.bf16.msra.mxu0 0
      %2132 = vmatprep.subr.bf16.mxu0 0
      %2133 = vmatpush2.bf16.msra.mxu0 0
      %2134 = vmatprep.mubr.bf16.mxu0 0
      %2135 = vmatmul.mubr.bf16.gmra.mxu0 %v726
      %v2136 = vpop.f32.mrf.mxu0
      %v2137 = vadd.f32 %v2076, %v2136
      %v2138 = vpop.f32.mrf.mxu0
      %v2139 = vpop.f32.mrf.mxu0
      %v2140 = vpop.f32.mrf.mxu0
      %2141 = vdwg.mxu0
      %v2142 = vpack.c.bf16 %v1975, %v1975
      %v2143 = vpack.c.bf16 %v2056, %v2056
      %v2145 = vsel %vm928, %v2142, 0
      %v2148 = vsel %vm928, %v2143, 0
      %2150 = vmatprep.subr.bf16.mxu0 0
      %2151 = vmatpush1.bf16.xpose.msra.mxu0 0
      %2152 = vmatprep.subr.bf16.mxu0 0
      %2153 = vmatpush1.bf16.xpose.msra.mxu0 0
      %2154 = vmatprep.subr.bf16.mxu0 0
      %2155 = vmatpush1.bf16.xpose.msra.mxu0 0
      %2156 = vmatprep.subr.bf16.mxu0 0
      %2157 = vmatpush1.bf16.xpose.msra.mxu0 0
      %2158 = vmatprep.subr.bf16.mxu0 0
      %2159 = vmatpush1.bf16.xpose.msra.mxu0 0
      %2160 = vmatprep.subr.bf16.mxu0 0
      %2161 = vmatpush1.bf16.xpose.msra.mxu0 0
      %2162 = vmatprep.subr.bf16.mxu0 0
      %2163 = vmatpush1.bf16.xpose.msra.mxu0 0
      %2164 = vmatprep.subr.bf16.mxu0 0
      %2165 = vmatpush1.bf16.xpose.msra.mxu0 %v2148
      %2166 = vmatprep.subr.bf16.mxu0 0
      %2167 = vmatpush2.bf16.xpose.msra.mxu0 0
      %2168 = vmatprep.subr.bf16.mxu0 0
      %2169 = vmatpush2.bf16.xpose.msra.mxu0 0
      %2170 = vmatprep.subr.bf16.mxu0 0
      %2171 = vmatpush2.bf16.xpose.msra.mxu0 0
      %2172 = vmatprep.subr.bf16.mxu0 0
      %2173 = vmatpush2.bf16.xpose.msra.mxu0 0
      %2174 = vmatprep.subr.bf16.mxu0 0
      %2175 = vmatpush2.bf16.xpose.msra.mxu0 0
      %2176 = vmatprep.subr.bf16.mxu0 0
      %2177 = vmatpush2.bf16.xpose.msra.mxu0 0
      %2178 = vmatprep.subr.bf16.mxu0 0
      %2179 = vmatpush2.bf16.xpose.msra.mxu0 0
      %2180 = vmatprep.subr.bf16.mxu0 0
      %2181 = vmatpush2.bf16.xpose.msra.mxu0 0
      %2182 = vmatprep.mubr.bf16.mxu0 0
      %2183 = vmatmul.mubr.bf16.gmra.mxu0 %v2145
      %v2184 = vpop.f32.mrf.mxu0
      %v2185 = vadd.f32 0.0, %v2184
      %v2186 = vpop.f32.mrf.mxu0
      %v2187 = vpop.f32.mrf.mxu0
      %v2188 = vpop.f32.mrf.mxu0
      %2189 = vdwg.mxu0
      %v2190 = vsel %vm975, %v2185, -inf
      %2191 = vmax.xlane.f32.xlu0 %v2190
      %v2192 = vpop.xlane.xlu0 %2191
      %v2193 = vsub.f32 %v2185, %v2192
      %v2194 = vmul.f32 %v2193, 1.442695
      %v2195 = vpow.pop %v2194
      %v2196 = vsel %vm975, %v2195, 0.0
      %2197 = vadd.xlane.f32.xlu0 %v2196
      %v2198 = vpop.xlane.xlu0 %2197
      %v2199 = vrcp.pop %v2198
      %v2200 = vmul.f32 %v2195, %v2199
      %v2201 = vpack.c.bf16 %v2200, %v2200
      %v2202 = vpack.c.bf16 %v2137, %v2137
      %v2204 = vsel %vm989, %v2201, 0
      %v2207 = vand.u32 %v2202, %v996
      %2209 = vmatprep.subr.bf16.mxu0 0
      %2210 = vmatpush1.bf16.msra.mxu0 0
      %2211 = vmatprep.subr.bf16.mxu0 0
      %2212 = vmatpush1.bf16.msra.mxu0 0
      %2213 = vmatprep.subr.bf16.mxu0 0
      %2214 = vmatpush1.bf16.msra.mxu0 0
      %2215 = vmatprep.subr.bf16.mxu0 0
      %2216 = vmatpush1.bf16.msra.mxu0 0
      %2217 = vmatprep.subr.bf16.mxu0 0
      %2218 = vmatpush1.bf16.msra.mxu0 0
      %2219 = vmatprep.subr.bf16.mxu0 0
      %2220 = vmatpush1.bf16.msra.mxu0 0
      %2221 = vmatprep.subr.bf16.mxu0 0
      %2222 = vmatpush1.bf16.msra.mxu0 0
      %2223 = vmatprep.subr.bf16.mxu0 0
      %2224 = vmatpush1.bf16.msra.mxu0 %v2207
      %2225 = vmatprep.subr.bf16.mxu0 0
      %2226 = vmatpush2.bf16.msra.mxu0 0
      %2227 = vmatprep.subr.bf16.mxu0 0
      %2228 = vmatpush2.bf16.msra.mxu0 0
      %2229 = vmatprep.subr.bf16.mxu0 0
      %2230 = vmatpush2.bf16.msra.mxu0 0
      %2231 = vmatprep.subr.bf16.mxu0 0
      %2232 = vmatpush2.bf16.msra.mxu0 0
      %2233 = vmatprep.subr.bf16.mxu0 0
      %2234 = vmatpush2.bf16.msra.mxu0 0
      %2235 = vmatprep.subr.bf16.mxu0 0
      %2236 = vmatpush2.bf16.msra.mxu0 0
      %2237 = vmatprep.subr.bf16.mxu0 0
      %2238 = vmatpush2.bf16.msra.mxu0 0
      %2239 = vmatprep.subr.bf16.mxu0 0
      %2240 = vmatpush2.bf16.msra.mxu0 0
      %2241 = vmatprep.mubr.bf16.mxu0 0
      %2242 = vmatmul.mubr.bf16.gmra.mxu0 %v2204
      %v2243 = vpop.f32.mrf.mxu0
      %v2244 = vadd.f32 0.0, %v2243
      %v2245 = vpop.f32.mrf.mxu0
      %v2246 = vpop.f32.mrf.mxu0
      %v2247 = vpop.f32.mrf.mxu0
      %2248 = vdwg.mxu0
      %v2249 = vpack.c.bf16 %v2244, %v2244
      %s2250 = scalar_lea.vmem %s11, 24
      %v2251 = vld [vmem:[%s2250] sm:$0xf]
      %v2252 = vld [vmem:[%s2250 + $0x4] sm:$0xf]
      %v2255 = vunpack.c.l.b16 %v2251
      %v2256 = vunpack.c.l.b16 %v2252
      %v2257 = vpack.c.b16 %v2256, %v2255
      %v2260 = vsel %vm928, %v2249, 0
      %2262 = vmatprep.subr.bf16.mxu0 0
      %2263 = vmatpush1.bf16.msra.mxu0 0
      %2264 = vmatprep.subr.bf16.mxu0 0
      %2265 = vmatpush1.bf16.msra.mxu0 0
      %2266 = vmatprep.subr.bf16.mxu0 0
      %2267 = vmatpush1.bf16.msra.mxu0 0
      %2268 = vmatprep.subr.bf16.mxu0 0
      %2269 = vmatpush1.bf16.msra.mxu0 0
      %2270 = vmatprep.subr.bf16.mxu0 0
      %2271 = vmatpush1.bf16.msra.mxu0 0
      %2272 = vmatprep.subr.bf16.mxu0 0
      %2273 = vmatpush1.bf16.msra.mxu0 0
      %2274 = vmatprep.subr.bf16.mxu0 0
      %2275 = vmatpush1.bf16.msra.mxu0 0
      %2276 = vmatprep.subr.bf16.mxu0 0
      %2277 = vmatpush1.bf16.msra.mxu0 %v2257
      %2278 = vmatprep.subr.bf16.mxu0 0
      %2279 = vmatpush2.bf16.msra.mxu0 0
      %2280 = vmatprep.subr.bf16.mxu0 0
      %2281 = vmatpush2.bf16.msra.mxu0 0
      %2282 = vmatprep.subr.bf16.mxu0 0
      %2283 = vmatpush2.bf16.msra.mxu0 0
      %2284 = vmatprep.subr.bf16.mxu0 0
      %2285 = vmatpush2.bf16.msra.mxu0 0
      %2286 = vmatprep.subr.bf16.mxu0 0
      %2287 = vmatpush2.bf16.msra.mxu0 0
      %2288 = vmatprep.subr.bf16.mxu0 0
      %2289 = vmatpush2.bf16.msra.mxu0 0
      %2290 = vmatprep.subr.bf16.mxu0 0
      %2291 = vmatpush2.bf16.msra.mxu0 0
      %2292 = vmatprep.subr.bf16.mxu0 0
      %2293 = vmatpush2.bf16.msra.mxu0 0
      %2294 = vmatprep.mubr.bf16.mxu0 0
      %2295 = vmatmul.mubr.bf16.gmra.mxu0 %v2260
      %v2296 = vpop.f32.mrf.mxu0
      %v2297 = vadd.f32 0.0, %v2296
      %v2298 = vpop.f32.mrf.mxu0
      %v2299 = vpop.f32.mrf.mxu0
      %v2300 = vpop.f32.mrf.mxu0
      %2301 = vdwg.mxu0
      %v2302 = vadd.f32 %v1898, %v2297
      %v2303 = vadd.f32 %v607, %v2302
      %v2305 = vlaneseq
      %v2306 = vshrl.u32 %v2305, 7
      %v2307 = vsub.s32 0, %v2306
      %v2308 = vrot.slane %v610, %v2307
      %v2310 = vadd.f32 %v2303, %v2308
      %v2311 = vsel %vm655, %v2310, 0.0
      %2312 = vadd.xlane.f32.xlu0 %v2311
      %v2313 = vpop.xlane.xlu0 %2312
      %v2314 = vmul.f32 %v2313, %v659
      %v2315 = vsub.f32 %v2310, %v2314
      %v2316 = vmul.f32 %v2315, %v2315
      %v2317 = vsel %vm655, %v2316, 0.0
      %2318 = vadd.xlane.f32.xlu0 %v2317
      %v2319 = vpop.xlane.xlu0 %2318
      %v2320 = vmul.f32 %v2319, %v659
      %v2321 = vadd.f32 %v2320, 1e-05
      %v2322 = vrsqrt.pop %v2321
      %v2323 = vmul.f32 %v2315, %v2322
      %v2325 = vlaneseq
      %v2326 = vshrl.u32 %v2325, 7
      %v2327 = vsub.s32 0, %v2326
      %v2328 = vrot.slane %v611, %v2327
      %v2330 = vmul.f32 %v2323, %v2328
      %v2332 = vlaneseq
      %v2333 = vshrl.u32 %v2332, 7
      %v2334 = vsub.s32 0, %v2333
      %v2335 = vrot.slane %v612, %v2334
      %v2337 = vadd.f32 %v2330, %v2335
      %v2338 = vpack.c.bf16 %v2337, %v2337
      %v2340 = vlaneseq
      %v2341 = vshrl.u32 %v2340, 7
      %v2342 = vsub.s32 0, %v2341
      %v2343 = vrot.slane %v621, %v2342
      %v2344 = vlaneseq
      %v2345 = vshrl.u32 %v2344, 7
      %v2346 = vsub.s32 1, %v2345
      %v2347 = vrot.slane %v621, %v2346
      %v2358 = vunpack.c.l.b16 %v613
      %v2359 = vunpack.c.h.b16 %v613
      %v2360 = vunpack.c.l.b16 %v614
      %v2361 = vunpack.c.h.b16 %v614
      %v2362 = vunpack.c.l.b16 %v615
      %v2363 = vunpack.c.h.b16 %v615
      %v2364 = vunpack.c.l.b16 %v616
      %v2365 = vunpack.c.h.b16 %v616
      %v2366 = vunpack.c.l.b16 %v617
      %v2367 = vunpack.c.h.b16 %v617
      %v2368 = vunpack.c.l.b16 %v618
      %v2369 = vunpack.c.h.b16 %v618
      %v2370 = vunpack.c.l.b16 %v619
      %v2371 = vunpack.c.h.b16 %v619
      %v2372 = vunpack.c.l.b16 %v620
      %v2373 = vunpack.c.h.b16 %v620
      %v2374 = vpack.c.b16 %v2360, %v2358
      %v2375 = vpack.c.b16 %v2361, %v2359
      %v2376 = vpack.c.b16 %v2364, %v2362
      %v2377 = vpack.c.b16 %v2365, %v2363
      %v2378 = vpack.c.b16 %v2368, %v2366
      %v2379 = vpack.c.b16 %v2369, %v2367
      %v2380 = vpack.c.b16 %v2372, %v2370
      %v2381 = vpack.c.b16 %v2373, %v2371
      %v2391 = vsel %vm724, %v2338, 0
      %2393 = vmatprep.subr.bf16.mxu0 0
      %2394 = vmatpush1.bf16.msra.mxu0 0
      %2395 = vmatprep.subr.bf16.mxu0 0
      %2396 = vmatpush1.bf16.msra.mxu0 0
      %2397 = vmatprep.subr.bf16.mxu0 0
      %2398 = vmatpush1.bf16.msra.mxu0 0
      %2399 = vmatprep.subr.bf16.mxu0 0
      %2400 = vmatpush1.bf16.msra.mxu0 0
      %2401 = vmatprep.subr.bf16.mxu0 %v2381
      %2402 = vmatpush1.bf16.msra.mxu0 %v2380
      %2403 = vmatprep.subr.bf16.mxu0 %v2379
      %2404 = vmatpush1.bf16.msra.mxu0 %v2378
      %2405 = vmatprep.subr.bf16.mxu0 %v2377
      %2406 = vmatpush1.bf16.msra.mxu0 %v2376
      %2407 = vmatprep.subr.bf16.mxu0 %v2375
      %2408 = vmatpush1.bf16.msra.mxu0 %v2374
      %2409 = vmatprep.subr.bf16.mxu0 0
      %2410 = vmatpush2.bf16.msra.mxu0 0
      %2411 = vmatprep.subr.bf16.mxu0 0
      %2412 = vmatpush2.bf16.msra.mxu0 0
      %2413 = vmatprep.subr.bf16.mxu0 0
      %2414 = vmatpush2.bf16.msra.mxu0 0
      %2415 = vmatprep.subr.bf16.mxu0 0
      %2416 = vmatpush2.bf16.msra.mxu0 0
      %2417 = vmatprep.subr.bf16.mxu0 0
      %2418 = vmatpush2.bf16.msra.mxu0 0
      %2419 = vmatprep.subr.bf16.mxu0 0
      %2420 = vmatpush2.bf16.msra.mxu0 0
      %2421 = vmatprep.subr.bf16.mxu0 0
      %2422 = vmatpush2.bf16.msra.mxu0 0
      %2423 = vmatprep.subr.bf16.mxu0 0
      %2424 = vmatpush2.bf16.msra.mxu0 0
      %2425 = vmatprep.mubr.bf16.mxu0 0
      %2426 = vmatmul.mubr.bf16.gmra.mxu0 %v2391
      %v2427 = vpop.f32.mrf.mxu0
      %v2428 = vadd.f32 %v2343, %v2427
      %v2429 = vpop.f32.mrf.mxu0
      %v2430 = vadd.f32 %v2347, %v2429
      %v2431 = vpop.f32.mrf.mxu0
      %v2432 = vpop.f32.mrf.mxu0
      %2433 = vdwg.mxu0
      %v2434 = vmul.f32 %v2428, %v2428
      %v2435 = vmul.f32 %v2430, %v2430
      %v2436 = vmul.f32 %v2428, %v2434
      %v2437 = vmul.f32 %v2430, %v2435
      %v2438 = vmul.f32 %v2436, 0.044715
      %v2439 = vmul.f32 %v2437, 0.044715
      %v2440 = vadd.f32 %v2428, %v2438
      %v2441 = vadd.f32 %v2430, %v2439
      %v2442 = vmul.f32 %v2440, 0.7978846
      %v2443 = vmul.f32 %v2441, 0.7978846
      %v2444 = vtanh.pop %v2442
      %v2445 = vtanh.pop %v2443
      %v2446 = vadd.f32 %v2444, 1.0
      %v2447 = vadd.f32 %v2445, 1.0
      %v2448 = vmul.f32 %v2446, 0.5
      %v2449 = vmul.f32 %v2447, 0.5
      %v2450 = vmul.f32 %v2428, %v2448
      %v2451 = vmul.f32 %v2430, %v2449
      %v2452 = vpack.c.bf16 %v2450, %v2450
      %v2453 = vpack.c.bf16 %v2451, %v2451
      %v2455 = vlaneseq
      %v2456 = vshrl.u32 %v2455, 7
      %v2457 = vsub.s32 0, %v2456
      %v2458 = vrot.slane %v654, %v2457
      %v2492 = vunpack.c.l.b16 %v622
      %v2493 = vunpack.c.l.b16 %v623
      %v2494 = vunpack.c.l.b16 %v624
      %v2495 = vunpack.c.l.b16 %v625
      %v2496 = vunpack.c.l.b16 %v626
      %v2497 = vunpack.c.l.b16 %v627
      %v2498 = vunpack.c.l.b16 %v628
      %v2499 = vunpack.c.l.b16 %v629
      %v2500 = vunpack.c.l.b16 %v630
      %v2501 = vunpack.c.l.b16 %v631
      %v2502 = vunpack.c.l.b16 %v632
      %v2503 = vunpack.c.l.b16 %v633
      %v2504 = vunpack.c.l.b16 %v634
      %v2505 = vunpack.c.l.b16 %v635
      %v2506 = vunpack.c.l.b16 %v636
      %v2507 = vunpack.c.l.b16 %v637
      %v2508 = vunpack.c.l.b16 %v638
      %v2509 = vunpack.c.l.b16 %v639
      %v2510 = vunpack.c.l.b16 %v640
      %v2511 = vunpack.c.l.b16 %v641
      %v2512 = vunpack.c.l.b16 %v642
      %v2513 = vunpack.c.l.b16 %v643
      %v2514 = vunpack.c.l.b16 %v644
      %v2515 = vunpack.c.l.b16 %v645
      %v2516 = vunpack.c.l.b16 %v646
      %v2517 = vunpack.c.l.b16 %v647
      %v2518 = vunpack.c.l.b16 %v648
      %v2519 = vunpack.c.l.b16 %v649
      %v2520 = vunpack.c.l.b16 %v650
      %v2521 = vunpack.c.l.b16 %v651
      %v2522 = vunpack.c.l.b16 %v652
      %v2523 = vunpack.c.l.b16 %v653
      %v2524 = vpack.c.b16 %v2493, %v2492
      %v2525 = vpack.c.b16 %v2495, %v2494
      %v2526 = vpack.c.b16 %v2497, %v2496
      %v2527 = vpack.c.b16 %v2499, %v2498
      %v2528 = vpack.c.b16 %v2501, %v2500
      %v2529 = vpack.c.b16 %v2503, %v2502
      %v2530 = vpack.c.b16 %v2505, %v2504
      %v2531 = vpack.c.b16 %v2507, %v2506
      %v2532 = vpack.c.b16 %v2509, %v2508
      %v2533 = vpack.c.b16 %v2511, %v2510
      %v2534 = vpack.c.b16 %v2513, %v2512
      %v2535 = vpack.c.b16 %v2515, %v2514
      %v2536 = vpack.c.b16 %v2517, %v2516
      %v2537 = vpack.c.b16 %v2519, %v2518
      %v2538 = vpack.c.b16 %v2521, %v2520
      %v2539 = vpack.c.b16 %v2523, %v2522
      %2556 = vmatprep.subr.bf16.mxu0 0
      %2557 = vmatpush1.bf16.msra.mxu0 %v2531
      %2558 = vmatprep.subr.bf16.mxu0 0
      %2559 = vmatpush1.bf16.msra.mxu0 %v2530
      %2560 = vmatprep.subr.bf16.mxu0 0
      %2561 = vmatpush1.bf16.msra.mxu0 %v2529
      %2562 = vmatprep.subr.bf16.mxu0 0
      %2563 = vmatpush1.bf16.msra.mxu0 %v2528
      %2564 = vmatprep.subr.bf16.mxu0 0
      %2565 = vmatpush1.bf16.msra.mxu0 %v2527
      %2566 = vmatprep.subr.bf16.mxu0 0
      %2567 = vmatpush1.bf16.msra.mxu0 %v2526
      %2568 = vmatprep.subr.bf16.mxu0 0
      %2569 = vmatpush1.bf16.msra.mxu0 %v2525
      %2570 = vmatprep.subr.bf16.mxu0 0
      %2571 = vmatpush1.bf16.msra.mxu0 %v2524
      %2572 = vmatprep.subr.bf16.mxu0 0
      %2573 = vmatpush2.bf16.msra.mxu0 %v2539
      %2574 = vmatprep.subr.bf16.mxu0 0
      %2575 = vmatpush2.bf16.msra.mxu0 %v2538
      %2576 = vmatprep.subr.bf16.mxu0 0
      %2577 = vmatpush2.bf16.msra.mxu0 %v2537
      %2578 = vmatprep.subr.bf16.mxu0 0
      %2579 = vmatpush2.bf16.msra.mxu0 %v2536
      %2580 = vmatprep.subr.bf16.mxu0 0
      %2581 = vmatpush2.bf16.msra.mxu0 %v2535
      %2582 = vmatprep.subr.bf16.mxu0 0
      %2583 = vmatpush2.bf16.msra.mxu0 %v2534
      %2584 = vmatprep.subr.bf16.mxu0 0
      %2585 = vmatpush2.bf16.msra.mxu0 %v2533
      %2586 = vmatprep.subr.bf16.mxu0 0
      %2587 = vmatpush2.bf16.msra.mxu0 %v2532
      %2588 = vmatprep.mubr.bf16.mxu0 %v2453
      %2589 = vmatmul.mubr.bf16.gmra.mxu0 %v2452
      %v2590 = vpop.f32.mrf.mxu0
      %v2591 = vadd.f32 %v2458, %v2590
      %v2592 = vpop.f32.mrf.mxu0
      %v2593 = vpop.f32.mrf.mxu0
      %v2594 = vpop.f32.mrf.mxu0
      %2595 = vdwg.mxu0
      %v2596 = vadd.f32 %v2310, %v2591
      %2597 = vst.msk [vmem:[%s597] sm:$0x1f] %vm655, %v2596
      %p2598 = scmp.lt.s32.totalorder %s30, 1
      %s2599 = scalar_select %p2598, %s30, 1
      %s2600 = smul.addr %s2599, 8
      %s2601 = scalar_lea.vmem %s19, %s2600
      // Predicated region
      $region97: #{anycalib_forward.5} parent=95 // pred_check
        %p2602 = pneg %p452
      $region98: #{anycalib_forward.5} parent=95 // pred_check_branch
        %2604 = sbr.rel (%p2602) target = $region100
      $region99: #{anycalib_forward.5} parent=95 // pred_region
        _
      $region100: #{anycalib_forward.5} parent=95 // pred_fallthru
        _
    $region96: #{anycalib_forward.5} parent=5 // pred_fallthru
      _
    %p2605 = scmp.le.s32.totalorder 2, %s25
    // Predicated region
    $region101: #{anycalib_forward.5} parent=5 // pred_check
      %p2606 = pneg %p2605
    $region102: #{anycalib_forward.5} parent=5 // pred_check_branch
      %2608 = sbr.rel (%p2606) target = $region104
    $region103: #{anycalib_forward.5} parent=5 // pred_region
      %s2609 = ssub.s32 %s25, 2
      // Predicated region
      $region105: #{anycalib_forward.5} parent=103 // pred_check
        %p2610 = pneg %p458
      $region106: #{anycalib_forward.5} parent=103 // pred_check_branch
        %2612 = sbr.rel (%p2610) target = $region108
      $region107: #{anycalib_forward.5} parent=103 // pred_region
        %p2613 = scmp.lt.s32.totalorder %s31, 1
        %s2614 = scalar_select %p2613, %s31, 1
        %s2615 = smul.addr %s2614, 8
        %s2616 = scalar_lea.vmem %s19, %s2615
      $region108: #{anycalib_forward.5} parent=103 // pred_fallthru
        _
    $region104: #{anycalib_forward.5} parent=5 // pred_fallthru
      _
  $region6: #{anycalib_forward.5} parent=0 // loop_footer
    %s29 = sadd.s32 1, %s25
  $region7: #{anycalib_forward.5} parent=0 // loop_footer_branch
    %24 = sbr.rel target = $region3
  $region8: #{anycalib_forward.5} parent=0 // loop_exit
    _

// kernel: anycalib_forward.6
$region0: #{anycalib_forward.6}
  #allocation0 [shape = 'u32[]', space=smem, size = 0x4, offset = 0x4, fixed_abs, tag = 'smem constant byte address 0x4 - core index']
  #allocation1 [shape = 'u32[144,128]{1,0:T(1,128)}', space=vmem, size = 0x12000, scoped, tag = 'internal scratch']
  %s0 = inlined_call_operand.vmem [shape: f32[2,5,64], index: 0, kind: input, shape index: {}]
  %s1 = inlined_call_operand.vmem [shape: f32[1,64], index: 1, kind: input, shape index: {}]
  %s2 = inlined_call_operand.vmem [shape: f32[1,64], index: 2, kind: input, shape index: {}]
  %s3 = inlined_call_operand.vmem [shape: bf16[4,64,16], index: 3, kind: input, shape index: {}]
  %s4 = inlined_call_operand.vmem [shape: f32[4,1,16], index: 4, kind: input, shape index: {}]
  %s5 = inlined_call_operand.vmem [shape: bf16[4,64,16], index: 5, kind: input, shape index: {}]
  %s6 = inlined_call_operand.vmem [shape: f32[4,1,16], index: 6, kind: input, shape index: {}]
  %s7 = inlined_call_operand.vmem [shape: bf16[4,64,16], index: 7, kind: input, shape index: {}]
  %s8 = inlined_call_operand.vmem [shape: f32[4,1,16], index: 8, kind: input, shape index: {}]
  %s9 = inlined_call_operand.vmem [shape: bf16[4,16,64], index: 9, kind: input, shape index: {}]
  %s10 = inlined_call_operand.vmem [shape: f32[1,64], index: 10, kind: input, shape index: {}]
  %s11 = inlined_call_operand.vmem [shape: f32[1,64], index: 11, kind: input, shape index: {}]
  %s12 = inlined_call_operand.vmem [shape: f32[1,64], index: 12, kind: input, shape index: {}]
  %s13 = inlined_call_operand.vmem [shape: bf16[64,256], index: 13, kind: input, shape index: {}]
  %s14 = inlined_call_operand.vmem [shape: f32[1,256], index: 14, kind: input, shape index: {}]
  %s15 = inlined_call_operand.vmem [shape: bf16[256,64], index: 15, kind: input, shape index: {}]
  %s16 = inlined_call_operand.vmem [shape: f32[1,64], index: 16, kind: input, shape index: {}]
  %s17 = inlined_call_operand.vmem [shape: f32[2,5,64], index: 17, kind: output, shape index: {}]
  %s18 = sld [smem:[#allocation0]]
  $region101: #{anycalib_forward.6} parent=0
    _
  %s20 = ssub.s32 1, %s18
  %s21 = scalar_select 0, %s20, %s18
  loop: start=0, step=1, limit=4
  $region2: #{anycalib_forward.6} parent=0 // loop_pre_header
    _
  $region3: #{anycalib_forward.6} parent=0 // loop_header
    %s23 = sphi 0, %s27
    %p24 = scmp.ge.s32.totalorder %s23, 4
    %s33 = sphi 0, %s35
    %s36 = sphi 0, %s33
    %s37 = sphi 0, %s36
    %s53 = sphi 0, %s37
    %s57 = sphi 0, %s57
    %s59 = sphi 0, %s57
    %s60 = sphi 0, %s59
    %s74 = sphi 0, %s60
    %s78 = sphi 0, %s78
    %s80 = sphi 0, %s78
    %s81 = sphi 0, %s80
    %s95 = sphi 0, %s81
    %s99 = sphi 0, %s99
    %s101 = sphi 0, %s99
    %s102 = sphi 0, %s101
    %s116 = sphi 0, %s102
    %s120 = sphi 0, %s120
    %s122 = sphi 0, %s120
    %s123 = sphi 0, %s122
    %s137 = sphi 0, %s123
    %s141 = sphi 0, %s141
    %s143 = sphi 0, %s141
    %s144 = sphi 0, %s143
    %s158 = sphi 0, %s144
    %s162 = sphi 0, %s162
    %s164 = sphi 0, %s162
    %s165 = sphi 0, %s164
    %s179 = sphi 0, %s165
    %s183 = sphi 0, %s183
    %s185 = sphi 0, %s183
    %s186 = sphi 0, %s185
    %s200 = sphi 0, %s186
    %s204 = sphi 0, %s204
    %s206 = sphi 0, %s204
    %s207 = sphi 0, %s206
    %s221 = sphi 0, %s207
    %s225 = sphi 0, %s225
    %s227 = sphi 0, %s225
    %s228 = sphi 0, %s227
    %s242 = sphi 0, %s228
    %s246 = sphi 0, %s246
    %s248 = sphi 0, %s246
    %s249 = sphi 0, %s248
    %s263 = sphi 0, %s249
    %s267 = sphi 0, %s267
    %s269 = sphi 0, %s267
    %s270 = sphi 0, %s269
    %s284 = sphi 0, %s270
    %s288 = sphi 0, %s288
    %s290 = sphi 0, %s288
    %s291 = sphi 0, %s290
    %s305 = sphi 0, %s291
    %s309 = sphi 0, %s309
    %s311 = sphi 0, %s309
    %s312 = sphi 0, %s311
    %s326 = sphi 0, %s312
    %s330 = sphi 0, %s330
    %s332 = sphi 0, %s330
    %s333 = sphi 0, %s332
    %s347 = sphi 0, %s333
    %s351 = sphi 0, %s351
    %s353 = sphi 0, %s351
    %s354 = sphi 0, %s353
    %s368 = sphi 0, %s354
    %s372 = sphi 0, %s372
    %s374 = sphi 0, %s372
    %s375 = sphi 0, %s374
    %s389 = sphi 0, %s375
    %s395 = sphi 0, %s397
    %s398 = sphi 0, %s395
    %s399 = sphi 0, %s398
    %s415 = sphi 0, %s399
  $region4: #{anycalib_forward.6} parent=0 // loop_header_branch
    %26 = sbr.rel (%p24) target = $region8
  $region5: #{anycalib_forward.6} parent=0 // loop_body
    %s28 = ssub.s32 %s23, 1
    %s29 = ssub.s32 %s23, 2
    %s30 = sadd.s32 %s23, 1
    %s31 = ssub.s32 %s23, %s30
    %p32 = scmp.eq.s32.totalorder %s31, 0
    %s34 = sadd.s32 %s33, 1
    %s35 = scalar_select %p32, %s33, %s34
    %p38 = pneg %p32
    %p39 = scmp.eq.s32.totalorder %s23, 1
    %p40 = por %p38, %p39
    %p41 = scmp.ne.s32.totalorder %s33, %s36
    %p42 = scmp.eq.s32.totalorder %s23, 0
    %p43 = por %p41, %p42
    %p44 = scmp.ne.s32.totalorder %s33, %s36
    %p45 = scmp.eq.s32.totalorder %s28, 1
    %p46 = por %p44, %p45
    %p47 = scmp.ne.s32.totalorder %s36, %s37
    %p48 = scmp.eq.s32.totalorder %s28, 0
    %p49 = por %p47, %p48
    %p50 = scmp.ne.s32.totalorder %s36, %s37
    %p51 = scmp.eq.s32.totalorder %s29, 1
    %p52 = por %p50, %p51
    %p54 = scmp.ne.s32.totalorder %s37, %s53
    %p55 = scmp.eq.s32.totalorder %s29, 0
    %p56 = por %p54, %p55
    %s58 = sadd.s32 %s57, 1
    %p61 = scmp.eq.s32.totalorder %s23, 1
    %p62 = scmp.ne.s32.totalorder %s57, %s59
    %p63 = scmp.eq.s32.totalorder %s23, 0
    %p64 = por %p62, %p63
    %p65 = scmp.ne.s32.totalorder %s57, %s59
    %p66 = scmp.eq.s32.totalorder %s28, 1
    %p67 = por %p65, %p66
    %p68 = scmp.ne.s32.totalorder %s59, %s60
    %p69 = scmp.eq.s32.totalorder %s28, 0
    %p70 = por %p68, %p69
    %p71 = scmp.ne.s32.totalorder %s59, %s60
    %p72 = scmp.eq.s32.totalorder %s29, 1
    %p73 = por %p71, %p72
    %p75 = scmp.ne.s32.totalorder %s60, %s74
    %p76 = scmp.eq.s32.totalorder %s29, 0
    %p77 = por %p75, %p76
    %s79 = sadd.s32 %s78, 1
    %p82 = scmp.eq.s32.totalorder %s23, 1
    %p83 = scmp.ne.s32.totalorder %s78, %s80
    %p84 = scmp.eq.s32.totalorder %s23, 0
    %p85 = por %p83, %p84
    %p86 = scmp.ne.s32.totalorder %s78, %s80
    %p87 = scmp.eq.s32.totalorder %s28, 1
    %p88 = por %p86, %p87
    %p89 = scmp.ne.s32.totalorder %s80, %s81
    %p90 = scmp.eq.s32.totalorder %s28, 0
    %p91 = por %p89, %p90
    %p92 = scmp.ne.s32.totalorder %s80, %s81
    %p93 = scmp.eq.s32.totalorder %s29, 1
    %p94 = por %p92, %p93
    %p96 = scmp.ne.s32.totalorder %s81, %s95
    %p97 = scmp.eq.s32.totalorder %s29, 0
    %p98 = por %p96, %p97
    %s100 = sadd.s32 %s99, 1
    %p103 = scmp.eq.s32.totalorder %s23, 1
    %p104 = scmp.ne.s32.totalorder %s99, %s101
    %p105 = scmp.eq.s32.totalorder %s23, 0
    %p106 = por %p104, %p105
    %p107 = scmp.ne.s32.totalorder %s99, %s101
    %p108 = scmp.eq.s32.totalorder %s28, 1
    %p109 = por %p107, %p108
    %p110 = scmp.ne.s32.totalorder %s101, %s102
    %p111 = scmp.eq.s32.totalorder %s28, 0
    %p112 = por %p110, %p111
    %p113 = scmp.ne.s32.totalorder %s101, %s102
    %p114 = scmp.eq.s32.totalorder %s29, 1
    %p115 = por %p113, %p114
    %p117 = scmp.ne.s32.totalorder %s102, %s116
    %p118 = scmp.eq.s32.totalorder %s29, 0
    %p119 = por %p117, %p118
    %s121 = sadd.s32 %s120, 1
    %p124 = scmp.eq.s32.totalorder %s23, 1
    %p125 = scmp.ne.s32.totalorder %s120, %s122
    %p126 = scmp.eq.s32.totalorder %s23, 0
    %p127 = por %p125, %p126
    %p128 = scmp.ne.s32.totalorder %s120, %s122
    %p129 = scmp.eq.s32.totalorder %s28, 1
    %p130 = por %p128, %p129
    %p131 = scmp.ne.s32.totalorder %s122, %s123
    %p132 = scmp.eq.s32.totalorder %s28, 0
    %p133 = por %p131, %p132
    %p134 = scmp.ne.s32.totalorder %s122, %s123
    %p135 = scmp.eq.s32.totalorder %s29, 1
    %p136 = por %p134, %p135
    %p138 = scmp.ne.s32.totalorder %s123, %s137
    %p139 = scmp.eq.s32.totalorder %s29, 0
    %p140 = por %p138, %p139
    %s142 = sadd.s32 %s141, 1
    %p145 = scmp.eq.s32.totalorder %s23, 1
    %p146 = scmp.ne.s32.totalorder %s141, %s143
    %p147 = scmp.eq.s32.totalorder %s23, 0
    %p148 = por %p146, %p147
    %p149 = scmp.ne.s32.totalorder %s141, %s143
    %p150 = scmp.eq.s32.totalorder %s28, 1
    %p151 = por %p149, %p150
    %p152 = scmp.ne.s32.totalorder %s143, %s144
    %p153 = scmp.eq.s32.totalorder %s28, 0
    %p154 = por %p152, %p153
    %p155 = scmp.ne.s32.totalorder %s143, %s144
    %p156 = scmp.eq.s32.totalorder %s29, 1
    %p157 = por %p155, %p156
    %p159 = scmp.ne.s32.totalorder %s144, %s158
    %p160 = scmp.eq.s32.totalorder %s29, 0
    %p161 = por %p159, %p160
    %s163 = sadd.s32 %s162, 1
    %p166 = scmp.eq.s32.totalorder %s23, 1
    %p167 = scmp.ne.s32.totalorder %s162, %s164
    %p168 = scmp.eq.s32.totalorder %s23, 0
    %p169 = por %p167, %p168
    %p170 = scmp.ne.s32.totalorder %s162, %s164
    %p171 = scmp.eq.s32.totalorder %s28, 1
    %p172 = por %p170, %p171
    %p173 = scmp.ne.s32.totalorder %s164, %s165
    %p174 = scmp.eq.s32.totalorder %s28, 0
    %p175 = por %p173, %p174
    %p176 = scmp.ne.s32.totalorder %s164, %s165
    %p177 = scmp.eq.s32.totalorder %s29, 1
    %p178 = por %p176, %p177
    %p180 = scmp.ne.s32.totalorder %s165, %s179
    %p181 = scmp.eq.s32.totalorder %s29, 0
    %p182 = por %p180, %p181
    %s184 = sadd.s32 %s183, 1
    %p187 = scmp.eq.s32.totalorder %s23, 1
    %p188 = scmp.ne.s32.totalorder %s183, %s185
    %p189 = scmp.eq.s32.totalorder %s23, 0
    %p190 = por %p188, %p189
    %p191 = scmp.ne.s32.totalorder %s183, %s185
    %p192 = scmp.eq.s32.totalorder %s28, 1
    %p193 = por %p191, %p192
    %p194 = scmp.ne.s32.totalorder %s185, %s186
    %p195 = scmp.eq.s32.totalorder %s28, 0
    %p196 = por %p194, %p195
    %p197 = scmp.ne.s32.totalorder %s185, %s186
    %p198 = scmp.eq.s32.totalorder %s29, 1
    %p199 = por %p197, %p198
    %p201 = scmp.ne.s32.totalorder %s186, %s200
    %p202 = scmp.eq.s32.totalorder %s29, 0
    %p203 = por %p201, %p202
    %s205 = sadd.s32 %s204, 1
    %p208 = scmp.eq.s32.totalorder %s23, 1
    %p209 = scmp.ne.s32.totalorder %s204, %s206
    %p210 = scmp.eq.s32.totalorder %s23, 0
    %p211 = por %p209, %p210
    %p212 = scmp.ne.s32.totalorder %s204, %s206
    %p213 = scmp.eq.s32.totalorder %s28, 1
    %p214 = por %p212, %p213
    %p215 = scmp.ne.s32.totalorder %s206, %s207
    %p216 = scmp.eq.s32.totalorder %s28, 0
    %p217 = por %p215, %p216
    %p218 = scmp.ne.s32.totalorder %s206, %s207
    %p219 = scmp.eq.s32.totalorder %s29, 1
    %p220 = por %p218, %p219
    %p222 = scmp.ne.s32.totalorder %s207, %s221
    %p223 = scmp.eq.s32.totalorder %s29, 0
    %p224 = por %p222, %p223
    %s226 = sadd.s32 %s225, 1
    %p229 = scmp.eq.s32.totalorder %s23, 1
    %p230 = scmp.ne.s32.totalorder %s225, %s227
    %p231 = scmp.eq.s32.totalorder %s23, 0
    %p232 = por %p230, %p231
    %p233 = scmp.ne.s32.totalorder %s225, %s227
    %p234 = scmp.eq.s32.totalorder %s28, 1
    %p235 = por %p233, %p234
    %p236 = scmp.ne.s32.totalorder %s227, %s228
    %p237 = scmp.eq.s32.totalorder %s28, 0
    %p238 = por %p236, %p237
    %p239 = scmp.ne.s32.totalorder %s227, %s228
    %p240 = scmp.eq.s32.totalorder %s29, 1
    %p241 = por %p239, %p240
    %p243 = scmp.ne.s32.totalorder %s228, %s242
    %p244 = scmp.eq.s32.totalorder %s29, 0
    %p245 = por %p243, %p244
    %s247 = sadd.s32 %s246, 1
    %p250 = scmp.eq.s32.totalorder %s23, 1
    %p251 = scmp.ne.s32.totalorder %s246, %s248
    %p252 = scmp.eq.s32.totalorder %s23, 0
    %p253 = por %p251, %p252
    %p254 = scmp.ne.s32.totalorder %s246, %s248
    %p255 = scmp.eq.s32.totalorder %s28, 1
    %p256 = por %p254, %p255
    %p257 = scmp.ne.s32.totalorder %s248, %s249
    %p258 = scmp.eq.s32.totalorder %s28, 0
    %p259 = por %p257, %p258
    %p260 = scmp.ne.s32.totalorder %s248, %s249
    %p261 = scmp.eq.s32.totalorder %s29, 1
    %p262 = por %p260, %p261
    %p264 = scmp.ne.s32.totalorder %s249, %s263
    %p265 = scmp.eq.s32.totalorder %s29, 0
    %p266 = por %p264, %p265
    %s268 = sadd.s32 %s267, 1
    %p271 = scmp.eq.s32.totalorder %s23, 1
    %p272 = scmp.ne.s32.totalorder %s267, %s269
    %p273 = scmp.eq.s32.totalorder %s23, 0
    %p274 = por %p272, %p273
    %p275 = scmp.ne.s32.totalorder %s267, %s269
    %p276 = scmp.eq.s32.totalorder %s28, 1
    %p277 = por %p275, %p276
    %p278 = scmp.ne.s32.totalorder %s269, %s270
    %p279 = scmp.eq.s32.totalorder %s28, 0
    %p280 = por %p278, %p279
    %p281 = scmp.ne.s32.totalorder %s269, %s270
    %p282 = scmp.eq.s32.totalorder %s29, 1
    %p283 = por %p281, %p282
    %p285 = scmp.ne.s32.totalorder %s270, %s284
    %p286 = scmp.eq.s32.totalorder %s29, 0
    %p287 = por %p285, %p286
    %s289 = sadd.s32 %s288, 1
    %p292 = scmp.eq.s32.totalorder %s23, 1
    %p293 = scmp.ne.s32.totalorder %s288, %s290
    %p294 = scmp.eq.s32.totalorder %s23, 0
    %p295 = por %p293, %p294
    %p296 = scmp.ne.s32.totalorder %s288, %s290
    %p297 = scmp.eq.s32.totalorder %s28, 1
    %p298 = por %p296, %p297
    %p299 = scmp.ne.s32.totalorder %s290, %s291
    %p300 = scmp.eq.s32.totalorder %s28, 0
    %p301 = por %p299, %p300
    %p302 = scmp.ne.s32.totalorder %s290, %s291
    %p303 = scmp.eq.s32.totalorder %s29, 1
    %p304 = por %p302, %p303
    %p306 = scmp.ne.s32.totalorder %s291, %s305
    %p307 = scmp.eq.s32.totalorder %s29, 0
    %p308 = por %p306, %p307
    %s310 = sadd.s32 %s309, 1
    %p313 = scmp.eq.s32.totalorder %s23, 1
    %p314 = scmp.ne.s32.totalorder %s309, %s311
    %p315 = scmp.eq.s32.totalorder %s23, 0
    %p316 = por %p314, %p315
    %p317 = scmp.ne.s32.totalorder %s309, %s311
    %p318 = scmp.eq.s32.totalorder %s28, 1
    %p319 = por %p317, %p318
    %p320 = scmp.ne.s32.totalorder %s311, %s312
    %p321 = scmp.eq.s32.totalorder %s28, 0
    %p322 = por %p320, %p321
    %p323 = scmp.ne.s32.totalorder %s311, %s312
    %p324 = scmp.eq.s32.totalorder %s29, 1
    %p325 = por %p323, %p324
    %p327 = scmp.ne.s32.totalorder %s312, %s326
    %p328 = scmp.eq.s32.totalorder %s29, 0
    %p329 = por %p327, %p328
    %s331 = sadd.s32 %s330, 1
    %p334 = scmp.eq.s32.totalorder %s23, 1
    %p335 = scmp.ne.s32.totalorder %s330, %s332
    %p336 = scmp.eq.s32.totalorder %s23, 0
    %p337 = por %p335, %p336
    %p338 = scmp.ne.s32.totalorder %s330, %s332
    %p339 = scmp.eq.s32.totalorder %s28, 1
    %p340 = por %p338, %p339
    %p341 = scmp.ne.s32.totalorder %s332, %s333
    %p342 = scmp.eq.s32.totalorder %s28, 0
    %p343 = por %p341, %p342
    %p344 = scmp.ne.s32.totalorder %s332, %s333
    %p345 = scmp.eq.s32.totalorder %s29, 1
    %p346 = por %p344, %p345
    %p348 = scmp.ne.s32.totalorder %s333, %s347
    %p349 = scmp.eq.s32.totalorder %s29, 0
    %p350 = por %p348, %p349
    %s352 = sadd.s32 %s351, 1
    %p355 = scmp.eq.s32.totalorder %s23, 1
    %p356 = scmp.ne.s32.totalorder %s351, %s353
    %p357 = scmp.eq.s32.totalorder %s23, 0
    %p358 = por %p356, %p357
    %p359 = scmp.ne.s32.totalorder %s351, %s353
    %p360 = scmp.eq.s32.totalorder %s28, 1
    %p361 = por %p359, %p360
    %p362 = scmp.ne.s32.totalorder %s353, %s354
    %p363 = scmp.eq.s32.totalorder %s28, 0
    %p364 = por %p362, %p363
    %p365 = scmp.ne.s32.totalorder %s353, %s354
    %p366 = scmp.eq.s32.totalorder %s29, 1
    %p367 = por %p365, %p366
    %p369 = scmp.ne.s32.totalorder %s354, %s368
    %p370 = scmp.eq.s32.totalorder %s29, 0
    %p371 = por %p369, %p370
    %s373 = sadd.s32 %s372, 1
    %p376 = scmp.eq.s32.totalorder %s23, 1
    %p377 = scmp.ne.s32.totalorder %s372, %s374
    %p378 = scmp.eq.s32.totalorder %s23, 0
    %p379 = por %p377, %p378
    %p380 = scmp.ne.s32.totalorder %s372, %s374
    %p381 = scmp.eq.s32.totalorder %s28, 1
    %p382 = por %p380, %p381
    %p383 = scmp.ne.s32.totalorder %s374, %s375
    %p384 = scmp.eq.s32.totalorder %s28, 0
    %p385 = por %p383, %p384
    %p386 = scmp.ne.s32.totalorder %s374, %s375
    %p387 = scmp.eq.s32.totalorder %s29, 1
    %p388 = por %p386, %p387
    %p390 = scmp.ne.s32.totalorder %s375, %s389
    %p391 = scmp.eq.s32.totalorder %s29, 0
    %p392 = por %p390, %p391
    %s393 = ssub.s32 %s23, %s30
    %p394 = scmp.eq.s32.totalorder %s393, 0
    %s396 = sadd.s32 %s395, 1
    %s397 = scalar_select %p394, %s395, %s396
    %p400 = pneg %p394
    %p401 = scmp.eq.s32.totalorder %s23, 1
    %p402 = por %p400, %p401
    %p403 = scmp.ne.s32.totalorder %s395, %s398
    %p404 = scmp.eq.s32.totalorder %s23, 0
    %p405 = por %p403, %p404
    %p406 = scmp.ne.s32.totalorder %s395, %s398
    %p407 = scmp.eq.s32.totalorder %s28, 1
    %p408 = por %p406, %p407
    %p409 = scmp.ne.s32.totalorder %s398, %s399
    %p410 = scmp.eq.s32.totalorder %s28, 0
    %p411 = por %p409, %p410
    %p412 = scmp.ne.s32.totalorder %s398, %s399
    %p413 = scmp.eq.s32.totalorder %s29, 1
    %p414 = por %p412, %p413
    %p416 = scmp.ne.s32.totalorder %s399, %s415
    %p417 = scmp.eq.s32.totalorder %s29, 0
    %p418 = por %p416, %p417
    %p419 = scmp.le.s32.totalorder 1, %s23
    %p420 = scmp.lt.s32.totalorder %s23, 3
    %p421 = pnand %p419, %p420
    %p422 = pneg %p421
    // Predicated region
    $region9: #{anycalib_forward.6} parent=5 // pred_check
      _
    $region10: #{anycalib_forward.6} parent=5 // pred_check_branch
      %424 = sbr.rel (%p421) target = $region12
    $region11: #{anycalib_forward.6} parent=5 // pred_region
      %s425 = ssub.s32 %s23, 1
      // Predicated region
      $region13: #{anycalib_forward.6} parent=11 // pred_check
        %p426 = pneg %p70
      $region14: #{anycalib_forward.6} parent=11 // pred_check_branch
        %428 = sbr.rel (%p426) target = $region16
      $region15: #{anycalib_forward.6} parent=11 // pred_region
        _
      $region16: #{anycalib_forward.6} parent=11 // pred_fallthru
        _
      // Predicated region
      $region17: #{anycalib_forward.6} parent=11 // pred_check
        %p429 = pneg %p91
      $region18: #{anycalib_forward.6} parent=11 // pred_check_branch
        %431 = sbr.rel (%p429) target = $region20
      $region19: #{anycalib_forward.6} parent=11 // pred_region
        _
      $region20: #{anycalib_forward.6} parent=11 // pred_fallthru
        _
      // Predicated region
      $region21: #{anycalib_forward.6} parent=11 // pred_check
        %p432 = pneg %p112
      $region22: #{anycalib_forward.6} parent=11 // pred_check_branch
        %434 = sbr.rel (%p432) target = $region24
      $region23: #{anycalib_forward.6} parent=11 // pred_region
        _
      $region24: #{anycalib_forward.6} parent=11 // pred_fallthru
        _
      // Predicated region
      $region25: #{anycalib_forward.6} parent=11 // pred_check
        %p435 = pneg %p133
      $region26: #{anycalib_forward.6} parent=11 // pred_check_branch
        %437 = sbr.rel (%p435) target = $region28
      $region27: #{anycalib_forward.6} parent=11 // pred_region
        _
      $region28: #{anycalib_forward.6} parent=11 // pred_fallthru
        _
      // Predicated region
      $region29: #{anycalib_forward.6} parent=11 // pred_check
        %p438 = pneg %p154
      $region30: #{anycalib_forward.6} parent=11 // pred_check_branch
        %440 = sbr.rel (%p438) target = $region32
      $region31: #{anycalib_forward.6} parent=11 // pred_region
        _
      $region32: #{anycalib_forward.6} parent=11 // pred_fallthru
        _
      // Predicated region
      $region33: #{anycalib_forward.6} parent=11 // pred_check
        %p441 = pneg %p175
      $region34: #{anycalib_forward.6} parent=11 // pred_check_branch
        %443 = sbr.rel (%p441) target = $region36
      $region35: #{anycalib_forward.6} parent=11 // pred_region
        _
      $region36: #{anycalib_forward.6} parent=11 // pred_fallthru
        _
      // Predicated region
      $region37: #{anycalib_forward.6} parent=11 // pred_check
        %p444 = pneg %p196
      $region38: #{anycalib_forward.6} parent=11 // pred_check_branch
        %446 = sbr.rel (%p444) target = $region40
      $region39: #{anycalib_forward.6} parent=11 // pred_region
        _
      $region40: #{anycalib_forward.6} parent=11 // pred_fallthru
        _
      // Predicated region
      $region41: #{anycalib_forward.6} parent=11 // pred_check
        %p447 = pneg %p217
      $region42: #{anycalib_forward.6} parent=11 // pred_check_branch
        %449 = sbr.rel (%p447) target = $region44
      $region43: #{anycalib_forward.6} parent=11 // pred_region
        _
      $region44: #{anycalib_forward.6} parent=11 // pred_fallthru
        _
      // Predicated region
      $region45: #{anycalib_forward.6} parent=11 // pred_check
        %p450 = pneg %p238
      $region46: #{anycalib_forward.6} parent=11 // pred_check_branch
        %452 = sbr.rel (%p450) target = $region48
      $region47: #{anycalib_forward.6} parent=11 // pred_region
        _
      $region48: #{anycalib_forward.6} parent=11 // pred_fallthru
        _
      // Predicated region
      $region49: #{anycalib_forward.6} parent=11 // pred_check
        %p453 = pneg %p259
      $region50: #{anycalib_forward.6} parent=11 // pred_check_branch
        %455 = sbr.rel (%p453) target = $region52
      $region51: #{anycalib_forward.6} parent=11 // pred_region
        _
      $region52: #{anycalib_forward.6} parent=11 // pred_fallthru
        _
      // Predicated region
      $region53: #{anycalib_forward.6} parent=11 // pred_check
        %p456 = pneg %p280
      $region54: #{anycalib_forward.6} parent=11 // pred_check_branch
        %458 = sbr.rel (%p456) target = $region56
      $region55: #{anycalib_forward.6} parent=11 // pred_region
        _
      $region56: #{anycalib_forward.6} parent=11 // pred_fallthru
        _
      // Predicated region
      $region57: #{anycalib_forward.6} parent=11 // pred_check
        %p459 = pneg %p301
      $region58: #{anycalib_forward.6} parent=11 // pred_check_branch
        %461 = sbr.rel (%p459) target = $region60
      $region59: #{anycalib_forward.6} parent=11 // pred_region
        _
      $region60: #{anycalib_forward.6} parent=11 // pred_fallthru
        _
      // Predicated region
      $region61: #{anycalib_forward.6} parent=11 // pred_check
        %p462 = pneg %p322
      $region62: #{anycalib_forward.6} parent=11 // pred_check_branch
        %464 = sbr.rel (%p462) target = $region64
      $region63: #{anycalib_forward.6} parent=11 // pred_region
        _
      $region64: #{anycalib_forward.6} parent=11 // pred_fallthru
        _
      // Predicated region
      $region65: #{anycalib_forward.6} parent=11 // pred_check
        %p465 = pneg %p343
      $region66: #{anycalib_forward.6} parent=11 // pred_check_branch
        %467 = sbr.rel (%p465) target = $region68
      $region67: #{anycalib_forward.6} parent=11 // pred_region
        _
      $region68: #{anycalib_forward.6} parent=11 // pred_fallthru
        _
      // Predicated region
      $region69: #{anycalib_forward.6} parent=11 // pred_check
        %p468 = pneg %p364
      $region70: #{anycalib_forward.6} parent=11 // pred_check_branch
        %470 = sbr.rel (%p468) target = $region72
      $region71: #{anycalib_forward.6} parent=11 // pred_region
        _
      $region72: #{anycalib_forward.6} parent=11 // pred_fallthru
        _
      // Predicated region
      $region73: #{anycalib_forward.6} parent=11 // pred_check
        %p471 = pneg %p385
      $region74: #{anycalib_forward.6} parent=11 // pred_check_branch
        %473 = sbr.rel (%p471) target = $region76
      $region75: #{anycalib_forward.6} parent=11 // pred_region
        _
      $region76: #{anycalib_forward.6} parent=11 // pred_fallthru
        _
    $region12: #{anycalib_forward.6} parent=5 // pred_fallthru
      _
    %p474 = scmp.lt.s32.totalorder %s23, 2
    // Predicated region
    $region77: #{anycalib_forward.6} parent=5 // pred_check
      %p475 = pneg %p474
    $region78: #{anycalib_forward.6} parent=5 // pred_check_branch
      %477 = sbr.rel (%p475) target = $region80
    $region79: #{anycalib_forward.6} parent=5 // pred_region
      // Predicated region
      $region81: #{anycalib_forward.6} parent=79 // pred_check
        %p478 = pneg %p43
      $region82: #{anycalib_forward.6} parent=79 // pred_check_branch
        %480 = sbr.rel (%p478) target = $region84
      $region83: #{anycalib_forward.6} parent=79 // pred_region
        %p481 = scmp.lt.s32.totalorder %s23, 1
        %s482 = scalar_select %p481, %s23, 1
        %s483 = smul.addr %s482, 8
        %s484 = scalar_lea.vmem %s0, %s483
      $region84: #{anycalib_forward.6} parent=79 // pred_fallthru
        _
    $region80: #{anycalib_forward.6} parent=5 // pred_fallthru
      _
    %p485 = scmp.le.s32.totalorder 1, %s23
    %p486 = scmp.lt.s32.totalorder %s23, 3
    %p487 = pnand %p485, %p486
    %p488 = pneg %p487
    // Predicated region
    $region85: #{anycalib_forward.6} parent=5 // pred_check
      _
    $region86: #{anycalib_forward.6} parent=5 // pred_check_branch
      %490 = sbr.rel (%p487) target = $region88
    $region87: #{anycalib_forward.6} parent=5 // pred_region
      %s491 = ssub.s32 %s23, 1
      %p492 = scmp.lt.s32.totalorder %s28, 1
      %s493 = scalar_select %p492, %s28, 1
      %s494 = smul.addr %s493, 8
      %s495 = scalar_lea.vmem %s0, %s494
      %p496 = pneg %p49
      %p497 = pneg %p46
      %p498 = pneg %p70
      %p499 = pneg %p67
      %p500 = pneg %p91
      %p501 = pneg %p88
      %p502 = pneg %p112
      %p503 = pneg %p109
      %p504 = pneg %p133
      %p505 = pneg %p130
      %p506 = pneg %p154
      %p507 = pneg %p151
      %p508 = pneg %p175
      %p509 = pneg %p172
      %p510 = pneg %p196
      %p511 = pneg %p193
      %p512 = pneg %p217
      %p513 = pneg %p214
      %p514 = pneg %p238
      %p515 = pneg %p235
      %p516 = pneg %p259
      %p517 = pneg %p256
      %p518 = pneg %p280
      %p519 = pneg %p277
      %p520 = pneg %p301
      %p521 = pneg %p298
      %p522 = pneg %p322
      %p523 = pneg %p319
      %p524 = pneg %p343
      %p525 = pneg %p340
      %p526 = pneg %p364
      %p527 = pneg %p361
      %p528 = pneg %p385
      %p529 = pneg %p382
      %p530 = pneg %p411
      %p531 = pneg %p408
      %p532 = scmp.lt.s32.totalorder %s28, 1
      %s533 = scalar_select %p532, %s28, 1
      %s534 = smul.addr %s533, 8
      %s535 = scalar_lea.vmem %s17, %s534
      %p536 = scmp.lt.s32.totalorder %s28, 1
      %s537 = scalar_select %p536, %s28, 1
      %s538 = smul.addr %s537, 8
      %s539 = scalar_lea.vmem %s0, %s538
      %p540 = scmp.lt.s32.totalorder %s28, 1
      %s541 = scalar_select %p540, %s28, 1
      %s542 = smul.addr %s541, 8
      %s543 = scalar_lea.vmem %s17, %s542
      %v545 = vld [vmem:[%s539] sm:$0x1f]
      %v546 = vld [vmem:[%s1] sm:$0x1]
      %v547 = vld [vmem:[%s2] sm:$0x1]
      %v548 = vld [vmem:[%s10] sm:$0x1]
      %v549 = vld [vmem:[%s11] sm:$0x1]
      %v550 = vld [vmem:[%s12] sm:$0x1]
      %v551 = vld [vmem:[%s13] sm:$0xff]
      %v552 = vld [vmem:[%s13 + $0x8] sm:$0xff]
      %v553 = vld [vmem:[%s13 + $0x10] sm:$0xff]
      %v554 = vld [vmem:[%s13 + $0x18] sm:$0xff]
      %v555 = vld [vmem:[%s13 + $0x20] sm:$0xff]
      %v556 = vld [vmem:[%s13 + $0x28] sm:$0xff]
      %v557 = vld [vmem:[%s13 + $0x30] sm:$0xff]
      %v558 = vld [vmem:[%s13 + $0x38] sm:$0xff]
      %v559 = vld [vmem:[%s14] sm:$0x3]
      %v560 = vld [vmem:[%s15] sm:$0xf]
      %v561 = vld [vmem:[%s15 + $0x4] sm:$0xf]
      %v562 = vld [vmem:[%s15 + $0x8] sm:$0xf]
      %v563 = vld [vmem:[%s15 + $0xc] sm:$0xf]
      %v564 = vld [vmem:[%s15 + $0x10] sm:$0xf]
      %v565 = vld [vmem:[%s15 + $0x14] sm:$0xf]
      %v566 = vld [vmem:[%s15 + $0x18] sm:$0xf]
      %v567 = vld [vmem:[%s15 + $0x1c] sm:$0xf]
      %v568 = vld [vmem:[%s15 + $0x20] sm:$0xf]
      %v569 = vld [vmem:[%s15 + $0x24] sm:$0xf]
      %v570 = vld [vmem:[%s15 + $0x28] sm:$0xf]
      %v571 = vld [vmem:[%s15 + $0x2c] sm:$0xf]
      %v572 = vld [vmem:[%s15 + $0x30] sm:$0xf]
      %v573 = vld [vmem:[%s15 + $0x34] sm:$0xf]
      %v574 = vld [vmem:[%s15 + $0x38] sm:$0xf]
      %v575 = vld [vmem:[%s15 + $0x3c] sm:$0xf]
      %v576 = vld [vmem:[%s15 + $0x40] sm:$0xf]
      %v577 = vld [vmem:[%s15 + $0x44] sm:$0xf]
      %v578 = vld [vmem:[%s15 + $0x48] sm:$0xf]
      %v579 = vld [vmem:[%s15 + $0x4c] sm:$0xf]
      %v580 = vld [vmem:[%s15 + $0x50] sm:$0xf]
      %v581 = vld [vmem:[%s15 + $0x54] sm:$0xf]
      %v582 = vld [vmem:[%s15 + $0x58] sm:$0xf]
      %v583 = vld [vmem:[%s15 + $0x5c] sm:$0xf]
      %v584 = vld [vmem:[%s15 + $0x60] sm:$0xf]
      %v585 = vld [vmem:[%s15 + $0x64] sm:$0xf]
      %v586 = vld [vmem:[%s15 + $0x68] sm:$0xf]
      %v587 = vld [vmem:[%s15 + $0x6c] sm:$0xf]
      %v588 = vld [vmem:[%s15 + $0x70] sm:$0xf]
      %v589 = vld [vmem:[%s15 + $0x74] sm:$0xf]
      %v590 = vld [vmem:[%s15 + $0x78] sm:$0xf]
      %v591 = vld [vmem:[%s15 + $0x7c] sm:$0xf]
      %v592 = vld [vmem:[%s16] sm:$0x1]
      %vm593 = vcmask 520192
      %v594 = vsel %vm593, %v545, 0.0
      %595 = vadd.xlane.f32.xlu0 %v594
      %v596 = vpop.xlane.xlu0 %595
      %v597 = vrcp.pop 64.0
      %v598 = vmul.f32 %v596, %v597
      %v599 = vsub.f32 %v545, %v598
      %v600 = vmul.f32 %v599, %v599
      %v601 = vsel %vm593, %v600, 0.0
      %602 = vadd.xlane.f32.xlu0 %v601
      %v603 = vpop.xlane.xlu0 %602
      %v604 = vmul.f32 %v603, %v597
      %v605 = vadd.f32 %v604, 1e-05
      %v606 = vrsqrt.pop %v605
      %v607 = vmul.f32 %v599, %v606
      %v609 = vlaneseq
      %v610 = vshrl.u32 %v609, 7
      %v611 = vsub.s32 0, %v610
      %v612 = vrot.slane %v546, %v611
      %v614 = vmul.f32 %v607, %v612
      %v616 = vlaneseq
      %v617 = vshrl.u32 %v616, 7
      %v618 = vsub.s32 0, %v617
      %v619 = vrot.slane %v547, %v618
      %v621 = vadd.f32 %v614, %v619
      %v622 = vpack.c.bf16 %v621, %v621
      %v623 = vld [vmem:[%s3] sm:$0xf]
      %v624 = vld [vmem:[%s3 + $0x4] sm:$0xf]
      %v625 = vld [vmem:[%s3 + $0x8] sm:$0xf]
      %v626 = vld [vmem:[%s3 + $0xc] sm:$0xf]
      %v627 = vld [vmem:[%s3 + $0x10] sm:$0xf]
      %v628 = vld [vmem:[%s3 + $0x14] sm:$0xf]
      %v629 = vld [vmem:[%s3 + $0x18] sm:$0xf]
      %v630 = vld [vmem:[%s3 + $0x1c] sm:$0xf]
      %v631 = vld [vmem:[%s4] sm:$0x1]
      %v633 = vlaneseq
      %v634 = vshrl.u32 %v633, 7
      %v635 = vsub.s32 0, %v634
      %v636 = vrot.slane %v631, %v635
      %v646 = vunpack.c.l.b16 %v623
      %v647 = vunpack.c.l.b16 %v624
      %v648 = vunpack.c.l.b16 %v625
      %v649 = vunpack.c.l.b16 %v626
      %v650 = vunpack.c.l.b16 %v627
      %v651 = vunpack.c.l.b16 %v628
      %v652 = vunpack.c.l.b16 %v629
      %v653 = vunpack.c.l.b16 %v630
      %v654 = vpack.c.b16 %v647, %v646
      %v655 = vpack.c.b16 %v649, %v648
      %v656 = vpack.c.b16 %v651, %v650
      %v657 = vpack.c.b16 %v653, %v652
      %vm662 = vcmask 523264
      %v664 = vsel %vm662, %v622, 0
      %666 = vmatprep.subr.bf16.mxu0 0
      %667 = vmatpush1.bf16.msra.mxu0 0
      %668 = vmatprep.subr.bf16.mxu0 0
      %669 = vmatpush1.bf16.msra.mxu0 0
      %670 = vmatprep.subr.bf16.mxu0 0
      %671 = vmatpush1.bf16.msra.mxu0 0
      %672 = vmatprep.subr.bf16.mxu0 0
      %673 = vmatpush1.bf16.msra.mxu0 0
      %674 = vmatprep.subr.bf16.mxu0 0
      %675 = vmatpush1.bf16.msra.mxu0 %v657
      %676 = vmatprep.subr.bf16.mxu0 0
      %677 = vmatpush1.bf16.msra.mxu0 %v656
      %678 = vmatprep.subr.bf16.mxu0 0
      %679 = vmatpush1.bf16.msra.mxu0 %v655
      %680 = vmatprep.subr.bf16.mxu0 0
      %681 = vmatpush1.bf16.msra.mxu0 %v654
      %682 = vmatprep.subr.bf16.mxu0 0
      %683 = vmatpush2.bf16.msra.mxu0 0
      %684 = vmatprep.subr.bf16.mxu0 0
      %685 = vmatpush2.bf16.msra.mxu0 0
      %686 = vmatprep.subr.bf16.mxu0 0
      %687 = vmatpush2.bf16.msra.mxu0 0
      %688 = vmatprep.subr.bf16.mxu0 0
      %689 = vmatpush2.bf16.msra.mxu0 0
      %690 = vmatprep.subr.bf16.mxu0 0
      %691 = vmatpush2.bf16.msra.mxu0 0
      %692 = vmatprep.subr.bf16.mxu0 0
      %693 = vmatpush2.bf16.msra.mxu0 0
      %694 = vmatprep.subr.bf16.mxu0 0
      %695 = vmatpush2.bf16.msra.mxu0 0
      %696 = vmatprep.subr.bf16.mxu0 0
      %697 = vmatpush2.bf16.msra.mxu0 0
      %698 = vmatprep.mubr.bf16.mxu0 0
      %699 = vmatmul.mubr.bf16.gmra.mxu0 %v664
      %v700 = vpop.f32.mrf.mxu0
      %v701 = vadd.f32 %v636, %v700
      %v702 = vpop.f32.mrf.mxu0
      %v703 = vpop.f32.mrf.mxu0
      %v704 = vpop.f32.mrf.mxu0
      %705 = vdwg.mxu0
      %v706 = vld [vmem:[%s5] sm:$0xf]
      %v707 = vld [vmem:[%s5 + $0x4] sm:$0xf]
      %v708 = vld [vmem:[%s5 + $0x8] sm:$0xf]
      %v709 = vld [vmem:[%s5 + $0xc] sm:$0xf]
      %v710 = vld [vmem:[%s5 + $0x10] sm:$0xf]
      %v711 = vld [vmem:[%s5 + $0x14] sm:$0xf]
      %v712 = vld [vmem:[%s5 + $0x18] sm:$0xf]
      %v713 = vld [vmem:[%s5 + $0x1c] sm:$0xf]
      %v714 = vld [vmem:[%s6] sm:$0x1]
      %v716 = vlaneseq
      %v717 = vshrl.u32 %v716, 7
      %v718 = vsub.s32 0, %v717
      %v719 = vrot.slane %v714, %v718
      %v729 = vunpack.c.l.b16 %v706
      %v730 = vunpack.c.l.b16 %v707
      %v731 = vunpack.c.l.b16 %v708
      %v732 = vunpack.c.l.b16 %v709
      %v733 = vunpack.c.l.b16 %v710
      %v734 = vunpack.c.l.b16 %v711
      %v735 = vunpack.c.l.b16 %v712
      %v736 = vunpack.c.l.b16 %v713
      %v737 = vpack.c.b16 %v730, %v729
      %v738 = vpack.c.b16 %v732, %v731
      %v739 = vpack.c.b16 %v734, %v733
      %v740 = vpack.c.b16 %v736, %v735
      %745 = vmatprep.subr.bf16.mxu0 0
      %746 = vmatpush1.bf16.msra.mxu0 0
      %747 = vmatprep.subr.bf16.mxu0 0
      %748 = vmatpush1.bf16.msra.mxu0 0
      %749 = vmatprep.subr.bf16.mxu0 0
      %750 = vmatpush1.bf16.msra.mxu0 0
      %751 = vmatprep.subr.bf16.mxu0 0
      %752 = vmatpush1.bf16.msra.mxu0 0
      %753 = vmatprep.subr.bf16.mxu0 0
      %754 = vmatpush1.bf16.msra.mxu0 %v740
      %755 = vmatprep.subr.bf16.mxu0 0
      %756 = vmatpush1.bf16.msra.mxu0 %v739
      %757 = vmatprep.subr.bf16.mxu0 0
      %758 = vmatpush1.bf16.msra.mxu0 %v738
      %759 = vmatprep.subr.bf16.mxu0 0
      %760 = vmatpush1.bf16.msra.mxu0 %v737
      %761 = vmatprep.subr.bf16.mxu0 0
      %762 = vmatpush2.bf16.msra.mxu0 0
      %763 = vmatprep.subr.bf16.mxu0 0
      %764 = vmatpush2.bf16.msra.mxu0 0
      %765 = vmatprep.subr.bf16.mxu0 0
      %766 = vmatpush2.bf16.msra.mxu0 0
      %767 = vmatprep.subr.bf16.mxu0 0
      %768 = vmatpush2.bf16.msra.mxu0 0
      %769 = vmatprep.subr.bf16.mxu0 0
      %770 = vmatpush2.bf16.msra.mxu0 0
      %771 = vmatprep.subr.bf16.mxu0 0
      %772 = vmatpush2.bf16.msra.mxu0 0
      %773 = vmatprep.subr.bf16.mxu0 0
      %774 = vmatpush2.bf16.msra.mxu0 0
      %775 = vmatprep.subr.bf16.mxu0 0
      %776 = vmatpush2.bf16.msra.mxu0 0
      %777 = vmatprep.mubr.bf16.mxu0 0
      %778 = vmatmul.mubr.bf16.gmra.mxu0 %v664
      %v779 = vpop.f32.mrf.mxu0
      %v780 = vadd.f32 %v719, %v779
      %v781 = vpop.f32.mrf.mxu0
      %v782 = vpop.f32.mrf.mxu0
      %v783 = vpop.f32.mrf.mxu0
      %784 = vdwg.mxu0
      %v785 = vld [vmem:[%s7] sm:$0xf]
      %v786 = vld [vmem:[%s7 + $0x4] sm:$0xf]
      %v787 = vld [vmem:[%s7 + $0x8] sm:$0xf]
      %v788 = vld [vmem:[%s7 + $0xc] sm:$0xf]
      %v789 = vld [vmem:[%s7 + $0x10] sm:$0xf]
      %v790 = vld [vmem:[%s7 + $0x14] sm:$0xf]
      %v791 = vld [vmem:[%s7 + $0x18] sm:$0xf]
      %v792 = vld [vmem:[%s7 + $0x1c] sm:$0xf]
      %v793 = vld [vmem:[%s8] sm:$0x1]
      %v795 = vlaneseq
      %v796 = vshrl.u32 %v795, 7
      %v797 = vsub.s32 0, %v796
      %v798 = vrot.slane %v793, %v797
      %v808 = vunpack.c.l.b16 %v785
      %v809 = vunpack.c.l.b16 %v786
      %v810 = vunpack.c.l.b16 %v787
      %v811 = vunpack.c.l.b16 %v788
      %v812 = vunpack.c.l.b16 %v789
      %v813 = vunpack.c.l.b16 %v790
      %v814 = vunpack.c.l.b16 %v791
      %v815 = vunpack.c.l.b16 %v792
      %v816 = vpack.c.b16 %v809, %v808
      %v817 = vpack.c.b16 %v811, %v810
      %v818 = vpack.c.b16 %v813, %v812
      %v819 = vpack.c.b16 %v815, %v814
      %824 = vmatprep.subr.bf16.mxu0 0
      %825 = vmatpush1.bf16.msra.mxu0 0
      %826 = vmatprep.subr.bf16.mxu0 0
      %827 = vmatpush1.bf16.msra.mxu0 0
      %828 = vmatprep.subr.bf16.mxu0 0
      %829 = vmatpush1.bf16.msra.mxu0 0
      %830 = vmatprep.subr.bf16.mxu0 0
      %831 = vmatpush1.bf16.msra.mxu0 0
      %832 = vmatprep.subr.bf16.mxu0 0
      %833 = vmatpush1.bf16.msra.mxu0 %v819
      %834 = vmatprep.subr.bf16.mxu0 0
      %835 = vmatpush1.bf16.msra.mxu0 %v818
      %836 = vmatprep.subr.bf16.mxu0 0
      %837 = vmatpush1.bf16.msra.mxu0 %v817
      %838 = vmatprep.subr.bf16.mxu0 0
      %839 = vmatpush1.bf16.msra.mxu0 %v816
      %840 = vmatprep.subr.bf16.mxu0 0
      %841 = vmatpush2.bf16.msra.mxu0 0
      %842 = vmatprep.subr.bf16.mxu0 0
      %843 = vmatpush2.bf16.msra.mxu0 0
      %844 = vmatprep.subr.bf16.mxu0 0
      %845 = vmatpush2.bf16.msra.mxu0 0
      %846 = vmatprep.subr.bf16.mxu0 0
      %847 = vmatpush2.bf16.msra.mxu0 0
      %848 = vmatprep.subr.bf16.mxu0 0
      %849 = vmatpush2.bf16.msra.mxu0 0
      %850 = vmatprep.subr.bf16.mxu0 0
      %851 = vmatpush2.bf16.msra.mxu0 0
      %852 = vmatprep.subr.bf16.mxu0 0
      %853 = vmatpush2.bf16.msra.mxu0 0
      %854 = vmatprep.subr.bf16.mxu0 0
      %855 = vmatpush2.bf16.msra.mxu0 0
      %856 = vmatprep.mubr.bf16.mxu0 0
      %857 = vmatmul.mubr.bf16.gmra.mxu0 %v664
      %v858 = vpop.f32.mrf.mxu0
      %v859 = vadd.f32 %v798, %v858
      %v860 = vpop.f32.mrf.mxu0
      %v861 = vpop.f32.mrf.mxu0
      %v862 = vpop.f32.mrf.mxu0
      %863 = vdwg.mxu0
      %v864 = vpack.c.bf16 %v701, %v701
      %v865 = vpack.c.bf16 %v780, %v780
      %vm866 = vcmask 130048
      %v868 = vsel %vm866, %v864, 0
      %v871 = vsel %vm866, %v865, 0
      %873 = vmatprep.subr.bf16.mxu0 0
      %874 = vmatpush1.bf16.xpose.msra.mxu0 0
      %875 = vmatprep.subr.bf16.mxu0 0
      %876 = vmatpush1.bf16.xpose.msra.mxu0 0
      %877 = vmatprep.subr.bf16.mxu0 0
      %878 = vmatpush1.bf16.xpose.msra.mxu0 0
      %879 = vmatprep.subr.bf16.mxu0 0
      %880 = vmatpush1.bf16.xpose.msra.mxu0 0
      %881 = vmatprep.subr.bf16.mxu0 0
      %882 = vmatpush1.bf16.xpose.msra.mxu0 0
      %883 = vmatprep.subr.bf16.mxu0 0
      %884 = vmatpush1.bf16.xpose.msra.mxu0 0
      %885 = vmatprep.subr.bf16.mxu0 0
      %886 = vmatpush1.bf16.xpose.msra.mxu0 0
      %887 = vmatprep.subr.bf16.mxu0 0
      %888 = vmatpush1.bf16.xpose.msra.mxu0 %v871
      %889 = vmatprep.subr.bf16.mxu0 0
      %890 = vmatpush2.bf16.xpose.msra.mxu0 0
      %891 = vmatprep.subr.bf16.mxu0 0
      %892 = vmatpush2.bf16.xpose.msra.mxu0 0
      %893 = vmatprep.subr.bf16.mxu0 0
      %894 = vmatpush2.bf16.xpose.msra.mxu0 0
      %895 = vmatprep.subr.bf16.mxu0 0
      %896 = vmatpush2.bf16.xpose.msra.mxu0 0
      %897 = vmatprep.subr.bf16.mxu0 0
      %898 = vmatpush2.bf16.xpose.msra.mxu0 0
      %899 = vmatprep.subr.bf16.mxu0 0
      %900 = vmatpush2.bf16.xpose.msra.mxu0 0
      %901 = vmatprep.subr.bf16.mxu0 0
      %902 = vmatpush2.bf16.xpose.msra.mxu0 0
      %903 = vmatprep.subr.bf16.mxu0 0
      %904 = vmatpush2.bf16.xpose.msra.mxu0 0
      %905 = vmatprep.mubr.bf16.mxu0 0
      %906 = vmatmul.mubr.bf16.gmra.mxu0 %v868
      %v907 = vpop.f32.mrf.mxu0
      %v908 = vadd.f32 0.0, %v907
      %v909 = vpop.f32.mrf.mxu0
      %v910 = vpop.f32.mrf.mxu0
      %v911 = vpop.f32.mrf.mxu0
      %912 = vdwg.mxu0
      %vm913 = vcmask 36864
      %v914 = vsel %vm913, %v908, -inf
      %915 = vmax.xlane.f32.xlu0 %v914
      %v916 = vpop.xlane.xlu0 %915
      %v917 = vsub.f32 %v908, %v916
      %v918 = vmul.f32 %v917, 1.442695
      %v919 = vpow.pop %v918
      %v920 = vsel %vm913, %v919, 0.0
      %921 = vadd.xlane.f32.xlu0 %v920
      %v922 = vpop.xlane.xlu0 %921
      %v923 = vrcp.pop %v922
      %v924 = vmul.f32 %v919, %v923
      %v925 = vpack.c.bf16 %v924, %v924
      %v926 = vpack.c.bf16 %v859, %v859
      %vm927 = vcmask 39936
      %v929 = vsel %vm927, %v925, 0
      %vm931 = vcmask 1041408
      %vm932 = vcmask 1042432
      %v933 = vsel %vm931, 4294967295, 65535
      %v934 = vsel %vm932, %v933, 0
      %v936 = vand.u32 %v926, %v934
      %938 = vmatprep.subr.bf16.mxu0 0
      %939 = vmatpush1.bf16.msra.mxu0 0
      %940 = vmatprep.subr.bf16.mxu0 0
      %941 = vmatpush1.bf16.msra.mxu0 0
      %942 = vmatprep.subr.bf16.mxu0 0
      %943 = vmatpush1.bf16.msra.mxu0 0
      %944 = vmatprep.subr.bf16.mxu0 0
      %945 = vmatpush1.bf16.msra.mxu0 0
      %946 = vmatprep.subr.bf16.mxu0 0
      %947 = vmatpush1.bf16.msra.mxu0 0
      %948 = vmatprep.subr.bf16.mxu0 0
      %949 = vmatpush1.bf16.msra.mxu0 0
      %950 = vmatprep.subr.bf16.mxu0 0
      %951 = vmatpush1.bf16.msra.mxu0 0
      %952 = vmatprep.subr.bf16.mxu0 0
      %953 = vmatpush1.bf16.msra.mxu0 %v936
      %954 = vmatprep.subr.bf16.mxu0 0
      %955 = vmatpush2.bf16.msra.mxu0 0
      %956 = vmatprep.subr.bf16.mxu0 0
      %957 = vmatpush2.bf16.msra.mxu0 0
      %958 = vmatprep.subr.bf16.mxu0 0
      %959 = vmatpush2.bf16.msra.mxu0 0
      %960 = vmatprep.subr.bf16.mxu0 0
      %961 = vmatpush2.bf16.msra.mxu0 0
      %962 = vmatprep.subr.bf16.mxu0 0
      %963 = vmatpush2.bf16.msra.mxu0 0
      %964 = vmatprep.subr.bf16.mxu0 0
      %965 = vmatpush2.bf16.msra.mxu0 0
      %966 = vmatprep.subr.bf16.mxu0 0
      %967 = vmatpush2.bf16.msra.mxu0 0
      %968 = vmatprep.subr.bf16.mxu0 0
      %969 = vmatpush2.bf16.msra.mxu0 0
      %970 = vmatprep.mubr.bf16.mxu0 0
      %971 = vmatmul.mubr.bf16.gmra.mxu0 %v929
      %v972 = vpop.f32.mrf.mxu0
      %v973 = vadd.f32 0.0, %v972
      %v974 = vpop.f32.mrf.mxu0
      %v975 = vpop.f32.mrf.mxu0
      %v976 = vpop.f32.mrf.mxu0
      %977 = vdwg.mxu0
      %v978 = vpack.c.bf16 %v973, %v973
      %v979 = vld [vmem:[%s9] sm:$0xf]
      %v980 = vld [vmem:[%s9 + $0x4] sm:$0xf]
      %s981 = scalar_lea.vmem %s3, 32
      %v982 = vld [vmem:[%s981] sm:$0xf]
      %v983 = vld [vmem:[%s981 + $0x4] sm:$0xf]
      %v984 = vld [vmem:[%s981 + $0x8] sm:$0xf]
      %v985 = vld [vmem:[%s981 + $0xc] sm:$0xf]
      %v986 = vld [vmem:[%s981 + $0x10] sm:$0xf]
      %v987 = vld [vmem:[%s981 + $0x14] sm:$0xf]
      %v988 = vld [vmem:[%s981 + $0x18] sm:$0xf]
      %v989 = vld [vmem:[%s981 + $0x1c] sm:$0xf]
      %s990 = scalar_lea.vmem %s4, 1
      %v991 = vld [vmem:[%s990] sm:$0x1]
      %v993 = vlaneseq
      %v994 = vshrl.u32 %v993, 7
      %v995 = vsub.s32 0, %v994
      %v996 = vrot.slane %v991, %v995
      %v1006 = vunpack.c.l.b16 %v982
      %v1007 = vunpack.c.l.b16 %v983
      %v1008 = vunpack.c.l.b16 %v984
      %v1009 = vunpack.c.l.b16 %v985
      %v1010 = vunpack.c.l.b16 %v986
      %v1011 = vunpack.c.l.b16 %v987
      %v1012 = vunpack.c.l.b16 %v988
      %v1013 = vunpack.c.l.b16 %v989
      %v1014 = vpack.c.b16 %v1007, %v1006
      %v1015 = vpack.c.b16 %v1009, %v1008
      %v1016 = vpack.c.b16 %v1011, %v1010
      %v1017 = vpack.c.b16 %v1013, %v1012
      %1022 = vmatprep.subr.bf16.mxu0 0
      %1023 = vmatpush1.bf16.msra.mxu0 0
      %1024 = vmatprep.subr.bf16.mxu0 0
      %1025 = vmatpush1.bf16.msra.mxu0 0
      %1026 = vmatprep.subr.bf16.mxu0 0
      %1027 = vmatpush1.bf16.msra.mxu0 0
      %1028 = vmatprep.subr.bf16.mxu0 0
      %1029 = vmatpush1.bf16.msra.mxu0 0
      %1030 = vmatprep.subr.bf16.mxu0 0
      %1031 = vmatpush1.bf16.msra.mxu0 %v1017
      %1032 = vmatprep.subr.bf16.mxu0 0
      %1033 = vmatpush1.bf16.msra.mxu0 %v1016
      %1034 = vmatprep.subr.bf16.mxu0 0
      %1035 = vmatpush1.bf16.msra.mxu0 %v1015
      %1036 = vmatprep.subr.bf16.mxu0 0
      %1037 = vmatpush1.bf16.msra.mxu0 %v1014
      %1038 = vmatprep.subr.bf16.mxu0 0
      %1039 = vmatpush2.bf16.msra.mxu0 0
      %1040 = vmatprep.subr.bf16.mxu0 0
      %1041 = vmatpush2.bf16.msra.mxu0 0
      %1042 = vmatprep.subr.bf16.mxu0 0
      %1043 = vmatpush2.bf16.msra.mxu0 0
      %1044 = vmatprep.subr.bf16.mxu0 0
      %1045 = vmatpush2.bf16.msra.mxu0 0
      %1046 = vmatprep.subr.bf16.mxu0 0
      %1047 = vmatpush2.bf16.msra.mxu0 0
      %1048 = vmatprep.subr.bf16.mxu0 0
      %1049 = vmatpush2.bf16.msra.mxu0 0
      %1050 = vmatprep.subr.bf16.mxu0 0
      %1051 = vmatpush2.bf16.msra.mxu0 0
      %1052 = vmatprep.subr.bf16.mxu0 0
      %1053 = vmatpush2.bf16.msra.mxu0 0
      %1054 = vmatprep.mubr.bf16.mxu0 0
      %1055 = vmatmul.mubr.bf16.gmra.mxu0 %v664
      %v1056 = vpop.f32.mrf.mxu0
      %v1057 = vadd.f32 %v996, %v1056
      %v1058 = vpop.f32.mrf.mxu0
      %v1059 = vpop.f32.mrf.mxu0
      %v1060 = vpop.f32.mrf.mxu0
      %1061 = vdwg.mxu0
      %s1062 = scalar_lea.vmem %s5, 32
      %v1063 = vld [vmem:[%s1062] sm:$0xf]
      %v1064 = vld [vmem:[%s1062 + $0x4] sm:$0xf]
      %v1065 = vld [vmem:[%s1062 + $0x8] sm:$0xf]
      %v1066 = vld [vmem:[%s1062 + $0xc] sm:$0xf]
      %v1067 = vld [vmem:[%s1062 + $0x10] sm:$0xf]
      %v1068 = vld [vmem:[%s1062 + $0x14] sm:$0xf]
      %v1069 = vld [vmem:[%s1062 + $0x18] sm:$0xf]
      %v1070 = vld [vmem:[%s1062 + $0x1c] sm:$0xf]
      %s1071 = scalar_lea.vmem %s6, 1
      %v1072 = vld [vmem:[%s1071] sm:$0x1]
      %v1074 = vlaneseq
      %v1075 = vshrl.u32 %v1074, 7
      %v1076 = vsub.s32 0, %v1075
      %v1077 = vrot.slane %v1072, %v1076
      %v1087 = vunpack.c.l.b16 %v1063
      %v1088 = vunpack.c.l.b16 %v1064
      %v1089 = vunpack.c.l.b16 %v1065
      %v1090 = vunpack.c.l.b16 %v1066
      %v1091 = vunpack.c.l.b16 %v1067
      %v1092 = vunpack.c.l.b16 %v1068
      %v1093 = vunpack.c.l.b16 %v1069
      %v1094 = vunpack.c.l.b16 %v1070
      %v1095 = vpack.c.b16 %v1088, %v1087
      %v1096 = vpack.c.b16 %v1090, %v1089
      %v1097 = vpack.c.b16 %v1092, %v1091
      %v1098 = vpack.c.b16 %v1094, %v1093
      %1103 = vmatprep.subr.bf16.mxu0 0
      %1104 = vmatpush1.bf16.msra.mxu0 0
      %1105 = vmatprep.subr.bf16.mxu0 0
      %1106 = vmatpush1.bf16.msra.mxu0 0
      %1107 = vmatprep.subr.bf16.mxu0 0
      %1108 = vmatpush1.bf16.msra.mxu0 0
      %1109 = vmatprep.subr.bf16.mxu0 0
      %1110 = vmatpush1.bf16.msra.mxu0 0
      %1111 = vmatprep.subr.bf16.mxu0 0
      %1112 = vmatpush1.bf16.msra.mxu0 %v1098
      %1113 = vmatprep.subr.bf16.mxu0 0
      %1114 = vmatpush1.bf16.msra.mxu0 %v1097
      %1115 = vmatprep.subr.bf16.mxu0 0
      %1116 = vmatpush1.bf16.msra.mxu0 %v1096
      %1117 = vmatprep.subr.bf16.mxu0 0
      %1118 = vmatpush1.bf16.msra.mxu0 %v1095
      %1119 = vmatprep.subr.bf16.mxu0 0
      %1120 = vmatpush2.bf16.msra.mxu0 0
      %1121 = vmatprep.subr.bf16.mxu0 0
      %1122 = vmatpush2.bf16.msra.mxu0 0
      %1123 = vmatprep.subr.bf16.mxu0 0
      %1124 = vmatpush2.bf16.msra.mxu0 0
      %1125 = vmatprep.subr.bf16.mxu0 0
      %1126 = vmatpush2.bf16.msra.mxu0 0
      %1127 = vmatprep.subr.bf16.mxu0 0
      %1128 = vmatpush2.bf16.msra.mxu0 0
      %1129 = vmatprep.subr.bf16.mxu0 0
      %1130 = vmatpush2.bf16.msra.mxu0 0
      %1131 = vmatprep.subr.bf16.mxu0 0
      %1132 = vmatpush2.bf16.msra.mxu0 0
      %1133 = vmatprep.subr.bf16.mxu0 0
      %1134 = vmatpush2.bf16.msra.mxu0 0
      %1135 = vmatprep.mubr.bf16.mxu0 0
      %1136 = vmatmul.mubr.bf16.gmra.mxu0 %v664
      %v1137 = vpop.f32.mrf.mxu0
      %v1138 = vadd.f32 %v1077, %v1137
      %v1139 = vpop.f32.mrf.mxu0
      %v1140 = vpop.f32.mrf.mxu0
      %v1141 = vpop.f32.mrf.mxu0
      %1142 = vdwg.mxu0
      %s1143 = scalar_lea.vmem %s7, 32
      %v1144 = vld [vmem:[%s1143] sm:$0xf]
      %v1145 = vld [vmem:[%s1143 + $0x4] sm:$0xf]
      %v1146 = vld [vmem:[%s1143 + $0x8] sm:$0xf]
      %v1147 = vld [vmem:[%s1143 + $0xc] sm:$0xf]
      %v1148 = vld [vmem:[%s1143 + $0x10] sm:$0xf]
      %v1149 = vld [vmem:[%s1143 + $0x14] sm:$0xf]
      %v1150 = vld [vmem:[%s1143 + $0x18] sm:$0xf]
      %v1151 = vld [vmem:[%s1143 + $0x1c] sm:$0xf]
      %s1152 = scalar_lea.vmem %s8, 1
      %v1153 = vld [vmem:[%s1152] sm:$0x1]
      %v1155 = vlaneseq
      %v1156 = vshrl.u32 %v1155, 7
      %v1157 = vsub.s32 0, %v1156
      %v1158 = vrot.slane %v1153, %v1157
      %v1168 = vunpack.c.l.b16 %v1144
      %v1169 = vunpack.c.l.b16 %v1145
      %v1170 = vunpack.c.l.b16 %v1146
      %v1171 = vunpack.c.l.b16 %v1147
      %v1172 = vunpack.c.l.b16 %v1148
      %v1173 = vunpack.c.l.b16 %v1149
      %v1174 = vunpack.c.l.b16 %v1150
      %v1175 = vunpack.c.l.b16 %v1151
      %v1176 = vpack.c.b16 %v1169, %v1168
      %v1177 = vpack.c.b16 %v1171, %v1170
      %v1178 = vpack.c.b16 %v1173, %v1172
      %v1179 = vpack.c.b16 %v1175, %v1174
      %1184 = vmatprep.subr.bf16.mxu0 0
      %1185 = vmatpush1.bf16.msra.mxu0 0
      %1186 = vmatprep.subr.bf16.mxu0 0
      %1187 = vmatpush1.bf16.msra.mxu0 0
      %1188 = vmatprep.subr.bf16.mxu0 0
      %1189 = vmatpush1.bf16.msra.mxu0 0
      %1190 = vmatprep.subr.bf16.mxu0 0
      %1191 = vmatpush1.bf16.msra.mxu0 0
      %1192 = vmatprep.subr.bf16.mxu0 0
      %1193 = vmatpush1.bf16.msra.mxu0 %v1179
      %1194 = vmatprep.subr.bf16.mxu0 0
      %1195 = vmatpush1.bf16.msra.mxu0 %v1178
      %1196 = vmatprep.subr.bf16.mxu0 0
      %1197 = vmatpush1.bf16.msra.mxu0 %v1177
      %1198 = vmatprep.subr.bf16.mxu0 0
      %1199 = vmatpush1.bf16.msra.mxu0 %v1176
      %1200 = vmatprep.subr.bf16.mxu0 0
      %1201 = vmatpush2.bf16.msra.mxu0 0
      %1202 = vmatprep.subr.bf16.mxu0 0
      %1203 = vmatpush2.bf16.msra.mxu0 0
      %1204 = vmatprep.subr.bf16.mxu0 0
      %1205 = vmatpush2.bf16.msra.mxu0 0
      %1206 = vmatprep.subr.bf16.mxu0 0
      %1207 = vmatpush2.bf16.msra.mxu0 0
      %1208 = vmatprep.subr.bf16.mxu0 0
      %1209 = vmatpush2.bf16.msra.mxu0 0
      %1210 = vmatprep.subr.bf16.mxu0 0
      %1211 = vmatpush2.bf16.msra.mxu0 0
      %1212 = vmatprep.subr.bf16.mxu0 0
      %1213 = vmatpush2.bf16.msra.mxu0 0
      %1214 = vmatprep.subr.bf16.mxu0 0
      %1215 = vmatpush2.bf16.msra.mxu0 0
      %1216 = vmatprep.mubr.bf16.mxu0 0
      %1217 = vmatmul.mubr.bf16.gmra.mxu0 %v664
      %v1218 = vpop.f32.mrf.mxu0
      %v1219 = vadd.f32 %v1158, %v1218
      %v1220 = vpop.f32.mrf.mxu0
      %v1221 = vpop.f32.mrf.mxu0
      %v1222 = vpop.f32.mrf.mxu0
      %1223 = vdwg.mxu0
      %v1224 = vpack.c.bf16 %v1057, %v1057
      %v1225 = vpack.c.bf16 %v1138, %v1138
      %v1227 = vsel %vm866, %v1224, 0
      %v1230 = vsel %vm866, %v1225, 0
      %1232 = vmatprep.subr.bf16.mxu0 0
      %1233 = vmatpush1.bf16.xpose.msra.mxu0 0
      %1234 = vmatprep.subr.bf16.mxu0 0
      %1235 = vmatpush1.bf16.xpose.msra.mxu0 0
      %1236 = vmatprep.subr.bf16.mxu0 0
      %1237 = vmatpush1.bf16.xpose.msra.mxu0 0
      %1238 = vmatprep.subr.bf16.mxu0 0
      %1239 = vmatpush1.bf16.xpose.msra.mxu0 0
      %1240 = vmatprep.subr.bf16.mxu0 0
      %1241 = vmatpush1.bf16.xpose.msra.mxu0 0
      %1242 = vmatprep.subr.bf16.mxu0 0
      %1243 = vmatpush1.bf16.xpose.msra.mxu0 0
      %1244 = vmatprep.subr.bf16.mxu0 0
      %1245 = vmatpush1.bf16.xpose.msra.mxu0 0
      %1246 = vmatprep.subr.bf16.mxu0 0
      %1247 = vmatpush1.bf16.xpose.msra.mxu0 %v1230
      %1248 = vmatprep.subr.bf16.mxu0 0
      %1249 = vmatpush2.bf16.xpose.msra.mxu0 0
      %1250 = vmatprep.subr.bf16.mxu0 0
      %1251 = vmatpush2.bf16.xpose.msra.mxu0 0
      %1252 = vmatprep.subr.bf16.mxu0 0
      %1253 = vmatpush2.bf16.xpose.msra.mxu0 0
      %1254 = vmatprep.subr.bf16.mxu0 0
      %1255 = vmatpush2.bf16.xpose.msra.mxu0 0
      %1256 = vmatprep.subr.bf16.mxu0 0
      %1257 = vmatpush2.bf16.xpose.msra.mxu0 0
      %1258 = vmatprep.subr.bf16.mxu0 0
      %1259 = vmatpush2.bf16.xpose.msra.mxu0 0
      %1260 = vmatprep.subr.bf16.mxu0 0
      %1261 = vmatpush2.bf16.xpose.msra.mxu0 0
      %1262 = vmatprep.subr.bf16.mxu0 0
      %1263 = vmatpush2.bf16.xpose.msra.mxu0 0
      %1264 = vmatprep.mubr.bf16.mxu0 0
      %1265 = vmatmul.mubr.bf16.gmra.mxu0 %v1227
      %v1266 = vpop.f32.mrf.mxu0
      %v1267 = vadd.f32 0.0, %v1266
      %v1268 = vpop.f32.mrf.mxu0
      %v1269 = vpop.f32.mrf.mxu0
      %v1270 = vpop.f32.mrf.mxu0
      %1271 = vdwg.mxu0
      %v1272 = vsel %vm913, %v1267, -inf
      %1273 = vmax.xlane.f32.xlu0 %v1272
      %v1274 = vpop.xlane.xlu0 %1273
      %v1275 = vsub.f32 %v1267, %v1274
      %v1276 = vmul.f32 %v1275, 1.442695
      %v1277 = vpow.pop %v1276
      %v1278 = vsel %vm913, %v1277, 0.0
      %1279 = vadd.xlane.f32.xlu0 %v1278
      %v1280 = vpop.xlane.xlu0 %1279
      %v1281 = vrcp.pop %v1280
      %v1282 = vmul.f32 %v1277, %v1281
      %v1283 = vpack.c.bf16 %v1282, %v1282
      %v1284 = vpack.c.bf16 %v1219, %v1219
      %v1286 = vsel %vm927, %v1283, 0
      %v1289 = vand.u32 %v1284, %v934
      %1291 = vmatprep.subr.bf16.mxu0 0
      %1292 = vmatpush1.bf16.msra.mxu0 0
      %1293 = vmatprep.subr.bf16.mxu0 0
      %1294 = vmatpush1.bf16.msra.mxu0 0
      %1295 = vmatprep.subr.bf16.mxu0 0
      %1296 = vmatpush1.bf16.msra.mxu0 0
      %1297 = vmatprep.subr.bf16.mxu0 0
      %1298 = vmatpush1.bf16.msra.mxu0 0
      %1299 = vmatprep.subr.bf16.mxu0 0
      %1300 = vmatpush1.bf16.msra.mxu0 0
      %1301 = vmatprep.subr.bf16.mxu0 0
      %1302 = vmatpush1.bf16.msra.mxu0 0
      %1303 = vmatprep.subr.bf16.mxu0 0
      %1304 = vmatpush1.bf16.msra.mxu0 0
      %1305 = vmatprep.subr.bf16.mxu0 0
      %1306 = vmatpush1.bf16.msra.mxu0 %v1289
      %1307 = vmatprep.subr.bf16.mxu0 0
      %1308 = vmatpush2.bf16.msra.mxu0 0
      %1309 = vmatprep.subr.bf16.mxu0 0
      %1310 = vmatpush2.bf16.msra.mxu0 0
      %1311 = vmatprep.subr.bf16.mxu0 0
      %1312 = vmatpush2.bf16.msra.mxu0 0
      %1313 = vmatprep.subr.bf16.mxu0 0
      %1314 = vmatpush2.bf16.msra.mxu0 0
      %1315 = vmatprep.subr.bf16.mxu0 0
      %1316 = vmatpush2.bf16.msra.mxu0 0
      %1317 = vmatprep.subr.bf16.mxu0 0
      %1318 = vmatpush2.bf16.msra.mxu0 0
      %1319 = vmatprep.subr.bf16.mxu0 0
      %1320 = vmatpush2.bf16.msra.mxu0 0
      %1321 = vmatprep.subr.bf16.mxu0 0
      %1322 = vmatpush2.bf16.msra.mxu0 0
      %1323 = vmatprep.mubr.bf16.mxu0 0
      %1324 = vmatmul.mubr.bf16.gmra.mxu0 %v1286
      %v1325 = vpop.f32.mrf.mxu0
      %v1326 = vadd.f32 0.0, %v1325
      %v1327 = vpop.f32.mrf.mxu0
      %v1328 = vpop.f32.mrf.mxu0
      %v1329 = vpop.f32.mrf.mxu0
      %1330 = vdwg.mxu0
      %v1331 = vpack.c.bf16 %v1326, %v1326
      %s1332 = scalar_lea.vmem %s9, 8
      %v1333 = vld [vmem:[%s1332] sm:$0xf]
      %v1334 = vld [vmem:[%s1332 + $0x4] sm:$0xf]
      %v1337 = vunpack.c.l.b16 %v1333
      %v1338 = vunpack.c.l.b16 %v1334
      %v1339 = vpack.c.b16 %v1338, %v1337
      %v1342 = vsel %vm866, %v1331, 0
      %1344 = vmatprep.subr.bf16.mxu0 0
      %1345 = vmatpush1.bf16.msra.mxu0 0
      %1346 = vmatprep.subr.bf16.mxu0 0
      %1347 = vmatpush1.bf16.msra.mxu0 0
      %1348 = vmatprep.subr.bf16.mxu0 0
      %1349 = vmatpush1.bf16.msra.mxu0 0
      %1350 = vmatprep.subr.bf16.mxu0 0
      %1351 = vmatpush1.bf16.msra.mxu0 0
      %1352 = vmatprep.subr.bf16.mxu0 0
      %1353 = vmatpush1.bf16.msra.mxu0 0
      %1354 = vmatprep.subr.bf16.mxu0 0
      %1355 = vmatpush1.bf16.msra.mxu0 0
      %1356 = vmatprep.subr.bf16.mxu0 0
      %1357 = vmatpush1.bf16.msra.mxu0 0
      %1358 = vmatprep.subr.bf16.mxu0 0
      %1359 = vmatpush1.bf16.msra.mxu0 %v1339
      %1360 = vmatprep.subr.bf16.mxu0 0
      %1361 = vmatpush2.bf16.msra.mxu0 0
      %1362 = vmatprep.subr.bf16.mxu0 0
      %1363 = vmatpush2.bf16.msra.mxu0 0
      %1364 = vmatprep.subr.bf16.mxu0 0
      %1365 = vmatpush2.bf16.msra.mxu0 0
      %1366 = vmatprep.subr.bf16.mxu0 0
      %1367 = vmatpush2.bf16.msra.mxu0 0
      %1368 = vmatprep.subr.bf16.mxu0 0
      %1369 = vmatpush2.bf16.msra.mxu0 0
      %1370 = vmatprep.subr.bf16.mxu0 0
      %1371 = vmatpush2.bf16.msra.mxu0 0
      %1372 = vmatprep.subr.bf16.mxu0 0
      %1373 = vmatpush2.bf16.msra.mxu0 0
      %1374 = vmatprep.subr.bf16.mxu0 0
      %1375 = vmatpush2.bf16.msra.mxu0 0
      %1376 = vmatprep.mubr.bf16.mxu0 0
      %1377 = vmatmul.mubr.bf16.gmra.mxu0 %v1342
      %v1378 = vpop.f32.mrf.mxu0
      %v1379 = vadd.f32 0.0, %v1378
      %v1380 = vpop.f32.mrf.mxu0
      %v1381 = vpop.f32.mrf.mxu0
      %v1382 = vpop.f32.mrf.mxu0
      %1383 = vdwg.mxu0
      %v1386 = vunpack.c.l.b16 %v979
      %v1387 = vunpack.c.l.b16 %v980
      %v1388 = vpack.c.b16 %v1387, %v1386
      %v1391 = vsel %vm866, %v978, 0
      %1393 = vmatprep.subr.bf16.mxu0 0
      %1394 = vmatpush1.bf16.msra.mxu0 0
      %1395 = vmatprep.subr.bf16.mxu0 0
      %1396 = vmatpush1.bf16.msra.mxu0 0
      %1397 = vmatprep.subr.bf16.mxu0 0
      %1398 = vmatpush1.bf16.msra.mxu0 0
      %1399 = vmatprep.subr.bf16.mxu0 0
      %1400 = vmatpush1.bf16.msra.mxu0 0
      %1401 = vmatprep.subr.bf16.mxu0 0
      %1402 = vmatpush1.bf16.msra.mxu0 0
      %1403 = vmatprep.subr.bf16.mxu0 0
      %1404 = vmatpush1.bf16.msra.mxu0 0
      %1405 = vmatprep.subr.bf16.mxu0 0
      %1406 = vmatpush1.bf16.msra.mxu0 0
      %1407 = vmatprep.subr.bf16.mxu0 0
      %1408 = vmatpush1.bf16.msra.mxu0 %v1388
      %1409 = vmatprep.subr.bf16.mxu0 0
      %1410 = vmatpush2.bf16.msra.mxu0 0
      %1411 = vmatprep.subr.bf16.mxu0 0
      %1412 = vmatpush2.bf16.msra.mxu0 0
      %1413 = vmatprep.subr.bf16.mxu0 0
      %1414 = vmatpush2.bf16.msra.mxu0 0
      %1415 = vmatprep.subr.bf16.mxu0 0
      %1416 = vmatpush2.bf16.msra.mxu0 0
      %1417 = vmatprep.subr.bf16.mxu0 0
      %1418 = vmatpush2.bf16.msra.mxu0 0
      %1419 = vmatprep.subr.bf16.mxu0 0
      %1420 = vmatpush2.bf16.msra.mxu0 0
      %1421 = vmatprep.subr.bf16.mxu0 0
      %1422 = vmatpush2.bf16.msra.mxu0 0
      %1423 = vmatprep.subr.bf16.mxu0 0
      %1424 = vmatpush2.bf16.msra.mxu0 0
      %1425 = vmatprep.mubr.bf16.mxu0 0
      %1426 = vmatmul.mubr.bf16.gmra.mxu0 %v1391
      %v1427 = vpop.f32.mrf.mxu0
      %v1428 = vadd.f32 %v1379, %v1427
      %v1429 = vpop.f32.mrf.mxu0
      %v1430 = vpop.f32.mrf.mxu0
      %v1431 = vpop.f32.mrf.mxu0
      %1432 = vdwg.mxu0
      %s1433 = scalar_lea.vmem %s3, 64
      %v1434 = vld [vmem:[%s1433] sm:$0xf]
      %v1435 = vld [vmem:[%s1433 + $0x4] sm:$0xf]
      %v1436 = vld [vmem:[%s1433 + $0x8] sm:$0xf]
      %v1437 = vld [vmem:[%s1433 + $0xc] sm:$0xf]
      %v1438 = vld [vmem:[%s1433 + $0x10] sm:$0xf]
      %v1439 = vld [vmem:[%s1433 + $0x14] sm:$0xf]
      %v1440 = vld [vmem:[%s1433 + $0x18] sm:$0xf]
      %v1441 = vld [vmem:[%s1433 + $0x1c] sm:$0xf]
      %s1442 = scalar_lea.vmem %s4, 2
      %v1443 = vld [vmem:[%s1442] sm:$0x1]
      %v1445 = vlaneseq
      %v1446 = vshrl.u32 %v1445, 7
      %v1447 = vsub.s32 0, %v1446
      %v1448 = vrot.slane %v1443, %v1447
      %v1458 = vunpack.c.l.b16 %v1434
      %v1459 = vunpack.c.l.b16 %v1435
      %v1460 = vunpack.c.l.b16 %v1436
      %v1461 = vunpack.c.l.b16 %v1437
      %v1462 = vunpack.c.l.b16 %v1438
      %v1463 = vunpack.c.l.b16 %v1439
      %v1464 = vunpack.c.l.b16 %v1440
      %v1465 = vunpack.c.l.b16 %v1441
      %v1466 = vpack.c.b16 %v1459, %v1458
      %v1467 = vpack.c.b16 %v1461, %v1460
      %v1468 = vpack.c.b16 %v1463, %v1462
      %v1469 = vpack.c.b16 %v1465, %v1464
      %1474 = vmatprep.subr.bf16.mxu0 0
      %1475 = vmatpush1.bf16.msra.mxu0 0
      %1476 = vmatprep.subr.bf16.mxu0 0
      %1477 = vmatpush1.bf16.msra.mxu0 0
      %1478 = vmatprep.subr.bf16.mxu0 0
      %1479 = vmatpush1.bf16.msra.mxu0 0
      %1480 = vmatprep.subr.bf16.mxu0 0
      %1481 = vmatpush1.bf16.msra.mxu0 0
      %1482 = vmatprep.subr.bf16.mxu0 0
      %1483 = vmatpush1.bf16.msra.mxu0 %v1469
      %1484 = vmatprep.subr.bf16.mxu0 0
      %1485 = vmatpush1.bf16.msra.mxu0 %v1468
      %1486 = vmatprep.subr.bf16.mxu0 0
      %1487 = vmatpush1.bf16.msra.mxu0 %v1467
      %1488 = vmatprep.subr.bf16.mxu0 0
      %1489 = vmatpush1.bf16.msra.mxu0 %v1466
      %1490 = vmatprep.subr.bf16.mxu0 0
      %1491 = vmatpush2.bf16.msra.mxu0 0
      %1492 = vmatprep.subr.bf16.mxu0 0
      %1493 = vmatpush2.bf16.msra.mxu0 0
      %1494 = vmatprep.subr.bf16.mxu0 0
      %1495 = vmatpush2.bf16.msra.mxu0 0
      %1496 = vmatprep.subr.bf16.mxu0 0
      %1497 = vmatpush2.bf16.msra.mxu0 0
      %1498 = vmatprep.subr.bf16.mxu0 0
      %1499 = vmatpush2.bf16.msra.mxu0 0
      %1500 = vmatprep.subr.bf16.mxu0 0
      %1501 = vmatpush2.bf16.msra.mxu0 0
      %1502 = vmatprep.subr.bf16.mxu0 0
      %1503 = vmatpush2.bf16.msra.mxu0 0
      %1504 = vmatprep.subr.bf16.mxu0 0
      %1505 = vmatpush2.bf16.msra.mxu0 0
      %1506 = vmatprep.mubr.bf16.mxu0 0
      %1507 = vmatmul.mubr.bf16.gmra.mxu0 %v664
      %v1508 = vpop.f32.mrf.mxu0
      %v1509 = vadd.f32 %v1448, %v1508
      %v1510 = vpop.f32.mrf.mxu0
      %v1511 = vpop.f32.mrf.mxu0
      %v1512 = vpop.f32.mrf.mxu0
      %1513 = vdwg.mxu0
      %s1514 = scalar_lea.vmem %s5, 64
      %v1515 = vld [vmem:[%s1514] sm:$0xf]
      %v1516 = vld [vmem:[%s1514 + $0x4] sm:$0xf]
      %v1517 = vld [vmem:[%s1514 + $0x8] sm:$0xf]
      %v1518 = vld [vmem:[%s1514 + $0xc] sm:$0xf]
      %v1519 = vld [vmem:[%s1514 + $0x10] sm:$0xf]
      %v1520 = vld [vmem:[%s1514 + $0x14] sm:$0xf]
      %v1521 = vld [vmem:[%s1514 + $0x18] sm:$0xf]
      %v1522 = vld [vmem:[%s1514 + $0x1c] sm:$0xf]
      %s1523 = scalar_lea.vmem %s6, 2
      %v1524 = vld [vmem:[%s1523] sm:$0x1]
      %v1526 = vlaneseq
      %v1527 = vshrl.u32 %v1526, 7
      %v1528 = vsub.s32 0, %v1527
      %v1529 = vrot.slane %v1524, %v1528
      %v1539 = vunpack.c.l.b16 %v1515
      %v1540 = vunpack.c.l.b16 %v1516
      %v1541 = vunpack.c.l.b16 %v1517
      %v1542 = vunpack.c.l.b16 %v1518
      %v1543 = vunpack.c.l.b16 %v1519
      %v1544 = vunpack.c.l.b16 %v1520
      %v1545 = vunpack.c.l.b16 %v1521
      %v1546 = vunpack.c.l.b16 %v1522
      %v1547 = vpack.c.b16 %v1540, %v1539
      %v1548 = vpack.c.b16 %v1542, %v1541
      %v1549 = vpack.c.b16 %v1544, %v1543
      %v1550 = vpack.c.b16 %v1546, %v1545
      %1555 = vmatprep.subr.bf16.mxu0 0
      %1556 = vmatpush1.bf16.msra.mxu0 0
      %1557 = vmatprep.subr.bf16.mxu0 0
      %1558 = vmatpush1.bf16.msra.mxu0 0
      %1559 = vmatprep.subr.bf16.mxu0 0
      %1560 = vmatpush1.bf16.msra.mxu0 0
      %1561 = vmatprep.subr.bf16.mxu0 0
      %1562 = vmatpush1.bf16.msra.mxu0 0
      %1563 = vmatprep.subr.bf16.mxu0 0
      %1564 = vmatpush1.bf16.msra.mxu0 %v1550
      %1565 = vmatprep.subr.bf16.mxu0 0
      %1566 = vmatpush1.bf16.msra.mxu0 %v1549
      %1567 = vmatprep.subr.bf16.mxu0 0
      %1568 = vmatpush1.bf16.msra.mxu0 %v1548
      %1569 = vmatprep.subr.bf16.mxu0 0
      %1570 = vmatpush1.bf16.msra.mxu0 %v1547
      %1571 = vmatprep.subr.bf16.mxu0 0
      %1572 = vmatpush2.bf16.msra.mxu0 0
      %1573 = vmatprep.subr.bf16.mxu0 0
      %1574 = vmatpush2.bf16.msra.mxu0 0
      %1575 = vmatprep.subr.bf16.mxu0 0
      %1576 = vmatpush2.bf16.msra.mxu0 0
      %1577 = vmatprep.subr.bf16.mxu0 0
      %1578 = vmatpush2.bf16.msra.mxu0 0
      %1579 = vmatprep.subr.bf16.mxu0 0
      %1580 = vmatpush2.bf16.msra.mxu0 0
      %1581 = vmatprep.subr.bf16.mxu0 0
      %1582 = vmatpush2.bf16.msra.mxu0 0
      %1583 = vmatprep.subr.bf16.mxu0 0
      %1584 = vmatpush2.bf16.msra.mxu0 0
      %1585 = vmatprep.subr.bf16.mxu0 0
      %1586 = vmatpush2.bf16.msra.mxu0 0
      %1587 = vmatprep.mubr.bf16.mxu0 0
      %1588 = vmatmul.mubr.bf16.gmra.mxu0 %v664
      %v1589 = vpop.f32.mrf.mxu0
      %v1590 = vadd.f32 %v1529, %v1589
      %v1591 = vpop.f32.mrf.mxu0
      %v1592 = vpop.f32.mrf.mxu0
      %v1593 = vpop.f32.mrf.mxu0
      %1594 = vdwg.mxu0
      %s1595 = scalar_lea.vmem %s7, 64
      %v1596 = vld [vmem:[%s1595] sm:$0xf]
      %v1597 = vld [vmem:[%s1595 + $0x4] sm:$0xf]
      %v1598 = vld [vmem:[%s1595 + $0x8] sm:$0xf]
      %v1599 = vld [vmem:[%s1595 + $0xc] sm:$0xf]
      %v1600 = vld [vmem:[%s1595 + $0x10] sm:$0xf]
      %v1601 = vld [vmem:[%s1595 + $0x14] sm:$0xf]
      %v1602 = vld [vmem:[%s1595 + $0x18] sm:$0xf]
      %v1603 = vld [vmem:[%s1595 + $0x1c] sm:$0xf]
      %s1604 = scalar_lea.vmem %s8, 2
      %v1605 = vld [vmem:[%s1604] sm:$0x1]
      %v1607 = vlaneseq
      %v1608 = vshrl.u32 %v1607, 7
      %v1609 = vsub.s32 0, %v1608
      %v1610 = vrot.slane %v1605, %v1609
      %v1620 = vunpack.c.l.b16 %v1596
      %v1621 = vunpack.c.l.b16 %v1597
      %v1622 = vunpack.c.l.b16 %v1598
      %v1623 = vunpack.c.l.b16 %v1599
      %v1624 = vunpack.c.l.b16 %v1600
      %v1625 = vunpack.c.l.b16 %v1601
      %v1626 = vunpack.c.l.b16 %v1602
      %v1627 = vunpack.c.l.b16 %v1603
      %v1628 = vpack.c.b16 %v1621, %v1620
      %v1629 = vpack.c.b16 %v1623, %v1622
      %v1630 = vpack.c.b16 %v1625, %v1624
      %v1631 = vpack.c.b16 %v1627, %v1626
      %1636 = vmatprep.subr.bf16.mxu0 0
      %1637 = vmatpush1.bf16.msra.mxu0 0
      %1638 = vmatprep.subr.bf16.mxu0 0
      %1639 = vmatpush1.bf16.msra.mxu0 0
      %1640 = vmatprep.subr.bf16.mxu0 0
      %1641 = vmatpush1.bf16.msra.mxu0 0
      %1642 = vmatprep.subr.bf16.mxu0 0
      %1643 = vmatpush1.bf16.msra.mxu0 0
      %1644 = vmatprep.subr.bf16.mxu0 0
      %1645 = vmatpush1.bf16.msra.mxu0 %v1631
      %1646 = vmatprep.subr.bf16.mxu0 0
      %1647 = vmatpush1.bf16.msra.mxu0 %v1630
      %1648 = vmatprep.subr.bf16.mxu0 0
      %1649 = vmatpush1.bf16.msra.mxu0 %v1629
      %1650 = vmatprep.subr.bf16.mxu0 0
      %1651 = vmatpush1.bf16.msra.mxu0 %v1628
      %1652 = vmatprep.subr.bf16.mxu0 0
      %1653 = vmatpush2.bf16.msra.mxu0 0
      %1654 = vmatprep.subr.bf16.mxu0 0
      %1655 = vmatpush2.bf16.msra.mxu0 0
      %1656 = vmatprep.subr.bf16.mxu0 0
      %1657 = vmatpush2.bf16.msra.mxu0 0
      %1658 = vmatprep.subr.bf16.mxu0 0
      %1659 = vmatpush2.bf16.msra.mxu0 0
      %1660 = vmatprep.subr.bf16.mxu0 0
      %1661 = vmatpush2.bf16.msra.mxu0 0
      %1662 = vmatprep.subr.bf16.mxu0 0
      %1663 = vmatpush2.bf16.msra.mxu0 0
      %1664 = vmatprep.subr.bf16.mxu0 0
      %1665 = vmatpush2.bf16.msra.mxu0 0
      %1666 = vmatprep.subr.bf16.mxu0 0
      %1667 = vmatpush2.bf16.msra.mxu0 0
      %1668 = vmatprep.mubr.bf16.mxu0 0
      %1669 = vmatmul.mubr.bf16.gmra.mxu0 %v664
      %v1670 = vpop.f32.mrf.mxu0
      %v1671 = vadd.f32 %v1610, %v1670
      %v1672 = vpop.f32.mrf.mxu0
      %v1673 = vpop.f32.mrf.mxu0
      %v1674 = vpop.f32.mrf.mxu0
      %1675 = vdwg.mxu0
      %v1676 = vpack.c.bf16 %v1509, %v1509
      %v1677 = vpack.c.bf16 %v1590, %v1590
      %v1679 = vsel %vm866, %v1676, 0
      %v1682 = vsel %vm866, %v1677, 0
      %1684 = vmatprep.subr.bf16.mxu0 0
      %1685 = vmatpush1.bf16.xpose.msra.mxu0 0
      %1686 = vmatprep.subr.bf16.mxu0 0
      %1687 = vmatpush1.bf16.xpose.msra.mxu0 0
      %1688 = vmatprep.subr.bf16.mxu0 0
      %1689 = vmatpush1.bf16.xpose.msra.mxu0 0
      %1690 = vmatprep.subr.bf16.mxu0 0
      %1691 = vmatpush1.bf16.xpose.msra.mxu0 0
      %1692 = vmatprep.subr.bf16.mxu0 0
      %1693 = vmatpush1.bf16.xpose.msra.mxu0 0
      %1694 = vmatprep.subr.bf16.mxu0 0
      %1695 = vmatpush1.bf16.xpose.msra.mxu0 0
      %1696 = vmatprep.subr.bf16.mxu0 0
      %1697 = vmatpush1.bf16.xpose.msra.mxu0 0
      %1698 = vmatprep.subr.bf16.mxu0 0
      %1699 = vmatpush1.bf16.xpose.msra.mxu0 %v1682
      %1700 = vmatprep.subr.bf16.mxu0 0
      %1701 = vmatpush2.bf16.xpose.msra.mxu0 0
      %1702 = vmatprep.subr.bf16.mxu0 0
      %1703 = vmatpush2.bf16.xpose.msra.mxu0 0
      %1704 = vmatprep.subr.bf16.mxu0 0
      %1705 = vmatpush2.bf16.xpose.msra.mxu0 0
      %1706 = vmatprep.subr.bf16.mxu0 0
      %1707 = vmatpush2.bf16.xpose.msra.mxu0 0
      %1708 = vmatprep.subr.bf16.mxu0 0
      %1709 = vmatpush2.bf16.xpose.msra.mxu0 0
      %1710 = vmatprep.subr.bf16.mxu0 0
      %1711 = vmatpush2.bf16.xpose.msra.mxu0 0
      %1712 = vmatprep.subr.bf16.mxu0 0
      %1713 = vmatpush2.bf16.xpose.msra.mxu0 0
      %1714 = vmatprep.subr.bf16.mxu0 0
      %1715 = vmatpush2.bf16.xpose.msra.mxu0 0
      %1716 = vmatprep.mubr.bf16.mxu0 0
      %1717 = vmatmul.mubr.bf16.gmra.mxu0 %v1679
      %v1718 = vpop.f32.mrf.mxu0
      %v1719 = vadd.f32 0.0, %v1718
      %v1720 = vpop.f32.mrf.mxu0
      %v1721 = vpop.f32.mrf.mxu0
      %v1722 = vpop.f32.mrf.mxu0
      %1723 = vdwg.mxu0
      %v1724 = vsel %vm913, %v1719, -inf
      %1725 = vmax.xlane.f32.xlu0 %v1724
      %v1726 = vpop.xlane.xlu0 %1725
      %v1727 = vsub.f32 %v1719, %v1726
      %v1728 = vmul.f32 %v1727, 1.442695
      %v1729 = vpow.pop %v1728
      %v1730 = vsel %vm913, %v1729, 0.0
      %1731 = vadd.xlane.f32.xlu0 %v1730
      %v1732 = vpop.xlane.xlu0 %1731
      %v1733 = vrcp.pop %v1732
      %v1734 = vmul.f32 %v1729, %v1733
      %v1735 = vpack.c.bf16 %v1734, %v1734
      %v1736 = vpack.c.bf16 %v1671, %v1671
      %v1738 = vsel %vm927, %v1735, 0
      %v1741 = vand.u32 %v1736, %v934
      %1743 = vmatprep.subr.bf16.mxu0 0
      %1744 = vmatpush1.bf16.msra.mxu0 0
      %1745 = vmatprep.subr.bf16.mxu0 0
      %1746 = vmatpush1.bf16.msra.mxu0 0
      %1747 = vmatprep.subr.bf16.mxu0 0
      %1748 = vmatpush1.bf16.msra.mxu0 0
      %1749 = vmatprep.subr.bf16.mxu0 0
      %1750 = vmatpush1.bf16.msra.mxu0 0
      %1751 = vmatprep.subr.bf16.mxu0 0
      %1752 = vmatpush1.bf16.msra.mxu0 0
      %1753 = vmatprep.subr.bf16.mxu0 0
      %1754 = vmatpush1.bf16.msra.mxu0 0
      %1755 = vmatprep.subr.bf16.mxu0 0
      %1756 = vmatpush1.bf16.msra.mxu0 0
      %1757 = vmatprep.subr.bf16.mxu0 0
      %1758 = vmatpush1.bf16.msra.mxu0 %v1741
      %1759 = vmatprep.subr.bf16.mxu0 0
      %1760 = vmatpush2.bf16.msra.mxu0 0
      %1761 = vmatprep.subr.bf16.mxu0 0
      %1762 = vmatpush2.bf16.msra.mxu0 0
      %1763 = vmatprep.subr.bf16.mxu0 0
      %1764 = vmatpush2.bf16.msra.mxu0 0
      %1765 = vmatprep.subr.bf16.mxu0 0
      %1766 = vmatpush2.bf16.msra.mxu0 0
      %1767 = vmatprep.subr.bf16.mxu0 0
      %1768 = vmatpush2.bf16.msra.mxu0 0
      %1769 = vmatprep.subr.bf16.mxu0 0
      %1770 = vmatpush2.bf16.msra.mxu0 0
      %1771 = vmatprep.subr.bf16.mxu0 0
      %1772 = vmatpush2.bf16.msra.mxu0 0
      %1773 = vmatprep.subr.bf16.mxu0 0
      %1774 = vmatpush2.bf16.msra.mxu0 0
      %1775 = vmatprep.mubr.bf16.mxu0 0
      %1776 = vmatmul.mubr.bf16.gmra.mxu0 %v1738
      %v1777 = vpop.f32.mrf.mxu0
      %v1778 = vadd.f32 0.0, %v1777
      %v1779 = vpop.f32.mrf.mxu0
      %v1780 = vpop.f32.mrf.mxu0
      %v1781 = vpop.f32.mrf.mxu0
      %1782 = vdwg.mxu0
      %v1783 = vpack.c.bf16 %v1778, %v1778
      %s1784 = scalar_lea.vmem %s9, 16
      %v1785 = vld [vmem:[%s1784] sm:$0xf]
      %v1786 = vld [vmem:[%s1784 + $0x4] sm:$0xf]
      %v1789 = vunpack.c.l.b16 %v1785
      %v1790 = vunpack.c.l.b16 %v1786
      %v1791 = vpack.c.b16 %v1790, %v1789
      %v1794 = vsel %vm866, %v1783, 0
      %1796 = vmatprep.subr.bf16.mxu0 0
      %1797 = vmatpush1.bf16.msra.mxu0 0
      %1798 = vmatprep.subr.bf16.mxu0 0
      %1799 = vmatpush1.bf16.msra.mxu0 0
      %1800 = vmatprep.subr.bf16.mxu0 0
      %1801 = vmatpush1.bf16.msra.mxu0 0
      %1802 = vmatprep.subr.bf16.mxu0 0
      %1803 = vmatpush1.bf16.msra.mxu0 0
      %1804 = vmatprep.subr.bf16.mxu0 0
      %1805 = vmatpush1.bf16.msra.mxu0 0
      %1806 = vmatprep.subr.bf16.mxu0 0
      %1807 = vmatpush1.bf16.msra.mxu0 0
      %1808 = vmatprep.subr.bf16.mxu0 0
      %1809 = vmatpush1.bf16.msra.mxu0 0
      %1810 = vmatprep.subr.bf16.mxu0 0
      %1811 = vmatpush1.bf16.msra.mxu0 %v1791
      %1812 = vmatprep.subr.bf16.mxu0 0
      %1813 = vmatpush2.bf16.msra.mxu0 0
      %1814 = vmatprep.subr.bf16.mxu0 0
      %1815 = vmatpush2.bf16.msra.mxu0 0
      %1816 = vmatprep.subr.bf16.mxu0 0
      %1817 = vmatpush2.bf16.msra.mxu0 0
      %1818 = vmatprep.subr.bf16.mxu0 0
      %1819 = vmatpush2.bf16.msra.mxu0 0
      %1820 = vmatprep.subr.bf16.mxu0 0
      %1821 = vmatpush2.bf16.msra.mxu0 0
      %1822 = vmatprep.subr.bf16.mxu0 0
      %1823 = vmatpush2.bf16.msra.mxu0 0
      %1824 = vmatprep.subr.bf16.mxu0 0
      %1825 = vmatpush2.bf16.msra.mxu0 0
      %1826 = vmatprep.subr.bf16.mxu0 0
      %1827 = vmatpush2.bf16.msra.mxu0 0
      %1828 = vmatprep.mubr.bf16.mxu0 0
      %1829 = vmatmul.mubr.bf16.gmra.mxu0 %v1794
      %v1830 = vpop.f32.mrf.mxu0
      %v1831 = vadd.f32 0.0, %v1830
      %v1832 = vpop.f32.mrf.mxu0
      %v1833 = vpop.f32.mrf.mxu0
      %v1834 = vpop.f32.mrf.mxu0
      %1835 = vdwg.mxu0
      %v1836 = vadd.f32 %v1428, %v1831
      %s1837 = scalar_lea.vmem %s3, 96
      %v1838 = vld [vmem:[%s1837] sm:$0xf]
      %v1839 = vld [vmem:[%s1837 + $0x4] sm:$0xf]
      %v1840 = vld [vmem:[%s1837 + $0x8] sm:$0xf]
      %v1841 = vld [vmem:[%s1837 + $0xc] sm:$0xf]
      %v1842 = vld [vmem:[%s1837 + $0x10] sm:$0xf]
      %v1843 = vld [vmem:[%s1837 + $0x14] sm:$0xf]
      %v1844 = vld [vmem:[%s1837 + $0x18] sm:$0xf]
      %v1845 = vld [vmem:[%s1837 + $0x1c] sm:$0xf]
      %s1846 = scalar_lea.vmem %s4, 3
      %v1847 = vld [vmem:[%s1846] sm:$0x1]
      %v1849 = vlaneseq
      %v1850 = vshrl.u32 %v1849, 7
      %v1851 = vsub.s32 0, %v1850
      %v1852 = vrot.slane %v1847, %v1851
      %v1862 = vunpack.c.l.b16 %v1838
      %v1863 = vunpack.c.l.b16 %v1839
      %v1864 = vunpack.c.l.b16 %v1840
      %v1865 = vunpack.c.l.b16 %v1841
      %v1866 = vunpack.c.l.b16 %v1842
      %v1867 = vunpack.c.l.b16 %v1843
      %v1868 = vunpack.c.l.b16 %v1844
      %v1869 = vunpack.c.l.b16 %v1845
      %v1870 = vpack.c.b16 %v1863, %v1862
      %v1871 = vpack.c.b16 %v1865, %v1864
      %v1872 = vpack.c.b16 %v1867, %v1866
      %v1873 = vpack.c.b16 %v1869, %v1868
      %1878 = vmatprep.subr.bf16.mxu0 0
      %1879 = vmatpush1.bf16.msra.mxu0 0
      %1880 = vmatprep.subr.bf16.mxu0 0
      %1881 = vmatpush1.bf16.msra.mxu0 0
      %1882 = vmatprep.subr.bf16.mxu0 0
      %1883 = vmatpush1.bf16.msra.mxu0 0
      %1884 = vmatprep.subr.bf16.mxu0 0
      %1885 = vmatpush1.bf16.msra.mxu0 0
      %1886 = vmatprep.subr.bf16.mxu0 0
      %1887 = vmatpush1.bf16.msra.mxu0 %v1873
      %1888 = vmatprep.subr.bf16.mxu0 0
      %1889 = vmatpush1.bf16.msra.mxu0 %v1872
      %1890 = vmatprep.subr.bf16.mxu0 0
      %1891 = vmatpush1.bf16.msra.mxu0 %v1871
      %1892 = vmatprep.subr.bf16.mxu0 0
      %1893 = vmatpush1.bf16.msra.mxu0 %v1870
      %1894 = vmatprep.subr.bf16.mxu0 0
      %1895 = vmatpush2.bf16.msra.mxu0 0
      %1896 = vmatprep.subr.bf16.mxu0 0
      %1897 = vmatpush2.bf16.msra.mxu0 0
      %1898 = vmatprep.subr.bf16.mxu0 0
      %1899 = vmatpush2.bf16.msra.mxu0 0
      %1900 = vmatprep.subr.bf16.mxu0 0
      %1901 = vmatpush2.bf16.msra.mxu0 0
      %1902 = vmatprep.subr.bf16.mxu0 0
      %1903 = vmatpush2.bf16.msra.mxu0 0
      %1904 = vmatprep.subr.bf16.mxu0 0
      %1905 = vmatpush2.bf16.msra.mxu0 0
      %1906 = vmatprep.subr.bf16.mxu0 0
      %1907 = vmatpush2.bf16.msra.mxu0 0
      %1908 = vmatprep.subr.bf16.mxu0 0
      %1909 = vmatpush2.bf16.msra.mxu0 0
      %1910 = vmatprep.mubr.bf16.mxu0 0
      %1911 = vmatmul.mubr.bf16.gmra.mxu0 %v664
      %v1912 = vpop.f32.mrf.mxu0
      %v1913 = vadd.f32 %v1852, %v1912
      %v1914 = vpop.f32.mrf.mxu0
      %v1915 = vpop.f32.mrf.mxu0
      %v1916 = vpop.f32.mrf.mxu0
      %1917 = vdwg.mxu0
      %s1918 = scalar_lea.vmem %s5, 96
      %v1919 = vld [vmem:[%s1918] sm:$0xf]
      %v1920 = vld [vmem:[%s1918 + $0x4] sm:$0xf]
      %v1921 = vld [vmem:[%s1918 + $0x8] sm:$0xf]
      %v1922 = vld [vmem:[%s1918 + $0xc] sm:$0xf]
      %v1923 = vld [vmem:[%s1918 + $0x10] sm:$0xf]
      %v1924 = vld [vmem:[%s1918 + $0x14] sm:$0xf]
      %v1925 = vld [vmem:[%s1918 + $0x18] sm:$0xf]
      %v1926 = vld [vmem:[%s1918 + $0x1c] sm:$0xf]
      %s1927 = scalar_lea.vmem %s6, 3
      %v1928 = vld [vmem:[%s1927] sm:$0x1]
      %v1930 = vlaneseq
      %v1931 = vshrl.u32 %v1930, 7
      %v1932 = vsub.s32 0, %v1931
      %v1933 = vrot.slane %v1928, %v1932
      %v1943 = vunpack.c.l.b16 %v1919
      %v1944 = vunpack.c.l.b16 %v1920
      %v1945 = vunpack.c.l.b16 %v1921
      %v1946 = vunpack.c.l.b16 %v1922
      %v1947 = vunpack.c.l.b16 %v1923
      %v1948 = vunpack.c.l.b16 %v1924
      %v1949 = vunpack.c.l.b16 %v1925
      %v1950 = vunpack.c.l.b16 %v1926
      %v1951 = vpack.c.b16 %v1944, %v1943
      %v1952 = vpack.c.b16 %v1946, %v1945
      %v1953 = vpack.c.b16 %v1948, %v1947
      %v1954 = vpack.c.b16 %v1950, %v1949
      %1959 = vmatprep.subr.bf16.mxu0 0
      %1960 = vmatpush1.bf16.msra.mxu0 0
      %1961 = vmatprep.subr.bf16.mxu0 0
      %1962 = vmatpush1.bf16.msra.mxu0 0
      %1963 = vmatprep.subr.bf16.mxu0 0
      %1964 = vmatpush1.bf16.msra.mxu0 0
      %1965 = vmatprep.subr.bf16.mxu0 0
      %1966 = vmatpush1.bf16.msra.mxu0 0
      %1967 = vmatprep.subr.bf16.mxu0 0
      %1968 = vmatpush1.bf16.msra.mxu0 %v1954
      %1969 = vmatprep.subr.bf16.mxu0 0
      %1970 = vmatpush1.bf16.msra.mxu0 %v1953
      %1971 = vmatprep.subr.bf16.mxu0 0
      %1972 = vmatpush1.bf16.msra.mxu0 %v1952
      %1973 = vmatprep.subr.bf16.mxu0 0
      %1974 = vmatpush1.bf16.msra.mxu0 %v1951
      %1975 = vmatprep.subr.bf16.mxu0 0
      %1976 = vmatpush2.bf16.msra.mxu0 0
      %1977 = vmatprep.subr.bf16.mxu0 0
      %1978 = vmatpush2.bf16.msra.mxu0 0
      %1979 = vmatprep.subr.bf16.mxu0 0
      %1980 = vmatpush2.bf16.msra.mxu0 0
      %1981 = vmatprep.subr.bf16.mxu0 0
      %1982 = vmatpush2.bf16.msra.mxu0 0
      %1983 = vmatprep.subr.bf16.mxu0 0
      %1984 = vmatpush2.bf16.msra.mxu0 0
      %1985 = vmatprep.subr.bf16.mxu0 0
      %1986 = vmatpush2.bf16.msra.mxu0 0
      %1987 = vmatprep.subr.bf16.mxu0 0
      %1988 = vmatpush2.bf16.msra.mxu0 0
      %1989 = vmatprep.subr.bf16.mxu0 0
      %1990 = vmatpush2.bf16.msra.mxu0 0
      %1991 = vmatprep.mubr.bf16.mxu0 0
      %1992 = vmatmul.mubr.bf16.gmra.mxu0 %v664
      %v1993 = vpop.f32.mrf.mxu0
      %v1994 = vadd.f32 %v1933, %v1993
      %v1995 = vpop.f32.mrf.mxu0
      %v1996 = vpop.f32.mrf.mxu0
      %v1997 = vpop.f32.mrf.mxu0
      %1998 = vdwg.mxu0
      %s1999 = scalar_lea.vmem %s7, 96
      %v2000 = vld [vmem:[%s1999] sm:$0xf]
      %v2001 = vld [vmem:[%s1999 + $0x4] sm:$0xf]
      %v2002 = vld [vmem:[%s1999 + $0x8] sm:$0xf]
      %v2003 = vld [vmem:[%s1999 + $0xc] sm:$0xf]
      %v2004 = vld [vmem:[%s1999 + $0x10] sm:$0xf]
      %v2005 = vld [vmem:[%s1999 + $0x14] sm:$0xf]
      %v2006 = vld [vmem:[%s1999 + $0x18] sm:$0xf]
      %v2007 = vld [vmem:[%s1999 + $0x1c] sm:$0xf]
      %s2008 = scalar_lea.vmem %s8, 3
      %v2009 = vld [vmem:[%s2008] sm:$0x1]
      %v2011 = vlaneseq
      %v2012 = vshrl.u32 %v2011, 7
      %v2013 = vsub.s32 0, %v2012
      %v2014 = vrot.slane %v2009, %v2013
      %v2024 = vunpack.c.l.b16 %v2000
      %v2025 = vunpack.c.l.b16 %v2001
      %v2026 = vunpack.c.l.b16 %v2002
      %v2027 = vunpack.c.l.b16 %v2003
      %v2028 = vunpack.c.l.b16 %v2004
      %v2029 = vunpack.c.l.b16 %v2005
      %v2030 = vunpack.c.l.b16 %v2006
      %v2031 = vunpack.c.l.b16 %v2007
      %v2032 = vpack.c.b16 %v2025, %v2024
      %v2033 = vpack.c.b16 %v2027, %v2026
      %v2034 = vpack.c.b16 %v2029, %v2028
      %v2035 = vpack.c.b16 %v2031, %v2030
      %2040 = vmatprep.subr.bf16.mxu0 0
      %2041 = vmatpush1.bf16.msra.mxu0 0
      %2042 = vmatprep.subr.bf16.mxu0 0
      %2043 = vmatpush1.bf16.msra.mxu0 0
      %2044 = vmatprep.subr.bf16.mxu0 0
      %2045 = vmatpush1.bf16.msra.mxu0 0
      %2046 = vmatprep.subr.bf16.mxu0 0
      %2047 = vmatpush1.bf16.msra.mxu0 0
      %2048 = vmatprep.subr.bf16.mxu0 0
      %2049 = vmatpush1.bf16.msra.mxu0 %v2035
      %2050 = vmatprep.subr.bf16.mxu0 0
      %2051 = vmatpush1.bf16.msra.mxu0 %v2034
      %2052 = vmatprep.subr.bf16.mxu0 0
      %2053 = vmatpush1.bf16.msra.mxu0 %v2033
      %2054 = vmatprep.subr.bf16.mxu0 0
      %2055 = vmatpush1.bf16.msra.mxu0 %v2032
      %2056 = vmatprep.subr.bf16.mxu0 0
      %2057 = vmatpush2.bf16.msra.mxu0 0
      %2058 = vmatprep.subr.bf16.mxu0 0
      %2059 = vmatpush2.bf16.msra.mxu0 0
      %2060 = vmatprep.subr.bf16.mxu0 0
      %2061 = vmatpush2.bf16.msra.mxu0 0
      %2062 = vmatprep.subr.bf16.mxu0 0
      %2063 = vmatpush2.bf16.msra.mxu0 0
      %2064 = vmatprep.subr.bf16.mxu0 0
      %2065 = vmatpush2.bf16.msra.mxu0 0
      %2066 = vmatprep.subr.bf16.mxu0 0
      %2067 = vmatpush2.bf16.msra.mxu0 0
      %2068 = vmatprep.subr.bf16.mxu0 0
      %2069 = vmatpush2.bf16.msra.mxu0 0
      %2070 = vmatprep.subr.bf16.mxu0 0
      %2071 = vmatpush2.bf16.msra.mxu0 0
      %2072 = vmatprep.mubr.bf16.mxu0 0
      %2073 = vmatmul.mubr.bf16.gmra.mxu0 %v664
      %v2074 = vpop.f32.mrf.mxu0
      %v2075 = vadd.f32 %v2014, %v2074
      %v2076 = vpop.f32.mrf.mxu0
      %v2077 = vpop.f32.mrf.mxu0
      %v2078 = vpop.f32.mrf.mxu0
      %2079 = vdwg.mxu0
      %v2080 = vpack.c.bf16 %v1913, %v1913
      %v2081 = vpack.c.bf16 %v1994, %v1994
      %v2083 = vsel %vm866, %v2080, 0
      %v2086 = vsel %vm866, %v2081, 0
      %2088 = vmatprep.subr.bf16.mxu0 0
      %2089 = vmatpush1.bf16.xpose.msra.mxu0 0
      %2090 = vmatprep.subr.bf16.mxu0 0
      %2091 = vmatpush1.bf16.xpose.msra.mxu0 0
      %2092 = vmatprep.subr.bf16.mxu0 0
      %2093 = vmatpush1.bf16.xpose.msra.mxu0 0
      %2094 = vmatprep.subr.bf16.mxu0 0
      %2095 = vmatpush1.bf16.xpose.msra.mxu0 0
      %2096 = vmatprep.subr.bf16.mxu0 0
      %2097 = vmatpush1.bf16.xpose.msra.mxu0 0
      %2098 = vmatprep.subr.bf16.mxu0 0
      %2099 = vmatpush1.bf16.xpose.msra.mxu0 0
      %2100 = vmatprep.subr.bf16.mxu0 0
      %2101 = vmatpush1.bf16.xpose.msra.mxu0 0
      %2102 = vmatprep.subr.bf16.mxu0 0
      %2103 = vmatpush1.bf16.xpose.msra.mxu0 %v2086
      %2104 = vmatprep.subr.bf16.mxu0 0
      %2105 = vmatpush2.bf16.xpose.msra.mxu0 0
      %2106 = vmatprep.subr.bf16.mxu0 0
      %2107 = vmatpush2.bf16.xpose.msra.mxu0 0
      %2108 = vmatprep.subr.bf16.mxu0 0
      %2109 = vmatpush2.bf16.xpose.msra.mxu0 0
      %2110 = vmatprep.subr.bf16.mxu0 0
      %2111 = vmatpush2.bf16.xpose.msra.mxu0 0
      %2112 = vmatprep.subr.bf16.mxu0 0
      %2113 = vmatpush2.bf16.xpose.msra.mxu0 0
      %2114 = vmatprep.subr.bf16.mxu0 0
      %2115 = vmatpush2.bf16.xpose.msra.mxu0 0
      %2116 = vmatprep.subr.bf16.mxu0 0
      %2117 = vmatpush2.bf16.xpose.msra.mxu0 0
      %2118 = vmatprep.subr.bf16.mxu0 0
      %2119 = vmatpush2.bf16.xpose.msra.mxu0 0
      %2120 = vmatprep.mubr.bf16.mxu0 0
      %2121 = vmatmul.mubr.bf16.gmra.mxu0 %v2083
      %v2122 = vpop.f32.mrf.mxu0
      %v2123 = vadd.f32 0.0, %v2122
      %v2124 = vpop.f32.mrf.mxu0
      %v2125 = vpop.f32.mrf.mxu0
      %v2126 = vpop.f32.mrf.mxu0
      %2127 = vdwg.mxu0
      %v2128 = vsel %vm913, %v2123, -inf
      %2129 = vmax.xlane.f32.xlu0 %v2128
      %v2130 = vpop.xlane.xlu0 %2129
      %v2131 = vsub.f32 %v2123, %v2130
      %v2132 = vmul.f32 %v2131, 1.442695
      %v2133 = vpow.pop %v2132
      %v2134 = vsel %vm913, %v2133, 0.0
      %2135 = vadd.xlane.f32.xlu0 %v2134
      %v2136 = vpop.xlane.xlu0 %2135
      %v2137 = vrcp.pop %v2136
      %v2138 = vmul.f32 %v2133, %v2137
      %v2139 = vpack.c.bf16 %v2138, %v2138
      %v2140 = vpack.c.bf16 %v2075, %v2075
      %v2142 = vsel %vm927, %v2139, 0
      %v2145 = vand.u32 %v2140, %v934
      %2147 = vmatprep.subr.bf16.mxu0 0
      %2148 = vmatpush1.bf16.msra.mxu0 0
      %2149 = vmatprep.subr.bf16.mxu0 0
      %2150 = vmatpush1.bf16.msra.mxu0 0
      %2151 = vmatprep.subr.bf16.mxu0 0
      %2152 = vmatpush1.bf16.msra.mxu0 0
      %2153 = vmatprep.subr.bf16.mxu0 0
      %2154 = vmatpush1.bf16.msra.mxu0 0
      %2155 = vmatprep.subr.bf16.mxu0 0
      %2156 = vmatpush1.bf16.msra.mxu0 0
      %2157 = vmatprep.subr.bf16.mxu0 0
      %2158 = vmatpush1.bf16.msra.mxu0 0
      %2159 = vmatprep.subr.bf16.mxu0 0
      %2160 = vmatpush1.bf16.msra.mxu0 0
      %2161 = vmatprep.subr.bf16.mxu0 0
      %2162 = vmatpush1.bf16.msra.mxu0 %v2145
      %2163 = vmatprep.subr.bf16.mxu0 0
      %2164 = vmatpush2.bf16.msra.mxu0 0
      %2165 = vmatprep.subr.bf16.mxu0 0
      %2166 = vmatpush2.bf16.msra.mxu0 0
      %2167 = vmatprep.subr.bf16.mxu0 0
      %2168 = vmatpush2.bf16.msra.mxu0 0
      %2169 = vmatprep.subr.bf16.mxu0 0
      %2170 = vmatpush2.bf16.msra.mxu0 0
      %2171 = vmatprep.subr.bf16.mxu0 0
      %2172 = vmatpush2.bf16.msra.mxu0 0
      %2173 = vmatprep.subr.bf16.mxu0 0
      %2174 = vmatpush2.bf16.msra.mxu0 0
      %2175 = vmatprep.subr.bf16.mxu0 0
      %2176 = vmatpush2.bf16.msra.mxu0 0
      %2177 = vmatprep.subr.bf16.mxu0 0
      %2178 = vmatpush2.bf16.msra.mxu0 0
      %2179 = vmatprep.mubr.bf16.mxu0 0
      %2180 = vmatmul.mubr.bf16.gmra.mxu0 %v2142
      %v2181 = vpop.f32.mrf.mxu0
      %v2182 = vadd.f32 0.0, %v2181
      %v2183 = vpop.f32.mrf.mxu0
      %v2184 = vpop.f32.mrf.mxu0
      %v2185 = vpop.f32.mrf.mxu0
      %2186 = vdwg.mxu0
      %v2187 = vpack.c.bf16 %v2182, %v2182
      %s2188 = scalar_lea.vmem %s9, 24
      %v2189 = vld [vmem:[%s2188] sm:$0xf]
      %v2190 = vld [vmem:[%s2188 + $0x4] sm:$0xf]
      %v2193 = vunpack.c.l.b16 %v2189
      %v2194 = vunpack.c.l.b16 %v2190
      %v2195 = vpack.c.b16 %v2194, %v2193
      %v2198 = vsel %vm866, %v2187, 0
      %2200 = vmatprep.subr.bf16.mxu0 0
      %2201 = vmatpush1.bf16.msra.mxu0 0
      %2202 = vmatprep.subr.bf16.mxu0 0
      %2203 = vmatpush1.bf16.msra.mxu0 0
      %2204 = vmatprep.subr.bf16.mxu0 0
      %2205 = vmatpush1.bf16.msra.mxu0 0
      %2206 = vmatprep.subr.bf16.mxu0 0
      %2207 = vmatpush1.bf16.msra.mxu0 0
      %2208 = vmatprep.subr.bf16.mxu0 0
      %2209 = vmatpush1.bf16.msra.mxu0 0
      %2210 = vmatprep.subr.bf16.mxu0 0
      %2211 = vmatpush1.bf16.msra.mxu0 0
      %2212 = vmatprep.subr.bf16.mxu0 0
      %2213 = vmatpush1.bf16.msra.mxu0 0
      %2214 = vmatprep.subr.bf16.mxu0 0
      %2215 = vmatpush1.bf16.msra.mxu0 %v2195
      %2216 = vmatprep.subr.bf16.mxu0 0
      %2217 = vmatpush2.bf16.msra.mxu0 0
      %2218 = vmatprep.subr.bf16.mxu0 0
      %2219 = vmatpush2.bf16.msra.mxu0 0
      %2220 = vmatprep.subr.bf16.mxu0 0
      %2221 = vmatpush2.bf16.msra.mxu0 0
      %2222 = vmatprep.subr.bf16.mxu0 0
      %2223 = vmatpush2.bf16.msra.mxu0 0
      %2224 = vmatprep.subr.bf16.mxu0 0
      %2225 = vmatpush2.bf16.msra.mxu0 0
      %2226 = vmatprep.subr.bf16.mxu0 0
      %2227 = vmatpush2.bf16.msra.mxu0 0
      %2228 = vmatprep.subr.bf16.mxu0 0
      %2229 = vmatpush2.bf16.msra.mxu0 0
      %2230 = vmatprep.subr.bf16.mxu0 0
      %2231 = vmatpush2.bf16.msra.mxu0 0
      %2232 = vmatprep.mubr.bf16.mxu0 0
      %2233 = vmatmul.mubr.bf16.gmra.mxu0 %v2198
      %v2234 = vpop.f32.mrf.mxu0
      %v2235 = vadd.f32 0.0, %v2234
      %v2236 = vpop.f32.mrf.mxu0
      %v2237 = vpop.f32.mrf.mxu0
      %v2238 = vpop.f32.mrf.mxu0
      %2239 = vdwg.mxu0
      %v2240 = vadd.f32 %v1836, %v2235
      %v2241 = vadd.f32 %v545, %v2240
      %v2243 = vlaneseq
      %v2244 = vshrl.u32 %v2243, 7
      %v2245 = vsub.s32 0, %v2244
      %v2246 = vrot.slane %v548, %v2245
      %v2248 = vadd.f32 %v2241, %v2246
      %v2249 = vsel %vm593, %v2248, 0.0
      %2250 = vadd.xlane.f32.xlu0 %v2249
      %v2251 = vpop.xlane.xlu0 %2250
      %v2252 = vmul.f32 %v2251, %v597
      %v2253 = vsub.f32 %v2248, %v2252
      %v2254 = vmul.f32 %v2253, %v2253
      %v2255 = vsel %vm593, %v2254, 0.0
      %2256 = vadd.xlane.f32.xlu0 %v2255
      %v2257 = vpop.xlane.xlu0 %2256
      %v2258 = vmul.f32 %v2257, %v597
      %v2259 = vadd.f32 %v2258, 1e-05
      %v2260 = vrsqrt.pop %v2259
      %v2261 = vmul.f32 %v2253, %v2260
      %v2263 = vlaneseq
      %v2264 = vshrl.u32 %v2263, 7
      %v2265 = vsub.s32 0, %v2264
      %v2266 = vrot.slane %v549, %v2265
      %v2268 = vmul.f32 %v2261, %v2266
      %v2270 = vlaneseq
      %v2271 = vshrl.u32 %v2270, 7
      %v2272 = vsub.s32 0, %v2271
      %v2273 = vrot.slane %v550, %v2272
      %v2275 = vadd.f32 %v2268, %v2273
      %v2276 = vpack.c.bf16 %v2275, %v2275
      %v2278 = vlaneseq
      %v2279 = vshrl.u32 %v2278, 7
      %v2280 = vsub.s32 0, %v2279
      %v2281 = vrot.slane %v559, %v2280
      %v2282 = vlaneseq
      %v2283 = vshrl.u32 %v2282, 7
      %v2284 = vsub.s32 1, %v2283
      %v2285 = vrot.slane %v559, %v2284
      %v2296 = vunpack.c.l.b16 %v551
      %v2297 = vunpack.c.h.b16 %v551
      %v2298 = vunpack.c.l.b16 %v552
      %v2299 = vunpack.c.h.b16 %v552
      %v2300 = vunpack.c.l.b16 %v553
      %v2301 = vunpack.c.h.b16 %v553
      %v2302 = vunpack.c.l.b16 %v554
      %v2303 = vunpack.c.h.b16 %v554
      %v2304 = vunpack.c.l.b16 %v555
      %v2305 = vunpack.c.h.b16 %v555
      %v2306 = vunpack.c.l.b16 %v556
      %v2307 = vunpack.c.h.b16 %v556
      %v2308 = vunpack.c.l.b16 %v557
      %v2309 = vunpack.c.h.b16 %v557
      %v2310 = vunpack.c.l.b16 %v558
      %v2311 = vunpack.c.h.b16 %v558
      %v2312 = vpack.c.b16 %v2298, %v2296
      %v2313 = vpack.c.b16 %v2299, %v2297
      %v2314 = vpack.c.b16 %v2302, %v2300
      %v2315 = vpack.c.b16 %v2303, %v2301
      %v2316 = vpack.c.b16 %v2306, %v2304
      %v2317 = vpack.c.b16 %v2307, %v2305
      %v2318 = vpack.c.b16 %v2310, %v2308
      %v2319 = vpack.c.b16 %v2311, %v2309
      %v2329 = vsel %vm662, %v2276, 0
      %2331 = vmatprep.subr.bf16.mxu0 0
      %2332 = vmatpush1.bf16.msra.mxu0 0
      %2333 = vmatprep.subr.bf16.mxu0 0
      %2334 = vmatpush1.bf16.msra.mxu0 0
      %2335 = vmatprep.subr.bf16.mxu0 0
      %2336 = vmatpush1.bf16.msra.mxu0 0
      %2337 = vmatprep.subr.bf16.mxu0 0
      %2338 = vmatpush1.bf16.msra.mxu0 0
      %2339 = vmatprep.subr.bf16.mxu0 %v2319
      %2340 = vmatpush1.bf16.msra.mxu0 %v2318
      %2341 = vmatprep.subr.bf16.mxu0 %v2317
      %2342 = vmatpush1.bf16.msra.mxu0 %v2316
      %2343 = vmatprep.subr.bf16.mxu0 %v2315
      %2344 = vmatpush1.bf16.msra.mxu0 %v2314
      %2345 = vmatprep.subr.bf16.mxu0 %v2313
      %2346 = vmatpush1.bf16.msra.mxu0 %v2312
      %2347 = vmatprep.subr.bf16.mxu0 0
      %2348 = vmatpush2.bf16.msra.mxu0 0
      %2349 = vmatprep.subr.bf16.mxu0 0
      %2350 = vmatpush2.bf16.msra.mxu0 0
      %2351 = vmatprep.subr.bf16.mxu0 0
      %2352 = vmatpush2.bf16.msra.mxu0 0
      %2353 = vmatprep.subr.bf16.mxu0 0
      %2354 = vmatpush2.bf16.msra.mxu0 0
      %2355 = vmatprep.subr.bf16.mxu0 0
      %2356 = vmatpush2.bf16.msra.mxu0 0
      %2357 = vmatprep.subr.bf16.mxu0 0
      %2358 = vmatpush2.bf16.msra.mxu0 0
      %2359 = vmatprep.subr.bf16.mxu0 0
      %2360 = vmatpush2.bf16.msra.mxu0 0
      %2361 = vmatprep.subr.bf16.mxu0 0
      %2362 = vmatpush2.bf16.msra.mxu0 0
      %2363 = vmatprep.mubr.bf16.mxu0 0
      %2364 = vmatmul.mubr.bf16.gmra.mxu0 %v2329
      %v2365 = vpop.f32.mrf.mxu0
      %v2366 = vadd.f32 %v2281, %v2365
      %v2367 = vpop.f32.mrf.mxu0
      %v2368 = vadd.f32 %v2285, %v2367
      %v2369 = vpop.f32.mrf.mxu0
      %v2370 = vpop.f32.mrf.mxu0
      %2371 = vdwg.mxu0
      %v2372 = vmul.f32 %v2366, %v2366
      %v2373 = vmul.f32 %v2368, %v2368
      %v2374 = vmul.f32 %v2366, %v2372
      %v2375 = vmul.f32 %v2368, %v2373
      %v2376 = vmul.f32 %v2374, 0.044715
      %v2377 = vmul.f32 %v2375, 0.044715
      %v2378 = vadd.f32 %v2366, %v2376
      %v2379 = vadd.f32 %v2368, %v2377
      %v2380 = vmul.f32 %v2378, 0.7978846
      %v2381 = vmul.f32 %v2379, 0.7978846
      %v2382 = vtanh.pop %v2380
      %v2383 = vtanh.pop %v2381
      %v2384 = vadd.f32 %v2382, 1.0
      %v2385 = vadd.f32 %v2383, 1.0
      %v2386 = vmul.f32 %v2384, 0.5
      %v2387 = vmul.f32 %v2385, 0.5
      %v2388 = vmul.f32 %v2366, %v2386
      %v2389 = vmul.f32 %v2368, %v2387
      %v2390 = vpack.c.bf16 %v2388, %v2388
      %v2391 = vpack.c.bf16 %v2389, %v2389
      %v2393 = vlaneseq
      %v2394 = vshrl.u32 %v2393, 7
      %v2395 = vsub.s32 0, %v2394
      %v2396 = vrot.slane %v592, %v2395
      %v2430 = vunpack.c.l.b16 %v560
      %v2431 = vunpack.c.l.b16 %v561
      %v2432 = vunpack.c.l.b16 %v562
      %v2433 = vunpack.c.l.b16 %v563
      %v2434 = vunpack.c.l.b16 %v564
      %v2435 = vunpack.c.l.b16 %v565
      %v2436 = vunpack.c.l.b16 %v566
      %v2437 = vunpack.c.l.b16 %v567
      %v2438 = vunpack.c.l.b16 %v568
      %v2439 = vunpack.c.l.b16 %v569
      %v2440 = vunpack.c.l.b16 %v570
      %v2441 = vunpack.c.l.b16 %v571
      %v2442 = vunpack.c.l.b16 %v572
      %v2443 = vunpack.c.l.b16 %v573
      %v2444 = vunpack.c.l.b16 %v574
      %v2445 = vunpack.c.l.b16 %v575
      %v2446 = vunpack.c.l.b16 %v576
      %v2447 = vunpack.c.l.b16 %v577
      %v2448 = vunpack.c.l.b16 %v578
      %v2449 = vunpack.c.l.b16 %v579
      %v2450 = vunpack.c.l.b16 %v580
      %v2451 = vunpack.c.l.b16 %v581
      %v2452 = vunpack.c.l.b16 %v582
      %v2453 = vunpack.c.l.b16 %v583
      %v2454 = vunpack.c.l.b16 %v584
      %v2455 = vunpack.c.l.b16 %v585
      %v2456 = vunpack.c.l.b16 %v586
      %v2457 = vunpack.c.l.b16 %v587
      %v2458 = vunpack.c.l.b16 %v588
      %v2459 = vunpack.c.l.b16 %v589
      %v2460 = vunpack.c.l.b16 %v590
      %v2461 = vunpack.c.l.b16 %v591
      %v2462 = vpack.c.b16 %v2431, %v2430
      %v2463 = vpack.c.b16 %v2433, %v2432
      %v2464 = vpack.c.b16 %v2435, %v2434
      %v2465 = vpack.c.b16 %v2437, %v2436
      %v2466 = vpack.c.b16 %v2439, %v2438
      %v2467 = vpack.c.b16 %v2441, %v2440
      %v2468 = vpack.c.b16 %v2443, %v2442
      %v2469 = vpack.c.b16 %v2445, %v2444
      %v2470 = vpack.c.b16 %v2447, %v2446
      %v2471 = vpack.c.b16 %v2449, %v2448
      %v2472 = vpack.c.b16 %v2451, %v2450
      %v2473 = vpack.c.b16 %v2453, %v2452
      %v2474 = vpack.c.b16 %v2455, %v2454
      %v2475 = vpack.c.b16 %v2457, %v2456
      %v2476 = vpack.c.b16 %v2459, %v2458
      %v2477 = vpack.c.b16 %v2461, %v2460
      %2494 = vmatprep.subr.bf16.mxu0 0
      %2495 = vmatpush1.bf16.msra.mxu0 %v2469
      %2496 = vmatprep.subr.bf16.mxu0 0
      %2497 = vmatpush1.bf16.msra.mxu0 %v2468
      %2498 = vmatprep.subr.bf16.mxu0 0
      %2499 = vmatpush1.bf16.msra.mxu0 %v2467
      %2500 = vmatprep.subr.bf16.mxu0 0
      %2501 = vmatpush1.bf16.msra.mxu0 %v2466
      %2502 = vmatprep.subr.bf16.mxu0 0
      %2503 = vmatpush1.bf16.msra.mxu0 %v2465
      %2504 = vmatprep.subr.bf16.mxu0 0
      %2505 = vmatpush1.bf16.msra.mxu0 %v2464
      %2506 = vmatprep.subr.bf16.mxu0 0
      %2507 = vmatpush1.bf16.msra.mxu0 %v2463
      %2508 = vmatprep.subr.bf16.mxu0 0
      %2509 = vmatpush1.bf16.msra.mxu0 %v2462
      %2510 = vmatprep.subr.bf16.mxu0 0
      %2511 = vmatpush2.bf16.msra.mxu0 %v2477
      %2512 = vmatprep.subr.bf16.mxu0 0
      %2513 = vmatpush2.bf16.msra.mxu0 %v2476
      %2514 = vmatprep.subr.bf16.mxu0 0
      %2515 = vmatpush2.bf16.msra.mxu0 %v2475
      %2516 = vmatprep.subr.bf16.mxu0 0
      %2517 = vmatpush2.bf16.msra.mxu0 %v2474
      %2518 = vmatprep.subr.bf16.mxu0 0
      %2519 = vmatpush2.bf16.msra.mxu0 %v2473
      %2520 = vmatprep.subr.bf16.mxu0 0
      %2521 = vmatpush2.bf16.msra.mxu0 %v2472
      %2522 = vmatprep.subr.bf16.mxu0 0
      %2523 = vmatpush2.bf16.msra.mxu0 %v2471
      %2524 = vmatprep.subr.bf16.mxu0 0
      %2525 = vmatpush2.bf16.msra.mxu0 %v2470
      %2526 = vmatprep.mubr.bf16.mxu0 %v2391
      %2527 = vmatmul.mubr.bf16.gmra.mxu0 %v2390
      %v2528 = vpop.f32.mrf.mxu0
      %v2529 = vadd.f32 %v2396, %v2528
      %v2530 = vpop.f32.mrf.mxu0
      %v2531 = vpop.f32.mrf.mxu0
      %v2532 = vpop.f32.mrf.mxu0
      %2533 = vdwg.mxu0
      %v2534 = vadd.f32 %v2248, %v2529
      %2535 = vst.msk [vmem:[%s543] sm:$0x1f] %vm593, %v2534
      %p2536 = scmp.lt.s32.totalorder %s28, 1
      %s2537 = scalar_select %p2536, %s28, 1
      %s2538 = smul.addr %s2537, 8
      %s2539 = scalar_lea.vmem %s17, %s2538
      // Predicated region
      $region89: #{anycalib_forward.6} parent=87 // pred_check
        %p2540 = pneg %p408
      $region90: #{anycalib_forward.6} parent=87 // pred_check_branch
        %2542 = sbr.rel (%p2540) target = $region92
      $region91: #{anycalib_forward.6} parent=87 // pred_region
        _
      $region92: #{anycalib_forward.6} parent=87 // pred_fallthru
        _
    $region88: #{anycalib_forward.6} parent=5 // pred_fallthru
      _
    %p2543 = scmp.le.s32.totalorder 2, %s23
    // Predicated region
    $region93: #{anycalib_forward.6} parent=5 // pred_check
      %p2544 = pneg %p2543
    $region94: #{anycalib_forward.6} parent=5 // pred_check_branch
      %2546 = sbr.rel (%p2544) target = $region96
    $region95: #{anycalib_forward.6} parent=5 // pred_region
      %s2547 = ssub.s32 %s23, 2
      // Predicated region
      $region97: #{anycalib_forward.6} parent=95 // pred_check
        %p2548 = pneg %p414
      $region98: #{anycalib_forward.6} parent=95 // pred_check_branch
        %2550 = sbr.rel (%p2548) target = $region100
      $region99: #{anycalib_forward.6} parent=95 // pred_region
        %p2551 = scmp.lt.s32.totalorder %s29, 1
        %s2552 = scalar_select %p2551, %s29, 1
        %s2553 = smul.addr %s2552, 8
        %s2554 = scalar_lea.vmem %s17, %s2553
      $region100: #{anycalib_forward.6} parent=95 // pred_fallthru
        _
    $region96: #{anycalib_forward.6} parent=5 // pred_fallthru
      _
  $region6: #{anycalib_forward.6} parent=0 // loop_footer
    %s27 = sadd.s32 1, %s23
  $region7: #{anycalib_forward.6} parent=0 // loop_footer_branch
    %22 = sbr.rel target = $region3
  $region8: #{anycalib_forward.6} parent=0 // loop_exit
    _

// kernel: anycalib_forward.7
$region0: #{anycalib_forward.7}
  #allocation0 [shape = 'u32[]', space=smem, size = 0x4, offset = 0x4, fixed_abs, tag = 'smem constant byte address 0x4 - core index']
  #allocation1 [shape = 'u32[144,128]{1,0:T(1,128)}', space=vmem, size = 0x12000, scoped, tag = 'internal scratch']
  %s0 = inlined_call_operand.vmem [shape: f32[2,4,64], index: 0, kind: input, shape index: {}]
  %s1 = inlined_call_operand.vmem [shape: bf16[64,32], index: 1, kind: input, shape index: {}]
  %s2 = inlined_call_operand.vmem [shape: f32[1,32], index: 2, kind: input, shape index: {}]
  %s3 = inlined_call_operand.vmem [shape: bf16[32,32], index: 3, kind: input, shape index: {}]
  %s4 = inlined_call_operand.vmem [shape: f32[1,32], index: 4, kind: input, shape index: {}]
  %s5 = inlined_call_operand.vmem [shape: bf16[32,2], index: 5, kind: input, shape index: {}]
  %s6 = inlined_call_operand.vmem [shape: f32[1,2], index: 6, kind: input, shape index: {}]
  %s7 = inlined_call_operand.vmem [shape: f32[2,4,8], index: 7, kind: output, shape index: {0}]
  %s8 = inlined_call_operand.vmem [shape: f32[2,1,16], index: 8, kind: output, shape index: {1}]
  %9 = xla_tuple %s7, %s8
  %s10 = sld [smem:[#allocation0]]
  $region69: #{anycalib_forward.7} parent=0
    _
  %s12 = ssub.s32 1, %s10
  %s13 = scalar_select 0, %s12, %s10
  loop: start=0, step=1, limit=4
  $region2: #{anycalib_forward.7} parent=0 // loop_pre_header
    _
  $region3: #{anycalib_forward.7} parent=0 // loop_header
    %s15 = sphi 0, %s19
    %p16 = scmp.ge.s32.totalorder %s15, 4
    %s25 = sphi 0, %s27
    %s28 = sphi 0, %s25
    %s29 = sphi 0, %s28
    %s45 = sphi 0, %s29
    %s49 = sphi 0, %s49
    %s51 = sphi 0, %s49
    %s52 = sphi 0, %s51
    %s66 = sphi 0, %s52
    %s70 = sphi 0, %s70
    %s72 = sphi 0, %s70
    %s73 = sphi 0, %s72
    %s87 = sphi 0, %s73
    %s91 = sphi 0, %s91
    %s93 = sphi 0, %s91
    %s94 = sphi 0, %s93
    %s108 = sphi 0, %s94
    %s112 = sphi 0, %s112
    %s114 = sphi 0, %s112
    %s115 = sphi 0, %s114
    %s129 = sphi 0, %s115
    %s133 = sphi 0, %s133
    %s135 = sphi 0, %s133
    %s136 = sphi 0, %s135
    %s150 = sphi 0, %s136
    %s154 = sphi 0, %s154
    %s156 = sphi 0, %s154
    %s157 = sphi 0, %s156
    %s171 = sphi 0, %s157
    %s177 = sphi 0, %s179
    %s180 = sphi 0, %s177
    %s181 = sphi 0, %s180
    %s197 = sphi 0, %s181
    %s203 = sphi 0, %s205
    %s206 = sphi 0, %s203
    %s207 = sphi 0, %s206
    %s223 = sphi 0, %s207
  $region4: #{anycalib_forward.7} parent=0 // loop_header_branch
    %18 = sbr.rel (%p16) target = $region8
  $region5: #{anycalib_forward.7} parent=0 // loop_body
    %s20 = ssub.s32 %s15, 1
    %s21 = ssub.s32 %s15, 2
    %s22 = sadd.s32 %s15, 1
    %s23 = ssub.s32 %s15, %s22
    %p24 = scmp.eq.s32.totalorder %s23, 0
    %s26 = sadd.s32 %s25, 1
    %s27 = scalar_select %p24, %s25, %s26
    %p30 = pneg %p24
    %p31 = scmp.eq.s32.totalorder %s15, 1
    %p32 = por %p30, %p31
    %p33 = scmp.ne.s32.totalorder %s25, %s28
    %p34 = scmp.eq.s32.totalorder %s15, 0
    %p35 = por %p33, %p34
    %p36 = scmp.ne.s32.totalorder %s25, %s28
    %p37 = scmp.eq.s32.totalorder %s20, 1
    %p38 = por %p36, %p37
    %p39 = scmp.ne.s32.totalorder %s28, %s29
    %p40 = scmp.eq.s32.totalorder %s20, 0
    %p41 = por %p39, %p40
    %p42 = scmp.ne.s32.totalorder %s28, %s29
    %p43 = scmp.eq.s32.totalorder %s21, 1
    %p44 = por %p42, %p43
    %p46 = scmp.ne.s32.totalorder %s29, %s45
    %p47 = scmp.eq.s32.totalorder %s21, 0
    %p48 = por %p46, %p47
    %s50 = sadd.s32 %s49, 1
    %p53 = scmp.eq.s32.totalorder %s15, 1
    %p54 = scmp.ne.s32.totalorder %s49, %s51
    %p55 = scmp.eq.s32.totalorder %s15, 0
    %p56 = por %p54, %p55
    %p57 = scmp.ne.s32.totalorder %s49, %s51
    %p58 = scmp.eq.s32.totalorder %s20, 1
    %p59 = por %p57, %p58
    %p60 = scmp.ne.s32.totalorder %s51, %s52
    %p61 = scmp.eq.s32.totalorder %s20, 0
    %p62 = por %p60, %p61
    %p63 = scmp.ne.s32.totalorder %s51, %s52
    %p64 = scmp.eq.s32.totalorder %s21, 1
    %p65 = por %p63, %p64
    %p67 = scmp.ne.s32.totalorder %s52, %s66
    %p68 = scmp.eq.s32.totalorder %s21, 0
    %p69 = por %p67, %p68
    %s71 = sadd.s32 %s70, 1
    %p74 = scmp.eq.s32.totalorder %s15, 1
    %p75 = scmp.ne.s32.totalorder %s70, %s72
    %p76 = scmp.eq.s32.totalorder %s15, 0
    %p77 = por %p75, %p76
    %p78 = scmp.ne.s32.totalorder %s70, %s72
    %p79 = scmp.eq.s32.totalorder %s20, 1
    %p80 = por %p78, %p79
    %p81 = scmp.ne.s32.totalorder %s72, %s73
    %p82 = scmp.eq.s32.totalorder %s20, 0
    %p83 = por %p81, %p82
    %p84 = scmp.ne.s32.totalorder %s72, %s73
    %p85 = scmp.eq.s32.totalorder %s21, 1
    %p86 = por %p84, %p85
    %p88 = scmp.ne.s32.totalorder %s73, %s87
    %p89 = scmp.eq.s32.totalorder %s21, 0
    %p90 = por %p88, %p89
    %s92 = sadd.s32 %s91, 1
    %p95 = scmp.eq.s32.totalorder %s15, 1
    %p96 = scmp.ne.s32.totalorder %s91, %s93
    %p97 = scmp.eq.s32.totalorder %s15, 0
    %p98 = por %p96, %p97
    %p99 = scmp.ne.s32.totalorder %s91, %s93
    %p100 = scmp.eq.s32.totalorder %s20, 1
    %p101 = por %p99, %p100
    %p102 = scmp.ne.s32.totalorder %s93, %s94
    %p103 = scmp.eq.s32.totalorder %s20, 0
    %p104 = por %p102, %p103
    %p105 = scmp.ne.s32.totalorder %s93, %s94
    %p106 = scmp.eq.s32.totalorder %s21, 1
    %p107 = por %p105, %p106
    %p109 = scmp.ne.s32.totalorder %s94, %s108
    %p110 = scmp.eq.s32.totalorder %s21, 0
    %p111 = por %p109, %p110
    %s113 = sadd.s32 %s112, 1
    %p116 = scmp.eq.s32.totalorder %s15, 1
    %p117 = scmp.ne.s32.totalorder %s112, %s114
    %p118 = scmp.eq.s32.totalorder %s15, 0
    %p119 = por %p117, %p118
    %p120 = scmp.ne.s32.totalorder %s112, %s114
    %p121 = scmp.eq.s32.totalorder %s20, 1
    %p122 = por %p120, %p121
    %p123 = scmp.ne.s32.totalorder %s114, %s115
    %p124 = scmp.eq.s32.totalorder %s20, 0
    %p125 = por %p123, %p124
    %p126 = scmp.ne.s32.totalorder %s114, %s115
    %p127 = scmp.eq.s32.totalorder %s21, 1
    %p128 = por %p126, %p127
    %p130 = scmp.ne.s32.totalorder %s115, %s129
    %p131 = scmp.eq.s32.totalorder %s21, 0
    %p132 = por %p130, %p131
    %s134 = sadd.s32 %s133, 1
    %p137 = scmp.eq.s32.totalorder %s15, 1
    %p138 = scmp.ne.s32.totalorder %s133, %s135
    %p139 = scmp.eq.s32.totalorder %s15, 0
    %p140 = por %p138, %p139
    %p141 = scmp.ne.s32.totalorder %s133, %s135
    %p142 = scmp.eq.s32.totalorder %s20, 1
    %p143 = por %p141, %p142
    %p144 = scmp.ne.s32.totalorder %s135, %s136
    %p145 = scmp.eq.s32.totalorder %s20, 0
    %p146 = por %p144, %p145
    %p147 = scmp.ne.s32.totalorder %s135, %s136
    %p148 = scmp.eq.s32.totalorder %s21, 1
    %p149 = por %p147, %p148
    %p151 = scmp.ne.s32.totalorder %s136, %s150
    %p152 = scmp.eq.s32.totalorder %s21, 0
    %p153 = por %p151, %p152
    %s155 = sadd.s32 %s154, 1
    %p158 = scmp.eq.s32.totalorder %s15, 1
    %p159 = scmp.ne.s32.totalorder %s154, %s156
    %p160 = scmp.eq.s32.totalorder %s15, 0
    %p161 = por %p159, %p160
    %p162 = scmp.ne.s32.totalorder %s154, %s156
    %p163 = scmp.eq.s32.totalorder %s20, 1
    %p164 = por %p162, %p163
    %p165 = scmp.ne.s32.totalorder %s156, %s157
    %p166 = scmp.eq.s32.totalorder %s20, 0
    %p167 = por %p165, %p166
    %p168 = scmp.ne.s32.totalorder %s156, %s157
    %p169 = scmp.eq.s32.totalorder %s21, 1
    %p170 = por %p168, %p169
    %p172 = scmp.ne.s32.totalorder %s157, %s171
    %p173 = scmp.eq.s32.totalorder %s21, 0
    %p174 = por %p172, %p173
    %s175 = ssub.s32 %s15, %s22
    %p176 = scmp.eq.s32.totalorder %s175, 0
    %s178 = sadd.s32 %s177, 1
    %s179 = scalar_select %p176, %s177, %s178
    %p182 = pneg %p176
    %p183 = scmp.eq.s32.totalorder %s15, 1
    %p184 = por %p182, %p183
    %p185 = scmp.ne.s32.totalorder %s177, %s180
    %p186 = scmp.eq.s32.totalorder %s15, 0
    %p187 = por %p185, %p186
    %p188 = scmp.ne.s32.totalorder %s177, %s180
    %p189 = scmp.eq.s32.totalorder %s20, 1
    %p190 = por %p188, %p189
    %p191 = scmp.ne.s32.totalorder %s180, %s181
    %p192 = scmp.eq.s32.totalorder %s20, 0
    %p193 = por %p191, %p192
    %p194 = scmp.ne.s32.totalorder %s180, %s181
    %p195 = scmp.eq.s32.totalorder %s21, 1
    %p196 = por %p194, %p195
    %p198 = scmp.ne.s32.totalorder %s181, %s197
    %p199 = scmp.eq.s32.totalorder %s21, 0
    %p200 = por %p198, %p199
    %s201 = ssub.s32 %s15, %s22
    %p202 = scmp.eq.s32.totalorder %s201, 0
    %s204 = sadd.s32 %s203, 1
    %s205 = scalar_select %p202, %s203, %s204
    %p208 = pneg %p202
    %p209 = scmp.eq.s32.totalorder %s15, 1
    %p210 = por %p208, %p209
    %p211 = scmp.ne.s32.totalorder %s203, %s206
    %p212 = scmp.eq.s32.totalorder %s15, 0
    %p213 = por %p211, %p212
    %p214 = scmp.ne.s32.totalorder %s203, %s206
    %p215 = scmp.eq.s32.totalorder %s20, 1
    %p216 = por %p214, %p215
    %p217 = scmp.ne.s32.totalorder %s206, %s207
    %p218 = scmp.eq.s32.totalorder %s20, 0
    %p219 = por %p217, %p218
    %p220 = scmp.ne.s32.totalorder %s206, %s207
    %p221 = scmp.eq.s32.totalorder %s21, 1
    %p222 = por %p220, %p221
    %p224 = scmp.ne.s32.totalorder %s207, %s223
    %p225 = scmp.eq.s32.totalorder %s21, 0
    %p226 = por %p224, %p225
    %p227 = scmp.le.s32.totalorder 1, %s15
    %p228 = scmp.lt.s32.totalorder %s15, 3
    %p229 = pnand %p227, %p228
    %p230 = pneg %p229
    // Predicated region
    $region9: #{anycalib_forward.7} parent=5 // pred_check
      _
    $region10: #{anycalib_forward.7} parent=5 // pred_check_branch
      %232 = sbr.rel (%p229) target = $region12
    $region11: #{anycalib_forward.7} parent=5 // pred_region
      %s233 = ssub.s32 %s15, 1
      // Predicated region
      $region13: #{anycalib_forward.7} parent=11 // pred_check
        %p234 = pneg %p62
      $region14: #{anycalib_forward.7} parent=11 // pred_check_branch
        %236 = sbr.rel (%p234) target = $region16
      $region15: #{anycalib_forward.7} parent=11 // pred_region
        _
      $region16: #{anycalib_forward.7} parent=11 // pred_fallthru
        _
      // Predicated region
      $region17: #{anycalib_forward.7} parent=11 // pred_check
        %p237 = pneg %p83
      $region18: #{anycalib_forward.7} parent=11 // pred_check_branch
        %239 = sbr.rel (%p237) target = $region20
      $region19: #{anycalib_forward.7} parent=11 // pred_region
        _
      $region20: #{anycalib_forward.7} parent=11 // pred_fallthru
        _
      // Predicated region
      $region21: #{anycalib_forward.7} parent=11 // pred_check
        %p240 = pneg %p104
      $region22: #{anycalib_forward.7} parent=11 // pred_check_branch
        %242 = sbr.rel (%p240) target = $region24
      $region23: #{anycalib_forward.7} parent=11 // pred_region
        _
      $region24: #{anycalib_forward.7} parent=11 // pred_fallthru
        _
      // Predicated region
      $region25: #{anycalib_forward.7} parent=11 // pred_check
        %p243 = pneg %p125
      $region26: #{anycalib_forward.7} parent=11 // pred_check_branch
        %245 = sbr.rel (%p243) target = $region28
      $region27: #{anycalib_forward.7} parent=11 // pred_region
        _
      $region28: #{anycalib_forward.7} parent=11 // pred_fallthru
        _
      // Predicated region
      $region29: #{anycalib_forward.7} parent=11 // pred_check
        %p246 = pneg %p146
      $region30: #{anycalib_forward.7} parent=11 // pred_check_branch
        %248 = sbr.rel (%p246) target = $region32
      $region31: #{anycalib_forward.7} parent=11 // pred_region
        _
      $region32: #{anycalib_forward.7} parent=11 // pred_fallthru
        _
      // Predicated region
      $region33: #{anycalib_forward.7} parent=11 // pred_check
        %p249 = pneg %p167
      $region34: #{anycalib_forward.7} parent=11 // pred_check_branch
        %251 = sbr.rel (%p249) target = $region36
      $region35: #{anycalib_forward.7} parent=11 // pred_region
        _
      $region36: #{anycalib_forward.7} parent=11 // pred_fallthru
        _
    $region12: #{anycalib_forward.7} parent=5 // pred_fallthru
      _
    %p252 = scmp.lt.s32.totalorder %s15, 2
    // Predicated region
    $region37: #{anycalib_forward.7} parent=5 // pred_check
      %p253 = pneg %p252
    $region38: #{anycalib_forward.7} parent=5 // pred_check_branch
      %255 = sbr.rel (%p253) target = $region40
    $region39: #{anycalib_forward.7} parent=5 // pred_region
      // Predicated region
      $region41: #{anycalib_forward.7} parent=39 // pred_check
        %p256 = pneg %p35
      $region42: #{anycalib_forward.7} parent=39 // pred_check_branch
        %258 = sbr.rel (%p256) target = $region44
      $region43: #{anycalib_forward.7} parent=39 // pred_region
        %p259 = scmp.lt.s32.totalorder %s15, 1
        %s260 = scalar_select %p259, %s15, 1
        %s261 = smul.addr %s260, 4
        %s262 = scalar_lea.vmem %s0, %s261
      $region44: #{anycalib_forward.7} parent=39 // pred_fallthru
        _
    $region40: #{anycalib_forward.7} parent=5 // pred_fallthru
      _
    %p263 = scmp.le.s32.totalorder 1, %s15
    %p264 = scmp.lt.s32.totalorder %s15, 3
    %p265 = pnand %p263, %p264
    %p266 = pneg %p265
    // Predicated region
    $region45: #{anycalib_forward.7} parent=5 // pred_check
      _
    $region46: #{anycalib_forward.7} parent=5 // pred_check_branch
      %268 = sbr.rel (%p265) target = $region48
    $region47: #{anycalib_forward.7} parent=5 // pred_region
      %s269 = ssub.s32 %s15, 1
      %p270 = scmp.lt.s32.totalorder %s20, 1
      %s271 = scalar_select %p270, %s20, 1
      %s272 = smul.addr %s271, 4
      %s273 = scalar_lea.vmem %s0, %s272
      %p274 = pneg %p41
      %p275 = pneg %p38
      %p276 = pneg %p62
      %p277 = pneg %p59
      %p278 = pneg %p83
      %p279 = pneg %p80
      %p280 = pneg %p104
      %p281 = pneg %p101
      %p282 = pneg %p125
      %p283 = pneg %p122
      %p284 = pneg %p146
      %p285 = pneg %p143
      %p286 = pneg %p167
      %p287 = pneg %p164
      %p288 = pneg %p193
      %p289 = pneg %p190
      %p290 = scmp.lt.s32.totalorder %s20, 1
      %s291 = scalar_select %p290, %s20, 1
      %s292 = smul.addr %s291, 4
      %s293 = scalar_lea.vmem %s7, %s292
      %p294 = pneg %p219
      %p295 = pneg %p216
      %p296 = scmp.lt.s32.totalorder %s20, 1
      %s297 = scalar_select %p296, %s20, 1
      %s298 = scalar_lea.vmem %s8, %s297
      %p299 = scmp.lt.s32.totalorder %s20, 1
      %s300 = scalar_select %p299, %s20, 1
      %s301 = smul.addr %s300, 4
      %s302 = scalar_lea.vmem %s0, %s301
      %p303 = scmp.lt.s32.totalorder %s20, 1
      %s304 = scalar_select %p303, %s20, 1
      %s305 = smul.addr %s304, 4
      %s306 = scalar_lea.vmem %s7, %s305
      %p307 = scmp.lt.s32.totalorder %s20, 1
      %s308 = scalar_select %p307, %s20, 1
      %s309 = scalar_lea.vmem %s8, %s308
      %v311 = vld [vmem:[%s302] sm:$0xf]
      %v312 = vpack.c.bf16 %v311, %v311
      %v313 = vld [vmem:[%s1] sm:$0xf]
      %v314 = vld [vmem:[%s1 + $0x4] sm:$0xf]
      %v315 = vld [vmem:[%s1 + $0x8] sm:$0xf]
      %v316 = vld [vmem:[%s1 + $0xc] sm:$0xf]
      %v317 = vld [vmem:[%s1 + $0x10] sm:$0xf]
      %v318 = vld [vmem:[%s1 + $0x14] sm:$0xf]
      %v319 = vld [vmem:[%s1 + $0x18] sm:$0xf]
      %v320 = vld [vmem:[%s1 + $0x1c] sm:$0xf]
      %v321 = vld [vmem:[%s2] sm:$0x1]
      %v323 = vlaneseq
      %v324 = vshrl.u32 %v323, 7
      %v325 = vsub.s32 0, %v324
      %v326 = vrot.slane %v321, %v325
      %v336 = vunpack.c.l.b16 %v313
      %v337 = vunpack.c.l.b16 %v314
      %v338 = vunpack.c.l.b16 %v315
      %v339 = vunpack.c.l.b16 %v316
      %v340 = vunpack.c.l.b16 %v317
      %v341 = vunpack.c.l.b16 %v318
      %v342 = vunpack.c.l.b16 %v319
      %v343 = vunpack.c.l.b16 %v320
      %v344 = vpack.c.b16 %v337, %v336
      %v345 = vpack.c.b16 %v339, %v338
      %v346 = vpack.c.b16 %v341, %v340
      %v347 = vpack.c.b16 %v343, %v342
      %vm352 = vcmask 523264
      %v354 = vsel %vm352, %v312, 0
      %356 = vmatprep.subr.bf16.mxu0 0
      %357 = vmatpush1.bf16.msra.mxu0 0
      %358 = vmatprep.subr.bf16.mxu0 0
      %359 = vmatpush1.bf16.msra.mxu0 0
      %360 = vmatprep.subr.bf16.mxu0 0
      %361 = vmatpush1.bf16.msra.mxu0 0
      %362 = vmatprep.subr.bf16.mxu0 0
      %363 = vmatpush1.bf16.msra.mxu0 0
      %364 = vmatprep.subr.bf16.mxu0 0
      %365 = vmatpush1.bf16.msra.mxu0 %v347
      %366 = vmatprep.subr.bf16.mxu0 0
      %367 = vmatpush1.bf16.msra.mxu0 %v346
      %368 = vmatprep.subr.bf16.mxu0 0
      %369 = vmatpush1.bf16.msra.mxu0 %v345
      %370 = vmatprep.subr.bf16.mxu0 0
      %371 = vmatpush1.bf16.msra.mxu0 %v344
      %372 = vmatprep.subr.bf16.mxu0 0
      %373 = vmatpush2.bf16.msra.mxu0 0
      %374 = vmatprep.subr.bf16.mxu0 0
      %375 = vmatpush2.bf16.msra.mxu0 0
      %376 = vmatprep.subr.bf16.mxu0 0
      %377 = vmatpush2.bf16.msra.mxu0 0
      %378 = vmatprep.subr.bf16.mxu0 0
      %379 = vmatpush2.bf16.msra.mxu0 0
      %380 = vmatprep.subr.bf16.mxu0 0
      %381 = vmatpush2.bf16.msra.mxu0 0
      %382 = vmatprep.subr.bf16.mxu0 0
      %383 = vmatpush2.bf16.msra.mxu0 0
      %384 = vmatprep.subr.bf16.mxu0 0
      %385 = vmatpush2.bf16.msra.mxu0 0
      %386 = vmatprep.subr.bf16.mxu0 0
      %387 = vmatpush2.bf16.msra.mxu0 0
      %388 = vmatprep.mubr.bf16.mxu0 0
      %389 = vmatmul.mubr.bf16.gmra.mxu0 %v354
      %v390 = vpop.f32.mrf.mxu0
      %v391 = vadd.f32 %v326, %v390
      %v392 = vpop.f32.mrf.mxu0
      %v393 = vpop.f32.mrf.mxu0
      %v394 = vpop.f32.mrf.mxu0
      %395 = vdwg.mxu0
      %v396 = vmul.f32 %v391, %v391
      %v397 = vmul.f32 %v391, %v396
      %v398 = vmul.f32 %v397, 0.044715
      %v399 = vadd.f32 %v391, %v398
      %v400 = vmul.f32 %v399, 0.7978846
      %v401 = vtanh.pop %v400
      %v402 = vadd.f32 %v401, 1.0
      %v403 = vmul.f32 %v402, 0.5
      %v404 = vmul.f32 %v391, %v403
      %v405 = vpack.c.bf16 %v404, %v404
      %v406 = vld [vmem:[%s3] sm:$0xf]
      %v407 = vld [vmem:[%s3 + $0x4] sm:$0xf]
      %v408 = vld [vmem:[%s3 + $0x8] sm:$0xf]
      %v409 = vld [vmem:[%s3 + $0xc] sm:$0xf]
      %v410 = vld [vmem:[%s4] sm:$0x1]
      %v412 = vlaneseq
      %v413 = vshrl.u32 %v412, 7
      %v414 = vsub.s32 0, %v413
      %v415 = vrot.slane %v410, %v414
      %v421 = vunpack.c.l.b16 %v406
      %v422 = vunpack.c.l.b16 %v407
      %v423 = vunpack.c.l.b16 %v408
      %v424 = vunpack.c.l.b16 %v409
      %v425 = vpack.c.b16 %v422, %v421
      %v426 = vpack.c.b16 %v424, %v423
      %vm429 = vcmask 261120
      %v431 = vsel %vm429, %v405, 0
      %433 = vmatprep.subr.bf16.mxu0 0
      %434 = vmatpush1.bf16.msra.mxu0 0
      %435 = vmatprep.subr.bf16.mxu0 0
      %436 = vmatpush1.bf16.msra.mxu0 0
      %437 = vmatprep.subr.bf16.mxu0 0
      %438 = vmatpush1.bf16.msra.mxu0 0
      %439 = vmatprep.subr.bf16.mxu0 0
      %440 = vmatpush1.bf16.msra.mxu0 0
      %441 = vmatprep.subr.bf16.mxu0 0
      %442 = vmatpush1.bf16.msra.mxu0 0
      %443 = vmatprep.subr.bf16.mxu0 0
      %444 = vmatpush1.bf16.msra.mxu0 0
      %445 = vmatprep.subr.bf16.mxu0 0
      %446 = vmatpush1.bf16.msra.mxu0 %v426
      %447 = vmatprep.subr.bf16.mxu0 0
      %448 = vmatpush1.bf16.msra.mxu0 %v425
      %449 = vmatprep.subr.bf16.mxu0 0
      %450 = vmatpush2.bf16.msra.mxu0 0
      %451 = vmatprep.subr.bf16.mxu0 0
      %452 = vmatpush2.bf16.msra.mxu0 0
      %453 = vmatprep.subr.bf16.mxu0 0
      %454 = vmatpush2.bf16.msra.mxu0 0
      %455 = vmatprep.subr.bf16.mxu0 0
      %456 = vmatpush2.bf16.msra.mxu0 0
      %457 = vmatprep.subr.bf16.mxu0 0
      %458 = vmatpush2.bf16.msra.mxu0 0
      %459 = vmatprep.subr.bf16.mxu0 0
      %460 = vmatpush2.bf16.msra.mxu0 0
      %461 = vmatprep.subr.bf16.mxu0 0
      %462 = vmatpush2.bf16.msra.mxu0 0
      %463 = vmatprep.subr.bf16.mxu0 0
      %464 = vmatpush2.bf16.msra.mxu0 0
      %465 = vmatprep.mubr.bf16.mxu0 0
      %466 = vmatmul.mubr.bf16.gmra.mxu0 %v431
      %v467 = vpop.f32.mrf.mxu0
      %v468 = vadd.f32 %v415, %v467
      %v469 = vpop.f32.mrf.mxu0
      %v470 = vpop.f32.mrf.mxu0
      %v471 = vpop.f32.mrf.mxu0
      %472 = vdwg.mxu0
      %v473 = vmul.f32 %v468, %v468
      %v474 = vmul.f32 %v468, %v473
      %v475 = vmul.f32 %v474, 0.044715
      %v476 = vadd.f32 %v468, %v475
      %v477 = vmul.f32 %v476, 0.7978846
      %v478 = vtanh.pop %v477
      %v479 = vadd.f32 %v478, 1.0
      %v480 = vmul.f32 %v479, 0.5
      %v481 = vmul.f32 %v468, %v480
      %v482 = vpack.c.bf16 %v481, %v481
      %v483 = vld [vmem:[%s5] sm:$0xf]
      %v484 = vld [vmem:[%s5 + $0x4] sm:$0xf]
      %v485 = vld [vmem:[%s5 + $0x8] sm:$0xf]
      %v486 = vld [vmem:[%s5 + $0xc] sm:$0xf]
      %v487 = vld [vmem:[%s6] sm:$0x1]
      %v489 = vlaneseq
      %v490 = vshrl.u32 %v489, 7
      %v491 = vsub.s32 0, %v490
      %v492 = vrot.slane %v487, %v491
      %v498 = vunpack.c.l.b16 %v483
      %v499 = vunpack.c.l.b16 %v484
      %v500 = vunpack.c.l.b16 %v485
      %v501 = vunpack.c.l.b16 %v486
      %v502 = vpack.c.b16 %v499, %v498
      %v503 = vpack.c.b16 %v501, %v500
      %v507 = vsel %vm429, %v482, 0
      %509 = vmatprep.subr.bf16.mxu0 0
      %510 = vmatpush1.bf16.msra.mxu0 0
      %511 = vmatprep.subr.bf16.mxu0 0
      %512 = vmatpush1.bf16.msra.mxu0 0
      %513 = vmatprep.subr.bf16.mxu0 0
      %514 = vmatpush1.bf16.msra.mxu0 0
      %515 = vmatprep.subr.bf16.mxu0 0
      %516 = vmatpush1.bf16.msra.mxu0 0
      %517 = vmatprep.subr.bf16.mxu0 0
      %518 = vmatpush1.bf16.msra.mxu0 0
      %519 = vmatprep.subr.bf16.mxu0 0
      %520 = vmatpush1.bf16.msra.mxu0 0
      %521 = vmatprep.subr.bf16.mxu0 0
      %522 = vmatpush1.bf16.msra.mxu0 %v503
      %523 = vmatprep.subr.bf16.mxu0 0
      %524 = vmatpush1.bf16.msra.mxu0 %v502
      %525 = vmatprep.subr.bf16.mxu0 0
      %526 = vmatpush2.bf16.msra.mxu0 0
      %527 = vmatprep.subr.bf16.mxu0 0
      %528 = vmatpush2.bf16.msra.mxu0 0
      %529 = vmatprep.subr.bf16.mxu0 0
      %530 = vmatpush2.bf16.msra.mxu0 0
      %531 = vmatprep.subr.bf16.mxu0 0
      %532 = vmatpush2.bf16.msra.mxu0 0
      %533 = vmatprep.subr.bf16.mxu0 0
      %534 = vmatpush2.bf16.msra.mxu0 0
      %535 = vmatprep.subr.bf16.mxu0 0
      %536 = vmatpush2.bf16.msra.mxu0 0
      %537 = vmatprep.subr.bf16.mxu0 0
      %538 = vmatpush2.bf16.msra.mxu0 0
      %539 = vmatprep.subr.bf16.mxu0 0
      %540 = vmatpush2.bf16.msra.mxu0 0
      %541 = vmatprep.mubr.bf16.mxu0 0
      %542 = vmatmul.mubr.bf16.gmra.mxu0 %v507
      %v543 = vpop.f32.mrf.mxu0
      %v544 = vadd.f32 %v492, %v543
      %v545 = vpop.f32.mrf.mxu0
      %v546 = vpop.f32.mrf.mxu0
      %v547 = vpop.f32.mrf.mxu0
      %548 = vdwg.mxu0
      %v549 = vmul.f32 %v544, %v544
      %vm550 = vcmask 11264
      %v551 = vsel %vm550, %v549, 0.0
      %552 = vadd.xlane.f32.xlu0 %v551
      %v553 = vpop.xlane.xlu0 %552
      %v554 = vrsqrt.pop %v553
      %v555 = vmul.f32 %v553, %v554
      %vm556 = vcmp.eq.f32.partialorder %v553, inf
      %v557 = vsel %vm556, %v553, %v555
      %vm558 = vcmp.eq.f32.partialorder %v553, 0.0
      %v559 = vand.u32 %v553, 2147483648
      %v560 = vsel %vm558, %v559, %v557
      %vm561 = vcmp.lt.f32.partialorder %v560, 1e-06
      %v562 = vrcp.pop 6.0
      %v563 = vmul.f32 %v553, %v562
      %v564 = vsub.f32 1.0, %v563
      %v565 = vand.u32 2147483647, %v560
      %vm566 = vcmp.le.f32.partialorder %v565, 0.7853982
      %vm567 = vcmp.lt.s32.totalorder %v560, 0
      %v568 = vand.u32 %v560, 2139095040
      %v569 = vshrl.u32 %v568, 23
      %v570 = vsub.s32 %v569, 127
      %v571 = vand.u32 2147483647, %v560
      %v572 = vand.u32 %v571, 8388607
      %v573 = vor.u32 %v572, 8388608
      %v574 = vsub.s32 0, %v573
      %v575 = vadd.s32 %v570, 1
      %vm576 = vcmp.gt.s32.totalorder %v575, 0
      %v577 = vsel %vm576, %v575, 0
      %v578 = vshrl.u32 %v577, 5
      %v579 = vand.u32 %v577, 31
      %v580 = vsub.s32 32, %v579
      %v581 = vshrl.u32 683565275, %v580
      %v582 = vshll.u32 683565275, %v579
      %v583 = vshrl.u32 2475754826, %v580
      %v584 = vor.u32 %v582, %v583
      %v585 = vshll.u32 2475754826, %v579
      %v586 = vshrl.u32 2131351028, %v580
      %v587 = vor.u32 %v585, %v586
      %v588 = vshll.u32 2131351028, %v579
      %v589 = vshrl.u32 2102212464, %v580
      %v590 = vor.u32 %v588, %v589
      %v591 = vshll.u32 2102212464, %v579
      %v592 = vshrl.u32 920167782, %v580
      %v593 = vor.u32 %v591, %v592
      %v594 = vshll.u32 920167782, %v579
      %v595 = vshrl.u32 1326507024, %v580
      %v596 = vor.u32 %v594, %v595
      %vm597 = vcmp.lt.s32.totalorder %v578, 1
      %vm598 = vcmp.lt.s32.totalorder %v578, 2
      %vm599 = vcmp.lt.s32.totalorder %v578, 3
      %vm600 = vcmp.lt.s32.totalorder %v578, 4
      %v601 = vsel %vm597, %v581, %v584
      %v602 = vsel %vm600, %v590, 2102212464
      %v603 = vsel %vm599, %v587, %v602
      %v604 = vsel %vm598, %v601, %v603
      %v605 = vsel %vm597, %v584, %v587
      %v606 = vsel %vm600, %v593, 920167782
      %v607 = vsel %vm599, %v590, %v606
      %v608 = vsel %vm598, %v605, %v607
      %v609 = vsel %vm597, %v587, %v590
      %v610 = vsel %vm600, %v596, 1326507024
      %v611 = vsel %vm599, %v593, %v610
      %v612 = vsel %vm598, %v609, %v611
      %v613 = vshll.u32 %v573, 8
      %v614 = vmul.u32.u64.compose %v613, %v612
      %v615 = vextract.low.u32 %v614
      %v616 = vextract.high.u32 %v614
      %v617 = vmul.u32.u64.compose %v613, %v608
      %v618 = vextract.low.u32 %v617
      %v619 = vextract.high.u32 %v617
      %v620 = vmul.u32 %v613, %v604
      %v621 = vadd.s32 %v616, %v618
      %vm622 = vc.u32 %v616, %v618
      %v623 = vadd.s32 %v619, 1
      %v624 = vsel %vm622, %v623, %v619
      %v625 = vadd.s32 %v620, %v624
      %v626 = vadd.s32 %v625, 536870912
      %v627 = vshrl.u32 %v626, 30
      %v628 = vshll.u32 %v627, 30
      %v629 = vsub.s32 %v625, %v628
      %vm630 = vcmp.lt.s32.totalorder %v629, 0
      %v631 = vsub.s32 0, %v629
      %v632 = vsel %vm630, %v631, %v629
      %v633 = vclz %v632
      %v634 = vsub.s32 %v633, 2
      %vm635 = vcmp.gt.s32.totalorder 0, %v634
      %v636 = vsel %vm635, 0, %v634
      %v637 = vsub.s32 32, %v636
      %v638 = vshll.u32 %v629, %v636
      %v639 = vshrl.u32 %v621, %v637
      %v640 = vor.u32 %v638, %v639
      %v641 = vsub.s32 4294967266, %v636
      %v642 = vadd.s32 %v641, 127
      %v643 = vshll.u32 %v642, 23
      %v644 = vor.u32 4788187, %v643
      %v645 = vand.u32 2147483647, %v644
      %v647 = vcvt.s32.f32 %v640
      %v648 = vmul.f32 %v647, %v645
      %v649 = vxor.u32 %v648, 2147483648
      %v650 = vsel %vm567, %v649, %v648
      %v651 = vsub.s32 4, %v627
      %v652 = vsel %vm567, %v651, %v627
      %v653 = vsel %vm566, %v560, %v650
      %v654 = vsel %vm566, 0, %v652
      %v655 = vcosq.f32.pop %v653
      %v656 = vsinq.f32.pop %v653
      %vm657 = vweird.f32 %v560
      %v658 = vadd.s32 %v654, 3
      %v659 = vand.u32 %v658, 3
      %vm660 = vcmp.lt.s32.totalorder %v659, 2
      %vm661 = vcmp.eq.s32.totalorder %v659, 0
      %v662 = vxor.u32 %v656, 2147483648
      %v663 = vsel %vm661, %v655, %v662
      %vm664 = vcmp.eq.s32.totalorder %v659, 2
      %v665 = vxor.u32 %v655, 2147483648
      %v666 = vsel %vm664, %v665, %v656
      %v667 = vsel %vm660, %v663, %v666
      %v668 = vsel %vm657, nan, %v667
      %v669 = vmax.f32 %v560, 1e-12
      %v670 = vrcp.pop %v669
      %v671 = vmul.f32 %v668, %v670
      %v672 = vsel %vm561, %v564, %v671
      %v673 = vmul.f32 %v672, %v544
      %v674 = vand.u32 2147483647, %v560
      %vm675 = vcmp.le.f32.partialorder %v674, 0.7853982
      %vm676 = vcmp.lt.s32.totalorder %v560, 0
      %v677 = vand.u32 %v560, 2139095040
      %v678 = vshrl.u32 %v677, 23
      %v679 = vsub.s32 %v678, 127
      %v680 = vand.u32 2147483647, %v560
      %v681 = vand.u32 %v680, 8388607
      %v682 = vor.u32 %v681, 8388608
      %v683 = vsub.s32 0, %v682
      %v684 = vadd.s32 %v679, 1
      %vm685 = vcmp.gt.s32.totalorder %v684, 0
      %v686 = vsel %vm685, %v684, 0
      %v687 = vshrl.u32 %v686, 5
      %v688 = vand.u32 %v686, 31
      %v689 = vsub.s32 32, %v688
      %v690 = vshrl.u32 683565275, %v689
      %v691 = vshll.u32 683565275, %v688
      %v692 = vshrl.u32 2475754826, %v689
      %v693 = vor.u32 %v691, %v692
      %v694 = vshll.u32 2475754826, %v688
      %v695 = vshrl.u32 2131351028, %v689
      %v696 = vor.u32 %v694, %v695
      %v697 = vshll.u32 2131351028, %v688
      %v698 = vshrl.u32 2102212464, %v689
      %v699 = vor.u32 %v697, %v698
      %v700 = vshll.u32 2102212464, %v688
      %v701 = vshrl.u32 920167782, %v689
      %v702 = vor.u32 %v700, %v701
      %v703 = vshll.u32 920167782, %v688
      %v704 = vshrl.u32 1326507024, %v689
      %v705 = vor.u32 %v703, %v704
      %vm706 = vcmp.lt.s32.totalorder %v687, 1
      %vm707 = vcmp.lt.s32.totalorder %v687, 2
      %vm708 = vcmp.lt.s32.totalorder %v687, 3
      %vm709 = vcmp.lt.s32.totalorder %v687, 4
      %v710 = vsel %vm706, %v690, %v693
      %v711 = vsel %vm709, %v699, 2102212464
      %v712 = vsel %vm708, %v696, %v711
      %v713 = vsel %vm707, %v710, %v712
      %v714 = vsel %vm706, %v693, %v696
      %v715 = vsel %vm709, %v702, 920167782
      %v716 = vsel %vm708, %v699, %v715
      %v717 = vsel %vm707, %v714, %v716
      %v718 = vsel %vm706, %v696, %v699
      %v719 = vsel %vm709, %v705, 1326507024
      %v720 = vsel %vm708, %v702, %v719
      %v721 = vsel %vm707, %v718, %v720
      %v722 = vshll.u32 %v682, 8
      %v723 = vmul.u32.u64.compose %v722, %v721
      %v724 = vextract.low.u32 %v723
      %v725 = vextract.high.u32 %v723
      %v726 = vmul.u32.u64.compose %v722, %v717
      %v727 = vextract.low.u32 %v726
      %v728 = vextract.high.u32 %v726
      %v729 = vmul.u32 %v722, %v713
      %v730 = vadd.s32 %v725, %v727
      %vm731 = vc.u32 %v725, %v727
      %v732 = vadd.s32 %v728, 1
      %v733 = vsel %vm731, %v732, %v728
      %v734 = vadd.s32 %v729, %v733
      %v735 = vadd.s32 %v734, 536870912
      %v736 = vshrl.u32 %v735, 30
      %v737 = vshll.u32 %v736, 30
      %v738 = vsub.s32 %v734, %v737
      %vm739 = vcmp.lt.s32.totalorder %v738, 0
      %v740 = vsub.s32 0, %v738
      %v741 = vsel %vm739, %v740, %v738
      %v742 = vclz %v741
      %v743 = vsub.s32 %v742, 2
      %vm744 = vcmp.gt.s32.totalorder 0, %v743
      %v745 = vsel %vm744, 0, %v743
      %v746 = vsub.s32 32, %v745
      %v747 = vshll.u32 %v738, %v745
      %v748 = vshrl.u32 %v730, %v746
      %v749 = vor.u32 %v747, %v748
      %v750 = vsub.s32 4294967266, %v745
      %v751 = vadd.s32 %v750, 127
      %v752 = vshll.u32 %v751, 23
      %v753 = vor.u32 4788187, %v752
      %v754 = vand.u32 2147483647, %v753
      %v756 = vcvt.s32.f32 %v749
      %v757 = vmul.f32 %v756, %v754
      %v758 = vxor.u32 %v757, 2147483648
      %v759 = vsel %vm676, %v758, %v757
      %v760 = vsub.s32 4, %v736
      %v761 = vsel %vm676, %v760, %v736
      %v762 = vsel %vm675, %v560, %v759
      %v763 = vsel %vm675, 0, %v761
      %v764 = vcosq.f32.pop %v762
      %v765 = vsinq.f32.pop %v762
      %vm766 = vweird.f32 %v560
      %v767 = vand.u32 %v763, 3
      %vm768 = vcmp.lt.s32.totalorder %v767, 2
      %vm769 = vcmp.eq.s32.totalorder %v767, 0
      %v770 = vxor.u32 %v765, 2147483648
      %v771 = vsel %vm769, %v764, %v770
      %vm772 = vcmp.eq.s32.totalorder %v767, 2
      %v773 = vxor.u32 %v764, 2147483648
      %v774 = vsel %vm772, %v773, %v765
      %v775 = vsel %vm768, %v771, %v774
      %v776 = vsel %vm766, nan, %v775
      %778 = vrot.lane.b32.xlu0 %v673, 2
      %v779 = vpop.permute.xlu0 %778
      %vm781 = vcmask 15360
      %v782 = vsel %vm781, %v544, %v779
      %vm783 = vcmask 31744
      %v784 = vsel %vm783, %v782, %v776
      %vm785 = vcmask 39936
      %v786 = vsel %vm785, %v784, 0.0
      %vm787 = vcmask 60416
      %788 = vst.msk [vmem:[%s306] sm:$0xf] %vm787, %v786
      %v789 = vlaneseq
      %v790 = vshrl.u32 %v789, 7
      %v791 = vcvt.s32.f32 %v790
      %v792 = vadd.f32 %v791, 0.5
      %v793 = vrcp.pop 2.0
      %v794 = vmul.f32 %v792, %v793
      %v795 = vfloor.f32 %v794
      %v796 = vmul.f32 %v795, 2.0
      %v797 = vsub.f32 %v791, %v796
      %v798 = vadd.f32 %v797, 0.5
      %v799 = vmul.f32 %v798, 14.0
      %v800 = vadd.f32 %v795, 0.5
      %v801 = vmul.f32 %v800, 14.0
      %v802 = vrcp.pop %v776
      %v803 = vmul.f32 1.0, %v802
      %v804 = vmul.f32 %v673, %v803
      %v805 = vmul.f32 %v804, %v804
      %vm806 = vcmask 3072
      %v807 = vsel %vm806, %v805, 0.0
      %v808 = vrot.slane %v807, 4
      %v809 = vadd.f32 %v807, %v808
      %v810 = vrot.slane %v809, 2
      %v811 = vadd.f32 %v809, %v810
      %v812 = vrot.slane %v811, 1
      %v813 = vadd.f32 %v811, %v812
      %v814 = vsel %vm806, %v804, 0.0
      %v815 = vrot.slane %v814, 4
      %v816 = vadd.f32 %v814, %v815
      %v817 = vrot.slane %v816, 2
      %v818 = vadd.f32 %v816, %v817
      %v819 = vrot.slane %v818, 1
      %v820 = vadd.f32 %v818, %v819
      %vm821 = vcmask 11272
      %v822 = vsel %vm821, %v805, 0.0
      %v823 = vrot.slane %v822, 4
      %v824 = vadd.f32 %v822, %v823
      %v825 = vrot.slane %v824, 2
      %v826 = vadd.f32 %v824, %v825
      %v827 = vrot.slane %v826, 1
      %v828 = vadd.f32 %v826, %v827
      %v829 = vsel %vm821, %v804, 0.0
      %v830 = vrot.slane %v829, 4
      %v831 = vadd.f32 %v829, %v830
      %v832 = vrot.slane %v831, 2
      %v833 = vadd.f32 %v831, %v832
      %v834 = vrot.slane %v833, 1
      %v835 = vadd.f32 %v833, %v834
      %v836 = vmul.f32 %v804, %v799
      %v837 = vsel %vm806, %v836, 0.0
      %v838 = vrot.slane %v837, 4
      %v839 = vadd.f32 %v837, %v838
      %v840 = vrot.slane %v839, 2
      %v841 = vadd.f32 %v839, %v840
      %v842 = vrot.slane %v841, 1
      %v843 = vadd.f32 %v841, %v842
      %vm844 = vcmask 1043456
      %v845 = vsel %vm844, %v799, 0.0
      %v846 = vrot.slane %v845, 4
      %v847 = vadd.f32 %v845, %v846
      %v848 = vrot.slane %v847, 2
      %v849 = vadd.f32 %v847, %v848
      %v850 = vrot.slane %v849, 1
      %v851 = vadd.f32 %v849, %v850
      %v852 = vmul.f32 %v804, %v801
      %v853 = vsel %vm821, %v852, 0.0
      %v854 = vrot.slane %v853, 4
      %v855 = vadd.f32 %v853, %v854
      %v856 = vrot.slane %v855, 2
      %v857 = vadd.f32 %v855, %v856
      %v858 = vrot.slane %v857, 1
      %v859 = vadd.f32 %v857, %v858
      %v860 = vsel %vm844, %v801, 0.0
      %v861 = vrot.slane %v860, 4
      %v862 = vadd.f32 %v860, %v861
      %v863 = vrot.slane %v862, 2
      %v864 = vadd.f32 %v862, %v863
      %v865 = vrot.slane %v864, 1
      %v866 = vadd.f32 %v864, %v865
      %868 = vrot.lane.b32.xlu0 %v820, 1
      %v869 = vpop.permute.xlu0 %868
      %872 = vrot.lane.b32.xlu0 %v828, 1
      %v873 = vpop.permute.xlu0 %872
      %876 = vrot.lane.b32.xlu0 %v835, 2
      %v877 = vpop.permute.xlu0 %876
      %880 = vrot.lane.b32.xlu0 %v843, 5
      %v881 = vpop.permute.xlu0 %880
      %884 = vrot.lane.b32.xlu0 %v859, 6
      %v885 = vpop.permute.xlu0 %884
      %vm887 = vcmask 7168
      %v888 = vsel %vm887, %v813, %v869
      %v889 = vsel %vm781, %v888, %v873
      %vm890 = vcmask 23552
      %v891 = vsel %vm890, %v889, %v877
      %v892 = vsel %vm783, %v891, 4.0
      %v893 = vsel %vm785, %v892, %v881
      %vm894 = vcmask 48128
      %v895 = vsel %vm894, %v893, %v851
      %vm896 = vcmask 56320
      %v897 = vsel %vm896, %v895, %v885
      %vm898 = vcmask 64512
      %v899 = vsel %vm898, %v897, %v866
      %vm900 = vcmask 72704
      %v901 = vsel %vm900, %v899, 0.0
      %v902 = vmul.f32 %v901, 196.0
      %vm903 = vcmask 122880
      %904 = vst.msk [vmem:[%s309] sm:$0x1] %vm903, %v902
      %p905 = scmp.lt.s32.totalorder %s20, 1
      %s906 = scalar_select %p905, %s20, 1
      %s907 = smul.addr %s906, 4
      %s908 = scalar_lea.vmem %s7, %s907
      %p909 = scmp.lt.s32.totalorder %s20, 1
      %s910 = scalar_select %p909, %s20, 1
      %s911 = scalar_lea.vmem %s8, %s910
      // Predicated region
      $region49: #{anycalib_forward.7} parent=47 // pred_check
        %p912 = pneg %p190
      $region50: #{anycalib_forward.7} parent=47 // pred_check_branch
        %914 = sbr.rel (%p912) target = $region52
      $region51: #{anycalib_forward.7} parent=47 // pred_region
        _
      $region52: #{anycalib_forward.7} parent=47 // pred_fallthru
        _
      // Predicated region
      $region53: #{anycalib_forward.7} parent=47 // pred_check
        %p915 = pneg %p216
      $region54: #{anycalib_forward.7} parent=47 // pred_check_branch
        %917 = sbr.rel (%p915) target = $region56
      $region55: #{anycalib_forward.7} parent=47 // pred_region
        _
      $region56: #{anycalib_forward.7} parent=47 // pred_fallthru
        _
    $region48: #{anycalib_forward.7} parent=5 // pred_fallthru
      _
    %p918 = scmp.le.s32.totalorder 2, %s15
    // Predicated region
    $region57: #{anycalib_forward.7} parent=5 // pred_check
      %p919 = pneg %p918
    $region58: #{anycalib_forward.7} parent=5 // pred_check_branch
      %921 = sbr.rel (%p919) target = $region60
    $region59: #{anycalib_forward.7} parent=5 // pred_region
      %s922 = ssub.s32 %s15, 2
      // Predicated region
      $region61: #{anycalib_forward.7} parent=59 // pred_check
        %p923 = pneg %p196
      $region62: #{anycalib_forward.7} parent=59 // pred_check_branch
        %925 = sbr.rel (%p923) target = $region64
      $region63: #{anycalib_forward.7} parent=59 // pred_region
        %p926 = scmp.lt.s32.totalorder %s21, 1
        %s927 = scalar_select %p926, %s21, 1
        %s928 = smul.addr %s927, 4
        %s929 = scalar_lea.vmem %s7, %s928
      $region64: #{anycalib_forward.7} parent=59 // pred_fallthru
        _
      // Predicated region
      $region65: #{anycalib_forward.7} parent=59 // pred_check
        %p930 = pneg %p222
      $region66: #{anycalib_forward.7} parent=59 // pred_check_branch
        %932 = sbr.rel (%p930) target = $region68
      $region67: #{anycalib_forward.7} parent=59 // pred_region
        %p933 = scmp.lt.s32.totalorder %s21, 1
        %s934 = scalar_select %p933, %s21, 1
        %s935 = scalar_lea.vmem %s8, %s934
      $region68: #{anycalib_forward.7} parent=59 // pred_fallthru
        _
    $region60: #{anycalib_forward.7} parent=5 // pred_fallthru
      _
  $region6: #{anycalib_forward.7} parent=0 // loop_footer
    %s19 = sadd.s32 1, %s15
  $region7: #{anycalib_forward.7} parent=0 // loop_footer_branch
    %14 = sbr.rel target = $region3
  $region8: #{anycalib_forward.7} parent=0 // loop_exit
    _

</llo_original>
